<compile_context>
chip_gen: v6e
topology: v6e:2x2x1
jax: 0.10.0
libtpu: 0.0.40
codegen_flags: <defaults>
</compile_context>

<pallas_src>
import functools

import jax
import jax.numpy as jnp
import numpy as np
from jax import lax
from jax.experimental import pallas as pl
from jax.experimental.pallas import tpu as pltpu

LANE = 128  # padded width of every gate block / of the output (one vreg)


# ----------------------------------------------------------------------------
# Fused kernel: 2-layer bidirectional LSTM + LayerNorm/ReLU/Linear epilogue.
# ----------------------------------------------------------------------------
def _fused_rater_kernel(x_ref,                                    # (S*B, IN)
                        wih0_ref, b0_ref, whh0f_ref, whh0b_ref,   # layer 0
                        wih1f_ref, wih1b_ref, b1_ref,             # layer 1
                        whh1f_ref, whh1b_ref,
                        gamma_ref, beta_ref, fcw_ref, fcb_ref,    # out_fc
                        out_ref,                                  # (2*S*B, 128)
                        xproj_sc,                                 # (S*B, 8*128)
                        h_sc,                                     # (2*S*B, H)
                        *, seq_len, batch, hidden):
    S, B, H = seq_len, batch, hidden
    HP = LANE                      # lane-aligned gate block width
    SB = S * B

    def sigmoid(v):
        # One EUP tanh on the recurrent chain instead of exp + reciprocal.
        return 0.5 * jnp.tanh(0.5 * v) + 0.5

    def run_recurrence(whhf_ref, whhb_ref):
        whh_f = whhf_ref[...]      # (H, 4*HP), gate blocks lane-aligned
        whh_b = whhb_ref[...]      # (H, 4*HP)

        def gates(pre, c_prev):    # pre: (B, 4*HP); gate k starts at k*HP
            i_g = sigmoid(pre[:, 0 * HP:0 * HP + H])
            f_g = sigmoid(pre[:, 1 * HP:1 * HP + H])
            g_g = jnp.tanh(pre[:, 2 * HP:2 * HP + H])
            o_g = sigmoid(pre[:, 3 * HP:3 * HP + H])
            c_new = f_g * c_prev + i_g * g_g
            h_new = o_g * jnp.tanh(c_new)
            return h_new, c_new

        def step(t, carry):
            h_f, c_f, h_b, c_b = carry
            rt = S - 1 - t
            # One (B,H)@(H,4*HP) matmul per direction on the serial chain;
            # the two directions are independent and hide each other.
            xp_f = xproj_sc[pl.ds(t * B, B), :]     # (B, 8*HP)
            xp_b = xproj_sc[pl.ds(rt * B, B), :]    # (B, 8*HP)
            pre_f = xp_f[:, 0:4 * HP] + jnp.dot(
                h_f, whh_f, preferred_element_type=jnp.float32)
            pre_b = xp_b[:, 4 * HP:8 * HP] + jnp.dot(
                h_b, whh_b, preferred_element_type=jnp.float32)
            h_f, c_f = gates(pre_f, c_f)
            h_b, c_b = gates(pre_b, c_b)
            h_sc[pl.ds(t * B, B), :] = h_f           # rows [0, SB): forward
            h_sc[pl.ds(SB + rt * B, B), :] = h_b     # rows [SB, 2SB): backward
            return (h_f, c_f, h_b, c_b)

        z = jnp.zeros((B, H), jnp.float32)
        lax.fori_loop(0, S, step, (z, z, z, z), unroll=True)

    # ---- layer 0: hoisted input projection (all steps, both dirs, 8 gates) --
    xproj_sc[...] = (jnp.dot(x_ref[...], wih0_ref[...],
                             preferred_element_type=jnp.float32) + b0_ref[...])
    run_recurrence(whh0f_ref, whh0b_ref)

    # ---- layer 1: two row-sliced matmuls, no lane concat ---------------------
    # Read layer-0 hidden slabs into values BEFORE layer-1 overwrites h_sc.
    hf0 = h_sc[pl.ds(0, SB), :]      # (SB, H)
    hb0 = h_sc[pl.ds(SB, SB), :]     # (SB, H)
    xproj_sc[...] = (
        jnp.dot(hf0, wih1f_ref[...], preferred_element_type=jnp.float32)
        + jnp.dot(hb0, wih1b_ref[...], preferred_element_type=jnp.float32)
        + b1_ref[...])
    run_recurrence(whh1f_ref, whh1b_ref)

    # ---- merged out_fc epilogue over the whole (2*SB, H) slab ---------------
    # (dropout = identity at inference)
    h_all = h_sc[...]                                            # (2*SB, H)
    mean = jnp.mean(h_all, axis=-1, keepdims=True)
    var = jnp.mean((h_all - mean) ** 2, axis=-1, keepdims=True)
    xn = (h_all - mean) * lax.rsqrt(var + 1e-5)                  # PyTorch eps
    y = jnp.maximum(xn * gamma_ref[...] + beta_ref[...], 0.0)    # ReLU
    # Lane-dense (2*SB, 128) store; real out_ch columns sliced in the wrapper.
    out_ref[...] = (jnp.dot(y, fcw_ref[...],
                            preferred_element_type=jnp.float32) + fcb_ref[...])


# ----------------------------------------------------------------------------
# Parameter construction (deterministic, synthetic — no checkpoint loading)
# Natural (unpadded) layout, consumed by both the kernel wrapper and the ref:
#   l{k}_wih   : (Din, 8H)  lanes = [fwd i|f|g|o | bwd i|f|g|o], each block H
#   l{k}_b     : (1, 8H)    bias_ih + bias_hh, same packing
#   l{k}_whh_f : (H, 4H)    recurrent weights, forward direction
#   l{k}_whh_b : (H, 4H)    recurrent weights, backward direction
# ----------------------------------------------------------------------------
def init_params(key, in_ch, embed_ch, out_ch):
    H = embed_ch
    scale = 1.0 / np.sqrt(H)
    keys = iter(jax.random.split(key, 32))

    def u(shape):
        return jax.random.uniform(next(keys), shape, jnp.float32, -scale, scale)

    params = {}
    din = [in_ch, 2 * H]
    for layer in range(2):
        params[f"l{layer}_wih"] = u((din[layer], 8 * H))
        params[f"l{layer}_b"] = u((1, 8 * H)) + u((1, 8 * H))   # b_ih + b_hh
        params[f"l{layer}_whh_f"] = u((H, 4 * H))
        params[f"l{layer}_whh_b"] = u((H, 4 * H))
    params["ln_gamma"] = jnp.ones((1, H), jnp.float32)
    params["ln_beta"] = jnp.zeros((1, H), jnp.float32)
    params["fc_w"] = u((H, out_ch))
    params["fc_b"] = u((1, out_ch))
    return params


def _pad_gate_cols(w, H):
    """(rows, n_gates*H) -> (rows, n_gates*LANE): each gate block zero-padded
    so every gate starts on a 128-lane (vreg) boundary."""
    rows, cols = w.shape
    n_gates = cols // H
    w = w.reshape(rows, n_gates, H)
    w = jnp.pad(w, ((0, 0), (0, 0), (0, LANE - H)))
    return w.reshape(rows, n_gates * LANE)


# ----------------------------------------------------------------------------
# Forward pass: single fused pallas_call + trivial layout glue.
# ----------------------------------------------------------------------------
def transformer_rater_forward(x, params, *, embed_ch, out_ch):
    """x: (B, in_ch, num_slice) float32 -> (B, num_slice, 2, out_ch)."""
    B, in_ch, S = x.shape
    H = embed_ch
    SB = S * B

    # (B, in_ch, S) -> time-major row slab (S*B, in_ch), rows ordered (s, b).
    x_flat = jnp.transpose(x, (2, 0, 1)).reshape(SB, in_ch).astype(jnp.float32)

    # Pad every gate block to a 128-lane boundary (tiny one-time layout glue
    # outside the kernel; zero columns are free MXU output lanes).
    wih0 = _pad_gate_cols(params["l0_wih"], H)           # (in_ch, 8*128)
    b0 = _pad_gate_cols(params["l0_b"], H)               # (1, 8*128)
    whh0f = _pad_gate_cols(params["l0_whh_f"], H)        # (H, 4*128)
    whh0b = _pad_gate_cols(params["l0_whh_b"], H)
    wih1f = _pad_gate_cols(params["l1_wih"][:H], H)      # (H, 8*128)
    wih1b = _pad_gate_cols(params["l1_wih"][H:], H)      # (H, 8*128)
    b1 = _pad_gate_cols(params["l1_b"], H)
    whh1f = _pad_gate_cols(params["l1_whh_f"], H)
    whh1b = _pad_gate_cols(params["l1_whh_b"], H)
    fcw = jnp.pad(params["fc_w"], ((0, 0), (0, LANE - out_ch)))   # (H, 128)
    fcb = jnp.pad(params["fc_b"], ((0, 0), (0, LANE - out_ch)))   # (1, 128)

    kernel = functools.partial(_fused_rater_kernel,
                               seq_len=S, batch=B, hidden=H)
    vmem = pl.BlockSpec(memory_space=pltpu.MemorySpace.VMEM)

    out_flat = pl.pallas_call(
        kernel,
        out_shape=jax.ShapeDtypeStruct((2 * SB, LANE), jnp.float32),
        in_specs=[vmem] * 14,
        out_specs=vmem,
        scratch_shapes=[
            pltpu.VMEM((SB, 8 * LANE), jnp.float32),   # hoisted gate pre-acts
            pltpu.VMEM((2 * SB, H), jnp.float32),      # [fwd; bwd] hidden slab
        ],
    )(x_flat, wih0, b0, whh0f, whh0b,
      wih1f, wih1b, b1, whh1f, whh1b,
      params["ln_gamma"], params["ln_beta"], fcw, fcb)

    # rows: [fwd (s,b) | bwd (s,b)]; lanes: [out_ch | zero pad]
    out = out_flat[:, :out_ch].reshape(2, S, B, out_ch)
    return out.transpose(2, 1, 0, 3)                    # (B, S, 2, out_ch)


# ----------------------------------------------------------------------------
# Pure-JAX reference (consumes the same unpadded params) for correctness check.
# ----------------------------------------------------------------------------
def _ref_lstm_dir(x_sbd, wih4, whh4, b4):
    B = x_sbd.shape[1]
    H = whh4.shape[0]

    def step(carry, x_t):
        h, c = carry
        pre = x_t @ wih4 + h @ whh4 + b4
        i = jax.nn.sigmoid(pre[:, 0:H])
        f = jax.nn.sigmoid(pre[:, H:2 * H])
        g = jnp.tanh(pre[:, 2 * H:3 * H])
        o = jax.nn.sigmoid(pre[:, 3 * H:4 * H])
        c = f * c + i * g
        h = o * jnp.tanh(c)
        return (h, c), h

    init = (jnp.zeros((B, H), jnp.float32), jnp.zeros((B, H), jnp.float32))
    _, hs = lax.scan(step, init, x_sbd)
    return hs


def ref_forward(x, params, *, embed_ch, out_ch):
    B, _, S = x.shape
    H = embed_ch
    inp = jnp.transpose(x, (2, 0, 1)).astype(jnp.float32)        # (S, B, in)
    for layer in range(2):
        wih = params[f"l{layer}_wih"]
        b = params[f"l{layer}_b"]
        h_f = _ref_lstm_dir(inp, wih[:, :4 * H],
                            params[f"l{layer}_whh_f"], b[:, :4 * H])
        h_b = _ref_lstm_dir(inp[::-1], wih[:, 4 * H:],
                            params[f"l{layer}_whh_b"], b[:, 4 * H:])[::-1]
        inp = jnp.concatenate([h_f, h_b], axis=-1)               # (S, B, 2H)
    o = jnp.transpose(inp, (1, 0, 2)).reshape(B, S, 2, H)
    mean = jnp.mean(o, axis=-1, keepdims=True)
    var = jnp.mean((o - mean) ** 2, axis=-1, keepdims=True)
    y = (o - mean) * lax.rsqrt(var + 1e-5)
    y = y * params["ln_gamma"].reshape(1, 1, 1, H) + params["ln_beta"].reshape(1, 1, 1, H)
    y = jnp.maximum(y, 0.0)
    return y @ params["fc_w"] + params["fc_b"].reshape(1, 1, 1, out_ch)


# ----------------------------------------------------------------------------
if __name__ == "__main__":
    # Small shapes consistent with the module: batch=2, in_ch=32 (d_model),
    # num_slice=8 (sequence of slices), embed_ch=32, out_ch=2.
    B, IN_CH, SEQ = 2, 32, 8
    EMBED_CH, OUT_CH = 32, 2

    key = jax.random.PRNGKey(0)
    k_x, k_p = jax.random.split(key)
    x = jax.random.normal(k_x, (B, IN_CH, SEQ), dtype=jnp.float32)
    params = init_params(k_p, IN_CH, EMBED_CH, OUT_CH)

    fwd = jax.jit(functools.partial(transformer_rater_forward,
                                    embed_ch=EMBED_CH, out_ch=OUT_CH))
    out = jax.block_until_ready(fwd(x, params))
    assert out.shape == (B, SEQ, 2, OUT_CH)

    ref = jax.block_until_ready(ref_forward(x, params, embed_ch=EMBED_CH,
                                            out_ch=OUT_CH))
    np.testing.assert_allclose(np.asarray(out), np.asarray(ref),
                               rtol=2e-4, atol=2e-4)

    # TODO(synk): RECORD_ON playback bookkeeping is host-side list mutation
    # (detach/cpu); no kernel equivalent, intentionally omitted.
    print("KERNEL_OK")
</pallas_src>

<mosaic_0001>
module attributes {stable_mosaic.version = 11 : i64} {
  func.func @_fused_rater_kernel(%arg0: memref<16x32xf32, #tpu.memory_space<vmem>>, %arg1: memref<32x1024xf32, #tpu.memory_space<vmem>>, %arg2: memref<1x1024xf32, #tpu.memory_space<vmem>>, %arg3: memref<32x512xf32, #tpu.memory_space<vmem>>, %arg4: memref<32x512xf32, #tpu.memory_space<vmem>>, %arg5: memref<32x1024xf32, #tpu.memory_space<vmem>>, %arg6: memref<32x1024xf32, #tpu.memory_space<vmem>>, %arg7: memref<1x1024xf32, #tpu.memory_space<vmem>>, %arg8: memref<32x512xf32, #tpu.memory_space<vmem>>, %arg9: memref<32x512xf32, #tpu.memory_space<vmem>>, %arg10: memref<1x32xf32, #tpu.memory_space<vmem>>, %arg11: memref<1x32xf32, #tpu.memory_space<vmem>>, %arg12: memref<32x128xf32, #tpu.memory_space<vmem>>, %arg13: memref<1x128xf32, #tpu.memory_space<vmem>>, %arg14: memref<32x128xf32, #tpu.memory_space<vmem>>, %arg15: memref<16x1024xf32, #tpu.memory_space<vmem>>, %arg16: memref<32x32xf32, #tpu.memory_space<vmem>>) attributes {dimension_semantics = [], scalar_prefetch = 0 : i64, scratch_operands = 2 : i64, tpu.core_type = #tpu.core_type<tc>} {
    %c0 = arith.constant 0 : index
    %c0_0 = arith.constant 0 : index
    %0 = vector.load %arg0[%c0, %c0_0] : memref<16x32xf32, #tpu.memory_space<vmem>>, vector<16x32xf32>
    %c0_1 = arith.constant 0 : index
    %c0_2 = arith.constant 0 : index
    %1 = vector.load %arg1[%c0_1, %c0_2] : memref<32x1024xf32, #tpu.memory_space<vmem>>, vector<32x1024xf32>
    %cst = arith.constant dense<0.000000e+00> : vector<16x1024xf32>
    %2 = tpu.matmul %0, %1, %cst {dimension_numbers = #tpu.dot_dimension_numbers<[1], [0], [0], [1], [0, 0, 1, 1], [], []>} : vector<16x32xf32>, vector<32x1024xf32>, vector<16x1024xf32> -> vector<16x1024xf32>
    %c0_3 = arith.constant 0 : index
    %c0_4 = arith.constant 0 : index
    %3 = vector.load %arg2[%c0_3, %c0_4] : memref<1x1024xf32, #tpu.memory_space<vmem>>, vector<1x1024xf32>
    %4 = vector.broadcast %3 : vector<1x1024xf32> to vector<16x1024xf32>
    %5 = arith.addf %2, %4 : vector<16x1024xf32>
    %c0_5 = arith.constant 0 : index
    %c0_6 = arith.constant 0 : index
    %6 = vector.load %arg15[%c0_5, %c0_6] : memref<16x1024xf32, #tpu.memory_space<vmem>>, vector<16x1024xf32>
    tpu.vector_store %arg15[%c0_5, %c0_6], %5 {strides = array<i32>} : memref<16x1024xf32, #tpu.memory_space<vmem>>, vector<16x1024xf32>,
    %c0_7 = arith.constant 0 : index
    %c0_8 = arith.constant 0 : index
    %7 = vector.load %arg3[%c0_7, %c0_8] : memref<32x512xf32, #tpu.memory_space<vmem>>, vector<32x512xf32>
    %c0_9 = arith.constant 0 : index
    %c0_10 = arith.constant 0 : index
    %8 = vector.load %arg4[%c0_9, %c0_10] : memref<32x512xf32, #tpu.memory_space<vmem>>, vector<32x512xf32>
    %cst_11 = arith.constant 0.000000e+00 : f32
    %9 = vector.broadcast %cst_11 : f32 to vector<2x32xf32>
    %c0_i32 = arith.constant 0 : i32
    %c7_i32 = arith.constant 7 : i32
    %10 = arith.subi %c7_i32, %c0_i32 : i32
    %c2_i32 = arith.constant 2 : i32
    %11 = arith.muli %c0_i32, %c2_i32 : i32
    %12 = arith.index_cast %11 : i32 to index
    %c0_12 = arith.constant 0 : index
    %13 = vector.load %arg15[%12, %c0_12] : memref<16x1024xf32, #tpu.memory_space<vmem>>, vector<2x1024xf32>
    %c2_i32_13 = arith.constant 2 : i32
    %14 = arith.muli %10, %c2_i32_13 : i32
    %15 = arith.index_cast %14 : i32 to index
    %c0_14 = arith.constant 0 : index
    %16 = vector.load %arg15[%15, %c0_14] : memref<16x1024xf32, #tpu.memory_space<vmem>>, vector<2x1024xf32>
    %17 = vector.extract_strided_slice %13 {offsets = [0, 0], sizes = [2, 512], strides = [1, 1]} : vector<2x1024xf32> to vector<2x512xf32>
    %cst_15 = arith.constant dense<0.000000e+00> : vector<2x512xf32>
    %18 = tpu.matmul %9, %7, %cst_15 {dimension_numbers = #tpu.dot_dimension_numbers<[1], [0], [0], [1], [0, 0, 1, 1], [], []>} : vector<2x32xf32>, vector<32x512xf32>, vector<2x512xf32> -> vector<2x512xf32>
    %19 = arith.addf %17, %18 : vector<2x512xf32>
    %20 = vector.extract_strided_slice %16 {offsets = [0, 512], sizes = [2, 512], strides = [1, 1]} : vector<2x1024xf32> to vector<2x512xf32>
    %cst_16 = arith.constant dense<0.000000e+00> : vector<2x512xf32>
    %21 = tpu.matmul %9, %8, %cst_16 {dimension_numbers = #tpu.dot_dimension_numbers<[1], [0], [0], [1], [0, 0, 1, 1], [], []>} : vector<2x32xf32>, vector<32x512xf32>, vector<2x512xf32> -> vector<2x512xf32>
    %22 = arith.addf %20, %21 : vector<2x512xf32>
    %23 = vector.extract_strided_slice %19 {offsets = [0, 0], sizes = [2, 32], strides = [1, 1]} : vector<2x512xf32> to vector<2x32xf32>
    %cst_17 = arith.constant 5.000000e-01 : f32
    %24 = vector.broadcast %cst_17 : f32 to vector<2x32xf32>
    %25 = arith.mulf %24, %23 : vector<2x32xf32>
    %26 = math.tanh %25 : vector<2x32xf32>
    %cst_18 = arith.constant 5.000000e-01 : f32
    %27 = vector.broadcast %cst_18 : f32 to vector<2x32xf32>
    %28 = arith.mulf %27, %26 : vector<2x32xf32>
    %cst_19 = arith.constant 5.000000e-01 : f32
    %29 = vector.broadcast %cst_19 : f32 to vector<2x32xf32>
    %30 = arith.addf %28, %29 : vector<2x32xf32>
    %31 = vector.extract_strided_slice %19 {offsets = [0, 128], sizes = [2, 32], strides = [1, 1]} : vector<2x512xf32> to vector<2x32xf32>
    %cst_20 = arith.constant 5.000000e-01 : f32
    %32 = vector.broadcast %cst_20 : f32 to vector<2x32xf32>
    %33 = arith.mulf %32, %31 : vector<2x32xf32>
    %34 = math.tanh %33 : vector<2x32xf32>
    %cst_21 = arith.constant 5.000000e-01 : f32
    %35 = vector.broadcast %cst_21 : f32 to vector<2x32xf32>
    %36 = arith.mulf %35, %34 : vector<2x32xf32>
    %cst_22 = arith.constant 5.000000e-01 : f32
    %37 = vector.broadcast %cst_22 : f32 to vector<2x32xf32>
    %38 = arith.addf %36, %37 : vector<2x32xf32>
    %39 = vector.extract_strided_slice %19 {offsets = [0, 256], sizes = [2, 32], strides = [1, 1]} : vector<2x512xf32> to vector<2x32xf32>
    %40 = math.tanh %39 : vector<2x32xf32>
    %41 = vector.extract_strided_slice %19 {offsets = [0, 384], sizes = [2, 32], strides = [1, 1]} : vector<2x512xf32> to vector<2x32xf32>
    %cst_23 = arith.constant 5.000000e-01 : f32
    %42 = vector.broadcast %cst_23 : f32 to vector<2x32xf32>
    %43 = arith.mulf %42, %41 : vector<2x32xf32>
    %44 = math.tanh %43 : vector<2x32xf32>
    %cst_24 = arith.constant 5.000000e-01 : f32
    %45 = vector.broadcast %cst_24 : f32 to vector<2x32xf32>
    %46 = arith.mulf %45, %44 : vector<2x32xf32>
    %cst_25 = arith.constant 5.000000e-01 : f32
    %47 = vector.broadcast %cst_25 : f32 to vector<2x32xf32>
    %48 = arith.addf %46, %47 : vector<2x32xf32>
    %49 = arith.mulf %38, %9 : vector<2x32xf32>
    %50 = arith.mulf %30, %40 : vector<2x32xf32>
    %51 = arith.addf %49, %50 : vector<2x32xf32>
    %52 = math.tanh %51 : vector<2x32xf32>
    %53 = arith.mulf %48, %52 : vector<2x32xf32>
    %54 = vector.extract_strided_slice %22 {offsets = [0, 0], sizes = [2, 32], strides = [1, 1]} : vector<2x512xf32> to vector<2x32xf32>
    %cst_26 = arith.constant 5.000000e-01 : f32
    %55 = vector.broadcast %cst_26 : f32 to vector<2x32xf32>
    %56 = arith.mulf %55, %54 : vector<2x32xf32>
    %57 = math.tanh %56 : vector<2x32xf32>
    %cst_27 = arith.constant 5.000000e-01 : f32
    %58 = vector.broadcast %cst_27 : f32 to vector<2x32xf32>
    %59 = arith.mulf %58, %57 : vector<2x32xf32>
    %cst_28 = arith.constant 5.000000e-01 : f32
    %60 = vector.broadcast %cst_28 : f32 to vector<2x32xf32>
    %61 = arith.addf %59, %60 : vector<2x32xf32>
    %62 = vector.extract_strided_slice %22 {offsets = [0, 128], sizes = [2, 32], strides = [1, 1]} : vector<2x512xf32> to vector<2x32xf32>
    %cst_29 = arith.constant 5.000000e-01 : f32
    %63 = vector.broadcast %cst_29 : f32 to vector<2x32xf32>
    %64 = arith.mulf %63, %62 : vector<2x32xf32>
    %65 = math.tanh %64 : vector<2x32xf32>
    %cst_30 = arith.constant 5.000000e-01 : f32
    %66 = vector.broadcast %cst_30 : f32 to vector<2x32xf32>
    %67 = arith.mulf %66, %65 : vector<2x32xf32>
    %cst_31 = arith.constant 5.000000e-01 : f32
    %68 = vector.broadcast %cst_31 : f32 to vector<2x32xf32>
    %69 = arith.addf %67, %68 : vector<2x32xf32>
    %70 = vector.extract_strided_slice %22 {offsets = [0, 256], sizes = [2, 32], strides = [1, 1]} : vector<2x512xf32> to vector<2x32xf32>
    %71 = math.tanh %70 : vector<2x32xf32>
    %72 = vector.extract_strided_slice %22 {offsets = [0, 384], sizes = [2, 32], strides = [1, 1]} : vector<2x512xf32> to vector<2x32xf32>
    %cst_32 = arith.constant 5.000000e-01 : f32
    %73 = vector.broadcast %cst_32 : f32 to vector<2x32xf32>
    %74 = arith.mulf %73, %72 : vector<2x32xf32>
    %75 = math.tanh %74 : vector<2x32xf32>
    %cst_33 = arith.constant 5.000000e-01 : f32
    %76 = vector.broadcast %cst_33 : f32 to vector<2x32xf32>
    %77 = arith.mulf %76, %75 : vector<2x32xf32>
    %cst_34 = arith.constant 5.000000e-01 : f32
    %78 = vector.broadcast %cst_34 : f32 to vector<2x32xf32>
    %79 = arith.addf %77, %78 : vector<2x32xf32>
    %80 = arith.mulf %69, %9 : vector<2x32xf32>
    %81 = arith.mulf %61, %71 : vector<2x32xf32>
    %82 = arith.addf %80, %81 : vector<2x32xf32>
    %83 = math.tanh %82 : vector<2x32xf32>
    %84 = arith.mulf %79, %83 : vector<2x32xf32>
    %c2_i32_35 = arith.constant 2 : i32
    %85 = arith.muli %c0_i32, %c2_i32_35 : i32
    %86 = arith.index_cast %85 : i32 to index
    %c0_36 = arith.constant 0 : index
    %87 = vector.load %arg16[%86, %c0_36] : memref<32x32xf32, #tpu.memory_space<vmem>>, vector<2x32xf32>
    tpu.vector_store %arg16[%86, %c0_36], %53 {strides = array<i32>} : memref<32x32xf32, #tpu.memory_space<vmem>>, vector<2x32xf32>,
    %c2_i32_37 = arith.constant 2 : i32
    %88 = arith.muli %10, %c2_i32_37 : i32
    %c16_i32 = arith.constant 16 : i32
    %89 = arith.addi %c16_i32, %88 : i32
    %90 = arith.index_cast %89 : i32 to index
    %c0_38 = arith.constant 0 : index
    %91 = vector.load %arg16[%90, %c0_38] : memref<32x32xf32, #tpu.memory_space<vmem>>, vector<2x32xf32>
    tpu.vector_store %arg16[%90, %c0_38], %84 {strides = array<i32>} : memref<32x32xf32, #tpu.memory_space<vmem>>, vector<2x32xf32>,
    %c1_i32 = arith.constant 1 : i32
    %c7_i32_39 = arith.constant 7 : i32
    %92 = arith.subi %c7_i32_39, %c1_i32 : i32
    %c2_i32_40 = arith.constant 2 : i32
    %93 = arith.muli %c1_i32, %c2_i32_40 : i32
    %94 = arith.index_cast %93 : i32 to index
    %c0_41 = arith.constant 0 : index
    %95 = vector.load %arg15[%94, %c0_41] : memref<16x1024xf32, #tpu.memory_space<vmem>>, vector<2x1024xf32>
    %c2_i32_42 = arith.constant 2 : i32
    %96 = arith.muli %92, %c2_i32_42 : i32
    %97 = arith.index_cast %96 : i32 to index
    %c0_43 = arith.constant 0 : index
    %98 = vector.load %arg15[%97, %c0_43] : memref<16x1024xf32, #tpu.memory_space<vmem>>, vector<2x1024xf32>
    %99 = vector.extract_strided_slice %95 {offsets = [0, 0], sizes = [2, 512], strides = [1, 1]} : vector<2x1024xf32> to vector<2x512xf32>
    %cst_44 = arith.constant dense<0.000000e+00> : vector<2x512xf32>
    %100 = tpu.matmul %53, %7, %cst_44 {dimension_numbers = #tpu.dot_dimension_numbers<[1], [0], [0], [1], [0, 0, 1, 1], [], []>} : vector<2x32xf32>, vector<32x512xf32>, vector<2x512xf32> -> vector<2x512xf32>
    %101 = arith.addf %99, %100 : vector<2x512xf32>
    %102 = vector.extract_strided_slice %98 {offsets = [0, 512], sizes = [2, 512], strides = [1, 1]} : vector<2x1024xf32> to vector<2x512xf32>
    %cst_45 = arith.constant dense<0.000000e+00> : vector<2x512xf32>
    %103 = tpu.matmul %84, %8, %cst_45 {dimension_numbers = #tpu.dot_dimension_numbers<[1], [0], [0], [1], [0, 0, 1, 1], [], []>} : vector<2x32xf32>, vector<32x512xf32>, vector<2x512xf32> -> vector<2x512xf32>
    %104 = arith.addf %102, %103 : vector<2x512xf32>
    %105 = vector.extract_strided_slice %101 {offsets = [0, 0], sizes = [2, 32], strides = [1, 1]} : vector<2x512xf32> to vector<2x32xf32>
    %cst_46 = arith.constant 5.000000e-01 : f32
    %106 = vector.broadcast %cst_46 : f32 to vector<2x32xf32>
    %107 = arith.mulf %106, %105 : vector<2x32xf32>
    %108 = math.tanh %107 : vector<2x32xf32>
    %cst_47 = arith.constant 5.000000e-01 : f32
    %109 = vector.broadcast %cst_47 : f32 to vector<2x32xf32>
    %110 = arith.mulf %109, %108 : vector<2x32xf32>
    %cst_48 = arith.constant 5.000000e-01 : f32
    %111 = vector.broadcast %cst_48 : f32 to vector<2x32xf32>
    %112 = arith.addf %110, %111 : vector<2x32xf32>
    %113 = vector.extract_strided_slice %101 {offsets = [0, 128], sizes = [2, 32], strides = [1, 1]} : vector<2x512xf32> to vector<2x32xf32>
    %cst_49 = arith.constant 5.000000e-01 : f32
    %114 = vector.broadcast %cst_49 : f32 to vector<2x32xf32>
    %115 = arith.mulf %114, %113 : vector<2x32xf32>
    %116 = math.tanh %115 : vector<2x32xf32>
    %cst_50 = arith.constant 5.000000e-01 : f32
    %117 = vector.broadcast %cst_50 : f32 to vector<2x32xf32>
    %118 = arith.mulf %117, %116 : vector<2x32xf32>
    %cst_51 = arith.constant 5.000000e-01 : f32
    %119 = vector.broadcast %cst_51 : f32 to vector<2x32xf32>
    %120 = arith.addf %118, %119 : vector<2x32xf32>
    %121 = vector.extract_strided_slice %101 {offsets = [0, 256], sizes = [2, 32], strides = [1, 1]} : vector<2x512xf32> to vector<2x32xf32>
    %122 = math.tanh %121 : vector<2x32xf32>
    %123 = vector.extract_strided_slice %101 {offsets = [0, 384], sizes = [2, 32], strides = [1, 1]} : vector<2x512xf32> to vector<2x32xf32>
    %cst_52 = arith.constant 5.000000e-01 : f32
    %124 = vector.broadcast %cst_52 : f32 to vector<2x32xf32>
    %125 = arith.mulf %124, %123 : vector<2x32xf32>
    %126 = math.tanh %125 : vector<2x32xf32>
    %cst_53 = arith.constant 5.000000e-01 : f32
    %127 = vector.broadcast %cst_53 : f32 to vector<2x32xf32>
    %128 = arith.mulf %127, %126 : vector<2x32xf32>
    %cst_54 = arith.constant 5.000000e-01 : f32
    %129 = vector.broadcast %cst_54 : f32 to vector<2x32xf32>
    %130 = arith.addf %128, %129 : vector<2x32xf32>
    %131 = arith.mulf %120, %51 : vector<2x32xf32>
    %132 = arith.mulf %112, %122 : vector<2x32xf32>
    %133 = arith.addf %131, %132 : vector<2x32xf32>
    %134 = math.tanh %133 : vector<2x32xf32>
    %135 = arith.mulf %130, %134 : vector<2x32xf32>
    %136 = vector.extract_strided_slice %104 {offsets = [0, 0], sizes = [2, 32], strides = [1, 1]} : vector<2x512xf32> to vector<2x32xf32>
    %cst_55 = arith.constant 5.000000e-01 : f32
    %137 = vector.broadcast %cst_55 : f32 to vector<2x32xf32>
    %138 = arith.mulf %137, %136 : vector<2x32xf32>
    %139 = math.tanh %138 : vector<2x32xf32>
    %cst_56 = arith.constant 5.000000e-01 : f32
    %140 = vector.broadcast %cst_56 : f32 to vector<2x32xf32>
    %141 = arith.mulf %140, %139 : vector<2x32xf32>
    %cst_57 = arith.constant 5.000000e-01 : f32
    %142 = vector.broadcast %cst_57 : f32 to vector<2x32xf32>
    %143 = arith.addf %141, %142 : vector<2x32xf32>
    %144 = vector.extract_strided_slice %104 {offsets = [0, 128], sizes = [2, 32], strides = [1, 1]} : vector<2x512xf32> to vector<2x32xf32>
    %cst_58 = arith.constant 5.000000e-01 : f32
    %145 = vector.broadcast %cst_58 : f32 to vector<2x32xf32>
    %146 = arith.mulf %145, %144 : vector<2x32xf32>
    %147 = math.tanh %146 : vector<2x32xf32>
    %cst_59 = arith.constant 5.000000e-01 : f32
    %148 = vector.broadcast %cst_59 : f32 to vector<2x32xf32>
    %149 = arith.mulf %148, %147 : vector<2x32xf32>
    %cst_60 = arith.constant 5.000000e-01 : f32
    %150 = vector.broadcast %cst_60 : f32 to vector<2x32xf32>
    %151 = arith.addf %149, %150 : vector<2x32xf32>
    %152 = vector.extract_strided_slice %104 {offsets = [0, 256], sizes = [2, 32], strides = [1, 1]} : vector<2x512xf32> to vector<2x32xf32>
    %153 = math.tanh %152 : vector<2x32xf32>
    %154 = vector.extract_strided_slice %104 {offsets = [0, 384], sizes = [2, 32], strides = [1, 1]} : vector<2x512xf32> to vector<2x32xf32>
    %cst_61 = arith.constant 5.000000e-01 : f32
    %155 = vector.broadcast %cst_61 : f32 to vector<2x32xf32>
    %156 = arith.mulf %155, %154 : vector<2x32xf32>
    %157 = math.tanh %156 : vector<2x32xf32>
    %cst_62 = arith.constant 5.000000e-01 : f32
    %158 = vector.broadcast %cst_62 : f32 to vector<2x32xf32>
    %159 = arith.mulf %158, %157 : vector<2x32xf32>
    %cst_63 = arith.constant 5.000000e-01 : f32
    %160 = vector.broadcast %cst_63 : f32 to vector<2x32xf32>
    %161 = arith.addf %159, %160 : vector<2x32xf32>
    %162 = arith.mulf %151, %82 : vector<2x32xf32>
    %163 = arith.mulf %143, %153 : vector<2x32xf32>
    %164 = arith.addf %162, %163 : vector<2x32xf32>
    %165 = math.tanh %164 : vector<2x32xf32>
    %166 = arith.mulf %161, %165 : vector<2x32xf32>
    %c2_i32_64 = arith.constant 2 : i32
    %167 = arith.muli %c1_i32, %c2_i32_64 : i32
    %168 = arith.index_cast %167 : i32 to index
    %c0_65 = arith.constant 0 : index
    %169 = vector.load %arg16[%168, %c0_65] : memref<32x32xf32, #tpu.memory_space<vmem>>, vector<2x32xf32>
    tpu.vector_store %arg16[%168, %c0_65], %135 {strides = array<i32>} : memref<32x32xf32, #tpu.memory_space<vmem>>, vector<2x32xf32>,
    %c2_i32_66 = arith.constant 2 : i32
    %170 = arith.muli %92, %c2_i32_66 : i32
    %c16_i32_67 = arith.constant 16 : i32
    %171 = arith.addi %c16_i32_67, %170 : i32
    %172 = arith.index_cast %171 : i32 to index
    %c0_68 = arith.constant 0 : index
    %173 = vector.load %arg16[%172, %c0_68] : memref<32x32xf32, #tpu.memory_space<vmem>>, vector<2x32xf32>
    tpu.vector_store %arg16[%172, %c0_68], %166 {strides = array<i32>} : memref<32x32xf32, #tpu.memory_space<vmem>>, vector<2x32xf32>,
    %c2_i32_69 = arith.constant 2 : i32
    %c7_i32_70 = arith.constant 7 : i32
    %174 = arith.subi %c7_i32_70, %c2_i32_69 : i32
    %c2_i32_71 = arith.constant 2 : i32
    %175 = arith.muli %c2_i32_69, %c2_i32_71 : i32
    %176 = arith.index_cast %175 : i32 to index
    %c0_72 = arith.constant 0 : index
    %177 = vector.load %arg15[%176, %c0_72] : memref<16x1024xf32, #tpu.memory_space<vmem>>, vector<2x1024xf32>
    %c2_i32_73 = arith.constant 2 : i32
    %178 = arith.muli %174, %c2_i32_73 : i32
    %179 = arith.index_cast %178 : i32 to index
    %c0_74 = arith.constant 0 : index
    %180 = vector.load %arg15[%179, %c0_74] : memref<16x1024xf32, #tpu.memory_space<vmem>>, vector<2x1024xf32>
    %181 = vector.extract_strided_slice %177 {offsets = [0, 0], sizes = [2, 512], strides = [1, 1]} : vector<2x1024xf32> to vector<2x512xf32>
    %cst_75 = arith.constant dense<0.000000e+00> : vector<2x512xf32>
    %182 = tpu.matmul %135, %7, %cst_75 {dimension_numbers = #tpu.dot_dimension_numbers<[1], [0], [0], [1], [0, 0, 1, 1], [], []>} : vector<2x32xf32>, vector<32x512xf32>, vector<2x512xf32> -> vector<2x512xf32>
    %183 = arith.addf %181, %182 : vector<2x512xf32>
    %184 = vector.extract_strided_slice %180 {offsets = [0, 512], sizes = [2, 512], strides = [1, 1]} : vector<2x1024xf32> to vector<2x512xf32>
    %cst_76 = arith.constant dense<0.000000e+00> : vector<2x512xf32>
    %185 = tpu.matmul %166, %8, %cst_76 {dimension_numbers = #tpu.dot_dimension_numbers<[1], [0], [0], [1], [0, 0, 1, 1], [], []>} : vector<2x32xf32>, vector<32x512xf32>, vector<2x512xf32> -> vector<2x512xf32>
    %186 = arith.addf %184, %185 : vector<2x512xf32>
    %187 = vector.extract_strided_slice %183 {offsets = [0, 0], sizes = [2, 32], strides = [1, 1]} : vector<2x512xf32> to vector<2x32xf32>
    %cst_77 = arith.constant 5.000000e-01 : f32
    %188 = vector.broadcast %cst_77 : f32 to vector<2x32xf32>
    %189 = arith.mulf %188, %187 : vector<2x32xf32>
    %190 = math.tanh %189 : vector<2x32xf32>
    %cst_78 = arith.constant 5.000000e-01 : f32
    %191 = vector.broadcast %cst_78 : f32 to vector<2x32xf32>
    %192 = arith.mulf %191, %190 : vector<2x32xf32>
    %cst_79 = arith.constant 5.000000e-01 : f32
    %193 = vector.broadcast %cst_79 : f32 to vector<2x32xf32>
    %194 = arith.addf %192, %193 : vector<2x32xf32>
    %195 = vector.extract_strided_slice %183 {offsets = [0, 128], sizes = [2, 32], strides = [1, 1]} : vector<2x512xf32> to vector<2x32xf32>
    %cst_80 = arith.constant 5.000000e-01 : f32
    %196 = vector.broadcast %cst_80 : f32 to vector<2x32xf32>
    %197 = arith.mulf %196, %195 : vector<2x32xf32>
    %198 = math.tanh %197 : vector<2x32xf32>
    %cst_81 = arith.constant 5.000000e-01 : f32
    %199 = vector.broadcast %cst_81 : f32 to vector<2x32xf32>
    %200 = arith.mulf %199, %198 : vector<2x32xf32>
    %cst_82 = arith.constant 5.000000e-01 : f32
    %201 = vector.broadcast %cst_82 : f32 to vector<2x32xf32>
    %202 = arith.addf %200, %201 : vector<2x32xf32>
    %203 = vector.extract_strided_slice %183 {offsets = [0, 256], sizes = [2, 32], strides = [1, 1]} : vector<2x512xf32> to vector<2x32xf32>
    %204 = math.tanh %203 : vector<2x32xf32>
    %205 = vector.extract_strided_slice %183 {offsets = [0, 384], sizes = [2, 32], strides = [1, 1]} : vector<2x512xf32> to vector<2x32xf32>
    %cst_83 = arith.constant 5.000000e-01 : f32
    %206 = vector.broadcast %cst_83 : f32 to vector<2x32xf32>
    %207 = arith.mulf %206, %205 : vector<2x32xf32>
    %208 = math.tanh %207 : vector<2x32xf32>
    %cst_84 = arith.constant 5.000000e-01 : f32
    %209 = vector.broadcast %cst_84 : f32 to vector<2x32xf32>
    %210 = arith.mulf %209, %208 : vector<2x32xf32>
    %cst_85 = arith.constant 5.000000e-01 : f32
    %211 = vector.broadcast %cst_85 : f32 to vector<2x32xf32>
    %212 = arith.addf %210, %211 : vector<2x32xf32>
    %213 = arith.mulf %202, %133 : vector<2x32xf32>
    %214 = arith.mulf %194, %204 : vector<2x32xf32>
    %215 = arith.addf %213, %214 : vector<2x32xf32>
    %216 = math.tanh %215 : vector<2x32xf32>
    %217 = arith.mulf %212, %216 : vector<2x32xf32>
    %218 = vector.extract_strided_slice %186 {offsets = [0, 0], sizes = [2, 32], strides = [1, 1]} : vector<2x512xf32> to vector<2x32xf32>
    %cst_86 = arith.constant 5.000000e-01 : f32
    %219 = vector.broadcast %cst_86 : f32 to vector<2x32xf32>
    %220 = arith.mulf %219, %218 : vector<2x32xf32>
    %221 = math.tanh %220 : vector<2x32xf32>
    %cst_87 = arith.constant 5.000000e-01 : f32
    %222 = vector.broadcast %cst_87 : f32 to vector<2x32xf32>
    %223 = arith.mulf %222, %221 : vector<2x32xf32>
    %cst_88 = arith.constant 5.000000e-01 : f32
    %224 = vector.broadcast %cst_88 : f32 to vector<2x32xf32>
    %225 = arith.addf %223, %224 : vector<2x32xf32>
    %226 = vector.extract_strided_slice %186 {offsets = [0, 128], sizes = [2, 32], strides = [1, 1]} : vector<2x512xf32> to vector<2x32xf32>
    %cst_89 = arith.constant 5.000000e-01 : f32
    %227 = vector.broadcast %cst_89 : f32 to vector<2x32xf32>
    %228 = arith.mulf %227, %226 : vector<2x32xf32>
    %229 = math.tanh %228 : vector<2x32xf32>
    %cst_90 = arith.constant 5.000000e-01 : f32
    %230 = vector.broadcast %cst_90 : f32 to vector<2x32xf32>
    %231 = arith.mulf %230, %229 : vector<2x32xf32>
    %cst_91 = arith.constant 5.000000e-01 : f32
    %232 = vector.broadcast %cst_91 : f32 to vector<2x32xf32>
    %233 = arith.addf %231, %232 : vector<2x32xf32>
    %234 = vector.extract_strided_slice %186 {offsets = [0, 256], sizes = [2, 32], strides = [1, 1]} : vector<2x512xf32> to vector<2x32xf32>
    %235 = math.tanh %234 : vector<2x32xf32>
    %236 = vector.extract_strided_slice %186 {offsets = [0, 384], sizes = [2, 32], strides = [1, 1]} : vector<2x512xf32> to vector<2x32xf32>
    %cst_92 = arith.constant 5.000000e-01 : f32
    %237 = vector.broadcast %cst_92 : f32 to vector<2x32xf32>
    %238 = arith.mulf %237, %236 : vector<2x32xf32>
    %239 = math.tanh %238 : vector<2x32xf32>
    %cst_93 = arith.constant 5.000000e-01 : f32
    %240 = vector.broadcast %cst_93 : f32 to vector<2x32xf32>
    %241 = arith.mulf %240, %239 : vector<2x32xf32>
    %cst_94 = arith.constant 5.000000e-01 : f32
    %242 = vector.broadcast %cst_94 : f32 to vector<2x32xf32>
    %243 = arith.addf %241, %242 : vector<2x32xf32>
    %244 = arith.mulf %233, %164 : vector<2x32xf32>
    %245 = arith.mulf %225, %235 : vector<2x32xf32>
    %246 = arith.addf %244, %245 : vector<2x32xf32>
    %247 = math.tanh %246 : vector<2x32xf32>
    %248 = arith.mulf %243, %247 : vector<2x32xf32>
    %c2_i32_95 = arith.constant 2 : i32
    %249 = arith.muli %c2_i32_69, %c2_i32_95 : i32
    %250 = arith.index_cast %249 : i32 to index
    %c0_96 = arith.constant 0 : index
    %251 = vector.load %arg16[%250, %c0_96] : memref<32x32xf32, #tpu.memory_space<vmem>>, vector<2x32xf32>
    tpu.vector_store %arg16[%250, %c0_96], %217 {strides = array<i32>} : memref<32x32xf32, #tpu.memory_space<vmem>>, vector<2x32xf32>,
    %c2_i32_97 = arith.constant 2 : i32
    %252 = arith.muli %174, %c2_i32_97 : i32
    %c16_i32_98 = arith.constant 16 : i32
    %253 = arith.addi %c16_i32_98, %252 : i32
    %254 = arith.index_cast %253 : i32 to index
    %c0_99 = arith.constant 0 : index
    %255 = vector.load %arg16[%254, %c0_99] : memref<32x32xf32, #tpu.memory_space<vmem>>, vector<2x32xf32>
    tpu.vector_store %arg16[%254, %c0_99], %248 {strides = array<i32>} : memref<32x32xf32, #tpu.memory_space<vmem>>, vector<2x32xf32>,
    %c3_i32 = arith.constant 3 : i32
    %c7_i32_100 = arith.constant 7 : i32
    %256 = arith.subi %c7_i32_100, %c3_i32 : i32
    %c2_i32_101 = arith.constant 2 : i32
    %257 = arith.muli %c3_i32, %c2_i32_101 : i32
    %258 = arith.index_cast %257 : i32 to index
    %c0_102 = arith.constant 0 : index
    %259 = vector.load %arg15[%258, %c0_102] : memref<16x1024xf32, #tpu.memory_space<vmem>>, vector<2x1024xf32>
    %c2_i32_103 = arith.constant 2 : i32
    %260 = arith.muli %256, %c2_i32_103 : i32
    %261 = arith.index_cast %260 : i32 to index
    %c0_104 = arith.constant 0 : index
    %262 = vector.load %arg15[%261, %c0_104] : memref<16x1024xf32, #tpu.memory_space<vmem>>, vector<2x1024xf32>
    %263 = vector.extract_strided_slice %259 {offsets = [0, 0], sizes = [2, 512], strides = [1, 1]} : vector<2x1024xf32> to vector<2x512xf32>
    %cst_105 = arith.constant dense<0.000000e+00> : vector<2x512xf32>
    %264 = tpu.matmul %217, %7, %cst_105 {dimension_numbers = #tpu.dot_dimension_numbers<[1], [0], [0], [1], [0, 0, 1, 1], [], []>} : vector<2x32xf32>, vector<32x512xf32>, vector<2x512xf32> -> vector<2x512xf32>
    %265 = arith.addf %263, %264 : vector<2x512xf32>
    %266 = vector.extract_strided_slice %262 {offsets = [0, 512], sizes = [2, 512], strides = [1, 1]} : vector<2x1024xf32> to vector<2x512xf32>
    %cst_106 = arith.constant dense<0.000000e+00> : vector<2x512xf32>
    %267 = tpu.matmul %248, %8, %cst_106 {dimension_numbers = #tpu.dot_dimension_numbers<[1], [0], [0], [1], [0, 0, 1, 1], [], []>} : vector<2x32xf32>, vector<32x512xf32>, vector<2x512xf32> -> vector<2x512xf32>
    %268 = arith.addf %266, %267 : vector<2x512xf32>
    %269 = vector.extract_strided_slice %265 {offsets = [0, 0], sizes = [2, 32], strides = [1, 1]} : vector<2x512xf32> to vector<2x32xf32>
    %cst_107 = arith.constant 5.000000e-01 : f32
    %270 = vector.broadcast %cst_107 : f32 to vector<2x32xf32>
    %271 = arith.mulf %270, %269 : vector<2x32xf32>
    %272 = math.tanh %271 : vector<2x32xf32>
    %cst_108 = arith.constant 5.000000e-01 : f32
    %273 = vector.broadcast %cst_108 : f32 to vector<2x32xf32>
    %274 = arith.mulf %273, %272 : vector<2x32xf32>
    %cst_109 = arith.constant 5.000000e-01 : f32
    %275 = vector.broadcast %cst_109 : f32 to vector<2x32xf32>
    %276 = arith.addf %274, %275 : vector<2x32xf32>
    %277 = vector.extract_strided_slice %265 {offsets = [0, 128], sizes = [2, 32], strides = [1, 1]} : vector<2x512xf32> to vector<2x32xf32>
    %cst_110 = arith.constant 5.000000e-01 : f32
    %278 = vector.broadcast %cst_110 : f32 to vector<2x32xf32>
    %279 = arith.mulf %278, %277 : vector<2x32xf32>
    %280 = math.tanh %279 : vector<2x32xf32>
    %cst_111 = arith.constant 5.000000e-01 : f32
    %281 = vector.broadcast %cst_111 : f32 to vector<2x32xf32>
    %282 = arith.mulf %281, %280 : vector<2x32xf32>
    %cst_112 = arith.constant 5.000000e-01 : f32
    %283 = vector.broadcast %cst_112 : f32 to vector<2x32xf32>
    %284 = arith.addf %282, %283 : vector<2x32xf32>
    %285 = vector.extract_strided_slice %265 {offsets = [0, 256], sizes = [2, 32], strides = [1, 1]} : vector<2x512xf32> to vector<2x32xf32>
    %286 = math.tanh %285 : vector<2x32xf32>
    %287 = vector.extract_strided_slice %265 {offsets = [0, 384], sizes = [2, 32], strides = [1, 1]} : vector<2x512xf32> to vector<2x32xf32>
    %cst_113 = arith.constant 5.000000e-01 : f32
    %288 = vector.broadcast %cst_113 : f32 to vector<2x32xf32>
    %289 = arith.mulf %288, %287 : vector<2x32xf32>
    %290 = math.tanh %289 : vector<2x32xf32>
    %cst_114 = arith.constant 5.000000e-01 : f32
    %291 = vector.broadcast %cst_114 : f32 to vector<2x32xf32>
    %292 = arith.mulf %291, %290 : vector<2x32xf32>
    %cst_115 = arith.constant 5.000000e-01 : f32
    %293 = vector.broadcast %cst_115 : f32 to vector<2x32xf32>
    %294 = arith.addf %292, %293 : vector<2x32xf32>
    %295 = arith.mulf %284, %215 : vector<2x32xf32>
    %296 = arith.mulf %276, %286 : vector<2x32xf32>
    %297 = arith.addf %295, %296 : vector<2x32xf32>
    %298 = math.tanh %297 : vector<2x32xf32>
    %299 = arith.mulf %294, %298 : vector<2x32xf32>
    %300 = vector.extract_strided_slice %268 {offsets = [0, 0], sizes = [2, 32], strides = [1, 1]} : vector<2x512xf32> to vector<2x32xf32>
    %cst_116 = arith.constant 5.000000e-01 : f32
    %301 = vector.broadcast %cst_116 : f32 to vector<2x32xf32>
    %302 = arith.mulf %301, %300 : vector<2x32xf32>
    %303 = math.tanh %302 : vector<2x32xf32>
    %cst_117 = arith.constant 5.000000e-01 : f32
    %304 = vector.broadcast %cst_117 : f32 to vector<2x32xf32>
    %305 = arith.mulf %304, %303 : vector<2x32xf32>
    %cst_118 = arith.constant 5.000000e-01 : f32
    %306 = vector.broadcast %cst_118 : f32 to vector<2x32xf32>
    %307 = arith.addf %305, %306 : vector<2x32xf32>
    %308 = vector.extract_strided_slice %268 {offsets = [0, 128], sizes = [2, 32], strides = [1, 1]} : vector<2x512xf32> to vector<2x32xf32>
    %cst_119 = arith.constant 5.000000e-01 : f32
    %309 = vector.broadcast %cst_119 : f32 to vector<2x32xf32>
    %310 = arith.mulf %309, %308 : vector<2x32xf32>
    %311 = math.tanh %310 : vector<2x32xf32>
    %cst_120 = arith.constant 5.000000e-01 : f32
    %312 = vector.broadcast %cst_120 : f32 to vector<2x32xf32>
    %313 = arith.mulf %312, %311 : vector<2x32xf32>
    %cst_121 = arith.constant 5.000000e-01 : f32
    %314 = vector.broadcast %cst_121 : f32 to vector<2x32xf32>
    %315 = arith.addf %313, %314 : vector<2x32xf32>
    %316 = vector.extract_strided_slice %268 {offsets = [0, 256], sizes = [2, 32], strides = [1, 1]} : vector<2x512xf32> to vector<2x32xf32>
    %317 = math.tanh %316 : vector<2x32xf32>
    %318 = vector.extract_strided_slice %268 {offsets = [0, 384], sizes = [2, 32], strides = [1, 1]} : vector<2x512xf32> to vector<2x32xf32>
    %cst_122 = arith.constant 5.000000e-01 : f32
    %319 = vector.broadcast %cst_122 : f32 to vector<2x32xf32>
    %320 = arith.mulf %319, %318 : vector<2x32xf32>
    %321 = math.tanh %320 : vector<2x32xf32>
    %cst_123 = arith.constant 5.000000e-01 : f32
    %322 = vector.broadcast %cst_123 : f32 to vector<2x32xf32>
    %323 = arith.mulf %322, %321 : vector<2x32xf32>
    %cst_124 = arith.constant 5.000000e-01 : f32
    %324 = vector.broadcast %cst_124 : f32 to vector<2x32xf32>
    %325 = arith.addf %323, %324 : vector<2x32xf32>
    %326 = arith.mulf %315, %246 : vector<2x32xf32>
    %327 = arith.mulf %307, %317 : vector<2x32xf32>
    %328 = arith.addf %326, %327 : vector<2x32xf32>
    %329 = math.tanh %328 : vector<2x32xf32>
    %330 = arith.mulf %325, %329 : vector<2x32xf32>
    %c2_i32_125 = arith.constant 2 : i32
    %331 = arith.muli %c3_i32, %c2_i32_125 : i32
    %332 = arith.index_cast %331 : i32 to index
    %c0_126 = arith.constant 0 : index
    %333 = vector.load %arg16[%332, %c0_126] : memref<32x32xf32, #tpu.memory_space<vmem>>, vector<2x32xf32>
    tpu.vector_store %arg16[%332, %c0_126], %299 {strides = array<i32>} : memref<32x32xf32, #tpu.memory_space<vmem>>, vector<2x32xf32>,
    %c2_i32_127 = arith.constant 2 : i32
    %334 = arith.muli %256, %c2_i32_127 : i32
    %c16_i32_128 = arith.constant 16 : i32
    %335 = arith.addi %c16_i32_128, %334 : i32
    %336 = arith.index_cast %335 : i32 to index
    %c0_129 = arith.constant 0 : index
    %337 = vector.load %arg16[%336, %c0_129] : memref<32x32xf32, #tpu.memory_space<vmem>>, vector<2x32xf32>
    tpu.vector_store %arg16[%336, %c0_129], %330 {strides = array<i32>} : memref<32x32xf32, #tpu.memory_space<vmem>>, vector<2x32xf32>,
    %c4_i32 = arith.constant 4 : i32
    %c7_i32_130 = arith.constant 7 : i32
    %338 = arith.subi %c7_i32_130, %c4_i32 : i32
    %c2_i32_131 = arith.constant 2 : i32
    %339 = arith.muli %c4_i32, %c2_i32_131 : i32
    %340 = arith.index_cast %339 : i32 to index
    %c0_132 = arith.constant 0 : index
    %341 = vector.load %arg15[%340, %c0_132] : memref<16x1024xf32, #tpu.memory_space<vmem>>, vector<2x1024xf32>
    %c2_i32_133 = arith.constant 2 : i32
    %342 = arith.muli %338, %c2_i32_133 : i32
    %343 = arith.index_cast %342 : i32 to index
    %c0_134 = arith.constant 0 : index
    %344 = vector.load %arg15[%343, %c0_134] : memref<16x1024xf32, #tpu.memory_space<vmem>>, vector<2x1024xf32>
    %345 = vector.extract_strided_slice %341 {offsets = [0, 0], sizes = [2, 512], strides = [1, 1]} : vector<2x1024xf32> to vector<2x512xf32>
    %cst_135 = arith.constant dense<0.000000e+00> : vector<2x512xf32>
    %346 = tpu.matmul %299, %7, %cst_135 {dimension_numbers = #tpu.dot_dimension_numbers<[1], [0], [0], [1], [0, 0, 1, 1], [], []>} : vector<2x32xf32>, vector<32x512xf32>, vector<2x512xf32> -> vector<2x512xf32>
    %347 = arith.addf %345, %346 : vector<2x512xf32>
    %348 = vector.extract_strided_slice %344 {offsets = [0, 512], sizes = [2, 512], strides = [1, 1]} : vector<2x1024xf32> to vector<2x512xf32>
    %cst_136 = arith.constant dense<0.000000e+00> : vector<2x512xf32>
    %349 = tpu.matmul %330, %8, %cst_136 {dimension_numbers = #tpu.dot_dimension_numbers<[1], [0], [0], [1], [0, 0, 1, 1], [], []>} : vector<2x32xf32>, vector<32x512xf32>, vector<2x512xf32> -> vector<2x512xf32>
    %350 = arith.addf %348, %349 : vector<2x512xf32>
    %351 = vector.extract_strided_slice %347 {offsets = [0, 0], sizes = [2, 32], strides = [1, 1]} : vector<2x512xf32> to vector<2x32xf32>
    %cst_137 = arith.constant 5.000000e-01 : f32
    %352 = vector.broadcast %cst_137 : f32 to vector<2x32xf32>
    %353 = arith.mulf %352, %351 : vector<2x32xf32>
    %354 = math.tanh %353 : vector<2x32xf32>
    %cst_138 = arith.constant 5.000000e-01 : f32
    %355 = vector.broadcast %cst_138 : f32 to vector<2x32xf32>
    %356 = arith.mulf %355, %354 : vector<2x32xf32>
    %cst_139 = arith.constant 5.000000e-01 : f32
    %357 = vector.broadcast %cst_139 : f32 to vector<2x32xf32>
    %358 = arith.addf %356, %357 : vector<2x32xf32>
    %359 = vector.extract_strided_slice %347 {offsets = [0, 128], sizes = [2, 32], strides = [1, 1]} : vector<2x512xf32> to vector<2x32xf32>
    %cst_140 = arith.constant 5.000000e-01 : f32
    %360 = vector.broadcast %cst_140 : f32 to vector<2x32xf32>
    %361 = arith.mulf %360, %359 : vector<2x32xf32>
    %362 = math.tanh %361 : vector<2x32xf32>
    %cst_141 = arith.constant 5.000000e-01 : f32
    %363 = vector.broadcast %cst_141 : f32 to vector<2x32xf32>
    %364 = arith.mulf %363, %362 : vector<2x32xf32>
    %cst_142 = arith.constant 5.000000e-01 : f32
    %365 = vector.broadcast %cst_142 : f32 to vector<2x32xf32>
    %366 = arith.addf %364, %365 : vector<2x32xf32>
    %367 = vector.extract_strided_slice %347 {offsets = [0, 256], sizes = [2, 32], strides = [1, 1]} : vector<2x512xf32> to vector<2x32xf32>
    %368 = math.tanh %367 : vector<2x32xf32>
    %369 = vector.extract_strided_slice %347 {offsets = [0, 384], sizes = [2, 32], strides = [1, 1]} : vector<2x512xf32> to vector<2x32xf32>
    %cst_143 = arith.constant 5.000000e-01 : f32
    %370 = vector.broadcast %cst_143 : f32 to vector<2x32xf32>
    %371 = arith.mulf %370, %369 : vector<2x32xf32>
    %372 = math.tanh %371 : vector<2x32xf32>
    %cst_144 = arith.constant 5.000000e-01 : f32
    %373 = vector.broadcast %cst_144 : f32 to vector<2x32xf32>
    %374 = arith.mulf %373, %372 : vector<2x32xf32>
    %cst_145 = arith.constant 5.000000e-01 : f32
    %375 = vector.broadcast %cst_145 : f32 to vector<2x32xf32>
    %376 = arith.addf %374, %375 : vector<2x32xf32>
    %377 = arith.mulf %366, %297 : vector<2x32xf32>
    %378 = arith.mulf %358, %368 : vector<2x32xf32>
    %379 = arith.addf %377, %378 : vector<2x32xf32>
    %380 = math.tanh %379 : vector<2x32xf32>
    %381 = arith.mulf %376, %380 : vector<2x32xf32>
    %382 = vector.extract_strided_slice %350 {offsets = [0, 0], sizes = [2, 32], strides = [1, 1]} : vector<2x512xf32> to vector<2x32xf32>
    %cst_146 = arith.constant 5.000000e-01 : f32
    %383 = vector.broadcast %cst_146 : f32 to vector<2x32xf32>
    %384 = arith.mulf %383, %382 : vector<2x32xf32>
    %385 = math.tanh %384 : vector<2x32xf32>
    %cst_147 = arith.constant 5.000000e-01 : f32
    %386 = vector.broadcast %cst_147 : f32 to vector<2x32xf32>
    %387 = arith.mulf %386, %385 : vector<2x32xf32>
    %cst_148 = arith.constant 5.000000e-01 : f32
    %388 = vector.broadcast %cst_148 : f32 to vector<2x32xf32>
    %389 = arith.addf %387, %388 : vector<2x32xf32>
    %390 = vector.extract_strided_slice %350 {offsets = [0, 128], sizes = [2, 32], strides = [1, 1]} : vector<2x512xf32> to vector<2x32xf32>
    %cst_149 = arith.constant 5.000000e-01 : f32
    %391 = vector.broadcast %cst_149 : f32 to vector<2x32xf32>
    %392 = arith.mulf %391, %390 : vector<2x32xf32>
    %393 = math.tanh %392 : vector<2x32xf32>
    %cst_150 = arith.constant 5.000000e-01 : f32
    %394 = vector.broadcast %cst_150 : f32 to vector<2x32xf32>
    %395 = arith.mulf %394, %393 : vector<2x32xf32>
    %cst_151 = arith.constant 5.000000e-01 : f32
    %396 = vector.broadcast %cst_151 : f32 to vector<2x32xf32>
    %397 = arith.addf %395, %396 : vector<2x32xf32>
    %398 = vector.extract_strided_slice %350 {offsets = [0, 256], sizes = [2, 32], strides = [1, 1]} : vector<2x512xf32> to vector<2x32xf32>
    %399 = math.tanh %398 : vector<2x32xf32>
    %400 = vector.extract_strided_slice %350 {offsets = [0, 384], sizes = [2, 32], strides = [1, 1]} : vector<2x512xf32> to vector<2x32xf32>
    %cst_152 = arith.constant 5.000000e-01 : f32
    %401 = vector.broadcast %cst_152 : f32 to vector<2x32xf32>
    %402 = arith.mulf %401, %400 : vector<2x32xf32>
    %403 = math.tanh %402 : vector<2x32xf32>
    %cst_153 = arith.constant 5.000000e-01 : f32
    %404 = vector.broadcast %cst_153 : f32 to vector<2x32xf32>
    %405 = arith.mulf %404, %403 : vector<2x32xf32>
    %cst_154 = arith.constant 5.000000e-01 : f32
    %406 = vector.broadcast %cst_154 : f32 to vector<2x32xf32>
    %407 = arith.addf %405, %406 : vector<2x32xf32>
    %408 = arith.mulf %397, %328 : vector<2x32xf32>
    %409 = arith.mulf %389, %399 : vector<2x32xf32>
    %410 = arith.addf %408, %409 : vector<2x32xf32>
    %411 = math.tanh %410 : vector<2x32xf32>
    %412 = arith.mulf %407, %411 : vector<2x32xf32>
    %c2_i32_155 = arith.constant 2 : i32
    %413 = arith.muli %c4_i32, %c2_i32_155 : i32
    %414 = arith.index_cast %413 : i32 to index
    %c0_156 = arith.constant 0 : index
    %415 = vector.load %arg16[%414, %c0_156] : memref<32x32xf32, #tpu.memory_space<vmem>>, vector<2x32xf32>
    tpu.vector_store %arg16[%414, %c0_156], %381 {strides = array<i32>} : memref<32x32xf32, #tpu.memory_space<vmem>>, vector<2x32xf32>,
    %c2_i32_157 = arith.constant 2 : i32
    %416 = arith.muli %338, %c2_i32_157 : i32
    %c16_i32_158 = arith.constant 16 : i32
    %417 = arith.addi %c16_i32_158, %416 : i32
    %418 = arith.index_cast %417 : i32 to index
    %c0_159 = arith.constant 0 : index
    %419 = vector.load %arg16[%418, %c0_159] : memref<32x32xf32, #tpu.memory_space<vmem>>, vector<2x32xf32>
    tpu.vector_store %arg16[%418, %c0_159], %412 {strides = array<i32>} : memref<32x32xf32, #tpu.memory_space<vmem>>, vector<2x32xf32>,
    %c5_i32 = arith.constant 5 : i32
    %c7_i32_160 = arith.constant 7 : i32
    %420 = arith.subi %c7_i32_160, %c5_i32 : i32
    %c2_i32_161 = arith.constant 2 : i32
    %421 = arith.muli %c5_i32, %c2_i32_161 : i32
    %422 = arith.index_cast %421 : i32 to index
    %c0_162 = arith.constant 0 : index
    %423 = vector.load %arg15[%422, %c0_162] : memref<16x1024xf32, #tpu.memory_space<vmem>>, vector<2x1024xf32>
    %c2_i32_163 = arith.constant 2 : i32
    %424 = arith.muli %420, %c2_i32_163 : i32
    %425 = arith.index_cast %424 : i32 to index
    %c0_164 = arith.constant 0 : index
    %426 = vector.load %arg15[%425, %c0_164] : memref<16x1024xf32, #tpu.memory_space<vmem>>, vector<2x1024xf32>
    %427 = vector.extract_strided_slice %423 {offsets = [0, 0], sizes = [2, 512], strides = [1, 1]} : vector<2x1024xf32> to vector<2x512xf32>
    %cst_165 = arith.constant dense<0.000000e+00> : vector<2x512xf32>
    %428 = tpu.matmul %381, %7, %cst_165 {dimension_numbers = #tpu.dot_dimension_numbers<[1], [0], [0], [1], [0, 0, 1, 1], [], []>} : vector<2x32xf32>, vector<32x512xf32>, vector<2x512xf32> -> vector<2x512xf32>
    %429 = arith.addf %427, %428 : vector<2x512xf32>
    %430 = vector.extract_strided_slice %426 {offsets = [0, 512], sizes = [2, 512], strides = [1, 1]} : vector<2x1024xf32> to vector<2x512xf32>
    %cst_166 = arith.constant dense<0.000000e+00> : vector<2x512xf32>
    %431 = tpu.matmul %412, %8, %cst_166 {dimension_numbers = #tpu.dot_dimension_numbers<[1], [0], [0], [1], [0, 0, 1, 1], [], []>} : vector<2x32xf32>, vector<32x512xf32>, vector<2x512xf32> -> vector<2x512xf32>
    %432 = arith.addf %430, %431 : vector<2x512xf32>
    %433 = vector.extract_strided_slice %429 {offsets = [0, 0], sizes = [2, 32], strides = [1, 1]} : vector<2x512xf32> to vector<2x32xf32>
    %cst_167 = arith.constant 5.000000e-01 : f32
    %434 = vector.broadcast %cst_167 : f32 to vector<2x32xf32>
    %435 = arith.mulf %434, %433 : vector<2x32xf32>
    %436 = math.tanh %435 : vector<2x32xf32>
    %cst_168 = arith.constant 5.000000e-01 : f32
    %437 = vector.broadcast %cst_168 : f32 to vector<2x32xf32>
    %438 = arith.mulf %437, %436 : vector<2x32xf32>
    %cst_169 = arith.constant 5.000000e-01 : f32
    %439 = vector.broadcast %cst_169 : f32 to vector<2x32xf32>
    %440 = arith.addf %438, %439 : vector<2x32xf32>
    %441 = vector.extract_strided_slice %429 {offsets = [0, 128], sizes = [2, 32], strides = [1, 1]} : vector<2x512xf32> to vector<2x32xf32>
    %cst_170 = arith.constant 5.000000e-01 : f32
    %442 = vector.broadcast %cst_170 : f32 to vector<2x32xf32>
    %443 = arith.mulf %442, %441 : vector<2x32xf32>
    %444 = math.tanh %443 : vector<2x32xf32>
    %cst_171 = arith.constant 5.000000e-01 : f32
    %445 = vector.broadcast %cst_171 : f32 to vector<2x32xf32>
    %446 = arith.mulf %445, %444 : vector<2x32xf32>
    %cst_172 = arith.constant 5.000000e-01 : f32
    %447 = vector.broadcast %cst_172 : f32 to vector<2x32xf32>
    %448 = arith.addf %446, %447 : vector<2x32xf32>
    %449 = vector.extract_strided_slice %429 {offsets = [0, 256], sizes = [2, 32], strides = [1, 1]} : vector<2x512xf32> to vector<2x32xf32>
    %450 = math.tanh %449 : vector<2x32xf32>
    %451 = vector.extract_strided_slice %429 {offsets = [0, 384], sizes = [2, 32], strides = [1, 1]} : vector<2x512xf32> to vector<2x32xf32>
    %cst_173 = arith.constant 5.000000e-01 : f32
    %452 = vector.broadcast %cst_173 : f32 to vector<2x32xf32>
    %453 = arith.mulf %452, %451 : vector<2x32xf32>
    %454 = math.tanh %453 : vector<2x32xf32>
    %cst_174 = arith.constant 5.000000e-01 : f32
    %455 = vector.broadcast %cst_174 : f32 to vector<2x32xf32>
    %456 = arith.mulf %455, %454 : vector<2x32xf32>
    %cst_175 = arith.constant 5.000000e-01 : f32
    %457 = vector.broadcast %cst_175 : f32 to vector<2x32xf32>
    %458 = arith.addf %456, %457 : vector<2x32xf32>
    %459 = arith.mulf %448, %379 : vector<2x32xf32>
    %460 = arith.mulf %440, %450 : vector<2x32xf32>
    %461 = arith.addf %459, %460 : vector<2x32xf32>
    %462 = math.tanh %461 : vector<2x32xf32>
    %463 = arith.mulf %458, %462 : vector<2x32xf32>
    %464 = vector.extract_strided_slice %432 {offsets = [0, 0], sizes = [2, 32], strides = [1, 1]} : vector<2x512xf32> to vector<2x32xf32>
    %cst_176 = arith.constant 5.000000e-01 : f32
    %465 = vector.broadcast %cst_176 : f32 to vector<2x32xf32>
    %466 = arith.mulf %465, %464 : vector<2x32xf32>
    %467 = math.tanh %466 : vector<2x32xf32>
    %cst_177 = arith.constant 5.000000e-01 : f32
    %468 = vector.broadcast %cst_177 : f32 to vector<2x32xf32>
    %469 = arith.mulf %468, %467 : vector<2x32xf32>
    %cst_178 = arith.constant 5.000000e-01 : f32
    %470 = vector.broadcast %cst_178 : f32 to vector<2x32xf32>
    %471 = arith.addf %469, %470 : vector<2x32xf32>
    %472 = vector.extract_strided_slice %432 {offsets = [0, 128], sizes = [2, 32], strides = [1, 1]} : vector<2x512xf32> to vector<2x32xf32>
    %cst_179 = arith.constant 5.000000e-01 : f32
    %473 = vector.broadcast %cst_179 : f32 to vector<2x32xf32>
    %474 = arith.mulf %473, %472 : vector<2x32xf32>
    %475 = math.tanh %474 : vector<2x32xf32>
    %cst_180 = arith.constant 5.000000e-01 : f32
    %476 = vector.broadcast %cst_180 : f32 to vector<2x32xf32>
    %477 = arith.mulf %476, %475 : vector<2x32xf32>
    %cst_181 = arith.constant 5.000000e-01 : f32
    %478 = vector.broadcast %cst_181 : f32 to vector<2x32xf32>
    %479 = arith.addf %477, %478 : vector<2x32xf32>
    %480 = vector.extract_strided_slice %432 {offsets = [0, 256], sizes = [2, 32], strides = [1, 1]} : vector<2x512xf32> to vector<2x32xf32>
    %481 = math.tanh %480 : vector<2x32xf32>
    %482 = vector.extract_strided_slice %432 {offsets = [0, 384], sizes = [2, 32], strides = [1, 1]} : vector<2x512xf32> to vector<2x32xf32>
    %cst_182 = arith.constant 5.000000e-01 : f32
    %483 = vector.broadcast %cst_182 : f32 to vector<2x32xf32>
    %484 = arith.mulf %483, %482 : vector<2x32xf32>
    %485 = math.tanh %484 : vector<2x32xf32>
    %cst_183 = arith.constant 5.000000e-01 : f32
    %486 = vector.broadcast %cst_183 : f32 to vector<2x32xf32>
    %487 = arith.mulf %486, %485 : vector<2x32xf32>
    %cst_184 = arith.constant 5.000000e-01 : f32
    %488 = vector.broadcast %cst_184 : f32 to vector<2x32xf32>
    %489 = arith.addf %487, %488 : vector<2x32xf32>
    %490 = arith.mulf %479, %410 : vector<2x32xf32>
    %491 = arith.mulf %471, %481 : vector<2x32xf32>
    %492 = arith.addf %490, %491 : vector<2x32xf32>
    %493 = math.tanh %492 : vector<2x32xf32>
    %494 = arith.mulf %489, %493 : vector<2x32xf32>
    %c2_i32_185 = arith.constant 2 : i32
    %495 = arith.muli %c5_i32, %c2_i32_185 : i32
    %496 = arith.index_cast %495 : i32 to index
    %c0_186 = arith.constant 0 : index
    %497 = vector.load %arg16[%496, %c0_186] : memref<32x32xf32, #tpu.memory_space<vmem>>, vector<2x32xf32>
    tpu.vector_store %arg16[%496, %c0_186], %463 {strides = array<i32>} : memref<32x32xf32, #tpu.memory_space<vmem>>, vector<2x32xf32>,
    %c2_i32_187 = arith.constant 2 : i32
    %498 = arith.muli %420, %c2_i32_187 : i32
    %c16_i32_188 = arith.constant 16 : i32
    %499 = arith.addi %c16_i32_188, %498 : i32
    %500 = arith.index_cast %499 : i32 to index
    %c0_189 = arith.constant 0 : index
    %501 = vector.load %arg16[%500, %c0_189] : memref<32x32xf32, #tpu.memory_space<vmem>>, vector<2x32xf32>
    tpu.vector_store %arg16[%500, %c0_189], %494 {strides = array<i32>} : memref<32x32xf32, #tpu.memory_space<vmem>>, vector<2x32xf32>,
    %c6_i32 = arith.constant 6 : i32
    %c7_i32_190 = arith.constant 7 : i32
    %502 = arith.subi %c7_i32_190, %c6_i32 : i32
    %c2_i32_191 = arith.constant 2 : i32
    %503 = arith.muli %c6_i32, %c2_i32_191 : i32
    %504 = arith.index_cast %503 : i32 to index
    %c0_192 = arith.constant 0 : index
    %505 = vector.load %arg15[%504, %c0_192] : memref<16x1024xf32, #tpu.memory_space<vmem>>, vector<2x1024xf32>
    %c2_i32_193 = arith.constant 2 : i32
    %506 = arith.muli %502, %c2_i32_193 : i32
    %507 = arith.index_cast %506 : i32 to index
    %c0_194 = arith.constant 0 : index
    %508 = vector.load %arg15[%507, %c0_194] : memref<16x1024xf32, #tpu.memory_space<vmem>>, vector<2x1024xf32>
    %509 = vector.extract_strided_slice %505 {offsets = [0, 0], sizes = [2, 512], strides = [1, 1]} : vector<2x1024xf32> to vector<2x512xf32>
    %cst_195 = arith.constant dense<0.000000e+00> : vector<2x512xf32>
    %510 = tpu.matmul %463, %7, %cst_195 {dimension_numbers = #tpu.dot_dimension_numbers<[1], [0], [0], [1], [0, 0, 1, 1], [], []>} : vector<2x32xf32>, vector<32x512xf32>, vector<2x512xf32> -> vector<2x512xf32>
    %511 = arith.addf %509, %510 : vector<2x512xf32>
    %512 = vector.extract_strided_slice %508 {offsets = [0, 512], sizes = [2, 512], strides = [1, 1]} : vector<2x1024xf32> to vector<2x512xf32>
    %cst_196 = arith.constant dense<0.000000e+00> : vector<2x512xf32>
    %513 = tpu.matmul %494, %8, %cst_196 {dimension_numbers = #tpu.dot_dimension_numbers<[1], [0], [0], [1], [0, 0, 1, 1], [], []>} : vector<2x32xf32>, vector<32x512xf32>, vector<2x512xf32> -> vector<2x512xf32>
    %514 = arith.addf %512, %513 : vector<2x512xf32>
    %515 = vector.extract_strided_slice %511 {offsets = [0, 0], sizes = [2, 32], strides = [1, 1]} : vector<2x512xf32> to vector<2x32xf32>
    %cst_197 = arith.constant 5.000000e-01 : f32
    %516 = vector.broadcast %cst_197 : f32 to vector<2x32xf32>
    %517 = arith.mulf %516, %515 : vector<2x32xf32>
    %518 = math.tanh %517 : vector<2x32xf32>
    %cst_198 = arith.constant 5.000000e-01 : f32
    %519 = vector.broadcast %cst_198 : f32 to vector<2x32xf32>
    %520 = arith.mulf %519, %518 : vector<2x32xf32>
    %cst_199 = arith.constant 5.000000e-01 : f32
    %521 = vector.broadcast %cst_199 : f32 to vector<2x32xf32>
    %522 = arith.addf %520, %521 : vector<2x32xf32>
    %523 = vector.extract_strided_slice %511 {offsets = [0, 128], sizes = [2, 32], strides = [1, 1]} : vector<2x512xf32> to vector<2x32xf32>
    %cst_200 = arith.constant 5.000000e-01 : f32
    %524 = vector.broadcast %cst_200 : f32 to vector<2x32xf32>
    %525 = arith.mulf %524, %523 : vector<2x32xf32>
    %526 = math.tanh %525 : vector<2x32xf32>
    %cst_201 = arith.constant 5.000000e-01 : f32
    %527 = vector.broadcast %cst_201 : f32 to vector<2x32xf32>
    %528 = arith.mulf %527, %526 : vector<2x32xf32>
    %cst_202 = arith.constant 5.000000e-01 : f32
    %529 = vector.broadcast %cst_202 : f32 to vector<2x32xf32>
    %530 = arith.addf %528, %529 : vector<2x32xf32>
    %531 = vector.extract_strided_slice %511 {offsets = [0, 256], sizes = [2, 32], strides = [1, 1]} : vector<2x512xf32> to vector<2x32xf32>
    %532 = math.tanh %531 : vector<2x32xf32>
    %533 = vector.extract_strided_slice %511 {offsets = [0, 384], sizes = [2, 32], strides = [1, 1]} : vector<2x512xf32> to vector<2x32xf32>
    %cst_203 = arith.constant 5.000000e-01 : f32
    %534 = vector.broadcast %cst_203 : f32 to vector<2x32xf32>
    %535 = arith.mulf %534, %533 : vector<2x32xf32>
    %536 = math.tanh %535 : vector<2x32xf32>
    %cst_204 = arith.constant 5.000000e-01 : f32
    %537 = vector.broadcast %cst_204 : f32 to vector<2x32xf32>
    %538 = arith.mulf %537, %536 : vector<2x32xf32>
    %cst_205 = arith.constant 5.000000e-01 : f32
    %539 = vector.broadcast %cst_205 : f32 to vector<2x32xf32>
    %540 = arith.addf %538, %539 : vector<2x32xf32>
    %541 = arith.mulf %530, %461 : vector<2x32xf32>
    %542 = arith.mulf %522, %532 : vector<2x32xf32>
    %543 = arith.addf %541, %542 : vector<2x32xf32>
    %544 = math.tanh %543 : vector<2x32xf32>
    %545 = arith.mulf %540, %544 : vector<2x32xf32>
    %546 = vector.extract_strided_slice %514 {offsets = [0, 0], sizes = [2, 32], strides = [1, 1]} : vector<2x512xf32> to vector<2x32xf32>
    %cst_206 = arith.constant 5.000000e-01 : f32
    %547 = vector.broadcast %cst_206 : f32 to vector<2x32xf32>
    %548 = arith.mulf %547, %546 : vector<2x32xf32>
    %549 = math.tanh %548 : vector<2x32xf32>
    %cst_207 = arith.constant 5.000000e-01 : f32
    %550 = vector.broadcast %cst_207 : f32 to vector<2x32xf32>
    %551 = arith.mulf %550, %549 : vector<2x32xf32>
    %cst_208 = arith.constant 5.000000e-01 : f32
    %552 = vector.broadcast %cst_208 : f32 to vector<2x32xf32>
    %553 = arith.addf %551, %552 : vector<2x32xf32>
    %554 = vector.extract_strided_slice %514 {offsets = [0, 128], sizes = [2, 32], strides = [1, 1]} : vector<2x512xf32> to vector<2x32xf32>
    %cst_209 = arith.constant 5.000000e-01 : f32
    %555 = vector.broadcast %cst_209 : f32 to vector<2x32xf32>
    %556 = arith.mulf %555, %554 : vector<2x32xf32>
    %557 = math.tanh %556 : vector<2x32xf32>
    %cst_210 = arith.constant 5.000000e-01 : f32
    %558 = vector.broadcast %cst_210 : f32 to vector<2x32xf32>
    %559 = arith.mulf %558, %557 : vector<2x32xf32>
    %cst_211 = arith.constant 5.000000e-01 : f32
    %560 = vector.broadcast %cst_211 : f32 to vector<2x32xf32>
    %561 = arith.addf %559, %560 : vector<2x32xf32>
    %562 = vector.extract_strided_slice %514 {offsets = [0, 256], sizes = [2, 32], strides = [1, 1]} : vector<2x512xf32> to vector<2x32xf32>
    %563 = math.tanh %562 : vector<2x32xf32>
    %564 = vector.extract_strided_slice %514 {offsets = [0, 384], sizes = [2, 32], strides = [1, 1]} : vector<2x512xf32> to vector<2x32xf32>
    %cst_212 = arith.constant 5.000000e-01 : f32
    %565 = vector.broadcast %cst_212 : f32 to vector<2x32xf32>
    %566 = arith.mulf %565, %564 : vector<2x32xf32>
    %567 = math.tanh %566 : vector<2x32xf32>
    %cst_213 = arith.constant 5.000000e-01 : f32
    %568 = vector.broadcast %cst_213 : f32 to vector<2x32xf32>
    %569 = arith.mulf %568, %567 : vector<2x32xf32>
    %cst_214 = arith.constant 5.000000e-01 : f32
    %570 = vector.broadcast %cst_214 : f32 to vector<2x32xf32>
    %571 = arith.addf %569, %570 : vector<2x32xf32>
    %572 = arith.mulf %561, %492 : vector<2x32xf32>
    %573 = arith.mulf %553, %563 : vector<2x32xf32>
    %574 = arith.addf %572, %573 : vector<2x32xf32>
    %575 = math.tanh %574 : vector<2x32xf32>
    %576 = arith.mulf %571, %575 : vector<2x32xf32>
    %c2_i32_215 = arith.constant 2 : i32
    %577 = arith.muli %c6_i32, %c2_i32_215 : i32
    %578 = arith.index_cast %577 : i32 to index
    %c0_216 = arith.constant 0 : index
    %579 = vector.load %arg16[%578, %c0_216] : memref<32x32xf32, #tpu.memory_space<vmem>>, vector<2x32xf32>
    tpu.vector_store %arg16[%578, %c0_216], %545 {strides = array<i32>} : memref<32x32xf32, #tpu.memory_space<vmem>>, vector<2x32xf32>,
    %c2_i32_217 = arith.constant 2 : i32
    %580 = arith.muli %502, %c2_i32_217 : i32
    %c16_i32_218 = arith.constant 16 : i32
    %581 = arith.addi %c16_i32_218, %580 : i32
    %582 = arith.index_cast %581 : i32 to index
    %c0_219 = arith.constant 0 : index
    %583 = vector.load %arg16[%582, %c0_219] : memref<32x32xf32, #tpu.memory_space<vmem>>, vector<2x32xf32>
    tpu.vector_store %arg16[%582, %c0_219], %576 {strides = array<i32>} : memref<32x32xf32, #tpu.memory_space<vmem>>, vector<2x32xf32>,
    %c7_i32_220 = arith.constant 7 : i32
    %c7_i32_221 = arith.constant 7 : i32
    %584 = arith.subi %c7_i32_221, %c7_i32_220 : i32
    %c2_i32_222 = arith.constant 2 : i32
    %585 = arith.muli %c7_i32_220, %c2_i32_222 : i32
    %586 = arith.index_cast %585 : i32 to index
    %c0_223 = arith.constant 0 : index
    %587 = vector.load %arg15[%586, %c0_223] : memref<16x1024xf32, #tpu.memory_space<vmem>>, vector<2x1024xf32>
    %c2_i32_224 = arith.constant 2 : i32
    %588 = arith.muli %584, %c2_i32_224 : i32
    %589 = arith.index_cast %588 : i32 to index
    %c0_225 = arith.constant 0 : index
    %590 = vector.load %arg15[%589, %c0_225] : memref<16x1024xf32, #tpu.memory_space<vmem>>, vector<2x1024xf32>
    %591 = vector.extract_strided_slice %587 {offsets = [0, 0], sizes = [2, 512], strides = [1, 1]} : vector<2x1024xf32> to vector<2x512xf32>
    %cst_226 = arith.constant dense<0.000000e+00> : vector<2x512xf32>
    %592 = tpu.matmul %545, %7, %cst_226 {dimension_numbers = #tpu.dot_dimension_numbers<[1], [0], [0], [1], [0, 0, 1, 1], [], []>} : vector<2x32xf32>, vector<32x512xf32>, vector<2x512xf32> -> vector<2x512xf32>
    %593 = arith.addf %591, %592 : vector<2x512xf32>
    %594 = vector.extract_strided_slice %590 {offsets = [0, 512], sizes = [2, 512], strides = [1, 1]} : vector<2x1024xf32> to vector<2x512xf32>
    %cst_227 = arith.constant dense<0.000000e+00> : vector<2x512xf32>
    %595 = tpu.matmul %576, %8, %cst_227 {dimension_numbers = #tpu.dot_dimension_numbers<[1], [0], [0], [1], [0, 0, 1, 1], [], []>} : vector<2x32xf32>, vector<32x512xf32>, vector<2x512xf32> -> vector<2x512xf32>
    %596 = arith.addf %594, %595 : vector<2x512xf32>
    %597 = vector.extract_strided_slice %593 {offsets = [0, 0], sizes = [2, 32], strides = [1, 1]} : vector<2x512xf32> to vector<2x32xf32>
    %cst_228 = arith.constant 5.000000e-01 : f32
    %598 = vector.broadcast %cst_228 : f32 to vector<2x32xf32>
    %599 = arith.mulf %598, %597 : vector<2x32xf32>
    %600 = math.tanh %599 : vector<2x32xf32>
    %cst_229 = arith.constant 5.000000e-01 : f32
    %601 = vector.broadcast %cst_229 : f32 to vector<2x32xf32>
    %602 = arith.mulf %601, %600 : vector<2x32xf32>
    %cst_230 = arith.constant 5.000000e-01 : f32
    %603 = vector.broadcast %cst_230 : f32 to vector<2x32xf32>
    %604 = arith.addf %602, %603 : vector<2x32xf32>
    %605 = vector.extract_strided_slice %593 {offsets = [0, 128], sizes = [2, 32], strides = [1, 1]} : vector<2x512xf32> to vector<2x32xf32>
    %cst_231 = arith.constant 5.000000e-01 : f32
    %606 = vector.broadcast %cst_231 : f32 to vector<2x32xf32>
    %607 = arith.mulf %606, %605 : vector<2x32xf32>
    %608 = math.tanh %607 : vector<2x32xf32>
    %cst_232 = arith.constant 5.000000e-01 : f32
    %609 = vector.broadcast %cst_232 : f32 to vector<2x32xf32>
    %610 = arith.mulf %609, %608 : vector<2x32xf32>
    %cst_233 = arith.constant 5.000000e-01 : f32
    %611 = vector.broadcast %cst_233 : f32 to vector<2x32xf32>
    %612 = arith.addf %610, %611 : vector<2x32xf32>
    %613 = vector.extract_strided_slice %593 {offsets = [0, 256], sizes = [2, 32], strides = [1, 1]} : vector<2x512xf32> to vector<2x32xf32>
    %614 = math.tanh %613 : vector<2x32xf32>
    %615 = vector.extract_strided_slice %593 {offsets = [0, 384], sizes = [2, 32], strides = [1, 1]} : vector<2x512xf32> to vector<2x32xf32>
    %cst_234 = arith.constant 5.000000e-01 : f32
    %616 = vector.broadcast %cst_234 : f32 to vector<2x32xf32>
    %617 = arith.mulf %616, %615 : vector<2x32xf32>
    %618 = math.tanh %617 : vector<2x32xf32>
    %cst_235 = arith.constant 5.000000e-01 : f32
    %619 = vector.broadcast %cst_235 : f32 to vector<2x32xf32>
    %620 = arith.mulf %619, %618 : vector<2x32xf32>
    %cst_236 = arith.constant 5.000000e-01 : f32
    %621 = vector.broadcast %cst_236 : f32 to vector<2x32xf32>
    %622 = arith.addf %620, %621 : vector<2x32xf32>
    %623 = arith.mulf %612, %543 : vector<2x32xf32>
    %624 = arith.mulf %604, %614 : vector<2x32xf32>
    %625 = arith.addf %623, %624 : vector<2x32xf32>
    %626 = math.tanh %625 : vector<2x32xf32>
    %627 = arith.mulf %622, %626 : vector<2x32xf32>
    %628 = vector.extract_strided_slice %596 {offsets = [0, 0], sizes = [2, 32], strides = [1, 1]} : vector<2x512xf32> to vector<2x32xf32>
    %cst_237 = arith.constant 5.000000e-01 : f32
    %629 = vector.broadcast %cst_237 : f32 to vector<2x32xf32>
    %630 = arith.mulf %629, %628 : vector<2x32xf32>
    %631 = math.tanh %630 : vector<2x32xf32>
    %cst_238 = arith.constant 5.000000e-01 : f32
    %632 = vector.broadcast %cst_238 : f32 to vector<2x32xf32>
    %633 = arith.mulf %632, %631 : vector<2x32xf32>
    %cst_239 = arith.constant 5.000000e-01 : f32
    %634 = vector.broadcast %cst_239 : f32 to vector<2x32xf32>
    %635 = arith.addf %633, %634 : vector<2x32xf32>
    %636 = vector.extract_strided_slice %596 {offsets = [0, 128], sizes = [2, 32], strides = [1, 1]} : vector<2x512xf32> to vector<2x32xf32>
    %cst_240 = arith.constant 5.000000e-01 : f32
    %637 = vector.broadcast %cst_240 : f32 to vector<2x32xf32>
    %638 = arith.mulf %637, %636 : vector<2x32xf32>
    %639 = math.tanh %638 : vector<2x32xf32>
    %cst_241 = arith.constant 5.000000e-01 : f32
    %640 = vector.broadcast %cst_241 : f32 to vector<2x32xf32>
    %641 = arith.mulf %640, %639 : vector<2x32xf32>
    %cst_242 = arith.constant 5.000000e-01 : f32
    %642 = vector.broadcast %cst_242 : f32 to vector<2x32xf32>
    %643 = arith.addf %641, %642 : vector<2x32xf32>
    %644 = vector.extract_strided_slice %596 {offsets = [0, 256], sizes = [2, 32], strides = [1, 1]} : vector<2x512xf32> to vector<2x32xf32>
    %645 = math.tanh %644 : vector<2x32xf32>
    %646 = vector.extract_strided_slice %596 {offsets = [0, 384], sizes = [2, 32], strides = [1, 1]} : vector<2x512xf32> to vector<2x32xf32>
    %cst_243 = arith.constant 5.000000e-01 : f32
    %647 = vector.broadcast %cst_243 : f32 to vector<2x32xf32>
    %648 = arith.mulf %647, %646 : vector<2x32xf32>
    %649 = math.tanh %648 : vector<2x32xf32>
    %cst_244 = arith.constant 5.000000e-01 : f32
    %650 = vector.broadcast %cst_244 : f32 to vector<2x32xf32>
    %651 = arith.mulf %650, %649 : vector<2x32xf32>
    %cst_245 = arith.constant 5.000000e-01 : f32
    %652 = vector.broadcast %cst_245 : f32 to vector<2x32xf32>
    %653 = arith.addf %651, %652 : vector<2x32xf32>
    %654 = arith.mulf %643, %574 : vector<2x32xf32>
    %655 = arith.mulf %635, %645 : vector<2x32xf32>
    %656 = arith.addf %654, %655 : vector<2x32xf32>
    %657 = math.tanh %656 : vector<2x32xf32>
    %658 = arith.mulf %653, %657 : vector<2x32xf32>
    %c2_i32_246 = arith.constant 2 : i32
    %659 = arith.muli %c7_i32_220, %c2_i32_246 : i32
    %660 = arith.index_cast %659 : i32 to index
    %c0_247 = arith.constant 0 : index
    %661 = vector.load %arg16[%660, %c0_247] : memref<32x32xf32, #tpu.memory_space<vmem>>, vector<2x32xf32>
    tpu.vector_store %arg16[%660, %c0_247], %627 {strides = array<i32>} : memref<32x32xf32, #tpu.memory_space<vmem>>, vector<2x32xf32>,
    %c2_i32_248 = arith.constant 2 : i32
    %662 = arith.muli %584, %c2_i32_248 : i32
    %c16_i32_249 = arith.constant 16 : i32
    %663 = arith.addi %c16_i32_249, %662 : i32
    %664 = arith.index_cast %663 : i32 to index
    %c0_250 = arith.constant 0 : index
    %665 = vector.load %arg16[%664, %c0_250] : memref<32x32xf32, #tpu.memory_space<vmem>>, vector<2x32xf32>
    tpu.vector_store %arg16[%664, %c0_250], %658 {strides = array<i32>} : memref<32x32xf32, #tpu.memory_space<vmem>>, vector<2x32xf32>,
    %c8_i32 = arith.constant 8 : i32
    %c0_251 = arith.constant 0 : index
    %c0_252 = arith.constant 0 : index
    %666 = vector.load %arg16[%c0_251, %c0_252] : memref<32x32xf32, #tpu.memory_space<vmem>>, vector<16x32xf32>
    %c16 = arith.constant 16 : index
    %c0_253 = arith.constant 0 : index
    %667 = vector.load %arg16[%c16, %c0_253] : memref<32x32xf32, #tpu.memory_space<vmem>>, vector<16x32xf32>
    %c0_254 = arith.constant 0 : index
    %c0_255 = arith.constant 0 : index
    %668 = vector.load %arg5[%c0_254, %c0_255] : memref<32x1024xf32, #tpu.memory_space<vmem>>, vector<32x1024xf32>
    %cst_256 = arith.constant dense<0.000000e+00> : vector<16x1024xf32>
    %669 = tpu.matmul %666, %668, %cst_256 {dimension_numbers = #tpu.dot_dimension_numbers<[1], [0], [0], [1], [0, 0, 1, 1], [], []>} : vector<16x32xf32>, vector<32x1024xf32>, vector<16x1024xf32> -> vector<16x1024xf32>
    %c0_257 = arith.constant 0 : index
    %c0_258 = arith.constant 0 : index
    %670 = vector.load %arg6[%c0_257, %c0_258] : memref<32x1024xf32, #tpu.memory_space<vmem>>, vector<32x1024xf32>
    %cst_259 = arith.constant dense<0.000000e+00> : vector<16x1024xf32>
    %671 = tpu.matmul %667, %670, %cst_259 {dimension_numbers = #tpu.dot_dimension_numbers<[1], [0], [0], [1], [0, 0, 1, 1], [], []>} : vector<16x32xf32>, vector<32x1024xf32>, vector<16x1024xf32> -> vector<16x1024xf32>
    %672 = arith.addf %669, %671 : vector<16x1024xf32>
    %c0_260 = arith.constant 0 : index
    %c0_261 = arith.constant 0 : index
    %673 = vector.load %arg7[%c0_260, %c0_261] : memref<1x1024xf32, #tpu.memory_space<vmem>>, vector<1x1024xf32>
    %674 = vector.broadcast %673 : vector<1x1024xf32> to vector<16x1024xf32>
    %675 = arith.addf %672, %674 : vector<16x1024xf32>
    %c0_262 = arith.constant 0 : index
    %c0_263 = arith.constant 0 : index
    %676 = vector.load %arg15[%c0_262, %c0_263] : memref<16x1024xf32, #tpu.memory_space<vmem>>, vector<16x1024xf32>
    tpu.vector_store %arg15[%c0_262, %c0_263], %675 {strides = array<i32>} : memref<16x1024xf32, #tpu.memory_space<vmem>>, vector<16x1024xf32>,
    %c0_264 = arith.constant 0 : index
    %c0_265 = arith.constant 0 : index
    %677 = vector.load %arg8[%c0_264, %c0_265] : memref<32x512xf32, #tpu.memory_space<vmem>>, vector<32x512xf32>
    %c0_266 = arith.constant 0 : index
    %c0_267 = arith.constant 0 : index
    %678 = vector.load %arg9[%c0_266, %c0_267] : memref<32x512xf32, #tpu.memory_space<vmem>>, vector<32x512xf32>
    %cst_268 = arith.constant 0.000000e+00 : f32
    %679 = vector.broadcast %cst_268 : f32 to vector<2x32xf32>
    %c0_i32_269 = arith.constant 0 : i32
    %c7_i32_270 = arith.constant 7 : i32
    %680 = arith.subi %c7_i32_270, %c0_i32_269 : i32
    %c2_i32_271 = arith.constant 2 : i32
    %681 = arith.muli %c0_i32_269, %c2_i32_271 : i32
    %682 = arith.index_cast %681 : i32 to index
    %c0_272 = arith.constant 0 : index
    %683 = vector.load %arg15[%682, %c0_272] : memref<16x1024xf32, #tpu.memory_space<vmem>>, vector<2x1024xf32>
    %c2_i32_273 = arith.constant 2 : i32
    %684 = arith.muli %680, %c2_i32_273 : i32
    %685 = arith.index_cast %684 : i32 to index
    %c0_274 = arith.constant 0 : index
    %686 = vector.load %arg15[%685, %c0_274] : memref<16x1024xf32, #tpu.memory_space<vmem>>, vector<2x1024xf32>
    %687 = vector.extract_strided_slice %683 {offsets = [0, 0], sizes = [2, 512], strides = [1, 1]} : vector<2x1024xf32> to vector<2x512xf32>
    %cst_275 = arith.constant dense<0.000000e+00> : vector<2x512xf32>
    %688 = tpu.matmul %679, %677, %cst_275 {dimension_numbers = #tpu.dot_dimension_numbers<[1], [0], [0], [1], [0, 0, 1, 1], [], []>} : vector<2x32xf32>, vector<32x512xf32>, vector<2x512xf32> -> vector<2x512xf32>
    %689 = arith.addf %687, %688 : vector<2x512xf32>
    %690 = vector.extract_strided_slice %686 {offsets = [0, 512], sizes = [2, 512], strides = [1, 1]} : vector<2x1024xf32> to vector<2x512xf32>
    %cst_276 = arith.constant dense<0.000000e+00> : vector<2x512xf32>
    %691 = tpu.matmul %679, %678, %cst_276 {dimension_numbers = #tpu.dot_dimension_numbers<[1], [0], [0], [1], [0, 0, 1, 1], [], []>} : vector<2x32xf32>, vector<32x512xf32>, vector<2x512xf32> -> vector<2x512xf32>
    %692 = arith.addf %690, %691 : vector<2x512xf32>
    %693 = vector.extract_strided_slice %689 {offsets = [0, 0], sizes = [2, 32], strides = [1, 1]} : vector<2x512xf32> to vector<2x32xf32>
    %cst_277 = arith.constant 5.000000e-01 : f32
    %694 = vector.broadcast %cst_277 : f32 to vector<2x32xf32>
    %695 = arith.mulf %694, %693 : vector<2x32xf32>
    %696 = math.tanh %695 : vector<2x32xf32>
    %cst_278 = arith.constant 5.000000e-01 : f32
    %697 = vector.broadcast %cst_278 : f32 to vector<2x32xf32>
    %698 = arith.mulf %697, %696 : vector<2x32xf32>
    %cst_279 = arith.constant 5.000000e-01 : f32
    %699 = vector.broadcast %cst_279 : f32 to vector<2x32xf32>
    %700 = arith.addf %698, %699 : vector<2x32xf32>
    %701 = vector.extract_strided_slice %689 {offsets = [0, 128], sizes = [2, 32], strides = [1, 1]} : vector<2x512xf32> to vector<2x32xf32>
    %cst_280 = arith.constant 5.000000e-01 : f32
    %702 = vector.broadcast %cst_280 : f32 to vector<2x32xf32>
    %703 = arith.mulf %702, %701 : vector<2x32xf32>
    %704 = math.tanh %703 : vector<2x32xf32>
    %cst_281 = arith.constant 5.000000e-01 : f32
    %705 = vector.broadcast %cst_281 : f32 to vector<2x32xf32>
    %706 = arith.mulf %705, %704 : vector<2x32xf32>
    %cst_282 = arith.constant 5.000000e-01 : f32
    %707 = vector.broadcast %cst_282 : f32 to vector<2x32xf32>
    %708 = arith.addf %706, %707 : vector<2x32xf32>
    %709 = vector.extract_strided_slice %689 {offsets = [0, 256], sizes = [2, 32], strides = [1, 1]} : vector<2x512xf32> to vector<2x32xf32>
    %710 = math.tanh %709 : vector<2x32xf32>
    %711 = vector.extract_strided_slice %689 {offsets = [0, 384], sizes = [2, 32], strides = [1, 1]} : vector<2x512xf32> to vector<2x32xf32>
    %cst_283 = arith.constant 5.000000e-01 : f32
    %712 = vector.broadcast %cst_283 : f32 to vector<2x32xf32>
    %713 = arith.mulf %712, %711 : vector<2x32xf32>
    %714 = math.tanh %713 : vector<2x32xf32>
    %cst_284 = arith.constant 5.000000e-01 : f32
    %715 = vector.broadcast %cst_284 : f32 to vector<2x32xf32>
    %716 = arith.mulf %715, %714 : vector<2x32xf32>
    %cst_285 = arith.constant 5.000000e-01 : f32
    %717 = vector.broadcast %cst_285 : f32 to vector<2x32xf32>
    %718 = arith.addf %716, %717 : vector<2x32xf32>
    %719 = arith.mulf %708, %679 : vector<2x32xf32>
    %720 = arith.mulf %700, %710 : vector<2x32xf32>
    %721 = arith.addf %719, %720 : vector<2x32xf32>
    %722 = math.tanh %721 : vector<2x32xf32>
    %723 = arith.mulf %718, %722 : vector<2x32xf32>
    %724 = vector.extract_strided_slice %692 {offsets = [0, 0], sizes = [2, 32], strides = [1, 1]} : vector<2x512xf32> to vector<2x32xf32>
    %cst_286 = arith.constant 5.000000e-01 : f32
    %725 = vector.broadcast %cst_286 : f32 to vector<2x32xf32>
    %726 = arith.mulf %725, %724 : vector<2x32xf32>
    %727 = math.tanh %726 : vector<2x32xf32>
    %cst_287 = arith.constant 5.000000e-01 : f32
    %728 = vector.broadcast %cst_287 : f32 to vector<2x32xf32>
    %729 = arith.mulf %728, %727 : vector<2x32xf32>
    %cst_288 = arith.constant 5.000000e-01 : f32
    %730 = vector.broadcast %cst_288 : f32 to vector<2x32xf32>
    %731 = arith.addf %729, %730 : vector<2x32xf32>
    %732 = vector.extract_strided_slice %692 {offsets = [0, 128], sizes = [2, 32], strides = [1, 1]} : vector<2x512xf32> to vector<2x32xf32>
    %cst_289 = arith.constant 5.000000e-01 : f32
    %733 = vector.broadcast %cst_289 : f32 to vector<2x32xf32>
    %734 = arith.mulf %733, %732 : vector<2x32xf32>
    %735 = math.tanh %734 : vector<2x32xf32>
    %cst_290 = arith.constant 5.000000e-01 : f32
    %736 = vector.broadcast %cst_290 : f32 to vector<2x32xf32>
    %737 = arith.mulf %736, %735 : vector<2x32xf32>
    %cst_291 = arith.constant 5.000000e-01 : f32
    %738 = vector.broadcast %cst_291 : f32 to vector<2x32xf32>
    %739 = arith.addf %737, %738 : vector<2x32xf32>
    %740 = vector.extract_strided_slice %692 {offsets = [0, 256], sizes = [2, 32], strides = [1, 1]} : vector<2x512xf32> to vector<2x32xf32>
    %741 = math.tanh %740 : vector<2x32xf32>
    %742 = vector.extract_strided_slice %692 {offsets = [0, 384], sizes = [2, 32], strides = [1, 1]} : vector<2x512xf32> to vector<2x32xf32>
    %cst_292 = arith.constant 5.000000e-01 : f32
    %743 = vector.broadcast %cst_292 : f32 to vector<2x32xf32>
    %744 = arith.mulf %743, %742 : vector<2x32xf32>
    %745 = math.tanh %744 : vector<2x32xf32>
    %cst_293 = arith.constant 5.000000e-01 : f32
    %746 = vector.broadcast %cst_293 : f32 to vector<2x32xf32>
    %747 = arith.mulf %746, %745 : vector<2x32xf32>
    %cst_294 = arith.constant 5.000000e-01 : f32
    %748 = vector.broadcast %cst_294 : f32 to vector<2x32xf32>
    %749 = arith.addf %747, %748 : vector<2x32xf32>
    %750 = arith.mulf %739, %679 : vector<2x32xf32>
    %751 = arith.mulf %731, %741 : vector<2x32xf32>
    %752 = arith.addf %750, %751 : vector<2x32xf32>
    %753 = math.tanh %752 : vector<2x32xf32>
    %754 = arith.mulf %749, %753 : vector<2x32xf32>
    %c2_i32_295 = arith.constant 2 : i32
    %755 = arith.muli %c0_i32_269, %c2_i32_295 : i32
    %756 = arith.index_cast %755 : i32 to index
    %c0_296 = arith.constant 0 : index
    %757 = vector.load %arg16[%756, %c0_296] : memref<32x32xf32, #tpu.memory_space<vmem>>, vector<2x32xf32>
    tpu.vector_store %arg16[%756, %c0_296], %723 {strides = array<i32>} : memref<32x32xf32, #tpu.memory_space<vmem>>, vector<2x32xf32>,
    %c2_i32_297 = arith.constant 2 : i32
    %758 = arith.muli %680, %c2_i32_297 : i32
    %c16_i32_298 = arith.constant 16 : i32
    %759 = arith.addi %c16_i32_298, %758 : i32
    %760 = arith.index_cast %759 : i32 to index
    %c0_299 = arith.constant 0 : index
    %761 = vector.load %arg16[%760, %c0_299] : memref<32x32xf32, #tpu.memory_space<vmem>>, vector<2x32xf32>
    tpu.vector_store %arg16[%760, %c0_299], %754 {strides = array<i32>} : memref<32x32xf32, #tpu.memory_space<vmem>>, vector<2x32xf32>,
    %c1_i32_300 = arith.constant 1 : i32
    %c7_i32_301 = arith.constant 7 : i32
    %762 = arith.subi %c7_i32_301, %c1_i32_300 : i32
    %c2_i32_302 = arith.constant 2 : i32
    %763 = arith.muli %c1_i32_300, %c2_i32_302 : i32
    %764 = arith.index_cast %763 : i32 to index
    %c0_303 = arith.constant 0 : index
    %765 = vector.load %arg15[%764, %c0_303] : memref<16x1024xf32, #tpu.memory_space<vmem>>, vector<2x1024xf32>
    %c2_i32_304 = arith.constant 2 : i32
    %766 = arith.muli %762, %c2_i32_304 : i32
    %767 = arith.index_cast %766 : i32 to index
    %c0_305 = arith.constant 0 : index
    %768 = vector.load %arg15[%767, %c0_305] : memref<16x1024xf32, #tpu.memory_space<vmem>>, vector<2x1024xf32>
    %769 = vector.extract_strided_slice %765 {offsets = [0, 0], sizes = [2, 512], strides = [1, 1]} : vector<2x1024xf32> to vector<2x512xf32>
    %cst_306 = arith.constant dense<0.000000e+00> : vector<2x512xf32>
    %770 = tpu.matmul %723, %677, %cst_306 {dimension_numbers = #tpu.dot_dimension_numbers<[1], [0], [0], [1], [0, 0, 1, 1], [], []>} : vector<2x32xf32>, vector<32x512xf32>, vector<2x512xf32> -> vector<2x512xf32>
    %771 = arith.addf %769, %770 : vector<2x512xf32>
    %772 = vector.extract_strided_slice %768 {offsets = [0, 512], sizes = [2, 512], strides = [1, 1]} : vector<2x1024xf32> to vector<2x512xf32>
    %cst_307 = arith.constant dense<0.000000e+00> : vector<2x512xf32>
    %773 = tpu.matmul %754, %678, %cst_307 {dimension_numbers = #tpu.dot_dimension_numbers<[1], [0], [0], [1], [0, 0, 1, 1], [], []>} : vector<2x32xf32>, vector<32x512xf32>, vector<2x512xf32> -> vector<2x512xf32>
    %774 = arith.addf %772, %773 : vector<2x512xf32>
    %775 = vector.extract_strided_slice %771 {offsets = [0, 0], sizes = [2, 32], strides = [1, 1]} : vector<2x512xf32> to vector<2x32xf32>
    %cst_308 = arith.constant 5.000000e-01 : f32
    %776 = vector.broadcast %cst_308 : f32 to vector<2x32xf32>
    %777 = arith.mulf %776, %775 : vector<2x32xf32>
    %778 = math.tanh %777 : vector<2x32xf32>
    %cst_309 = arith.constant 5.000000e-01 : f32
    %779 = vector.broadcast %cst_309 : f32 to vector<2x32xf32>
    %780 = arith.mulf %779, %778 : vector<2x32xf32>
    %cst_310 = arith.constant 5.000000e-01 : f32
    %781 = vector.broadcast %cst_310 : f32 to vector<2x32xf32>
    %782 = arith.addf %780, %781 : vector<2x32xf32>
    %783 = vector.extract_strided_slice %771 {offsets = [0, 128], sizes = [2, 32], strides = [1, 1]} : vector<2x512xf32> to vector<2x32xf32>
    %cst_311 = arith.constant 5.000000e-01 : f32
    %784 = vector.broadcast %cst_311 : f32 to vector<2x32xf32>
    %785 = arith.mulf %784, %783 : vector<2x32xf32>
    %786 = math.tanh %785 : vector<2x32xf32>
    %cst_312 = arith.constant 5.000000e-01 : f32
    %787 = vector.broadcast %cst_312 : f32 to vector<2x32xf32>
    %788 = arith.mulf %787, %786 : vector<2x32xf32>
    %cst_313 = arith.constant 5.000000e-01 : f32
    %789 = vector.broadcast %cst_313 : f32 to vector<2x32xf32>
    %790 = arith.addf %788, %789 : vector<2x32xf32>
    %791 = vector.extract_strided_slice %771 {offsets = [0, 256], sizes = [2, 32], strides = [1, 1]} : vector<2x512xf32> to vector<2x32xf32>
    %792 = math.tanh %791 : vector<2x32xf32>
    %793 = vector.extract_strided_slice %771 {offsets = [0, 384], sizes = [2, 32], strides = [1, 1]} : vector<2x512xf32> to vector<2x32xf32>
    %cst_314 = arith.constant 5.000000e-01 : f32
    %794 = vector.broadcast %cst_314 : f32 to vector<2x32xf32>
    %795 = arith.mulf %794, %793 : vector<2x32xf32>
    %796 = math.tanh %795 : vector<2x32xf32>
    %cst_315 = arith.constant 5.000000e-01 : f32
    %797 = vector.broadcast %cst_315 : f32 to vector<2x32xf32>
    %798 = arith.mulf %797, %796 : vector<2x32xf32>
    %cst_316 = arith.constant 5.000000e-01 : f32
    %799 = vector.broadcast %cst_316 : f32 to vector<2x32xf32>
    %800 = arith.addf %798, %799 : vector<2x32xf32>
    %801 = arith.mulf %790, %721 : vector<2x32xf32>
    %802 = arith.mulf %782, %792 : vector<2x32xf32>
    %803 = arith.addf %801, %802 : vector<2x32xf32>
    %804 = math.tanh %803 : vector<2x32xf32>
    %805 = arith.mulf %800, %804 : vector<2x32xf32>
    %806 = vector.extract_strided_slice %774 {offsets = [0, 0], sizes = [2, 32], strides = [1, 1]} : vector<2x512xf32> to vector<2x32xf32>
    %cst_317 = arith.constant 5.000000e-01 : f32
    %807 = vector.broadcast %cst_317 : f32 to vector<2x32xf32>
    %808 = arith.mulf %807, %806 : vector<2x32xf32>
    %809 = math.tanh %808 : vector<2x32xf32>
    %cst_318 = arith.constant 5.000000e-01 : f32
    %810 = vector.broadcast %cst_318 : f32 to vector<2x32xf32>
    %811 = arith.mulf %810, %809 : vector<2x32xf32>
    %cst_319 = arith.constant 5.000000e-01 : f32
    %812 = vector.broadcast %cst_319 : f32 to vector<2x32xf32>
    %813 = arith.addf %811, %812 : vector<2x32xf32>
    %814 = vector.extract_strided_slice %774 {offsets = [0, 128], sizes = [2, 32], strides = [1, 1]} : vector<2x512xf32> to vector<2x32xf32>
    %cst_320 = arith.constant 5.000000e-01 : f32
    %815 = vector.broadcast %cst_320 : f32 to vector<2x32xf32>
    %816 = arith.mulf %815, %814 : vector<2x32xf32>
    %817 = math.tanh %816 : vector<2x32xf32>
    %cst_321 = arith.constant 5.000000e-01 : f32
    %818 = vector.broadcast %cst_321 : f32 to vector<2x32xf32>
    %819 = arith.mulf %818, %817 : vector<2x32xf32>
    %cst_322 = arith.constant 5.000000e-01 : f32
    %820 = vector.broadcast %cst_322 : f32 to vector<2x32xf32>
    %821 = arith.addf %819, %820 : vector<2x32xf32>
    %822 = vector.extract_strided_slice %774 {offsets = [0, 256], sizes = [2, 32], strides = [1, 1]} : vector<2x512xf32> to vector<2x32xf32>
    %823 = math.tanh %822 : vector<2x32xf32>
    %824 = vector.extract_strided_slice %774 {offsets = [0, 384], sizes = [2, 32], strides = [1, 1]} : vector<2x512xf32> to vector<2x32xf32>
    %cst_323 = arith.constant 5.000000e-01 : f32
    %825 = vector.broadcast %cst_323 : f32 to vector<2x32xf32>
    %826 = arith.mulf %825, %824 : vector<2x32xf32>
    %827 = math.tanh %826 : vector<2x32xf32>
    %cst_324 = arith.constant 5.000000e-01 : f32
    %828 = vector.broadcast %cst_324 : f32 to vector<2x32xf32>
    %829 = arith.mulf %828, %827 : vector<2x32xf32>
    %cst_325 = arith.constant 5.000000e-01 : f32
    %830 = vector.broadcast %cst_325 : f32 to vector<2x32xf32>
    %831 = arith.addf %829, %830 : vector<2x32xf32>
    %832 = arith.mulf %821, %752 : vector<2x32xf32>
    %833 = arith.mulf %813, %823 : vector<2x32xf32>
    %834 = arith.addf %832, %833 : vector<2x32xf32>
    %835 = math.tanh %834 : vector<2x32xf32>
    %836 = arith.mulf %831, %835 : vector<2x32xf32>
    %c2_i32_326 = arith.constant 2 : i32
    %837 = arith.muli %c1_i32_300, %c2_i32_326 : i32
    %838 = arith.index_cast %837 : i32 to index
    %c0_327 = arith.constant 0 : index
    %839 = vector.load %arg16[%838, %c0_327] : memref<32x32xf32, #tpu.memory_space<vmem>>, vector<2x32xf32>
    tpu.vector_store %arg16[%838, %c0_327], %805 {strides = array<i32>} : memref<32x32xf32, #tpu.memory_space<vmem>>, vector<2x32xf32>,
    %c2_i32_328 = arith.constant 2 : i32
    %840 = arith.muli %762, %c2_i32_328 : i32
    %c16_i32_329 = arith.constant 16 : i32
    %841 = arith.addi %c16_i32_329, %840 : i32
    %842 = arith.index_cast %841 : i32 to index
    %c0_330 = arith.constant 0 : index
    %843 = vector.load %arg16[%842, %c0_330] : memref<32x32xf32, #tpu.memory_space<vmem>>, vector<2x32xf32>
    tpu.vector_store %arg16[%842, %c0_330], %836 {strides = array<i32>} : memref<32x32xf32, #tpu.memory_space<vmem>>, vector<2x32xf32>,
    %c2_i32_331 = arith.constant 2 : i32
    %c7_i32_332 = arith.constant 7 : i32
    %844 = arith.subi %c7_i32_332, %c2_i32_331 : i32
    %c2_i32_333 = arith.constant 2 : i32
    %845 = arith.muli %c2_i32_331, %c2_i32_333 : i32
    %846 = arith.index_cast %845 : i32 to index
    %c0_334 = arith.constant 0 : index
    %847 = vector.load %arg15[%846, %c0_334] : memref<16x1024xf32, #tpu.memory_space<vmem>>, vector<2x1024xf32>
    %c2_i32_335 = arith.constant 2 : i32
    %848 = arith.muli %844, %c2_i32_335 : i32
    %849 = arith.index_cast %848 : i32 to index
    %c0_336 = arith.constant 0 : index
    %850 = vector.load %arg15[%849, %c0_336] : memref<16x1024xf32, #tpu.memory_space<vmem>>, vector<2x1024xf32>
    %851 = vector.extract_strided_slice %847 {offsets = [0, 0], sizes = [2, 512], strides = [1, 1]} : vector<2x1024xf32> to vector<2x512xf32>
    %cst_337 = arith.constant dense<0.000000e+00> : vector<2x512xf32>
    %852 = tpu.matmul %805, %677, %cst_337 {dimension_numbers = #tpu.dot_dimension_numbers<[1], [0], [0], [1], [0, 0, 1, 1], [], []>} : vector<2x32xf32>, vector<32x512xf32>, vector<2x512xf32> -> vector<2x512xf32>
    %853 = arith.addf %851, %852 : vector<2x512xf32>
    %854 = vector.extract_strided_slice %850 {offsets = [0, 512], sizes = [2, 512], strides = [1, 1]} : vector<2x1024xf32> to vector<2x512xf32>
    %cst_338 = arith.constant dense<0.000000e+00> : vector<2x512xf32>
    %855 = tpu.matmul %836, %678, %cst_338 {dimension_numbers = #tpu.dot_dimension_numbers<[1], [0], [0], [1], [0, 0, 1, 1], [], []>} : vector<2x32xf32>, vector<32x512xf32>, vector<2x512xf32> -> vector<2x512xf32>
    %856 = arith.addf %854, %855 : vector<2x512xf32>
    %857 = vector.extract_strided_slice %853 {offsets = [0, 0], sizes = [2, 32], strides = [1, 1]} : vector<2x512xf32> to vector<2x32xf32>
    %cst_339 = arith.constant 5.000000e-01 : f32
    %858 = vector.broadcast %cst_339 : f32 to vector<2x32xf32>
    %859 = arith.mulf %858, %857 : vector<2x32xf32>
    %860 = math.tanh %859 : vector<2x32xf32>
    %cst_340 = arith.constant 5.000000e-01 : f32
    %861 = vector.broadcast %cst_340 : f32 to vector<2x32xf32>
    %862 = arith.mulf %861, %860 : vector<2x32xf32>
    %cst_341 = arith.constant 5.000000e-01 : f32
    %863 = vector.broadcast %cst_341 : f32 to vector<2x32xf32>
    %864 = arith.addf %862, %863 : vector<2x32xf32>
    %865 = vector.extract_strided_slice %853 {offsets = [0, 128], sizes = [2, 32], strides = [1, 1]} : vector<2x512xf32> to vector<2x32xf32>
    %cst_342 = arith.constant 5.000000e-01 : f32
    %866 = vector.broadcast %cst_342 : f32 to vector<2x32xf32>
    %867 = arith.mulf %866, %865 : vector<2x32xf32>
    %868 = math.tanh %867 : vector<2x32xf32>
    %cst_343 = arith.constant 5.000000e-01 : f32
    %869 = vector.broadcast %cst_343 : f32 to vector<2x32xf32>
    %870 = arith.mulf %869, %868 : vector<2x32xf32>
    %cst_344 = arith.constant 5.000000e-01 : f32
    %871 = vector.broadcast %cst_344 : f32 to vector<2x32xf32>
    %872 = arith.addf %870, %871 : vector<2x32xf32>
    %873 = vector.extract_strided_slice %853 {offsets = [0, 256], sizes = [2, 32], strides = [1, 1]} : vector<2x512xf32> to vector<2x32xf32>
    %874 = math.tanh %873 : vector<2x32xf32>
    %875 = vector.extract_strided_slice %853 {offsets = [0, 384], sizes = [2, 32], strides = [1, 1]} : vector<2x512xf32> to vector<2x32xf32>
    %cst_345 = arith.constant 5.000000e-01 : f32
    %876 = vector.broadcast %cst_345 : f32 to vector<2x32xf32>
    %877 = arith.mulf %876, %875 : vector<2x32xf32>
    %878 = math.tanh %877 : vector<2x32xf32>
    %cst_346 = arith.constant 5.000000e-01 : f32
    %879 = vector.broadcast %cst_346 : f32 to vector<2x32xf32>
    %880 = arith.mulf %879, %878 : vector<2x32xf32>
    %cst_347 = arith.constant 5.000000e-01 : f32
    %881 = vector.broadcast %cst_347 : f32 to vector<2x32xf32>
    %882 = arith.addf %880, %881 : vector<2x32xf32>
    %883 = arith.mulf %872, %803 : vector<2x32xf32>
    %884 = arith.mulf %864, %874 : vector<2x32xf32>
    %885 = arith.addf %883, %884 : vector<2x32xf32>
    %886 = math.tanh %885 : vector<2x32xf32>
    %887 = arith.mulf %882, %886 : vector<2x32xf32>
    %888 = vector.extract_strided_slice %856 {offsets = [0, 0], sizes = [2, 32], strides = [1, 1]} : vector<2x512xf32> to vector<2x32xf32>
    %cst_348 = arith.constant 5.000000e-01 : f32
    %889 = vector.broadcast %cst_348 : f32 to vector<2x32xf32>
    %890 = arith.mulf %889, %888 : vector<2x32xf32>
    %891 = math.tanh %890 : vector<2x32xf32>
    %cst_349 = arith.constant 5.000000e-01 : f32
    %892 = vector.broadcast %cst_349 : f32 to vector<2x32xf32>
    %893 = arith.mulf %892, %891 : vector<2x32xf32>
    %cst_350 = arith.constant 5.000000e-01 : f32
    %894 = vector.broadcast %cst_350 : f32 to vector<2x32xf32>
    %895 = arith.addf %893, %894 : vector<2x32xf32>
    %896 = vector.extract_strided_slice %856 {offsets = [0, 128], sizes = [2, 32], strides = [1, 1]} : vector<2x512xf32> to vector<2x32xf32>
    %cst_351 = arith.constant 5.000000e-01 : f32
    %897 = vector.broadcast %cst_351 : f32 to vector<2x32xf32>
    %898 = arith.mulf %897, %896 : vector<2x32xf32>
    %899 = math.tanh %898 : vector<2x32xf32>
    %cst_352 = arith.constant 5.000000e-01 : f32
    %900 = vector.broadcast %cst_352 : f32 to vector<2x32xf32>
    %901 = arith.mulf %900, %899 : vector<2x32xf32>
    %cst_353 = arith.constant 5.000000e-01 : f32
    %902 = vector.broadcast %cst_353 : f32 to vector<2x32xf32>
    %903 = arith.addf %901, %902 : vector<2x32xf32>
    %904 = vector.extract_strided_slice %856 {offsets = [0, 256], sizes = [2, 32], strides = [1, 1]} : vector<2x512xf32> to vector<2x32xf32>
    %905 = math.tanh %904 : vector<2x32xf32>
    %906 = vector.extract_strided_slice %856 {offsets = [0, 384], sizes = [2, 32], strides = [1, 1]} : vector<2x512xf32> to vector<2x32xf32>
    %cst_354 = arith.constant 5.000000e-01 : f32
    %907 = vector.broadcast %cst_354 : f32 to vector<2x32xf32>
    %908 = arith.mulf %907, %906 : vector<2x32xf32>
    %909 = math.tanh %908 : vector<2x32xf32>
    %cst_355 = arith.constant 5.000000e-01 : f32
    %910 = vector.broadcast %cst_355 : f32 to vector<2x32xf32>
    %911 = arith.mulf %910, %909 : vector<2x32xf32>
    %cst_356 = arith.constant 5.000000e-01 : f32
    %912 = vector.broadcast %cst_356 : f32 to vector<2x32xf32>
    %913 = arith.addf %911, %912 : vector<2x32xf32>
    %914 = arith.mulf %903, %834 : vector<2x32xf32>
    %915 = arith.mulf %895, %905 : vector<2x32xf32>
    %916 = arith.addf %914, %915 : vector<2x32xf32>
    %917 = math.tanh %916 : vector<2x32xf32>
    %918 = arith.mulf %913, %917 : vector<2x32xf32>
    %c2_i32_357 = arith.constant 2 : i32
    %919 = arith.muli %c2_i32_331, %c2_i32_357 : i32
    %920 = arith.index_cast %919 : i32 to index
    %c0_358 = arith.constant 0 : index
    %921 = vector.load %arg16[%920, %c0_358] : memref<32x32xf32, #tpu.memory_space<vmem>>, vector<2x32xf32>
    tpu.vector_store %arg16[%920, %c0_358], %887 {strides = array<i32>} : memref<32x32xf32, #tpu.memory_space<vmem>>, vector<2x32xf32>,
    %c2_i32_359 = arith.constant 2 : i32
    %922 = arith.muli %844, %c2_i32_359 : i32
    %c16_i32_360 = arith.constant 16 : i32
    %923 = arith.addi %c16_i32_360, %922 : i32
    %924 = arith.index_cast %923 : i32 to index
    %c0_361 = arith.constant 0 : index
    %925 = vector.load %arg16[%924, %c0_361] : memref<32x32xf32, #tpu.memory_space<vmem>>, vector<2x32xf32>
    tpu.vector_store %arg16[%924, %c0_361], %918 {strides = array<i32>} : memref<32x32xf32, #tpu.memory_space<vmem>>, vector<2x32xf32>,
    %c3_i32_362 = arith.constant 3 : i32
    %c7_i32_363 = arith.constant 7 : i32
    %926 = arith.subi %c7_i32_363, %c3_i32_362 : i32
    %c2_i32_364 = arith.constant 2 : i32
    %927 = arith.muli %c3_i32_362, %c2_i32_364 : i32
    %928 = arith.index_cast %927 : i32 to index
    %c0_365 = arith.constant 0 : index
    %929 = vector.load %arg15[%928, %c0_365] : memref<16x1024xf32, #tpu.memory_space<vmem>>, vector<2x1024xf32>
    %c2_i32_366 = arith.constant 2 : i32
    %930 = arith.muli %926, %c2_i32_366 : i32
    %931 = arith.index_cast %930 : i32 to index
    %c0_367 = arith.constant 0 : index
    %932 = vector.load %arg15[%931, %c0_367] : memref<16x1024xf32, #tpu.memory_space<vmem>>, vector<2x1024xf32>
    %933 = vector.extract_strided_slice %929 {offsets = [0, 0], sizes = [2, 512], strides = [1, 1]} : vector<2x1024xf32> to vector<2x512xf32>
    %cst_368 = arith.constant dense<0.000000e+00> : vector<2x512xf32>
    %934 = tpu.matmul %887, %677, %cst_368 {dimension_numbers = #tpu.dot_dimension_numbers<[1], [0], [0], [1], [0, 0, 1, 1], [], []>} : vector<2x32xf32>, vector<32x512xf32>, vector<2x512xf32> -> vector<2x512xf32>
    %935 = arith.addf %933, %934 : vector<2x512xf32>
    %936 = vector.extract_strided_slice %932 {offsets = [0, 512], sizes = [2, 512], strides = [1, 1]} : vector<2x1024xf32> to vector<2x512xf32>
    %cst_369 = arith.constant dense<0.000000e+00> : vector<2x512xf32>
    %937 = tpu.matmul %918, %678, %cst_369 {dimension_numbers = #tpu.dot_dimension_numbers<[1], [0], [0], [1], [0, 0, 1, 1], [], []>} : vector<2x32xf32>, vector<32x512xf32>, vector<2x512xf32> -> vector<2x512xf32>
    %938 = arith.addf %936, %937 : vector<2x512xf32>
    %939 = vector.extract_strided_slice %935 {offsets = [0, 0], sizes = [2, 32], strides = [1, 1]} : vector<2x512xf32> to vector<2x32xf32>
    %cst_370 = arith.constant 5.000000e-01 : f32
    %940 = vector.broadcast %cst_370 : f32 to vector<2x32xf32>
    %941 = arith.mulf %940, %939 : vector<2x32xf32>
    %942 = math.tanh %941 : vector<2x32xf32>
    %cst_371 = arith.constant 5.000000e-01 : f32
    %943 = vector.broadcast %cst_371 : f32 to vector<2x32xf32>
    %944 = arith.mulf %943, %942 : vector<2x32xf32>
    %cst_372 = arith.constant 5.000000e-01 : f32
    %945 = vector.broadcast %cst_372 : f32 to vector<2x32xf32>
    %946 = arith.addf %944, %945 : vector<2x32xf32>
    %947 = vector.extract_strided_slice %935 {offsets = [0, 128], sizes = [2, 32], strides = [1, 1]} : vector<2x512xf32> to vector<2x32xf32>
    %cst_373 = arith.constant 5.000000e-01 : f32
    %948 = vector.broadcast %cst_373 : f32 to vector<2x32xf32>
    %949 = arith.mulf %948, %947 : vector<2x32xf32>
    %950 = math.tanh %949 : vector<2x32xf32>
    %cst_374 = arith.constant 5.000000e-01 : f32
    %951 = vector.broadcast %cst_374 : f32 to vector<2x32xf32>
    %952 = arith.mulf %951, %950 : vector<2x32xf32>
    %cst_375 = arith.constant 5.000000e-01 : f32
    %953 = vector.broadcast %cst_375 : f32 to vector<2x32xf32>
    %954 = arith.addf %952, %953 : vector<2x32xf32>
    %955 = vector.extract_strided_slice %935 {offsets = [0, 256], sizes = [2, 32], strides = [1, 1]} : vector<2x512xf32> to vector<2x32xf32>
    %956 = math.tanh %955 : vector<2x32xf32>
    %957 = vector.extract_strided_slice %935 {offsets = [0, 384], sizes = [2, 32], strides = [1, 1]} : vector<2x512xf32> to vector<2x32xf32>
    %cst_376 = arith.constant 5.000000e-01 : f32
    %958 = vector.broadcast %cst_376 : f32 to vector<2x32xf32>
    %959 = arith.mulf %958, %957 : vector<2x32xf32>
    %960 = math.tanh %959 : vector<2x32xf32>
    %cst_377 = arith.constant 5.000000e-01 : f32
    %961 = vector.broadcast %cst_377 : f32 to vector<2x32xf32>
    %962 = arith.mulf %961, %960 : vector<2x32xf32>
    %cst_378 = arith.constant 5.000000e-01 : f32
    %963 = vector.broadcast %cst_378 : f32 to vector<2x32xf32>
    %964 = arith.addf %962, %963 : vector<2x32xf32>
    %965 = arith.mulf %954, %885 : vector<2x32xf32>
    %966 = arith.mulf %946, %956 : vector<2x32xf32>
    %967 = arith.addf %965, %966 : vector<2x32xf32>
    %968 = math.tanh %967 : vector<2x32xf32>
    %969 = arith.mulf %964, %968 : vector<2x32xf32>
    %970 = vector.extract_strided_slice %938 {offsets = [0, 0], sizes = [2, 32], strides = [1, 1]} : vector<2x512xf32> to vector<2x32xf32>
    %cst_379 = arith.constant 5.000000e-01 : f32
    %971 = vector.broadcast %cst_379 : f32 to vector<2x32xf32>
    %972 = arith.mulf %971, %970 : vector<2x32xf32>
    %973 = math.tanh %972 : vector<2x32xf32>
    %cst_380 = arith.constant 5.000000e-01 : f32
    %974 = vector.broadcast %cst_380 : f32 to vector<2x32xf32>
    %975 = arith.mulf %974, %973 : vector<2x32xf32>
    %cst_381 = arith.constant 5.000000e-01 : f32
    %976 = vector.broadcast %cst_381 : f32 to vector<2x32xf32>
    %977 = arith.addf %975, %976 : vector<2x32xf32>
    %978 = vector.extract_strided_slice %938 {offsets = [0, 128], sizes = [2, 32], strides = [1, 1]} : vector<2x512xf32> to vector<2x32xf32>
    %cst_382 = arith.constant 5.000000e-01 : f32
    %979 = vector.broadcast %cst_382 : f32 to vector<2x32xf32>
    %980 = arith.mulf %979, %978 : vector<2x32xf32>
    %981 = math.tanh %980 : vector<2x32xf32>
    %cst_383 = arith.constant 5.000000e-01 : f32
    %982 = vector.broadcast %cst_383 : f32 to vector<2x32xf32>
    %983 = arith.mulf %982, %981 : vector<2x32xf32>
    %cst_384 = arith.constant 5.000000e-01 : f32
    %984 = vector.broadcast %cst_384 : f32 to vector<2x32xf32>
    %985 = arith.addf %983, %984 : vector<2x32xf32>
    %986 = vector.extract_strided_slice %938 {offsets = [0, 256], sizes = [2, 32], strides = [1, 1]} : vector<2x512xf32> to vector<2x32xf32>
    %987 = math.tanh %986 : vector<2x32xf32>
    %988 = vector.extract_strided_slice %938 {offsets = [0, 384], sizes = [2, 32], strides = [1, 1]} : vector<2x512xf32> to vector<2x32xf32>
    %cst_385 = arith.constant 5.000000e-01 : f32
    %989 = vector.broadcast %cst_385 : f32 to vector<2x32xf32>
    %990 = arith.mulf %989, %988 : vector<2x32xf32>
    %991 = math.tanh %990 : vector<2x32xf32>
    %cst_386 = arith.constant 5.000000e-01 : f32
    %992 = vector.broadcast %cst_386 : f32 to vector<2x32xf32>
    %993 = arith.mulf %992, %991 : vector<2x32xf32>
    %cst_387 = arith.constant 5.000000e-01 : f32
    %994 = vector.broadcast %cst_387 : f32 to vector<2x32xf32>
    %995 = arith.addf %993, %994 : vector<2x32xf32>
    %996 = arith.mulf %985, %916 : vector<2x32xf32>
    %997 = arith.mulf %977, %987 : vector<2x32xf32>
    %998 = arith.addf %996, %997 : vector<2x32xf32>
    %999 = math.tanh %998 : vector<2x32xf32>
    %1000 = arith.mulf %995, %999 : vector<2x32xf32>
    %c2_i32_388 = arith.constant 2 : i32
    %1001 = arith.muli %c3_i32_362, %c2_i32_388 : i32
    %1002 = arith.index_cast %1001 : i32 to index
    %c0_389 = arith.constant 0 : index
    %1003 = vector.load %arg16[%1002, %c0_389] : memref<32x32xf32, #tpu.memory_space<vmem>>, vector<2x32xf32>
    tpu.vector_store %arg16[%1002, %c0_389], %969 {strides = array<i32>} : memref<32x32xf32, #tpu.memory_space<vmem>>, vector<2x32xf32>,
    %c2_i32_390 = arith.constant 2 : i32
    %1004 = arith.muli %926, %c2_i32_390 : i32
    %c16_i32_391 = arith.constant 16 : i32
    %1005 = arith.addi %c16_i32_391, %1004 : i32
    %1006 = arith.index_cast %1005 : i32 to index
    %c0_392 = arith.constant 0 : index
    %1007 = vector.load %arg16[%1006, %c0_392] : memref<32x32xf32, #tpu.memory_space<vmem>>, vector<2x32xf32>
    tpu.vector_store %arg16[%1006, %c0_392], %1000 {strides = array<i32>} : memref<32x32xf32, #tpu.memory_space<vmem>>, vector<2x32xf32>,
    %c4_i32_393 = arith.constant 4 : i32
    %c7_i32_394 = arith.constant 7 : i32
    %1008 = arith.subi %c7_i32_394, %c4_i32_393 : i32
    %c2_i32_395 = arith.constant 2 : i32
    %1009 = arith.muli %c4_i32_393, %c2_i32_395 : i32
    %1010 = arith.index_cast %1009 : i32 to index
    %c0_396 = arith.constant 0 : index
    %1011 = vector.load %arg15[%1010, %c0_396] : memref<16x1024xf32, #tpu.memory_space<vmem>>, vector<2x1024xf32>
    %c2_i32_397 = arith.constant 2 : i32
    %1012 = arith.muli %1008, %c2_i32_397 : i32
    %1013 = arith.index_cast %1012 : i32 to index
    %c0_398 = arith.constant 0 : index
    %1014 = vector.load %arg15[%1013, %c0_398] : memref<16x1024xf32, #tpu.memory_space<vmem>>, vector<2x1024xf32>
    %1015 = vector.extract_strided_slice %1011 {offsets = [0, 0], sizes = [2, 512], strides = [1, 1]} : vector<2x1024xf32> to vector<2x512xf32>
    %cst_399 = arith.constant dense<0.000000e+00> : vector<2x512xf32>
    %1016 = tpu.matmul %969, %677, %cst_399 {dimension_numbers = #tpu.dot_dimension_numbers<[1], [0], [0], [1], [0, 0, 1, 1], [], []>} : vector<2x32xf32>, vector<32x512xf32>, vector<2x512xf32> -> vector<2x512xf32>
    %1017 = arith.addf %1015, %1016 : vector<2x512xf32>
    %1018 = vector.extract_strided_slice %1014 {offsets = [0, 512], sizes = [2, 512], strides = [1, 1]} : vector<2x1024xf32> to vector<2x512xf32>
    %cst_400 = arith.constant dense<0.000000e+00> : vector<2x512xf32>
    %1019 = tpu.matmul %1000, %678, %cst_400 {dimension_numbers = #tpu.dot_dimension_numbers<[1], [0], [0], [1], [0, 0, 1, 1], [], []>} : vector<2x32xf32>, vector<32x512xf32>, vector<2x512xf32> -> vector<2x512xf32>
    %1020 = arith.addf %1018, %1019 : vector<2x512xf32>
    %1021 = vector.extract_strided_slice %1017 {offsets = [0, 0], sizes = [2, 32], strides = [1, 1]} : vector<2x512xf32> to vector<2x32xf32>
    %cst_401 = arith.constant 5.000000e-01 : f32
    %1022 = vector.broadcast %cst_401 : f32 to vector<2x32xf32>
    %1023 = arith.mulf %1022, %1021 : vector<2x32xf32>
    %1024 = math.tanh %1023 : vector<2x32xf32>
    %cst_402 = arith.constant 5.000000e-01 : f32
    %1025 = vector.broadcast %cst_402 : f32 to vector<2x32xf32>
    %1026 = arith.mulf %1025, %1024 : vector<2x32xf32>
    %cst_403 = arith.constant 5.000000e-01 : f32
    %1027 = vector.broadcast %cst_403 : f32 to vector<2x32xf32>
    %1028 = arith.addf %1026, %1027 : vector<2x32xf32>
    %1029 = vector.extract_strided_slice %1017 {offsets = [0, 128], sizes = [2, 32], strides = [1, 1]} : vector<2x512xf32> to vector<2x32xf32>
    %cst_404 = arith.constant 5.000000e-01 : f32
    %1030 = vector.broadcast %cst_404 : f32 to vector<2x32xf32>
    %1031 = arith.mulf %1030, %1029 : vector<2x32xf32>
    %1032 = math.tanh %1031 : vector<2x32xf32>
    %cst_405 = arith.constant 5.000000e-01 : f32
    %1033 = vector.broadcast %cst_405 : f32 to vector<2x32xf32>
    %1034 = arith.mulf %1033, %1032 : vector<2x32xf32>
    %cst_406 = arith.constant 5.000000e-01 : f32
    %1035 = vector.broadcast %cst_406 : f32 to vector<2x32xf32>
    %1036 = arith.addf %1034, %1035 : vector<2x32xf32>
    %1037 = vector.extract_strided_slice %1017 {offsets = [0, 256], sizes = [2, 32], strides = [1, 1]} : vector<2x512xf32> to vector<2x32xf32>
    %1038 = math.tanh %1037 : vector<2x32xf32>
    %1039 = vector.extract_strided_slice %1017 {offsets = [0, 384], sizes = [2, 32], strides = [1, 1]} : vector<2x512xf32> to vector<2x32xf32>
    %cst_407 = arith.constant 5.000000e-01 : f32
    %1040 = vector.broadcast %cst_407 : f32 to vector<2x32xf32>
    %1041 = arith.mulf %1040, %1039 : vector<2x32xf32>
    %1042 = math.tanh %1041 : vector<2x32xf32>
    %cst_408 = arith.constant 5.000000e-01 : f32
    %1043 = vector.broadcast %cst_408 : f32 to vector<2x32xf32>
    %1044 = arith.mulf %1043, %1042 : vector<2x32xf32>
    %cst_409 = arith.constant 5.000000e-01 : f32
    %1045 = vector.broadcast %cst_409 : f32 to vector<2x32xf32>
    %1046 = arith.addf %1044, %1045 : vector<2x32xf32>
    %1047 = arith.mulf %1036, %967 : vector<2x32xf32>
    %1048 = arith.mulf %1028, %1038 : vector<2x32xf32>
    %1049 = arith.addf %1047, %1048 : vector<2x32xf32>
    %1050 = math.tanh %1049 : vector<2x32xf32>
    %1051 = arith.mulf %1046, %1050 : vector<2x32xf32>
    %1052 = vector.extract_strided_slice %1020 {offsets = [0, 0], sizes = [2, 32], strides = [1, 1]} : vector<2x512xf32> to vector<2x32xf32>
    %cst_410 = arith.constant 5.000000e-01 : f32
    %1053 = vector.broadcast %cst_410 : f32 to vector<2x32xf32>
    %1054 = arith.mulf %1053, %1052 : vector<2x32xf32>
    %1055 = math.tanh %1054 : vector<2x32xf32>
    %cst_411 = arith.constant 5.000000e-01 : f32
    %1056 = vector.broadcast %cst_411 : f32 to vector<2x32xf32>
    %1057 = arith.mulf %1056, %1055 : vector<2x32xf32>
    %cst_412 = arith.constant 5.000000e-01 : f32
    %1058 = vector.broadcast %cst_412 : f32 to vector<2x32xf32>
    %1059 = arith.addf %1057, %1058 : vector<2x32xf32>
    %1060 = vector.extract_strided_slice %1020 {offsets = [0, 128], sizes = [2, 32], strides = [1, 1]} : vector<2x512xf32> to vector<2x32xf32>
    %cst_413 = arith.constant 5.000000e-01 : f32
    %1061 = vector.broadcast %cst_413 : f32 to vector<2x32xf32>
    %1062 = arith.mulf %1061, %1060 : vector<2x32xf32>
    %1063 = math.tanh %1062 : vector<2x32xf32>
    %cst_414 = arith.constant 5.000000e-01 : f32
    %1064 = vector.broadcast %cst_414 : f32 to vector<2x32xf32>
    %1065 = arith.mulf %1064, %1063 : vector<2x32xf32>
    %cst_415 = arith.constant 5.000000e-01 : f32
    %1066 = vector.broadcast %cst_415 : f32 to vector<2x32xf32>
    %1067 = arith.addf %1065, %1066 : vector<2x32xf32>
    %1068 = vector.extract_strided_slice %1020 {offsets = [0, 256], sizes = [2, 32], strides = [1, 1]} : vector<2x512xf32> to vector<2x32xf32>
    %1069 = math.tanh %1068 : vector<2x32xf32>
    %1070 = vector.extract_strided_slice %1020 {offsets = [0, 384], sizes = [2, 32], strides = [1, 1]} : vector<2x512xf32> to vector<2x32xf32>
    %cst_416 = arith.constant 5.000000e-01 : f32
    %1071 = vector.broadcast %cst_416 : f32 to vector<2x32xf32>
    %1072 = arith.mulf %1071, %1070 : vector<2x32xf32>
    %1073 = math.tanh %1072 : vector<2x32xf32>
    %cst_417 = arith.constant 5.000000e-01 : f32
    %1074 = vector.broadcast %cst_417 : f32 to vector<2x32xf32>
    %1075 = arith.mulf %1074, %1073 : vector<2x32xf32>
    %cst_418 = arith.constant 5.000000e-01 : f32
    %1076 = vector.broadcast %cst_418 : f32 to vector<2x32xf32>
    %1077 = arith.addf %1075, %1076 : vector<2x32xf32>
    %1078 = arith.mulf %1067, %998 : vector<2x32xf32>
    %1079 = arith.mulf %1059, %1069 : vector<2x32xf32>
    %1080 = arith.addf %1078, %1079 : vector<2x32xf32>
    %1081 = math.tanh %1080 : vector<2x32xf32>
    %1082 = arith.mulf %1077, %1081 : vector<2x32xf32>
    %c2_i32_419 = arith.constant 2 : i32
    %1083 = arith.muli %c4_i32_393, %c2_i32_419 : i32
    %1084 = arith.index_cast %1083 : i32 to index
    %c0_420 = arith.constant 0 : index
    %1085 = vector.load %arg16[%1084, %c0_420] : memref<32x32xf32, #tpu.memory_space<vmem>>, vector<2x32xf32>
    tpu.vector_store %arg16[%1084, %c0_420], %1051 {strides = array<i32>} : memref<32x32xf32, #tpu.memory_space<vmem>>, vector<2x32xf32>,
    %c2_i32_421 = arith.constant 2 : i32
    %1086 = arith.muli %1008, %c2_i32_421 : i32
    %c16_i32_422 = arith.constant 16 : i32
    %1087 = arith.addi %c16_i32_422, %1086 : i32
    %1088 = arith.index_cast %1087 : i32 to index
    %c0_423 = arith.constant 0 : index
    %1089 = vector.load %arg16[%1088, %c0_423] : memref<32x32xf32, #tpu.memory_space<vmem>>, vector<2x32xf32>
    tpu.vector_store %arg16[%1088, %c0_423], %1082 {strides = array<i32>} : memref<32x32xf32, #tpu.memory_space<vmem>>, vector<2x32xf32>,
    %c5_i32_424 = arith.constant 5 : i32
    %c7_i32_425 = arith.constant 7 : i32
    %1090 = arith.subi %c7_i32_425, %c5_i32_424 : i32
    %c2_i32_426 = arith.constant 2 : i32
    %1091 = arith.muli %c5_i32_424, %c2_i32_426 : i32
    %1092 = arith.index_cast %1091 : i32 to index
    %c0_427 = arith.constant 0 : index
    %1093 = vector.load %arg15[%1092, %c0_427] : memref<16x1024xf32, #tpu.memory_space<vmem>>, vector<2x1024xf32>
    %c2_i32_428 = arith.constant 2 : i32
    %1094 = arith.muli %1090, %c2_i32_428 : i32
    %1095 = arith.index_cast %1094 : i32 to index
    %c0_429 = arith.constant 0 : index
    %1096 = vector.load %arg15[%1095, %c0_429] : memref<16x1024xf32, #tpu.memory_space<vmem>>, vector<2x1024xf32>
    %1097 = vector.extract_strided_slice %1093 {offsets = [0, 0], sizes = [2, 512], strides = [1, 1]} : vector<2x1024xf32> to vector<2x512xf32>
    %cst_430 = arith.constant dense<0.000000e+00> : vector<2x512xf32>
    %1098 = tpu.matmul %1051, %677, %cst_430 {dimension_numbers = #tpu.dot_dimension_numbers<[1], [0], [0], [1], [0, 0, 1, 1], [], []>} : vector<2x32xf32>, vector<32x512xf32>, vector<2x512xf32> -> vector<2x512xf32>
    %1099 = arith.addf %1097, %1098 : vector<2x512xf32>
    %1100 = vector.extract_strided_slice %1096 {offsets = [0, 512], sizes = [2, 512], strides = [1, 1]} : vector<2x1024xf32> to vector<2x512xf32>
    %cst_431 = arith.constant dense<0.000000e+00> : vector<2x512xf32>
    %1101 = tpu.matmul %1082, %678, %cst_431 {dimension_numbers = #tpu.dot_dimension_numbers<[1], [0], [0], [1], [0, 0, 1, 1], [], []>} : vector<2x32xf32>, vector<32x512xf32>, vector<2x512xf32> -> vector<2x512xf32>
    %1102 = arith.addf %1100, %1101 : vector<2x512xf32>
    %1103 = vector.extract_strided_slice %1099 {offsets = [0, 0], sizes = [2, 32], strides = [1, 1]} : vector<2x512xf32> to vector<2x32xf32>
    %cst_432 = arith.constant 5.000000e-01 : f32
    %1104 = vector.broadcast %cst_432 : f32 to vector<2x32xf32>
    %1105 = arith.mulf %1104, %1103 : vector<2x32xf32>
    %1106 = math.tanh %1105 : vector<2x32xf32>
    %cst_433 = arith.constant 5.000000e-01 : f32
    %1107 = vector.broadcast %cst_433 : f32 to vector<2x32xf32>
    %1108 = arith.mulf %1107, %1106 : vector<2x32xf32>
    %cst_434 = arith.constant 5.000000e-01 : f32
    %1109 = vector.broadcast %cst_434 : f32 to vector<2x32xf32>
    %1110 = arith.addf %1108, %1109 : vector<2x32xf32>
    %1111 = vector.extract_strided_slice %1099 {offsets = [0, 128], sizes = [2, 32], strides = [1, 1]} : vector<2x512xf32> to vector<2x32xf32>
    %cst_435 = arith.constant 5.000000e-01 : f32
    %1112 = vector.broadcast %cst_435 : f32 to vector<2x32xf32>
    %1113 = arith.mulf %1112, %1111 : vector<2x32xf32>
    %1114 = math.tanh %1113 : vector<2x32xf32>
    %cst_436 = arith.constant 5.000000e-01 : f32
    %1115 = vector.broadcast %cst_436 : f32 to vector<2x32xf32>
    %1116 = arith.mulf %1115, %1114 : vector<2x32xf32>
    %cst_437 = arith.constant 5.000000e-01 : f32
    %1117 = vector.broadcast %cst_437 : f32 to vector<2x32xf32>
    %1118 = arith.addf %1116, %1117 : vector<2x32xf32>
    %1119 = vector.extract_strided_slice %1099 {offsets = [0, 256], sizes = [2, 32], strides = [1, 1]} : vector<2x512xf32> to vector<2x32xf32>
    %1120 = math.tanh %1119 : vector<2x32xf32>
    %1121 = vector.extract_strided_slice %1099 {offsets = [0, 384], sizes = [2, 32], strides = [1, 1]} : vector<2x512xf32> to vector<2x32xf32>
    %cst_438 = arith.constant 5.000000e-01 : f32
    %1122 = vector.broadcast %cst_438 : f32 to vector<2x32xf32>
    %1123 = arith.mulf %1122, %1121 : vector<2x32xf32>
    %1124 = math.tanh %1123 : vector<2x32xf32>
    %cst_439 = arith.constant 5.000000e-01 : f32
    %1125 = vector.broadcast %cst_439 : f32 to vector<2x32xf32>
    %1126 = arith.mulf %1125, %1124 : vector<2x32xf32>
    %cst_440 = arith.constant 5.000000e-01 : f32
    %1127 = vector.broadcast %cst_440 : f32 to vector<2x32xf32>
    %1128 = arith.addf %1126, %1127 : vector<2x32xf32>
    %1129 = arith.mulf %1118, %1049 : vector<2x32xf32>
    %1130 = arith.mulf %1110, %1120 : vector<2x32xf32>
    %1131 = arith.addf %1129, %1130 : vector<2x32xf32>
    %1132 = math.tanh %1131 : vector<2x32xf32>
    %1133 = arith.mulf %1128, %1132 : vector<2x32xf32>
    %1134 = vector.extract_strided_slice %1102 {offsets = [0, 0], sizes = [2, 32], strides = [1, 1]} : vector<2x512xf32> to vector<2x32xf32>
    %cst_441 = arith.constant 5.000000e-01 : f32
    %1135 = vector.broadcast %cst_441 : f32 to vector<2x32xf32>
    %1136 = arith.mulf %1135, %1134 : vector<2x32xf32>
    %1137 = math.tanh %1136 : vector<2x32xf32>
    %cst_442 = arith.constant 5.000000e-01 : f32
    %1138 = vector.broadcast %cst_442 : f32 to vector<2x32xf32>
    %1139 = arith.mulf %1138, %1137 : vector<2x32xf32>
    %cst_443 = arith.constant 5.000000e-01 : f32
    %1140 = vector.broadcast %cst_443 : f32 to vector<2x32xf32>
    %1141 = arith.addf %1139, %1140 : vector<2x32xf32>
    %1142 = vector.extract_strided_slice %1102 {offsets = [0, 128], sizes = [2, 32], strides = [1, 1]} : vector<2x512xf32> to vector<2x32xf32>
    %cst_444 = arith.constant 5.000000e-01 : f32
    %1143 = vector.broadcast %cst_444 : f32 to vector<2x32xf32>
    %1144 = arith.mulf %1143, %1142 : vector<2x32xf32>
    %1145 = math.tanh %1144 : vector<2x32xf32>
    %cst_445 = arith.constant 5.000000e-01 : f32
    %1146 = vector.broadcast %cst_445 : f32 to vector<2x32xf32>
    %1147 = arith.mulf %1146, %1145 : vector<2x32xf32>
    %cst_446 = arith.constant 5.000000e-01 : f32
    %1148 = vector.broadcast %cst_446 : f32 to vector<2x32xf32>
    %1149 = arith.addf %1147, %1148 : vector<2x32xf32>
    %1150 = vector.extract_strided_slice %1102 {offsets = [0, 256], sizes = [2, 32], strides = [1, 1]} : vector<2x512xf32> to vector<2x32xf32>
    %1151 = math.tanh %1150 : vector<2x32xf32>
    %1152 = vector.extract_strided_slice %1102 {offsets = [0, 384], sizes = [2, 32], strides = [1, 1]} : vector<2x512xf32> to vector<2x32xf32>
    %cst_447 = arith.constant 5.000000e-01 : f32
    %1153 = vector.broadcast %cst_447 : f32 to vector<2x32xf32>
    %1154 = arith.mulf %1153, %1152 : vector<2x32xf32>
    %1155 = math.tanh %1154 : vector<2x32xf32>
    %cst_448 = arith.constant 5.000000e-01 : f32
    %1156 = vector.broadcast %cst_448 : f32 to vector<2x32xf32>
    %1157 = arith.mulf %1156, %1155 : vector<2x32xf32>
    %cst_449 = arith.constant 5.000000e-01 : f32
    %1158 = vector.broadcast %cst_449 : f32 to vector<2x32xf32>
    %1159 = arith.addf %1157, %1158 : vector<2x32xf32>
    %1160 = arith.mulf %1149, %1080 : vector<2x32xf32>
    %1161 = arith.mulf %1141, %1151 : vector<2x32xf32>
    %1162 = arith.addf %1160, %1161 : vector<2x32xf32>
    %1163 = math.tanh %1162 : vector<2x32xf32>
    %1164 = arith.mulf %1159, %1163 : vector<2x32xf32>
    %c2_i32_450 = arith.constant 2 : i32
    %1165 = arith.muli %c5_i32_424, %c2_i32_450 : i32
    %1166 = arith.index_cast %1165 : i32 to index
    %c0_451 = arith.constant 0 : index
    %1167 = vector.load %arg16[%1166, %c0_451] : memref<32x32xf32, #tpu.memory_space<vmem>>, vector<2x32xf32>
    tpu.vector_store %arg16[%1166, %c0_451], %1133 {strides = array<i32>} : memref<32x32xf32, #tpu.memory_space<vmem>>, vector<2x32xf32>,
    %c2_i32_452 = arith.constant 2 : i32
    %1168 = arith.muli %1090, %c2_i32_452 : i32
    %c16_i32_453 = arith.constant 16 : i32
    %1169 = arith.addi %c16_i32_453, %1168 : i32
    %1170 = arith.index_cast %1169 : i32 to index
    %c0_454 = arith.constant 0 : index
    %1171 = vector.load %arg16[%1170, %c0_454] : memref<32x32xf32, #tpu.memory_space<vmem>>, vector<2x32xf32>
    tpu.vector_store %arg16[%1170, %c0_454], %1164 {strides = array<i32>} : memref<32x32xf32, #tpu.memory_space<vmem>>, vector<2x32xf32>,
    %c6_i32_455 = arith.constant 6 : i32
    %c7_i32_456 = arith.constant 7 : i32
    %1172 = arith.subi %c7_i32_456, %c6_i32_455 : i32
    %c2_i32_457 = arith.constant 2 : i32
    %1173 = arith.muli %c6_i32_455, %c2_i32_457 : i32
    %1174 = arith.index_cast %1173 : i32 to index
    %c0_458 = arith.constant 0 : index
    %1175 = vector.load %arg15[%1174, %c0_458] : memref<16x1024xf32, #tpu.memory_space<vmem>>, vector<2x1024xf32>
    %c2_i32_459 = arith.constant 2 : i32
    %1176 = arith.muli %1172, %c2_i32_459 : i32
    %1177 = arith.index_cast %1176 : i32 to index
    %c0_460 = arith.constant 0 : index
    %1178 = vector.load %arg15[%1177, %c0_460] : memref<16x1024xf32, #tpu.memory_space<vmem>>, vector<2x1024xf32>
    %1179 = vector.extract_strided_slice %1175 {offsets = [0, 0], sizes = [2, 512], strides = [1, 1]} : vector<2x1024xf32> to vector<2x512xf32>
    %cst_461 = arith.constant dense<0.000000e+00> : vector<2x512xf32>
    %1180 = tpu.matmul %1133, %677, %cst_461 {dimension_numbers = #tpu.dot_dimension_numbers<[1], [0], [0], [1], [0, 0, 1, 1], [], []>} : vector<2x32xf32>, vector<32x512xf32>, vector<2x512xf32> -> vector<2x512xf32>
    %1181 = arith.addf %1179, %1180 : vector<2x512xf32>
    %1182 = vector.extract_strided_slice %1178 {offsets = [0, 512], sizes = [2, 512], strides = [1, 1]} : vector<2x1024xf32> to vector<2x512xf32>
    %cst_462 = arith.constant dense<0.000000e+00> : vector<2x512xf32>
    %1183 = tpu.matmul %1164, %678, %cst_462 {dimension_numbers = #tpu.dot_dimension_numbers<[1], [0], [0], [1], [0, 0, 1, 1], [], []>} : vector<2x32xf32>, vector<32x512xf32>, vector<2x512xf32> -> vector<2x512xf32>
    %1184 = arith.addf %1182, %1183 : vector<2x512xf32>
    %1185 = vector.extract_strided_slice %1181 {offsets = [0, 0], sizes = [2, 32], strides = [1, 1]} : vector<2x512xf32> to vector<2x32xf32>
    %cst_463 = arith.constant 5.000000e-01 : f32
    %1186 = vector.broadcast %cst_463 : f32 to vector<2x32xf32>
    %1187 = arith.mulf %1186, %1185 : vector<2x32xf32>
    %1188 = math.tanh %1187 : vector<2x32xf32>
    %cst_464 = arith.constant 5.000000e-01 : f32
    %1189 = vector.broadcast %cst_464 : f32 to vector<2x32xf32>
    %1190 = arith.mulf %1189, %1188 : vector<2x32xf32>
    %cst_465 = arith.constant 5.000000e-01 : f32
    %1191 = vector.broadcast %cst_465 : f32 to vector<2x32xf32>
    %1192 = arith.addf %1190, %1191 : vector<2x32xf32>
    %1193 = vector.extract_strided_slice %1181 {offsets = [0, 128], sizes = [2, 32], strides = [1, 1]} : vector<2x512xf32> to vector<2x32xf32>
    %cst_466 = arith.constant 5.000000e-01 : f32
    %1194 = vector.broadcast %cst_466 : f32 to vector<2x32xf32>
    %1195 = arith.mulf %1194, %1193 : vector<2x32xf32>
    %1196 = math.tanh %1195 : vector<2x32xf32>
    %cst_467 = arith.constant 5.000000e-01 : f32
    %1197 = vector.broadcast %cst_467 : f32 to vector<2x32xf32>
    %1198 = arith.mulf %1197, %1196 : vector<2x32xf32>
    %cst_468 = arith.constant 5.000000e-01 : f32
    %1199 = vector.broadcast %cst_468 : f32 to vector<2x32xf32>
    %1200 = arith.addf %1198, %1199 : vector<2x32xf32>
    %1201 = vector.extract_strided_slice %1181 {offsets = [0, 256], sizes = [2, 32], strides = [1, 1]} : vector<2x512xf32> to vector<2x32xf32>
    %1202 = math.tanh %1201 : vector<2x32xf32>
    %1203 = vector.extract_strided_slice %1181 {offsets = [0, 384], sizes = [2, 32], strides = [1, 1]} : vector<2x512xf32> to vector<2x32xf32>
    %cst_469 = arith.constant 5.000000e-01 : f32
    %1204 = vector.broadcast %cst_469 : f32 to vector<2x32xf32>
    %1205 = arith.mulf %1204, %1203 : vector<2x32xf32>
    %1206 = math.tanh %1205 : vector<2x32xf32>
    %cst_470 = arith.constant 5.000000e-01 : f32
    %1207 = vector.broadcast %cst_470 : f32 to vector<2x32xf32>
    %1208 = arith.mulf %1207, %1206 : vector<2x32xf32>
    %cst_471 = arith.constant 5.000000e-01 : f32
    %1209 = vector.broadcast %cst_471 : f32 to vector<2x32xf32>
    %1210 = arith.addf %1208, %1209 : vector<2x32xf32>
    %1211 = arith.mulf %1200, %1131 : vector<2x32xf32>
    %1212 = arith.mulf %1192, %1202 : vector<2x32xf32>
    %1213 = arith.addf %1211, %1212 : vector<2x32xf32>
    %1214 = math.tanh %1213 : vector<2x32xf32>
    %1215 = arith.mulf %1210, %1214 : vector<2x32xf32>
    %1216 = vector.extract_strided_slice %1184 {offsets = [0, 0], sizes = [2, 32], strides = [1, 1]} : vector<2x512xf32> to vector<2x32xf32>
    %cst_472 = arith.constant 5.000000e-01 : f32
    %1217 = vector.broadcast %cst_472 : f32 to vector<2x32xf32>
    %1218 = arith.mulf %1217, %1216 : vector<2x32xf32>
    %1219 = math.tanh %1218 : vector<2x32xf32>
    %cst_473 = arith.constant 5.000000e-01 : f32
    %1220 = vector.broadcast %cst_473 : f32 to vector<2x32xf32>
    %1221 = arith.mulf %1220, %1219 : vector<2x32xf32>
    %cst_474 = arith.constant 5.000000e-01 : f32
    %1222 = vector.broadcast %cst_474 : f32 to vector<2x32xf32>
    %1223 = arith.addf %1221, %1222 : vector<2x32xf32>
    %1224 = vector.extract_strided_slice %1184 {offsets = [0, 128], sizes = [2, 32], strides = [1, 1]} : vector<2x512xf32> to vector<2x32xf32>
    %cst_475 = arith.constant 5.000000e-01 : f32
    %1225 = vector.broadcast %cst_475 : f32 to vector<2x32xf32>
    %1226 = arith.mulf %1225, %1224 : vector<2x32xf32>
    %1227 = math.tanh %1226 : vector<2x32xf32>
    %cst_476 = arith.constant 5.000000e-01 : f32
    %1228 = vector.broadcast %cst_476 : f32 to vector<2x32xf32>
    %1229 = arith.mulf %1228, %1227 : vector<2x32xf32>
    %cst_477 = arith.constant 5.000000e-01 : f32
    %1230 = vector.broadcast %cst_477 : f32 to vector<2x32xf32>
    %1231 = arith.addf %1229, %1230 : vector<2x32xf32>
    %1232 = vector.extract_strided_slice %1184 {offsets = [0, 256], sizes = [2, 32], strides = [1, 1]} : vector<2x512xf32> to vector<2x32xf32>
    %1233 = math.tanh %1232 : vector<2x32xf32>
    %1234 = vector.extract_strided_slice %1184 {offsets = [0, 384], sizes = [2, 32], strides = [1, 1]} : vector<2x512xf32> to vector<2x32xf32>
    %cst_478 = arith.constant 5.000000e-01 : f32
    %1235 = vector.broadcast %cst_478 : f32 to vector<2x32xf32>
    %1236 = arith.mulf %1235, %1234 : vector<2x32xf32>
    %1237 = math.tanh %1236 : vector<2x32xf32>
    %cst_479 = arith.constant 5.000000e-01 : f32
    %1238 = vector.broadcast %cst_479 : f32 to vector<2x32xf32>
    %1239 = arith.mulf %1238, %1237 : vector<2x32xf32>
    %cst_480 = arith.constant 5.000000e-01 : f32
    %1240 = vector.broadcast %cst_480 : f32 to vector<2x32xf32>
    %1241 = arith.addf %1239, %1240 : vector<2x32xf32>
    %1242 = arith.mulf %1231, %1162 : vector<2x32xf32>
    %1243 = arith.mulf %1223, %1233 : vector<2x32xf32>
    %1244 = arith.addf %1242, %1243 : vector<2x32xf32>
    %1245 = math.tanh %1244 : vector<2x32xf32>
    %1246 = arith.mulf %1241, %1245 : vector<2x32xf32>
    %c2_i32_481 = arith.constant 2 : i32
    %1247 = arith.muli %c6_i32_455, %c2_i32_481 : i32
    %1248 = arith.index_cast %1247 : i32 to index
    %c0_482 = arith.constant 0 : index
    %1249 = vector.load %arg16[%1248, %c0_482] : memref<32x32xf32, #tpu.memory_space<vmem>>, vector<2x32xf32>
    tpu.vector_store %arg16[%1248, %c0_482], %1215 {strides = array<i32>} : memref<32x32xf32, #tpu.memory_space<vmem>>, vector<2x32xf32>,
    %c2_i32_483 = arith.constant 2 : i32
    %1250 = arith.muli %1172, %c2_i32_483 : i32
    %c16_i32_484 = arith.constant 16 : i32
    %1251 = arith.addi %c16_i32_484, %1250 : i32
    %1252 = arith.index_cast %1251 : i32 to index
    %c0_485 = arith.constant 0 : index
    %1253 = vector.load %arg16[%1252, %c0_485] : memref<32x32xf32, #tpu.memory_space<vmem>>, vector<2x32xf32>
    tpu.vector_store %arg16[%1252, %c0_485], %1246 {strides = array<i32>} : memref<32x32xf32, #tpu.memory_space<vmem>>, vector<2x32xf32>,
    %c7_i32_486 = arith.constant 7 : i32
    %c7_i32_487 = arith.constant 7 : i32
    %1254 = arith.subi %c7_i32_487, %c7_i32_486 : i32
    %c2_i32_488 = arith.constant 2 : i32
    %1255 = arith.muli %c7_i32_486, %c2_i32_488 : i32
    %1256 = arith.index_cast %1255 : i32 to index
    %c0_489 = arith.constant 0 : index
    %1257 = vector.load %arg15[%1256, %c0_489] : memref<16x1024xf32, #tpu.memory_space<vmem>>, vector<2x1024xf32>
    %c2_i32_490 = arith.constant 2 : i32
    %1258 = arith.muli %1254, %c2_i32_490 : i32
    %1259 = arith.index_cast %1258 : i32 to index
    %c0_491 = arith.constant 0 : index
    %1260 = vector.load %arg15[%1259, %c0_491] : memref<16x1024xf32, #tpu.memory_space<vmem>>, vector<2x1024xf32>
    %1261 = vector.extract_strided_slice %1257 {offsets = [0, 0], sizes = [2, 512], strides = [1, 1]} : vector<2x1024xf32> to vector<2x512xf32>
    %cst_492 = arith.constant dense<0.000000e+00> : vector<2x512xf32>
    %1262 = tpu.matmul %1215, %677, %cst_492 {dimension_numbers = #tpu.dot_dimension_numbers<[1], [0], [0], [1], [0, 0, 1, 1], [], []>} : vector<2x32xf32>, vector<32x512xf32>, vector<2x512xf32> -> vector<2x512xf32>
    %1263 = arith.addf %1261, %1262 : vector<2x512xf32>
    %1264 = vector.extract_strided_slice %1260 {offsets = [0, 512], sizes = [2, 512], strides = [1, 1]} : vector<2x1024xf32> to vector<2x512xf32>
    %cst_493 = arith.constant dense<0.000000e+00> : vector<2x512xf32>
    %1265 = tpu.matmul %1246, %678, %cst_493 {dimension_numbers = #tpu.dot_dimension_numbers<[1], [0], [0], [1], [0, 0, 1, 1], [], []>} : vector<2x32xf32>, vector<32x512xf32>, vector<2x512xf32> -> vector<2x512xf32>
    %1266 = arith.addf %1264, %1265 : vector<2x512xf32>
    %1267 = vector.extract_strided_slice %1263 {offsets = [0, 0], sizes = [2, 32], strides = [1, 1]} : vector<2x512xf32> to vector<2x32xf32>
    %cst_494 = arith.constant 5.000000e-01 : f32
    %1268 = vector.broadcast %cst_494 : f32 to vector<2x32xf32>
    %1269 = arith.mulf %1268, %1267 : vector<2x32xf32>
    %1270 = math.tanh %1269 : vector<2x32xf32>
    %cst_495 = arith.constant 5.000000e-01 : f32
    %1271 = vector.broadcast %cst_495 : f32 to vector<2x32xf32>
    %1272 = arith.mulf %1271, %1270 : vector<2x32xf32>
    %cst_496 = arith.constant 5.000000e-01 : f32
    %1273 = vector.broadcast %cst_496 : f32 to vector<2x32xf32>
    %1274 = arith.addf %1272, %1273 : vector<2x32xf32>
    %1275 = vector.extract_strided_slice %1263 {offsets = [0, 128], sizes = [2, 32], strides = [1, 1]} : vector<2x512xf32> to vector<2x32xf32>
    %cst_497 = arith.constant 5.000000e-01 : f32
    %1276 = vector.broadcast %cst_497 : f32 to vector<2x32xf32>
    %1277 = arith.mulf %1276, %1275 : vector<2x32xf32>
    %1278 = math.tanh %1277 : vector<2x32xf32>
    %cst_498 = arith.constant 5.000000e-01 : f32
    %1279 = vector.broadcast %cst_498 : f32 to vector<2x32xf32>
    %1280 = arith.mulf %1279, %1278 : vector<2x32xf32>
    %cst_499 = arith.constant 5.000000e-01 : f32
    %1281 = vector.broadcast %cst_499 : f32 to vector<2x32xf32>
    %1282 = arith.addf %1280, %1281 : vector<2x32xf32>
    %1283 = vector.extract_strided_slice %1263 {offsets = [0, 256], sizes = [2, 32], strides = [1, 1]} : vector<2x512xf32> to vector<2x32xf32>
    %1284 = math.tanh %1283 : vector<2x32xf32>
    %1285 = vector.extract_strided_slice %1263 {offsets = [0, 384], sizes = [2, 32], strides = [1, 1]} : vector<2x512xf32> to vector<2x32xf32>
    %cst_500 = arith.constant 5.000000e-01 : f32
    %1286 = vector.broadcast %cst_500 : f32 to vector<2x32xf32>
    %1287 = arith.mulf %1286, %1285 : vector<2x32xf32>
    %1288 = math.tanh %1287 : vector<2x32xf32>
    %cst_501 = arith.constant 5.000000e-01 : f32
    %1289 = vector.broadcast %cst_501 : f32 to vector<2x32xf32>
    %1290 = arith.mulf %1289, %1288 : vector<2x32xf32>
    %cst_502 = arith.constant 5.000000e-01 : f32
    %1291 = vector.broadcast %cst_502 : f32 to vector<2x32xf32>
    %1292 = arith.addf %1290, %1291 : vector<2x32xf32>
    %1293 = arith.mulf %1282, %1213 : vector<2x32xf32>
    %1294 = arith.mulf %1274, %1284 : vector<2x32xf32>
    %1295 = arith.addf %1293, %1294 : vector<2x32xf32>
    %1296 = math.tanh %1295 : vector<2x32xf32>
    %1297 = arith.mulf %1292, %1296 : vector<2x32xf32>
    %1298 = vector.extract_strided_slice %1266 {offsets = [0, 0], sizes = [2, 32], strides = [1, 1]} : vector<2x512xf32> to vector<2x32xf32>
    %cst_503 = arith.constant 5.000000e-01 : f32
    %1299 = vector.broadcast %cst_503 : f32 to vector<2x32xf32>
    %1300 = arith.mulf %1299, %1298 : vector<2x32xf32>
    %1301 = math.tanh %1300 : vector<2x32xf32>
    %cst_504 = arith.constant 5.000000e-01 : f32
    %1302 = vector.broadcast %cst_504 : f32 to vector<2x32xf32>
    %1303 = arith.mulf %1302, %1301 : vector<2x32xf32>
    %cst_505 = arith.constant 5.000000e-01 : f32
    %1304 = vector.broadcast %cst_505 : f32 to vector<2x32xf32>
    %1305 = arith.addf %1303, %1304 : vector<2x32xf32>
    %1306 = vector.extract_strided_slice %1266 {offsets = [0, 128], sizes = [2, 32], strides = [1, 1]} : vector<2x512xf32> to vector<2x32xf32>
    %cst_506 = arith.constant 5.000000e-01 : f32
    %1307 = vector.broadcast %cst_506 : f32 to vector<2x32xf32>
    %1308 = arith.mulf %1307, %1306 : vector<2x32xf32>
    %1309 = math.tanh %1308 : vector<2x32xf32>
    %cst_507 = arith.constant 5.000000e-01 : f32
    %1310 = vector.broadcast %cst_507 : f32 to vector<2x32xf32>
    %1311 = arith.mulf %1310, %1309 : vector<2x32xf32>
    %cst_508 = arith.constant 5.000000e-01 : f32
    %1312 = vector.broadcast %cst_508 : f32 to vector<2x32xf32>
    %1313 = arith.addf %1311, %1312 : vector<2x32xf32>
    %1314 = vector.extract_strided_slice %1266 {offsets = [0, 256], sizes = [2, 32], strides = [1, 1]} : vector<2x512xf32> to vector<2x32xf32>
    %1315 = math.tanh %1314 : vector<2x32xf32>
    %1316 = vector.extract_strided_slice %1266 {offsets = [0, 384], sizes = [2, 32], strides = [1, 1]} : vector<2x512xf32> to vector<2x32xf32>
    %cst_509 = arith.constant 5.000000e-01 : f32
    %1317 = vector.broadcast %cst_509 : f32 to vector<2x32xf32>
    %1318 = arith.mulf %1317, %1316 : vector<2x32xf32>
    %1319 = math.tanh %1318 : vector<2x32xf32>
    %cst_510 = arith.constant 5.000000e-01 : f32
    %1320 = vector.broadcast %cst_510 : f32 to vector<2x32xf32>
    %1321 = arith.mulf %1320, %1319 : vector<2x32xf32>
    %cst_511 = arith.constant 5.000000e-01 : f32
    %1322 = vector.broadcast %cst_511 : f32 to vector<2x32xf32>
    %1323 = arith.addf %1321, %1322 : vector<2x32xf32>
    %1324 = arith.mulf %1313, %1244 : vector<2x32xf32>
    %1325 = arith.mulf %1305, %1315 : vector<2x32xf32>
    %1326 = arith.addf %1324, %1325 : vector<2x32xf32>
    %1327 = math.tanh %1326 : vector<2x32xf32>
    %1328 = arith.mulf %1323, %1327 : vector<2x32xf32>
    %c2_i32_512 = arith.constant 2 : i32
    %1329 = arith.muli %c7_i32_486, %c2_i32_512 : i32
    %1330 = arith.index_cast %1329 : i32 to index
    %c0_513 = arith.constant 0 : index
    %1331 = vector.load %arg16[%1330, %c0_513] : memref<32x32xf32, #tpu.memory_space<vmem>>, vector<2x32xf32>
    tpu.vector_store %arg16[%1330, %c0_513], %1297 {strides = array<i32>} : memref<32x32xf32, #tpu.memory_space<vmem>>, vector<2x32xf32>,
    %c2_i32_514 = arith.constant 2 : i32
    %1332 = arith.muli %1254, %c2_i32_514 : i32
    %c16_i32_515 = arith.constant 16 : i32
    %1333 = arith.addi %c16_i32_515, %1332 : i32
    %1334 = arith.index_cast %1333 : i32 to index
    %c0_516 = arith.constant 0 : index
    %1335 = vector.load %arg16[%1334, %c0_516] : memref<32x32xf32, #tpu.memory_space<vmem>>, vector<2x32xf32>
    tpu.vector_store %arg16[%1334, %c0_516], %1328 {strides = array<i32>} : memref<32x32xf32, #tpu.memory_space<vmem>>, vector<2x32xf32>,
    %c8_i32_517 = arith.constant 8 : i32
    %c0_518 = arith.constant 0 : index
    %c0_519 = arith.constant 0 : index
    %1336 = vector.load %arg16[%c0_518, %c0_519] : memref<32x32xf32, #tpu.memory_space<vmem>>, vector<32x32xf32>
    %cst_520 = arith.constant dense<0.000000e+00> : vector<32xf32>
    %1337 = vector.multi_reduction <add>, %1336, %cst_520 [1] : vector<32x32xf32> to vector<32xf32>
    %1338 = vector.shape_cast %1337 : vector<32xf32> to vector<32x1xf32>
    %cst_521 = arith.constant 3.200000e+01 : f32
    %1339 = vector.broadcast %cst_521 : f32 to vector<32x1xf32>
    %1340 = arith.divf %1338, %1339 : vector<32x1xf32>
    %1341 = vector.broadcast %1340 : vector<32x1xf32> to vector<32x32xf32>
    %1342 = arith.subf %1336, %1341 : vector<32x32xf32>
    %1343 = arith.mulf %1342, %1342 : vector<32x32xf32>
    %cst_522 = arith.constant dense<0.000000e+00> : vector<32xf32>
    %1344 = vector.multi_reduction <add>, %1343, %cst_522 [1] : vector<32x32xf32> to vector<32xf32>
    %1345 = vector.shape_cast %1344 : vector<32xf32> to vector<32x1xf32>
    %cst_523 = arith.constant 3.200000e+01 : f32
    %1346 = vector.broadcast %cst_523 : f32 to vector<32x1xf32>
    %1347 = arith.divf %1345, %1346 : vector<32x1xf32>
    %1348 = vector.broadcast %1340 : vector<32x1xf32> to vector<32x32xf32>
    %1349 = arith.subf %1336, %1348 : vector<32x32xf32>
    %cst_524 = arith.constant 9.99999974E-6 : f32
    %1350 = vector.broadcast %cst_524 : f32 to vector<32x1xf32>
    %1351 = arith.addf %1347, %1350 : vector<32x1xf32>
    %1352 = math.rsqrt %1351 : vector<32x1xf32>
    %1353 = vector.broadcast %1352 : vector<32x1xf32> to vector<32x32xf32>
    %1354 = arith.mulf %1349, %1353 : vector<32x32xf32>
    %c0_525 = arith.constant 0 : index
    %c0_526 = arith.constant 0 : index
    %1355 = vector.load %arg10[%c0_525, %c0_526] : memref<1x32xf32, #tpu.memory_space<vmem>>, vector<1x32xf32>
    %1356 = vector.broadcast %1355 : vector<1x32xf32> to vector<32x32xf32>
    %1357 = arith.mulf %1354, %1356 : vector<32x32xf32>
    %c0_527 = arith.constant 0 : index
    %c0_528 = arith.constant 0 : index
    %1358 = vector.load %arg11[%c0_527, %c0_528] : memref<1x32xf32, #tpu.memory_space<vmem>>, vector<1x32xf32>
    %1359 = vector.broadcast %1358 : vector<1x32xf32> to vector<32x32xf32>
    %1360 = arith.addf %1357, %1359 : vector<32x32xf32>
    %cst_529 = arith.constant 0.000000e+00 : f32
    %1361 = vector.broadcast %cst_529 : f32 to vector<32x32xf32>
    %1362 = arith.maximumf %1360, %1361 : vector<32x32xf32>
    %c0_530 = arith.constant 0 : index
    %c0_531 = arith.constant 0 : index
    %1363 = vector.load %arg12[%c0_530, %c0_531] : memref<32x128xf32, #tpu.memory_space<vmem>>, vector<32x128xf32>
    %cst_532 = arith.constant dense<0.000000e+00> : vector<32x128xf32>
    %1364 = tpu.matmul %1362, %1363, %cst_532 {dimension_numbers = #tpu.dot_dimension_numbers<[1], [0], [0], [1], [0, 0, 1, 1], [], []>} : vector<32x32xf32>, vector<32x128xf32>, vector<32x128xf32> -> vector<32x128xf32>
    %c0_533 = arith.constant 0 : index
    %c0_534 = arith.constant 0 : index
    %1365 = vector.load %arg13[%c0_533, %c0_534] : memref<1x128xf32, #tpu.memory_space<vmem>>, vector<1x128xf32>
    %1366 = vector.broadcast %1365 : vector<1x128xf32> to vector<32x128xf32>
    %1367 = arith.addf %1364, %1366 : vector<32x128xf32>
    %c0_535 = arith.constant 0 : index
    %c0_536 = arith.constant 0 : index
    %1368 = vector.load %arg14[%c0_535, %c0_536] : memref<32x128xf32, #tpu.memory_space<vmem>>, vector<32x128xf32>
    tpu.vector_store %arg14[%c0_535, %c0_536], %1367 {strides = array<i32>} : memref<32x128xf32, #tpu.memory_space<vmem>>, vector<32x128xf32>,
    return
  }
}

</mosaic_0001>

<llo_original>
// kernel: transformer_rater_forward.1
$region0: #{transformer_rater_forward.1}
  #allocation0 [shape = 'u32[]', space=smem, size = 0x4, offset = 0x4, fixed_abs, tag = 'smem constant byte address 0x4 - core index']
  #allocation1 [shape = 'u32[144,128]{1,0:T(1,128)}', space=vmem, size = 0x12000, scoped, tag = 'internal scratch']
  #allocation2 [shape = 'f32[16,1024]{1,0:T(8,128)}', space=vmem, size = 0x10000, scoped, tag = 'scratch operand']
  #allocation3 [shape = 'f32[32,32]{1,0:T(8,128)}', space=vmem, size = 0x4000, scoped, tag = 'scratch operand']
  %s0 = inlined_call_operand.vmem [shape: f32[16,32], index: 0, kind: input, shape index: {}]
  %s1 = inlined_call_operand.vmem [shape: f32[32,1024], index: 1, kind: input, shape index: {}]
  %s2 = inlined_call_operand.vmem [shape: f32[1,1024], index: 2, kind: input, shape index: {}]
  %s3 = inlined_call_operand.vmem [shape: f32[32,512], index: 3, kind: input, shape index: {}]
  %s4 = inlined_call_operand.vmem [shape: f32[32,512], index: 4, kind: input, shape index: {}]
  %s5 = inlined_call_operand.vmem [shape: f32[32,1024], index: 5, kind: input, shape index: {}]
  %s6 = inlined_call_operand.vmem [shape: f32[32,1024], index: 6, kind: input, shape index: {}]
  %s7 = inlined_call_operand.vmem [shape: f32[1,1024], index: 7, kind: input, shape index: {}]
  %s8 = inlined_call_operand.vmem [shape: f32[32,512], index: 8, kind: input, shape index: {}]
  %s9 = inlined_call_operand.vmem [shape: f32[32,512], index: 9, kind: input, shape index: {}]
  %s10 = inlined_call_operand.vmem [shape: f32[1,32], index: 10, kind: input, shape index: {}]
  %s11 = inlined_call_operand.vmem [shape: f32[1,32], index: 11, kind: input, shape index: {}]
  %s12 = inlined_call_operand.vmem [shape: f32[32,128], index: 12, kind: input, shape index: {}]
  %s13 = inlined_call_operand.vmem [shape: f32[1,128], index: 13, kind: input, shape index: {}]
  %s14 = inlined_call_operand.vmem [shape: f32[32,128], index: 14, kind: output, shape index: {}]
  %s15 = sld [smem:[#allocation0]]
  $region66: #{transformer_rater_forward.1} parent=0
    _
  %s17 = ssub.s32 1, %s15
  %s18 = scalar_select 0, %s17, %s15
  // Predicated region
  $region2: #{transformer_rater_forward.1} parent=0 // pred_check
    _
  $region3: #{transformer_rater_forward.1} parent=0 // pred_check_branch
    %20 = sbr.rel (0) target = $region5
  $region4: #{transformer_rater_forward.1} parent=0 // pred_region
    _
  $region5: #{transformer_rater_forward.1} parent=0 // pred_fallthru
    _
  // Predicated region
  $region6: #{transformer_rater_forward.1} parent=0 // pred_check
    _
  $region7: #{transformer_rater_forward.1} parent=0 // pred_check_branch
    %22 = sbr.rel (0) target = $region9
  $region8: #{transformer_rater_forward.1} parent=0 // pred_region
    _
  $region9: #{transformer_rater_forward.1} parent=0 // pred_fallthru
    _
  // Predicated region
  $region10: #{transformer_rater_forward.1} parent=0 // pred_check
    _
  $region11: #{transformer_rater_forward.1} parent=0 // pred_check_branch
    %24 = sbr.rel (0) target = $region13
  $region12: #{transformer_rater_forward.1} parent=0 // pred_region
    _
  $region13: #{transformer_rater_forward.1} parent=0 // pred_fallthru
    _
  // Predicated region
  $region14: #{transformer_rater_forward.1} parent=0 // pred_check
    _
  $region15: #{transformer_rater_forward.1} parent=0 // pred_check_branch
    %26 = sbr.rel (0) target = $region17
  $region16: #{transformer_rater_forward.1} parent=0 // pred_region
    _
  $region17: #{transformer_rater_forward.1} parent=0 // pred_fallthru
    _
  // Predicated region
  $region18: #{transformer_rater_forward.1} parent=0 // pred_check
    _
  $region19: #{transformer_rater_forward.1} parent=0 // pred_check_branch
    %28 = sbr.rel (0) target = $region21
  $region20: #{transformer_rater_forward.1} parent=0 // pred_region
    _
  $region21: #{transformer_rater_forward.1} parent=0 // pred_fallthru
    _
  // Predicated region
  $region22: #{transformer_rater_forward.1} parent=0 // pred_check
    _
  $region23: #{transformer_rater_forward.1} parent=0 // pred_check_branch
    %30 = sbr.rel (0) target = $region25
  $region24: #{transformer_rater_forward.1} parent=0 // pred_region
    _
  $region25: #{transformer_rater_forward.1} parent=0 // pred_fallthru
    _
  // Predicated region
  $region26: #{transformer_rater_forward.1} parent=0 // pred_check
    _
  $region27: #{transformer_rater_forward.1} parent=0 // pred_check_branch
    %32 = sbr.rel (0) target = $region29
  $region28: #{transformer_rater_forward.1} parent=0 // pred_region
    _
  $region29: #{transformer_rater_forward.1} parent=0 // pred_fallthru
    _
  // Predicated region
  $region30: #{transformer_rater_forward.1} parent=0 // pred_check
    _
  $region31: #{transformer_rater_forward.1} parent=0 // pred_check_branch
    %34 = sbr.rel (0) target = $region33
  $region32: #{transformer_rater_forward.1} parent=0 // pred_region
    _
  $region33: #{transformer_rater_forward.1} parent=0 // pred_fallthru
    _
  // Predicated region
  $region34: #{transformer_rater_forward.1} parent=0 // pred_check
    _
  $region35: #{transformer_rater_forward.1} parent=0 // pred_check_branch
    %36 = sbr.rel (0) target = $region37
  $region36: #{transformer_rater_forward.1} parent=0 // pred_region
    _
  $region37: #{transformer_rater_forward.1} parent=0 // pred_fallthru
    _
  // Predicated region
  $region38: #{transformer_rater_forward.1} parent=0 // pred_check
    _
  $region39: #{transformer_rater_forward.1} parent=0 // pred_check_branch
    %38 = sbr.rel (0) target = $region41
  $region40: #{transformer_rater_forward.1} parent=0 // pred_region
    _
  $region41: #{transformer_rater_forward.1} parent=0 // pred_fallthru
    _
  // Predicated region
  $region42: #{transformer_rater_forward.1} parent=0 // pred_check
    _
  $region43: #{transformer_rater_forward.1} parent=0 // pred_check_branch
    %40 = sbr.rel (0) target = $region45
  $region44: #{transformer_rater_forward.1} parent=0 // pred_region
    _
  $region45: #{transformer_rater_forward.1} parent=0 // pred_fallthru
    _
  // Predicated region
  $region46: #{transformer_rater_forward.1} parent=0 // pred_check
    _
  $region47: #{transformer_rater_forward.1} parent=0 // pred_check_branch
    %42 = sbr.rel (0) target = $region49
  $region48: #{transformer_rater_forward.1} parent=0 // pred_region
    _
  $region49: #{transformer_rater_forward.1} parent=0 // pred_fallthru
    _
  // Predicated region
  $region50: #{transformer_rater_forward.1} parent=0 // pred_check
    _
  $region51: #{transformer_rater_forward.1} parent=0 // pred_check_branch
    %44 = sbr.rel (0) target = $region53
  $region52: #{transformer_rater_forward.1} parent=0 // pred_region
    _
  $region53: #{transformer_rater_forward.1} parent=0 // pred_fallthru
    _
  // Predicated region
  $region54: #{transformer_rater_forward.1} parent=0 // pred_check
    _
  $region55: #{transformer_rater_forward.1} parent=0 // pred_check_branch
    %46 = sbr.rel (0) target = $region57
  $region56: #{transformer_rater_forward.1} parent=0 // pred_region
    _
  $region57: #{transformer_rater_forward.1} parent=0 // pred_fallthru
    _
  %v47 = vld [vmem:[%s0] sm:$0xff]
  %v48 = vld [vmem:[%s0 + $0x8] sm:$0xff]
  %v49 = vld [vmem:[%s1] sm:$0xff]
  %v50 = vld [vmem:[%s1 + $0x8] sm:$0xff]
  %v51 = vld [vmem:[%s1 + $0x10] sm:$0xff]
  %v52 = vld [vmem:[%s1 + $0x18] sm:$0xff]
  %v53 = vld [vmem:[%s1 + $0x20] sm:$0xff]
  %v54 = vld [vmem:[%s1 + $0x28] sm:$0xff]
  %v55 = vld [vmem:[%s1 + $0x30] sm:$0xff]
  %v56 = vld [vmem:[%s1 + $0x38] sm:$0xff]
  %v57 = vld [vmem:[%s1 + $0x40] sm:$0xff]
  %v58 = vld [vmem:[%s1 + $0x48] sm:$0xff]
  %v59 = vld [vmem:[%s1 + $0x50] sm:$0xff]
  %v60 = vld [vmem:[%s1 + $0x58] sm:$0xff]
  %v61 = vld [vmem:[%s1 + $0x60] sm:$0xff]
  %v62 = vld [vmem:[%s1 + $0x68] sm:$0xff]
  %v63 = vld [vmem:[%s1 + $0x70] sm:$0xff]
  %v64 = vld [vmem:[%s1 + $0x78] sm:$0xff]
  %v65 = vld [vmem:[%s1 + $0x80] sm:$0xff]
  %v66 = vld [vmem:[%s1 + $0x88] sm:$0xff]
  %v67 = vld [vmem:[%s1 + $0x90] sm:$0xff]
  %v68 = vld [vmem:[%s1 + $0x98] sm:$0xff]
  %v69 = vld [vmem:[%s1 + $0xa0] sm:$0xff]
  %v70 = vld [vmem:[%s1 + $0xa8] sm:$0xff]
  %v71 = vld [vmem:[%s1 + $0xb0] sm:$0xff]
  %v72 = vld [vmem:[%s1 + $0xb8] sm:$0xff]
  %v73 = vld [vmem:[%s1 + $0xc0] sm:$0xff]
  %v74 = vld [vmem:[%s1 + $0xc8] sm:$0xff]
  %v75 = vld [vmem:[%s1 + $0xd0] sm:$0xff]
  %v76 = vld [vmem:[%s1 + $0xd8] sm:$0xff]
  %v77 = vld [vmem:[%s1 + $0xe0] sm:$0xff]
  %v78 = vld [vmem:[%s1 + $0xe8] sm:$0xff]
  %v79 = vld [vmem:[%s1 + $0xf0] sm:$0xff]
  %v80 = vld [vmem:[%s1 + $0xf8] sm:$0xff]
  %v81 = vld [vmem:[%s2] sm:$0xff]
  %v83 = vlaneseq
  %v84 = vshrl.u32 %v83, 7
  %v85 = vsub.s32 0, %v84
  %v86 = vrot.slane %v81, %v85
  %v87 = vlaneseq
  %v88 = vshrl.u32 %v87, 7
  %v89 = vsub.s32 1, %v88
  %v90 = vrot.slane %v81, %v89
  %v91 = vlaneseq
  %v92 = vshrl.u32 %v91, 7
  %v93 = vsub.s32 2, %v92
  %v94 = vrot.slane %v81, %v93
  %v95 = vlaneseq
  %v96 = vshrl.u32 %v95, 7
  %v97 = vsub.s32 3, %v96
  %v98 = vrot.slane %v81, %v97
  %v99 = vlaneseq
  %v100 = vshrl.u32 %v99, 7
  %v101 = vsub.s32 4, %v100
  %v102 = vrot.slane %v81, %v101
  %v103 = vlaneseq
  %v104 = vshrl.u32 %v103, 7
  %v105 = vsub.s32 5, %v104
  %v106 = vrot.slane %v81, %v105
  %v107 = vlaneseq
  %v108 = vshrl.u32 %v107, 7
  %v109 = vsub.s32 6, %v108
  %v110 = vrot.slane %v81, %v109
  %v111 = vlaneseq
  %v112 = vshrl.u32 %v111, 7
  %v113 = vsub.s32 7, %v112
  %v114 = vrot.slane %v81, %v113
  %vm123 = vcmask 261120
  %v125 = vsel %vm123, %v47, 0
  %v128 = vsel %vm123, %v48, 0
  %130 = vmatprep.subr.mxu0 0.0
  %131 = vmatpush1.msra.mxu0 0.0
  %132 = vmatprep.subr.mxu0 0.0
  %133 = vmatpush1.msra.mxu0 0.0
  %134 = vmatprep.subr.mxu0 0.0
  %135 = vmatpush1.msra.mxu0 0.0
  %136 = vmatprep.subr.mxu0 0.0
  %137 = vmatpush1.msra.mxu0 0.0
  %138 = vmatprep.subr.mxu0 0.0
  %139 = vmatpush1.msra.mxu0 0.0
  %140 = vmatprep.subr.mxu0 0.0
  %141 = vmatpush1.msra.mxu0 0.0
  %142 = vmatprep.subr.mxu0 0.0
  %143 = vmatpush1.msra.mxu0 0.0
  %144 = vmatprep.subr.mxu0 0.0
  %145 = vmatpush1.msra.mxu0 0.0
  %146 = vmatprep.subr.mxu0 0.0
  %147 = vmatpush1.msra.mxu0 0.0
  %148 = vmatprep.subr.mxu0 0.0
  %149 = vmatpush1.msra.mxu0 0.0
  %150 = vmatprep.subr.mxu0 0.0
  %151 = vmatpush1.msra.mxu0 0.0
  %152 = vmatprep.subr.mxu0 0.0
  %153 = vmatpush1.msra.mxu0 0.0
  %154 = vmatprep.subr.mxu0 %v74
  %155 = vmatpush1.msra.mxu0 %v73
  %156 = vmatprep.subr.mxu0 %v66
  %157 = vmatpush1.msra.mxu0 %v65
  %158 = vmatprep.subr.mxu0 %v58
  %159 = vmatpush1.msra.mxu0 %v57
  %160 = vmatprep.subr.mxu0 %v50
  %161 = vmatpush1.msra.mxu0 %v49
  %162 = vmatprep.subr.mxu0 0.0
  %163 = vmatpush2.msra.mxu0 0.0
  %164 = vmatprep.subr.mxu0 0.0
  %165 = vmatpush2.msra.mxu0 0.0
  %166 = vmatprep.subr.mxu0 0.0
  %167 = vmatpush2.msra.mxu0 0.0
  %168 = vmatprep.subr.mxu0 0.0
  %169 = vmatpush2.msra.mxu0 0.0
  %170 = vmatprep.subr.mxu0 0.0
  %171 = vmatpush2.msra.mxu0 0.0
  %172 = vmatprep.subr.mxu0 0.0
  %173 = vmatpush2.msra.mxu0 0.0
  %174 = vmatprep.subr.mxu0 0.0
  %175 = vmatpush2.msra.mxu0 0.0
  %176 = vmatprep.subr.mxu0 0.0
  %177 = vmatpush2.msra.mxu0 0.0
  %178 = vmatprep.subr.mxu0 0.0
  %179 = vmatpush2.msra.mxu0 0.0
  %180 = vmatprep.subr.mxu0 0.0
  %181 = vmatpush2.msra.mxu0 0.0
  %182 = vmatprep.subr.mxu0 0.0
  %183 = vmatpush2.msra.mxu0 0.0
  %184 = vmatprep.subr.mxu0 0.0
  %185 = vmatpush2.msra.mxu0 0.0
  %186 = vmatprep.subr.mxu0 0.0
  %187 = vmatpush2.msra.mxu0 0.0
  %188 = vmatprep.subr.mxu0 0.0
  %189 = vmatpush2.msra.mxu0 0.0
  %190 = vmatprep.subr.mxu0 0.0
  %191 = vmatpush2.msra.mxu0 0.0
  %192 = vmatprep.subr.mxu0 0.0
  %193 = vmatpush2.msra.mxu0 0.0
  %194 = vmatprep.mubr.f32.mxu0 0.0
  %195 = vmatmul.mubr.f32.gmra.mxu0 %v125
  %v196 = vpop.f32.mrf.mxu0
  %v197 = vadd.f32 %v86, %v196
  %v198 = vpop.f32.mrf.mxu0
  %v199 = vadd.f32 %v90, %v198
  %200 = vmatprep.mubr.f32.mxu0 0.0
  %201 = vmatmul.mubr.f32.gmra.mxu0 %v128
  %v202 = vpop.f32.mrf.mxu0
  %v203 = vadd.f32 %v86, %v202
  %v204 = vpop.f32.mrf.mxu0
  %v205 = vadd.f32 %v90, %v204
  %206 = vdwg.mxu0
  %207 = vmatprep.subr.mxu0 0.0
  %208 = vmatpush1.msra.mxu0 0.0
  %209 = vmatprep.subr.mxu0 0.0
  %210 = vmatpush1.msra.mxu0 0.0
  %211 = vmatprep.subr.mxu0 0.0
  %212 = vmatpush1.msra.mxu0 0.0
  %213 = vmatprep.subr.mxu0 0.0
  %214 = vmatpush1.msra.mxu0 0.0
  %215 = vmatprep.subr.mxu0 0.0
  %216 = vmatpush1.msra.mxu0 0.0
  %217 = vmatprep.subr.mxu0 0.0
  %218 = vmatpush1.msra.mxu0 0.0
  %219 = vmatprep.subr.mxu0 0.0
  %220 = vmatpush1.msra.mxu0 0.0
  %221 = vmatprep.subr.mxu0 0.0
  %222 = vmatpush1.msra.mxu0 0.0
  %223 = vmatprep.subr.mxu0 0.0
  %224 = vmatpush1.msra.mxu0 0.0
  %225 = vmatprep.subr.mxu0 0.0
  %226 = vmatpush1.msra.mxu0 0.0
  %227 = vmatprep.subr.mxu0 0.0
  %228 = vmatpush1.msra.mxu0 0.0
  %229 = vmatprep.subr.mxu0 0.0
  %230 = vmatpush1.msra.mxu0 0.0
  %231 = vmatprep.subr.mxu0 %v76
  %232 = vmatpush1.msra.mxu0 %v75
  %233 = vmatprep.subr.mxu0 %v68
  %234 = vmatpush1.msra.mxu0 %v67
  %235 = vmatprep.subr.mxu0 %v60
  %236 = vmatpush1.msra.mxu0 %v59
  %237 = vmatprep.subr.mxu0 %v52
  %238 = vmatpush1.msra.mxu0 %v51
  %239 = vmatprep.subr.mxu0 0.0
  %240 = vmatpush2.msra.mxu0 0.0
  %241 = vmatprep.subr.mxu0 0.0
  %242 = vmatpush2.msra.mxu0 0.0
  %243 = vmatprep.subr.mxu0 0.0
  %244 = vmatpush2.msra.mxu0 0.0
  %245 = vmatprep.subr.mxu0 0.0
  %246 = vmatpush2.msra.mxu0 0.0
  %247 = vmatprep.subr.mxu0 0.0
  %248 = vmatpush2.msra.mxu0 0.0
  %249 = vmatprep.subr.mxu0 0.0
  %250 = vmatpush2.msra.mxu0 0.0
  %251 = vmatprep.subr.mxu0 0.0
  %252 = vmatpush2.msra.mxu0 0.0
  %253 = vmatprep.subr.mxu0 0.0
  %254 = vmatpush2.msra.mxu0 0.0
  %255 = vmatprep.subr.mxu0 0.0
  %256 = vmatpush2.msra.mxu0 0.0
  %257 = vmatprep.subr.mxu0 0.0
  %258 = vmatpush2.msra.mxu0 0.0
  %259 = vmatprep.subr.mxu0 0.0
  %260 = vmatpush2.msra.mxu0 0.0
  %261 = vmatprep.subr.mxu0 0.0
  %262 = vmatpush2.msra.mxu0 0.0
  %263 = vmatprep.subr.mxu0 0.0
  %264 = vmatpush2.msra.mxu0 0.0
  %265 = vmatprep.subr.mxu0 0.0
  %266 = vmatpush2.msra.mxu0 0.0
  %267 = vmatprep.subr.mxu0 0.0
  %268 = vmatpush2.msra.mxu0 0.0
  %269 = vmatprep.subr.mxu0 0.0
  %270 = vmatpush2.msra.mxu0 0.0
  %271 = vmatprep.mubr.f32.mxu0 0.0
  %272 = vmatmul.mubr.f32.gmra.mxu0 %v125
  %v273 = vpop.f32.mrf.mxu0
  %v274 = vadd.f32 %v94, %v273
  %v275 = vpop.f32.mrf.mxu0
  %v276 = vadd.f32 %v98, %v275
  %277 = vmatprep.mubr.f32.mxu0 0.0
  %278 = vmatmul.mubr.f32.gmra.mxu0 %v128
  %v279 = vpop.f32.mrf.mxu0
  %v280 = vadd.f32 %v94, %v279
  %v281 = vpop.f32.mrf.mxu0
  %v282 = vadd.f32 %v98, %v281
  %283 = vdwg.mxu0
  %284 = vmatprep.subr.mxu0 0.0
  %285 = vmatpush1.msra.mxu0 0.0
  %286 = vmatprep.subr.mxu0 0.0
  %287 = vmatpush1.msra.mxu0 0.0
  %288 = vmatprep.subr.mxu0 0.0
  %289 = vmatpush1.msra.mxu0 0.0
  %290 = vmatprep.subr.mxu0 0.0
  %291 = vmatpush1.msra.mxu0 0.0
  %292 = vmatprep.subr.mxu0 0.0
  %293 = vmatpush1.msra.mxu0 0.0
  %294 = vmatprep.subr.mxu0 0.0
  %295 = vmatpush1.msra.mxu0 0.0
  %296 = vmatprep.subr.mxu0 0.0
  %297 = vmatpush1.msra.mxu0 0.0
  %298 = vmatprep.subr.mxu0 0.0
  %299 = vmatpush1.msra.mxu0 0.0
  %300 = vmatprep.subr.mxu0 0.0
  %301 = vmatpush1.msra.mxu0 0.0
  %302 = vmatprep.subr.mxu0 0.0
  %303 = vmatpush1.msra.mxu0 0.0
  %304 = vmatprep.subr.mxu0 0.0
  %305 = vmatpush1.msra.mxu0 0.0
  %306 = vmatprep.subr.mxu0 0.0
  %307 = vmatpush1.msra.mxu0 0.0
  %308 = vmatprep.subr.mxu0 %v78
  %309 = vmatpush1.msra.mxu0 %v77
  %310 = vmatprep.subr.mxu0 %v70
  %311 = vmatpush1.msra.mxu0 %v69
  %312 = vmatprep.subr.mxu0 %v62
  %313 = vmatpush1.msra.mxu0 %v61
  %314 = vmatprep.subr.mxu0 %v54
  %315 = vmatpush1.msra.mxu0 %v53
  %316 = vmatprep.subr.mxu0 0.0
  %317 = vmatpush2.msra.mxu0 0.0
  %318 = vmatprep.subr.mxu0 0.0
  %319 = vmatpush2.msra.mxu0 0.0
  %320 = vmatprep.subr.mxu0 0.0
  %321 = vmatpush2.msra.mxu0 0.0
  %322 = vmatprep.subr.mxu0 0.0
  %323 = vmatpush2.msra.mxu0 0.0
  %324 = vmatprep.subr.mxu0 0.0
  %325 = vmatpush2.msra.mxu0 0.0
  %326 = vmatprep.subr.mxu0 0.0
  %327 = vmatpush2.msra.mxu0 0.0
  %328 = vmatprep.subr.mxu0 0.0
  %329 = vmatpush2.msra.mxu0 0.0
  %330 = vmatprep.subr.mxu0 0.0
  %331 = vmatpush2.msra.mxu0 0.0
  %332 = vmatprep.subr.mxu0 0.0
  %333 = vmatpush2.msra.mxu0 0.0
  %334 = vmatprep.subr.mxu0 0.0
  %335 = vmatpush2.msra.mxu0 0.0
  %336 = vmatprep.subr.mxu0 0.0
  %337 = vmatpush2.msra.mxu0 0.0
  %338 = vmatprep.subr.mxu0 0.0
  %339 = vmatpush2.msra.mxu0 0.0
  %340 = vmatprep.subr.mxu0 0.0
  %341 = vmatpush2.msra.mxu0 0.0
  %342 = vmatprep.subr.mxu0 0.0
  %343 = vmatpush2.msra.mxu0 0.0
  %344 = vmatprep.subr.mxu0 0.0
  %345 = vmatpush2.msra.mxu0 0.0
  %346 = vmatprep.subr.mxu0 0.0
  %347 = vmatpush2.msra.mxu0 0.0
  %348 = vmatprep.mubr.f32.mxu0 0.0
  %349 = vmatmul.mubr.f32.gmra.mxu0 %v125
  %v350 = vpop.f32.mrf.mxu0
  %v351 = vadd.f32 %v102, %v350
  %v352 = vpop.f32.mrf.mxu0
  %v353 = vadd.f32 %v106, %v352
  %354 = vmatprep.mubr.f32.mxu0 0.0
  %355 = vmatmul.mubr.f32.gmra.mxu0 %v128
  %v356 = vpop.f32.mrf.mxu0
  %v357 = vadd.f32 %v102, %v356
  %v358 = vpop.f32.mrf.mxu0
  %v359 = vadd.f32 %v106, %v358
  %360 = vdwg.mxu0
  %361 = vmatprep.subr.mxu0 0.0
  %362 = vmatpush1.msra.mxu0 0.0
  %363 = vmatprep.subr.mxu0 0.0
  %364 = vmatpush1.msra.mxu0 0.0
  %365 = vmatprep.subr.mxu0 0.0
  %366 = vmatpush1.msra.mxu0 0.0
  %367 = vmatprep.subr.mxu0 0.0
  %368 = vmatpush1.msra.mxu0 0.0
  %369 = vmatprep.subr.mxu0 0.0
  %370 = vmatpush1.msra.mxu0 0.0
  %371 = vmatprep.subr.mxu0 0.0
  %372 = vmatpush1.msra.mxu0 0.0
  %373 = vmatprep.subr.mxu0 0.0
  %374 = vmatpush1.msra.mxu0 0.0
  %375 = vmatprep.subr.mxu0 0.0
  %376 = vmatpush1.msra.mxu0 0.0
  %377 = vmatprep.subr.mxu0 0.0
  %378 = vmatpush1.msra.mxu0 0.0
  %379 = vmatprep.subr.mxu0 0.0
  %380 = vmatpush1.msra.mxu0 0.0
  %381 = vmatprep.subr.mxu0 0.0
  %382 = vmatpush1.msra.mxu0 0.0
  %383 = vmatprep.subr.mxu0 0.0
  %384 = vmatpush1.msra.mxu0 0.0
  %385 = vmatprep.subr.mxu0 %v80
  %386 = vmatpush1.msra.mxu0 %v79
  %387 = vmatprep.subr.mxu0 %v72
  %388 = vmatpush1.msra.mxu0 %v71
  %389 = vmatprep.subr.mxu0 %v64
  %390 = vmatpush1.msra.mxu0 %v63
  %391 = vmatprep.subr.mxu0 %v56
  %392 = vmatpush1.msra.mxu0 %v55
  %393 = vmatprep.subr.mxu0 0.0
  %394 = vmatpush2.msra.mxu0 0.0
  %395 = vmatprep.subr.mxu0 0.0
  %396 = vmatpush2.msra.mxu0 0.0
  %397 = vmatprep.subr.mxu0 0.0
  %398 = vmatpush2.msra.mxu0 0.0
  %399 = vmatprep.subr.mxu0 0.0
  %400 = vmatpush2.msra.mxu0 0.0
  %401 = vmatprep.subr.mxu0 0.0
  %402 = vmatpush2.msra.mxu0 0.0
  %403 = vmatprep.subr.mxu0 0.0
  %404 = vmatpush2.msra.mxu0 0.0
  %405 = vmatprep.subr.mxu0 0.0
  %406 = vmatpush2.msra.mxu0 0.0
  %407 = vmatprep.subr.mxu0 0.0
  %408 = vmatpush2.msra.mxu0 0.0
  %409 = vmatprep.subr.mxu0 0.0
  %410 = vmatpush2.msra.mxu0 0.0
  %411 = vmatprep.subr.mxu0 0.0
  %412 = vmatpush2.msra.mxu0 0.0
  %413 = vmatprep.subr.mxu0 0.0
  %414 = vmatpush2.msra.mxu0 0.0
  %415 = vmatprep.subr.mxu0 0.0
  %416 = vmatpush2.msra.mxu0 0.0
  %417 = vmatprep.subr.mxu0 0.0
  %418 = vmatpush2.msra.mxu0 0.0
  %419 = vmatprep.subr.mxu0 0.0
  %420 = vmatpush2.msra.mxu0 0.0
  %421 = vmatprep.subr.mxu0 0.0
  %422 = vmatpush2.msra.mxu0 0.0
  %423 = vmatprep.subr.mxu0 0.0
  %424 = vmatpush2.msra.mxu0 0.0
  %425 = vmatprep.mubr.f32.mxu0 0.0
  %426 = vmatmul.mubr.f32.gmra.mxu0 %v125
  %v427 = vpop.f32.mrf.mxu0
  %v428 = vadd.f32 %v110, %v427
  %v429 = vpop.f32.mrf.mxu0
  %v430 = vadd.f32 %v114, %v429
  %431 = vmatprep.mubr.f32.mxu0 0.0
  %432 = vmatmul.mubr.f32.gmra.mxu0 %v128
  %v433 = vpop.f32.mrf.mxu0
  %v434 = vadd.f32 %v110, %v433
  %v435 = vpop.f32.mrf.mxu0
  %v436 = vadd.f32 %v114, %v435
  %437 = vdwg.mxu0
  %438 = vst [vmem:[#allocation2] sm:$0xff] %v197
  %439 = vst [vmem:[#allocation2 + $0x8] sm:$0xff] %v199
  %440 = vst [vmem:[#allocation2 + $0x10] sm:$0xff] %v274
  %441 = vst [vmem:[#allocation2 + $0x18] sm:$0xff] %v276
  %442 = vst [vmem:[#allocation2 + $0x20] sm:$0xff] %v351
  %443 = vst [vmem:[#allocation2 + $0x28] sm:$0xff] %v353
  %444 = vst [vmem:[#allocation2 + $0x30] sm:$0xff] %v428
  %445 = vst [vmem:[#allocation2 + $0x38] sm:$0xff] %v430
  %446 = vst [vmem:[#allocation2 + $0x40] sm:$0xff] %v203
  %447 = vst [vmem:[#allocation2 + $0x48] sm:$0xff] %v205
  %448 = vst [vmem:[#allocation2 + $0x50] sm:$0xff] %v280
  %449 = vst [vmem:[#allocation2 + $0x58] sm:$0xff] %v282
  %450 = vst [vmem:[#allocation2 + $0x60] sm:$0xff] %v357
  %451 = vst [vmem:[#allocation2 + $0x68] sm:$0xff] %v359
  %452 = vst [vmem:[#allocation2 + $0x70] sm:$0xff] %v434
  %453 = vst [vmem:[#allocation2 + $0x78] sm:$0xff] %v436
  %v454 = vld [vmem:[%s3] sm:$0xff]
  %v455 = vld [vmem:[%s3 + $0x8] sm:$0xff]
  %v456 = vld [vmem:[%s3 + $0x10] sm:$0xff]
  %v457 = vld [vmem:[%s3 + $0x18] sm:$0xff]
  %v458 = vld [vmem:[%s3 + $0x20] sm:$0xff]
  %v459 = vld [vmem:[%s3 + $0x28] sm:$0xff]
  %v460 = vld [vmem:[%s3 + $0x30] sm:$0xff]
  %v461 = vld [vmem:[%s3 + $0x38] sm:$0xff]
  %v462 = vld [vmem:[%s3 + $0x40] sm:$0xff]
  %v463 = vld [vmem:[%s3 + $0x48] sm:$0xff]
  %v464 = vld [vmem:[%s3 + $0x50] sm:$0xff]
  %v465 = vld [vmem:[%s3 + $0x58] sm:$0xff]
  %v466 = vld [vmem:[%s3 + $0x60] sm:$0xff]
  %v467 = vld [vmem:[%s3 + $0x68] sm:$0xff]
  %v468 = vld [vmem:[%s3 + $0x70] sm:$0xff]
  %v469 = vld [vmem:[%s3 + $0x78] sm:$0xff]
  %v470 = vld [vmem:[%s4] sm:$0xff]
  %v471 = vld [vmem:[%s4 + $0x8] sm:$0xff]
  %v472 = vld [vmem:[%s4 + $0x10] sm:$0xff]
  %v473 = vld [vmem:[%s4 + $0x18] sm:$0xff]
  %v474 = vld [vmem:[%s4 + $0x20] sm:$0xff]
  %v475 = vld [vmem:[%s4 + $0x28] sm:$0xff]
  %v476 = vld [vmem:[%s4 + $0x30] sm:$0xff]
  %v477 = vld [vmem:[%s4 + $0x38] sm:$0xff]
  %v478 = vld [vmem:[%s4 + $0x40] sm:$0xff]
  %v479 = vld [vmem:[%s4 + $0x48] sm:$0xff]
  %v480 = vld [vmem:[%s4 + $0x50] sm:$0xff]
  %v481 = vld [vmem:[%s4 + $0x58] sm:$0xff]
  %v482 = vld [vmem:[%s4 + $0x60] sm:$0xff]
  %v483 = vld [vmem:[%s4 + $0x68] sm:$0xff]
  %v484 = vld [vmem:[%s4 + $0x70] sm:$0xff]
  %v485 = vld [vmem:[%s4 + $0x78] sm:$0xff]
  %v486 = vld [vmem:[#allocation2] sm:$0x3]
  %v487 = vld [vmem:[#allocation2 + $0x8] sm:$0x3]
  %v488 = vld [vmem:[#allocation2 + $0x10] sm:$0x3]
  %v489 = vld [vmem:[#allocation2 + $0x18] sm:$0x3]
  %v490 = vld [vmem:[#allocation2 + $0x60] sm:$0xc0]
  %v491 = vld [vmem:[#allocation2 + $0x68] sm:$0xc0]
  %v492 = vld [vmem:[#allocation2 + $0x70] sm:$0xc0]
  %v493 = vld [vmem:[#allocation2 + $0x78] sm:$0xc0]
  %v495 = vsel %vm123, 0.0, 0
  %497 = vmatprep.subr.mxu0 0.0
  %498 = vmatpush1.msra.mxu0 0.0
  %499 = vmatprep.subr.mxu0 0.0
  %500 = vmatpush1.msra.mxu0 0.0
  %501 = vmatprep.subr.mxu0 0.0
  %502 = vmatpush1.msra.mxu0 0.0
  %503 = vmatprep.subr.mxu0 0.0
  %504 = vmatpush1.msra.mxu0 0.0
  %505 = vmatprep.subr.mxu0 0.0
  %506 = vmatpush1.msra.mxu0 0.0
  %507 = vmatprep.subr.mxu0 0.0
  %508 = vmatpush1.msra.mxu0 0.0
  %509 = vmatprep.subr.mxu0 0.0
  %510 = vmatpush1.msra.mxu0 0.0
  %511 = vmatprep.subr.mxu0 0.0
  %512 = vmatpush1.msra.mxu0 0.0
  %513 = vmatprep.subr.mxu0 0.0
  %514 = vmatpush1.msra.mxu0 0.0
  %515 = vmatprep.subr.mxu0 0.0
  %516 = vmatpush1.msra.mxu0 0.0
  %517 = vmatprep.subr.mxu0 0.0
  %518 = vmatpush1.msra.mxu0 0.0
  %519 = vmatprep.subr.mxu0 0.0
  %520 = vmatpush1.msra.mxu0 0.0
  %521 = vmatprep.subr.mxu0 %v467
  %522 = vmatpush1.msra.mxu0 %v466
  %523 = vmatprep.subr.mxu0 %v463
  %524 = vmatpush1.msra.mxu0 %v462
  %525 = vmatprep.subr.mxu0 %v459
  %526 = vmatpush1.msra.mxu0 %v458
  %527 = vmatprep.subr.mxu0 %v455
  %528 = vmatpush1.msra.mxu0 %v454
  %529 = vmatprep.subr.mxu0 0.0
  %530 = vmatpush2.msra.mxu0 0.0
  %531 = vmatprep.subr.mxu0 0.0
  %532 = vmatpush2.msra.mxu0 0.0
  %533 = vmatprep.subr.mxu0 0.0
  %534 = vmatpush2.msra.mxu0 0.0
  %535 = vmatprep.subr.mxu0 0.0
  %536 = vmatpush2.msra.mxu0 0.0
  %537 = vmatprep.subr.mxu0 0.0
  %538 = vmatpush2.msra.mxu0 0.0
  %539 = vmatprep.subr.mxu0 0.0
  %540 = vmatpush2.msra.mxu0 0.0
  %541 = vmatprep.subr.mxu0 0.0
  %542 = vmatpush2.msra.mxu0 0.0
  %543 = vmatprep.subr.mxu0 0.0
  %544 = vmatpush2.msra.mxu0 0.0
  %545 = vmatprep.subr.mxu0 0.0
  %546 = vmatpush2.msra.mxu0 0.0
  %547 = vmatprep.subr.mxu0 0.0
  %548 = vmatpush2.msra.mxu0 0.0
  %549 = vmatprep.subr.mxu0 0.0
  %550 = vmatpush2.msra.mxu0 0.0
  %551 = vmatprep.subr.mxu0 0.0
  %552 = vmatpush2.msra.mxu0 0.0
  %553 = vmatprep.subr.mxu0 0.0
  %554 = vmatpush2.msra.mxu0 0.0
  %555 = vmatprep.subr.mxu0 0.0
  %556 = vmatpush2.msra.mxu0 0.0
  %557 = vmatprep.subr.mxu0 0.0
  %558 = vmatpush2.msra.mxu0 0.0
  %559 = vmatprep.subr.mxu0 0.0
  %560 = vmatpush2.msra.mxu0 0.0
  %561 = vmatprep.mubr.f32.mxu0 0.0
  %562 = vmatmul.mubr.f32.gmra.mxu0 %v495
  %v563 = vpop.f32.mrf.mxu0
  %v564 = vadd.f32 0.0, %v563
  %v565 = vpop.f32.mrf.mxu0
  %v566 = vadd.f32 0.0, %v565
  %567 = vdwg.mxu0
  %568 = vmatprep.subr.mxu0 0.0
  %569 = vmatpush1.msra.mxu0 0.0
  %570 = vmatprep.subr.mxu0 0.0
  %571 = vmatpush1.msra.mxu0 0.0
  %572 = vmatprep.subr.mxu0 0.0
  %573 = vmatpush1.msra.mxu0 0.0
  %574 = vmatprep.subr.mxu0 0.0
  %575 = vmatpush1.msra.mxu0 0.0
  %576 = vmatprep.subr.mxu0 0.0
  %577 = vmatpush1.msra.mxu0 0.0
  %578 = vmatprep.subr.mxu0 0.0
  %579 = vmatpush1.msra.mxu0 0.0
  %580 = vmatprep.subr.mxu0 0.0
  %581 = vmatpush1.msra.mxu0 0.0
  %582 = vmatprep.subr.mxu0 0.0
  %583 = vmatpush1.msra.mxu0 0.0
  %584 = vmatprep.subr.mxu0 0.0
  %585 = vmatpush1.msra.mxu0 0.0
  %586 = vmatprep.subr.mxu0 0.0
  %587 = vmatpush1.msra.mxu0 0.0
  %588 = vmatprep.subr.mxu0 0.0
  %589 = vmatpush1.msra.mxu0 0.0
  %590 = vmatprep.subr.mxu0 0.0
  %591 = vmatpush1.msra.mxu0 0.0
  %592 = vmatprep.subr.mxu0 %v469
  %593 = vmatpush1.msra.mxu0 %v468
  %594 = vmatprep.subr.mxu0 %v465
  %595 = vmatpush1.msra.mxu0 %v464
  %596 = vmatprep.subr.mxu0 %v461
  %597 = vmatpush1.msra.mxu0 %v460
  %598 = vmatprep.subr.mxu0 %v457
  %599 = vmatpush1.msra.mxu0 %v456
  %600 = vmatprep.subr.mxu0 0.0
  %601 = vmatpush2.msra.mxu0 0.0
  %602 = vmatprep.subr.mxu0 0.0
  %603 = vmatpush2.msra.mxu0 0.0
  %604 = vmatprep.subr.mxu0 0.0
  %605 = vmatpush2.msra.mxu0 0.0
  %606 = vmatprep.subr.mxu0 0.0
  %607 = vmatpush2.msra.mxu0 0.0
  %608 = vmatprep.subr.mxu0 0.0
  %609 = vmatpush2.msra.mxu0 0.0
  %610 = vmatprep.subr.mxu0 0.0
  %611 = vmatpush2.msra.mxu0 0.0
  %612 = vmatprep.subr.mxu0 0.0
  %613 = vmatpush2.msra.mxu0 0.0
  %614 = vmatprep.subr.mxu0 0.0
  %615 = vmatpush2.msra.mxu0 0.0
  %616 = vmatprep.subr.mxu0 0.0
  %617 = vmatpush2.msra.mxu0 0.0
  %618 = vmatprep.subr.mxu0 0.0
  %619 = vmatpush2.msra.mxu0 0.0
  %620 = vmatprep.subr.mxu0 0.0
  %621 = vmatpush2.msra.mxu0 0.0
  %622 = vmatprep.subr.mxu0 0.0
  %623 = vmatpush2.msra.mxu0 0.0
  %624 = vmatprep.subr.mxu0 0.0
  %625 = vmatpush2.msra.mxu0 0.0
  %626 = vmatprep.subr.mxu0 0.0
  %627 = vmatpush2.msra.mxu0 0.0
  %628 = vmatprep.subr.mxu0 0.0
  %629 = vmatpush2.msra.mxu0 0.0
  %630 = vmatprep.subr.mxu0 0.0
  %631 = vmatpush2.msra.mxu0 0.0
  %632 = vmatprep.mubr.f32.mxu0 0.0
  %633 = vmatmul.mubr.f32.gmra.mxu0 %v495
  %v634 = vpop.f32.mrf.mxu0
  %v635 = vadd.f32 0.0, %v634
  %v636 = vpop.f32.mrf.mxu0
  %v637 = vadd.f32 0.0, %v636
  %638 = vdwg.mxu0
  %v639 = vadd.f32 %v486, %v564
  %v640 = vadd.f32 %v487, %v566
  %v641 = vadd.f32 %v488, %v635
  %v642 = vadd.f32 %v489, %v637
  %643 = vmatprep.subr.mxu0 0.0
  %644 = vmatpush1.msra.mxu0 0.0
  %645 = vmatprep.subr.mxu0 0.0
  %646 = vmatpush1.msra.mxu0 0.0
  %647 = vmatprep.subr.mxu0 0.0
  %648 = vmatpush1.msra.mxu0 0.0
  %649 = vmatprep.subr.mxu0 0.0
  %650 = vmatpush1.msra.mxu0 0.0
  %651 = vmatprep.subr.mxu0 0.0
  %652 = vmatpush1.msra.mxu0 0.0
  %653 = vmatprep.subr.mxu0 0.0
  %654 = vmatpush1.msra.mxu0 0.0
  %655 = vmatprep.subr.mxu0 0.0
  %656 = vmatpush1.msra.mxu0 0.0
  %657 = vmatprep.subr.mxu0 0.0
  %658 = vmatpush1.msra.mxu0 0.0
  %659 = vmatprep.subr.mxu0 0.0
  %660 = vmatpush1.msra.mxu0 0.0
  %661 = vmatprep.subr.mxu0 0.0
  %662 = vmatpush1.msra.mxu0 0.0
  %663 = vmatprep.subr.mxu0 0.0
  %664 = vmatpush1.msra.mxu0 0.0
  %665 = vmatprep.subr.mxu0 0.0
  %666 = vmatpush1.msra.mxu0 0.0
  %667 = vmatprep.subr.mxu0 %v483
  %668 = vmatpush1.msra.mxu0 %v482
  %669 = vmatprep.subr.mxu0 %v479
  %670 = vmatpush1.msra.mxu0 %v478
  %671 = vmatprep.subr.mxu0 %v475
  %672 = vmatpush1.msra.mxu0 %v474
  %673 = vmatprep.subr.mxu0 %v471
  %674 = vmatpush1.msra.mxu0 %v470
  %675 = vmatprep.subr.mxu0 0.0
  %676 = vmatpush2.msra.mxu0 0.0
  %677 = vmatprep.subr.mxu0 0.0
  %678 = vmatpush2.msra.mxu0 0.0
  %679 = vmatprep.subr.mxu0 0.0
  %680 = vmatpush2.msra.mxu0 0.0
  %681 = vmatprep.subr.mxu0 0.0
  %682 = vmatpush2.msra.mxu0 0.0
  %683 = vmatprep.subr.mxu0 0.0
  %684 = vmatpush2.msra.mxu0 0.0
  %685 = vmatprep.subr.mxu0 0.0
  %686 = vmatpush2.msra.mxu0 0.0
  %687 = vmatprep.subr.mxu0 0.0
  %688 = vmatpush2.msra.mxu0 0.0
  %689 = vmatprep.subr.mxu0 0.0
  %690 = vmatpush2.msra.mxu0 0.0
  %691 = vmatprep.subr.mxu0 0.0
  %692 = vmatpush2.msra.mxu0 0.0
  %693 = vmatprep.subr.mxu0 0.0
  %694 = vmatpush2.msra.mxu0 0.0
  %695 = vmatprep.subr.mxu0 0.0
  %696 = vmatpush2.msra.mxu0 0.0
  %697 = vmatprep.subr.mxu0 0.0
  %698 = vmatpush2.msra.mxu0 0.0
  %699 = vmatprep.subr.mxu0 0.0
  %700 = vmatpush2.msra.mxu0 0.0
  %701 = vmatprep.subr.mxu0 0.0
  %702 = vmatpush2.msra.mxu0 0.0
  %703 = vmatprep.subr.mxu0 0.0
  %704 = vmatpush2.msra.mxu0 0.0
  %705 = vmatprep.subr.mxu0 0.0
  %706 = vmatpush2.msra.mxu0 0.0
  %707 = vmatprep.mubr.f32.mxu0 0.0
  %708 = vmatmul.mubr.f32.gmra.mxu0 %v495
  %v709 = vpop.f32.mrf.mxu0
  %v710 = vadd.f32 0.0, %v709
  %v711 = vpop.f32.mrf.mxu0
  %v712 = vadd.f32 0.0, %v711
  %713 = vdwg.mxu0
  %714 = vmatprep.subr.mxu0 0.0
  %715 = vmatpush1.msra.mxu0 0.0
  %716 = vmatprep.subr.mxu0 0.0
  %717 = vmatpush1.msra.mxu0 0.0
  %718 = vmatprep.subr.mxu0 0.0
  %719 = vmatpush1.msra.mxu0 0.0
  %720 = vmatprep.subr.mxu0 0.0
  %721 = vmatpush1.msra.mxu0 0.0
  %722 = vmatprep.subr.mxu0 0.0
  %723 = vmatpush1.msra.mxu0 0.0
  %724 = vmatprep.subr.mxu0 0.0
  %725 = vmatpush1.msra.mxu0 0.0
  %726 = vmatprep.subr.mxu0 0.0
  %727 = vmatpush1.msra.mxu0 0.0
  %728 = vmatprep.subr.mxu0 0.0
  %729 = vmatpush1.msra.mxu0 0.0
  %730 = vmatprep.subr.mxu0 0.0
  %731 = vmatpush1.msra.mxu0 0.0
  %732 = vmatprep.subr.mxu0 0.0
  %733 = vmatpush1.msra.mxu0 0.0
  %734 = vmatprep.subr.mxu0 0.0
  %735 = vmatpush1.msra.mxu0 0.0
  %736 = vmatprep.subr.mxu0 0.0
  %737 = vmatpush1.msra.mxu0 0.0
  %738 = vmatprep.subr.mxu0 %v485
  %739 = vmatpush1.msra.mxu0 %v484
  %740 = vmatprep.subr.mxu0 %v481
  %741 = vmatpush1.msra.mxu0 %v480
  %742 = vmatprep.subr.mxu0 %v477
  %743 = vmatpush1.msra.mxu0 %v476
  %744 = vmatprep.subr.mxu0 %v473
  %745 = vmatpush1.msra.mxu0 %v472
  %746 = vmatprep.subr.mxu0 0.0
  %747 = vmatpush2.msra.mxu0 0.0
  %748 = vmatprep.subr.mxu0 0.0
  %749 = vmatpush2.msra.mxu0 0.0
  %750 = vmatprep.subr.mxu0 0.0
  %751 = vmatpush2.msra.mxu0 0.0
  %752 = vmatprep.subr.mxu0 0.0
  %753 = vmatpush2.msra.mxu0 0.0
  %754 = vmatprep.subr.mxu0 0.0
  %755 = vmatpush2.msra.mxu0 0.0
  %756 = vmatprep.subr.mxu0 0.0
  %757 = vmatpush2.msra.mxu0 0.0
  %758 = vmatprep.subr.mxu0 0.0
  %759 = vmatpush2.msra.mxu0 0.0
  %760 = vmatprep.subr.mxu0 0.0
  %761 = vmatpush2.msra.mxu0 0.0
  %762 = vmatprep.subr.mxu0 0.0
  %763 = vmatpush2.msra.mxu0 0.0
  %764 = vmatprep.subr.mxu0 0.0
  %765 = vmatpush2.msra.mxu0 0.0
  %766 = vmatprep.subr.mxu0 0.0
  %767 = vmatpush2.msra.mxu0 0.0
  %768 = vmatprep.subr.mxu0 0.0
  %769 = vmatpush2.msra.mxu0 0.0
  %770 = vmatprep.subr.mxu0 0.0
  %771 = vmatpush2.msra.mxu0 0.0
  %772 = vmatprep.subr.mxu0 0.0
  %773 = vmatpush2.msra.mxu0 0.0
  %774 = vmatprep.subr.mxu0 0.0
  %775 = vmatpush2.msra.mxu0 0.0
  %776 = vmatprep.subr.mxu0 0.0
  %777 = vmatpush2.msra.mxu0 0.0
  %778 = vmatprep.mubr.f32.mxu0 0.0
  %779 = vmatmul.mubr.f32.gmra.mxu0 %v495
  %v780 = vpop.f32.mrf.mxu0
  %v781 = vadd.f32 0.0, %v780
  %v782 = vpop.f32.mrf.mxu0
  %v783 = vadd.f32 0.0, %v782
  %784 = vdwg.mxu0
  %v789 = vrot.slane %v710, 2
  %v790 = vrot.slane %v712, 2
  %v791 = vrot.slane %v781, 2
  %v792 = vrot.slane %v783, 2
  %v797 = vadd.f32 %v490, %v789
  %v798 = vadd.f32 %v491, %v790
  %v799 = vadd.f32 %v492, %v791
  %v800 = vadd.f32 %v493, %v792
  %v801 = vmul.f32 %v639, 0.5
  %v802 = vtanh.pop %v801
  %v803 = vmul.f32 %v802, 0.5
  %v804 = vadd.f32 %v803, 0.5
  %v805 = vmul.f32 %v640, 0.5
  %v806 = vtanh.pop %v805
  %v807 = vmul.f32 %v806, 0.5
  %v808 = vadd.f32 %v807, 0.5
  %v809 = vtanh.pop %v641
  %v810 = vmul.f32 %v642, 0.5
  %v811 = vtanh.pop %v810
  %v812 = vmul.f32 %v811, 0.5
  %v813 = vadd.f32 %v812, 0.5
  %v814 = vmul.f32 %v808, 0.0
  %v815 = vmul.f32 %v804, %v809
  %v816 = vadd.f32 %v814, %v815
  %v817 = vtanh.pop %v816
  %v818 = vmul.f32 %v813, %v817
  %v819 = vmul.f32 %v797, 0.5
  %v820 = vtanh.pop %v819
  %v821 = vmul.f32 %v820, 0.5
  %v822 = vadd.f32 %v821, 0.5
  %v823 = vmul.f32 %v798, 0.5
  %v824 = vtanh.pop %v823
  %v825 = vmul.f32 %v824, 0.5
  %v826 = vadd.f32 %v825, 0.5
  %v827 = vtanh.pop %v799
  %v828 = vmul.f32 %v800, 0.5
  %v829 = vtanh.pop %v828
  %v830 = vmul.f32 %v829, 0.5
  %v831 = vadd.f32 %v830, 0.5
  %v832 = vmul.f32 %v826, 0.0
  %v833 = vmul.f32 %v822, %v827
  %v834 = vadd.f32 %v832, %v833
  %v835 = vtanh.pop %v834
  %v836 = vmul.f32 %v831, %v835
  %vm837 = vcmask 254976
  %838 = vst.msk [vmem:[#allocation3] sm:$0x3] %vm837, %v818
  %vm839 = vcmask 261126
  %840 = vst.msk [vmem:[#allocation3 + $0x18] sm:$0xc0] %vm839, %v836
  %v841 = vld [vmem:[#allocation2] sm:$0xc]
  %v842 = vld [vmem:[#allocation2 + $0x8] sm:$0xc]
  %v843 = vld [vmem:[#allocation2 + $0x10] sm:$0xc]
  %v844 = vld [vmem:[#allocation2 + $0x18] sm:$0xc]
  %v845 = vld [vmem:[#allocation2 + $0x60] sm:$0x30]
  %v846 = vld [vmem:[#allocation2 + $0x68] sm:$0x30]
  %v847 = vld [vmem:[#allocation2 + $0x70] sm:$0x30]
  %v848 = vld [vmem:[#allocation2 + $0x78] sm:$0x30]
  %v850 = vsel %vm123, %v818, 0
  %852 = vmatprep.subr.mxu0 0.0
  %853 = vmatpush1.msra.mxu0 0.0
  %854 = vmatprep.subr.mxu0 0.0
  %855 = vmatpush1.msra.mxu0 0.0
  %856 = vmatprep.subr.mxu0 0.0
  %857 = vmatpush1.msra.mxu0 0.0
  %858 = vmatprep.subr.mxu0 0.0
  %859 = vmatpush1.msra.mxu0 0.0
  %860 = vmatprep.subr.mxu0 0.0
  %861 = vmatpush1.msra.mxu0 0.0
  %862 = vmatprep.subr.mxu0 0.0
  %863 = vmatpush1.msra.mxu0 0.0
  %864 = vmatprep.subr.mxu0 0.0
  %865 = vmatpush1.msra.mxu0 0.0
  %866 = vmatprep.subr.mxu0 0.0
  %867 = vmatpush1.msra.mxu0 0.0
  %868 = vmatprep.subr.mxu0 0.0
  %869 = vmatpush1.msra.mxu0 0.0
  %870 = vmatprep.subr.mxu0 0.0
  %871 = vmatpush1.msra.mxu0 0.0
  %872 = vmatprep.subr.mxu0 0.0
  %873 = vmatpush1.msra.mxu0 0.0
  %874 = vmatprep.subr.mxu0 0.0
  %875 = vmatpush1.msra.mxu0 0.0
  %876 = vmatprep.subr.mxu0 %v467
  %877 = vmatpush1.msra.mxu0 %v466
  %878 = vmatprep.subr.mxu0 %v463
  %879 = vmatpush1.msra.mxu0 %v462
  %880 = vmatprep.subr.mxu0 %v459
  %881 = vmatpush1.msra.mxu0 %v458
  %882 = vmatprep.subr.mxu0 %v455
  %883 = vmatpush1.msra.mxu0 %v454
  %884 = vmatprep.subr.mxu0 0.0
  %885 = vmatpush2.msra.mxu0 0.0
  %886 = vmatprep.subr.mxu0 0.0
  %887 = vmatpush2.msra.mxu0 0.0
  %888 = vmatprep.subr.mxu0 0.0
  %889 = vmatpush2.msra.mxu0 0.0
  %890 = vmatprep.subr.mxu0 0.0
  %891 = vmatpush2.msra.mxu0 0.0
  %892 = vmatprep.subr.mxu0 0.0
  %893 = vmatpush2.msra.mxu0 0.0
  %894 = vmatprep.subr.mxu0 0.0
  %895 = vmatpush2.msra.mxu0 0.0
  %896 = vmatprep.subr.mxu0 0.0
  %897 = vmatpush2.msra.mxu0 0.0
  %898 = vmatprep.subr.mxu0 0.0
  %899 = vmatpush2.msra.mxu0 0.0
  %900 = vmatprep.subr.mxu0 0.0
  %901 = vmatpush2.msra.mxu0 0.0
  %902 = vmatprep.subr.mxu0 0.0
  %903 = vmatpush2.msra.mxu0 0.0
  %904 = vmatprep.subr.mxu0 0.0
  %905 = vmatpush2.msra.mxu0 0.0
  %906 = vmatprep.subr.mxu0 0.0
  %907 = vmatpush2.msra.mxu0 0.0
  %908 = vmatprep.subr.mxu0 0.0
  %909 = vmatpush2.msra.mxu0 0.0
  %910 = vmatprep.subr.mxu0 0.0
  %911 = vmatpush2.msra.mxu0 0.0
  %912 = vmatprep.subr.mxu0 0.0
  %913 = vmatpush2.msra.mxu0 0.0
  %914 = vmatprep.subr.mxu0 0.0
  %915 = vmatpush2.msra.mxu0 0.0
  %916 = vmatprep.mubr.f32.mxu0 0.0
  %917 = vmatmul.mubr.f32.gmra.mxu0 %v850
  %v918 = vpop.f32.mrf.mxu0
  %v919 = vadd.f32 0.0, %v918
  %v920 = vpop.f32.mrf.mxu0
  %v921 = vadd.f32 0.0, %v920
  %922 = vdwg.mxu0
  %923 = vmatprep.subr.mxu0 0.0
  %924 = vmatpush1.msra.mxu0 0.0
  %925 = vmatprep.subr.mxu0 0.0
  %926 = vmatpush1.msra.mxu0 0.0
  %927 = vmatprep.subr.mxu0 0.0
  %928 = vmatpush1.msra.mxu0 0.0
  %929 = vmatprep.subr.mxu0 0.0
  %930 = vmatpush1.msra.mxu0 0.0
  %931 = vmatprep.subr.mxu0 0.0
  %932 = vmatpush1.msra.mxu0 0.0
  %933 = vmatprep.subr.mxu0 0.0
  %934 = vmatpush1.msra.mxu0 0.0
  %935 = vmatprep.subr.mxu0 0.0
  %936 = vmatpush1.msra.mxu0 0.0
  %937 = vmatprep.subr.mxu0 0.0
  %938 = vmatpush1.msra.mxu0 0.0
  %939 = vmatprep.subr.mxu0 0.0
  %940 = vmatpush1.msra.mxu0 0.0
  %941 = vmatprep.subr.mxu0 0.0
  %942 = vmatpush1.msra.mxu0 0.0
  %943 = vmatprep.subr.mxu0 0.0
  %944 = vmatpush1.msra.mxu0 0.0
  %945 = vmatprep.subr.mxu0 0.0
  %946 = vmatpush1.msra.mxu0 0.0
  %947 = vmatprep.subr.mxu0 %v469
  %948 = vmatpush1.msra.mxu0 %v468
  %949 = vmatprep.subr.mxu0 %v465
  %950 = vmatpush1.msra.mxu0 %v464
  %951 = vmatprep.subr.mxu0 %v461
  %952 = vmatpush1.msra.mxu0 %v460
  %953 = vmatprep.subr.mxu0 %v457
  %954 = vmatpush1.msra.mxu0 %v456
  %955 = vmatprep.subr.mxu0 0.0
  %956 = vmatpush2.msra.mxu0 0.0
  %957 = vmatprep.subr.mxu0 0.0
  %958 = vmatpush2.msra.mxu0 0.0
  %959 = vmatprep.subr.mxu0 0.0
  %960 = vmatpush2.msra.mxu0 0.0
  %961 = vmatprep.subr.mxu0 0.0
  %962 = vmatpush2.msra.mxu0 0.0
  %963 = vmatprep.subr.mxu0 0.0
  %964 = vmatpush2.msra.mxu0 0.0
  %965 = vmatprep.subr.mxu0 0.0
  %966 = vmatpush2.msra.mxu0 0.0
  %967 = vmatprep.subr.mxu0 0.0
  %968 = vmatpush2.msra.mxu0 0.0
  %969 = vmatprep.subr.mxu0 0.0
  %970 = vmatpush2.msra.mxu0 0.0
  %971 = vmatprep.subr.mxu0 0.0
  %972 = vmatpush2.msra.mxu0 0.0
  %973 = vmatprep.subr.mxu0 0.0
  %974 = vmatpush2.msra.mxu0 0.0
  %975 = vmatprep.subr.mxu0 0.0
  %976 = vmatpush2.msra.mxu0 0.0
  %977 = vmatprep.subr.mxu0 0.0
  %978 = vmatpush2.msra.mxu0 0.0
  %979 = vmatprep.subr.mxu0 0.0
  %980 = vmatpush2.msra.mxu0 0.0
  %981 = vmatprep.subr.mxu0 0.0
  %982 = vmatpush2.msra.mxu0 0.0
  %983 = vmatprep.subr.mxu0 0.0
  %984 = vmatpush2.msra.mxu0 0.0
  %985 = vmatprep.subr.mxu0 0.0
  %986 = vmatpush2.msra.mxu0 0.0
  %987 = vmatprep.mubr.f32.mxu0 0.0
  %988 = vmatmul.mubr.f32.gmra.mxu0 %v850
  %v989 = vpop.f32.mrf.mxu0
  %v990 = vadd.f32 0.0, %v989
  %v991 = vpop.f32.mrf.mxu0
  %v992 = vadd.f32 0.0, %v991
  %993 = vdwg.mxu0
  %v998 = vrot.slane %v919, 6
  %v999 = vrot.slane %v921, 6
  %v1000 = vrot.slane %v990, 6
  %v1001 = vrot.slane %v992, 6
  %v1006 = vadd.f32 %v841, %v998
  %v1007 = vadd.f32 %v842, %v999
  %v1008 = vadd.f32 %v843, %v1000
  %v1009 = vadd.f32 %v844, %v1001
  %v1011 = vrot.slane %v836, 6
  %v1012 = vsel %vm123, %v1011, 0
  %1014 = vmatprep.subr.mxu0 0.0
  %1015 = vmatpush1.msra.mxu0 0.0
  %1016 = vmatprep.subr.mxu0 0.0
  %1017 = vmatpush1.msra.mxu0 0.0
  %1018 = vmatprep.subr.mxu0 0.0
  %1019 = vmatpush1.msra.mxu0 0.0
  %1020 = vmatprep.subr.mxu0 0.0
  %1021 = vmatpush1.msra.mxu0 0.0
  %1022 = vmatprep.subr.mxu0 0.0
  %1023 = vmatpush1.msra.mxu0 0.0
  %1024 = vmatprep.subr.mxu0 0.0
  %1025 = vmatpush1.msra.mxu0 0.0
  %1026 = vmatprep.subr.mxu0 0.0
  %1027 = vmatpush1.msra.mxu0 0.0
  %1028 = vmatprep.subr.mxu0 0.0
  %1029 = vmatpush1.msra.mxu0 0.0
  %1030 = vmatprep.subr.mxu0 0.0
  %1031 = vmatpush1.msra.mxu0 0.0
  %1032 = vmatprep.subr.mxu0 0.0
  %1033 = vmatpush1.msra.mxu0 0.0
  %1034 = vmatprep.subr.mxu0 0.0
  %1035 = vmatpush1.msra.mxu0 0.0
  %1036 = vmatprep.subr.mxu0 0.0
  %1037 = vmatpush1.msra.mxu0 0.0
  %1038 = vmatprep.subr.mxu0 %v483
  %1039 = vmatpush1.msra.mxu0 %v482
  %1040 = vmatprep.subr.mxu0 %v479
  %1041 = vmatpush1.msra.mxu0 %v478
  %1042 = vmatprep.subr.mxu0 %v475
  %1043 = vmatpush1.msra.mxu0 %v474
  %1044 = vmatprep.subr.mxu0 %v471
  %1045 = vmatpush1.msra.mxu0 %v470
  %1046 = vmatprep.subr.mxu0 0.0
  %1047 = vmatpush2.msra.mxu0 0.0
  %1048 = vmatprep.subr.mxu0 0.0
  %1049 = vmatpush2.msra.mxu0 0.0
  %1050 = vmatprep.subr.mxu0 0.0
  %1051 = vmatpush2.msra.mxu0 0.0
  %1052 = vmatprep.subr.mxu0 0.0
  %1053 = vmatpush2.msra.mxu0 0.0
  %1054 = vmatprep.subr.mxu0 0.0
  %1055 = vmatpush2.msra.mxu0 0.0
  %1056 = vmatprep.subr.mxu0 0.0
  %1057 = vmatpush2.msra.mxu0 0.0
  %1058 = vmatprep.subr.mxu0 0.0
  %1059 = vmatpush2.msra.mxu0 0.0
  %1060 = vmatprep.subr.mxu0 0.0
  %1061 = vmatpush2.msra.mxu0 0.0
  %1062 = vmatprep.subr.mxu0 0.0
  %1063 = vmatpush2.msra.mxu0 0.0
  %1064 = vmatprep.subr.mxu0 0.0
  %1065 = vmatpush2.msra.mxu0 0.0
  %1066 = vmatprep.subr.mxu0 0.0
  %1067 = vmatpush2.msra.mxu0 0.0
  %1068 = vmatprep.subr.mxu0 0.0
  %1069 = vmatpush2.msra.mxu0 0.0
  %1070 = vmatprep.subr.mxu0 0.0
  %1071 = vmatpush2.msra.mxu0 0.0
  %1072 = vmatprep.subr.mxu0 0.0
  %1073 = vmatpush2.msra.mxu0 0.0
  %1074 = vmatprep.subr.mxu0 0.0
  %1075 = vmatpush2.msra.mxu0 0.0
  %1076 = vmatprep.subr.mxu0 0.0
  %1077 = vmatpush2.msra.mxu0 0.0
  %1078 = vmatprep.mubr.f32.mxu0 0.0
  %1079 = vmatmul.mubr.f32.gmra.mxu0 %v1012
  %v1080 = vpop.f32.mrf.mxu0
  %v1081 = vadd.f32 0.0, %v1080
  %v1082 = vpop.f32.mrf.mxu0
  %v1083 = vadd.f32 0.0, %v1082
  %1084 = vdwg.mxu0
  %1085 = vmatprep.subr.mxu0 0.0
  %1086 = vmatpush1.msra.mxu0 0.0
  %1087 = vmatprep.subr.mxu0 0.0
  %1088 = vmatpush1.msra.mxu0 0.0
  %1089 = vmatprep.subr.mxu0 0.0
  %1090 = vmatpush1.msra.mxu0 0.0
  %1091 = vmatprep.subr.mxu0 0.0
  %1092 = vmatpush1.msra.mxu0 0.0
  %1093 = vmatprep.subr.mxu0 0.0
  %1094 = vmatpush1.msra.mxu0 0.0
  %1095 = vmatprep.subr.mxu0 0.0
  %1096 = vmatpush1.msra.mxu0 0.0
  %1097 = vmatprep.subr.mxu0 0.0
  %1098 = vmatpush1.msra.mxu0 0.0
  %1099 = vmatprep.subr.mxu0 0.0
  %1100 = vmatpush1.msra.mxu0 0.0
  %1101 = vmatprep.subr.mxu0 0.0
  %1102 = vmatpush1.msra.mxu0 0.0
  %1103 = vmatprep.subr.mxu0 0.0
  %1104 = vmatpush1.msra.mxu0 0.0
  %1105 = vmatprep.subr.mxu0 0.0
  %1106 = vmatpush1.msra.mxu0 0.0
  %1107 = vmatprep.subr.mxu0 0.0
  %1108 = vmatpush1.msra.mxu0 0.0
  %1109 = vmatprep.subr.mxu0 %v485
  %1110 = vmatpush1.msra.mxu0 %v484
  %1111 = vmatprep.subr.mxu0 %v481
  %1112 = vmatpush1.msra.mxu0 %v480
  %1113 = vmatprep.subr.mxu0 %v477
  %1114 = vmatpush1.msra.mxu0 %v476
  %1115 = vmatprep.subr.mxu0 %v473
  %1116 = vmatpush1.msra.mxu0 %v472
  %1117 = vmatprep.subr.mxu0 0.0
  %1118 = vmatpush2.msra.mxu0 0.0
  %1119 = vmatprep.subr.mxu0 0.0
  %1120 = vmatpush2.msra.mxu0 0.0
  %1121 = vmatprep.subr.mxu0 0.0
  %1122 = vmatpush2.msra.mxu0 0.0
  %1123 = vmatprep.subr.mxu0 0.0
  %1124 = vmatpush2.msra.mxu0 0.0
  %1125 = vmatprep.subr.mxu0 0.0
  %1126 = vmatpush2.msra.mxu0 0.0
  %1127 = vmatprep.subr.mxu0 0.0
  %1128 = vmatpush2.msra.mxu0 0.0
  %1129 = vmatprep.subr.mxu0 0.0
  %1130 = vmatpush2.msra.mxu0 0.0
  %1131 = vmatprep.subr.mxu0 0.0
  %1132 = vmatpush2.msra.mxu0 0.0
  %1133 = vmatprep.subr.mxu0 0.0
  %1134 = vmatpush2.msra.mxu0 0.0
  %1135 = vmatprep.subr.mxu0 0.0
  %1136 = vmatpush2.msra.mxu0 0.0
  %1137 = vmatprep.subr.mxu0 0.0
  %1138 = vmatpush2.msra.mxu0 0.0
  %1139 = vmatprep.subr.mxu0 0.0
  %1140 = vmatpush2.msra.mxu0 0.0
  %1141 = vmatprep.subr.mxu0 0.0
  %1142 = vmatpush2.msra.mxu0 0.0
  %1143 = vmatprep.subr.mxu0 0.0
  %1144 = vmatpush2.msra.mxu0 0.0
  %1145 = vmatprep.subr.mxu0 0.0
  %1146 = vmatpush2.msra.mxu0 0.0
  %1147 = vmatprep.subr.mxu0 0.0
  %1148 = vmatpush2.msra.mxu0 0.0
  %1149 = vmatprep.mubr.f32.mxu0 0.0
  %1150 = vmatmul.mubr.f32.gmra.mxu0 %v1012
  %v1151 = vpop.f32.mrf.mxu0
  %v1152 = vadd.f32 0.0, %v1151
  %v1153 = vpop.f32.mrf.mxu0
  %v1154 = vadd.f32 0.0, %v1153
  %1155 = vdwg.mxu0
  %v1160 = vrot.slane %v1081, 4
  %v1161 = vrot.slane %v1083, 4
  %v1162 = vrot.slane %v1152, 4
  %v1163 = vrot.slane %v1154, 4
  %v1168 = vadd.f32 %v845, %v1160
  %v1169 = vadd.f32 %v846, %v1161
  %v1170 = vadd.f32 %v847, %v1162
  %v1171 = vadd.f32 %v848, %v1163
  %v1172 = vmul.f32 %v1006, 0.5
  %v1173 = vtanh.pop %v1172
  %v1174 = vmul.f32 %v1173, 0.5
  %v1175 = vadd.f32 %v1174, 0.5
  %v1176 = vmul.f32 %v1007, 0.5
  %v1177 = vtanh.pop %v1176
  %v1178 = vmul.f32 %v1177, 0.5
  %v1179 = vadd.f32 %v1178, 0.5
  %v1180 = vtanh.pop %v1008
  %v1181 = vmul.f32 %v1009, 0.5
  %v1182 = vtanh.pop %v1181
  %v1183 = vmul.f32 %v1182, 0.5
  %v1184 = vadd.f32 %v1183, 0.5
  %v1186 = vrot.slane %v816, 6
  %v1188 = vmul.f32 %v1179, %v1186
  %v1189 = vmul.f32 %v1175, %v1180
  %v1190 = vadd.f32 %v1188, %v1189
  %v1191 = vtanh.pop %v1190
  %v1192 = vmul.f32 %v1184, %v1191
  %v1193 = vmul.f32 %v1168, 0.5
  %v1194 = vtanh.pop %v1193
  %v1195 = vmul.f32 %v1194, 0.5
  %v1196 = vadd.f32 %v1195, 0.5
  %v1197 = vmul.f32 %v1169, 0.5
  %v1198 = vtanh.pop %v1197
  %v1199 = vmul.f32 %v1198, 0.5
  %v1200 = vadd.f32 %v1199, 0.5
  %v1201 = vtanh.pop %v1170
  %v1202 = vmul.f32 %v1171, 0.5
  %v1203 = vtanh.pop %v1202
  %v1204 = vmul.f32 %v1203, 0.5
  %v1205 = vadd.f32 %v1204, 0.5
  %v1207 = vrot.slane %v834, 2
  %v1209 = vmul.f32 %v1200, %v1207
  %v1210 = vmul.f32 %v1196, %v1201
  %v1211 = vadd.f32 %v1209, %v1210
  %v1212 = vtanh.pop %v1211
  %v1213 = vmul.f32 %v1205, %v1212
  %vm1214 = vcmask 257026
  %1215 = vst.msk [vmem:[#allocation3] sm:$0xc] %vm1214, %v1192
  %vm1216 = vcmask 259076
  %1217 = vst.msk [vmem:[#allocation3 + $0x18] sm:$0x30] %vm1216, %v1213
  %v1218 = vld [vmem:[#allocation2] sm:$0x30]
  %v1219 = vld [vmem:[#allocation2 + $0x8] sm:$0x30]
  %v1220 = vld [vmem:[#allocation2 + $0x10] sm:$0x30]
  %v1221 = vld [vmem:[#allocation2 + $0x18] sm:$0x30]
  %v1222 = vld [vmem:[#allocation2 + $0x60] sm:$0xc]
  %v1223 = vld [vmem:[#allocation2 + $0x68] sm:$0xc]
  %v1224 = vld [vmem:[#allocation2 + $0x70] sm:$0xc]
  %v1225 = vld [vmem:[#allocation2 + $0x78] sm:$0xc]
  %v1227 = vrot.slane %v1192, 2
  %v1228 = vsel %vm123, %v1227, 0
  %1230 = vmatprep.subr.mxu0 0.0
  %1231 = vmatpush1.msra.mxu0 0.0
  %1232 = vmatprep.subr.mxu0 0.0
  %1233 = vmatpush1.msra.mxu0 0.0
  %1234 = vmatprep.subr.mxu0 0.0
  %1235 = vmatpush1.msra.mxu0 0.0
  %1236 = vmatprep.subr.mxu0 0.0
  %1237 = vmatpush1.msra.mxu0 0.0
  %1238 = vmatprep.subr.mxu0 0.0
  %1239 = vmatpush1.msra.mxu0 0.0
  %1240 = vmatprep.subr.mxu0 0.0
  %1241 = vmatpush1.msra.mxu0 0.0
  %1242 = vmatprep.subr.mxu0 0.0
  %1243 = vmatpush1.msra.mxu0 0.0
  %1244 = vmatprep.subr.mxu0 0.0
  %1245 = vmatpush1.msra.mxu0 0.0
  %1246 = vmatprep.subr.mxu0 0.0
  %1247 = vmatpush1.msra.mxu0 0.0
  %1248 = vmatprep.subr.mxu0 0.0
  %1249 = vmatpush1.msra.mxu0 0.0
  %1250 = vmatprep.subr.mxu0 0.0
  %1251 = vmatpush1.msra.mxu0 0.0
  %1252 = vmatprep.subr.mxu0 0.0
  %1253 = vmatpush1.msra.mxu0 0.0
  %1254 = vmatprep.subr.mxu0 %v467
  %1255 = vmatpush1.msra.mxu0 %v466
  %1256 = vmatprep.subr.mxu0 %v463
  %1257 = vmatpush1.msra.mxu0 %v462
  %1258 = vmatprep.subr.mxu0 %v459
  %1259 = vmatpush1.msra.mxu0 %v458
  %1260 = vmatprep.subr.mxu0 %v455
  %1261 = vmatpush1.msra.mxu0 %v454
  %1262 = vmatprep.subr.mxu0 0.0
  %1263 = vmatpush2.msra.mxu0 0.0
  %1264 = vmatprep.subr.mxu0 0.0
  %1265 = vmatpush2.msra.mxu0 0.0
  %1266 = vmatprep.subr.mxu0 0.0
  %1267 = vmatpush2.msra.mxu0 0.0
  %1268 = vmatprep.subr.mxu0 0.0
  %1269 = vmatpush2.msra.mxu0 0.0
  %1270 = vmatprep.subr.mxu0 0.0
  %1271 = vmatpush2.msra.mxu0 0.0
  %1272 = vmatprep.subr.mxu0 0.0
  %1273 = vmatpush2.msra.mxu0 0.0
  %1274 = vmatprep.subr.mxu0 0.0
  %1275 = vmatpush2.msra.mxu0 0.0
  %1276 = vmatprep.subr.mxu0 0.0
  %1277 = vmatpush2.msra.mxu0 0.0
  %1278 = vmatprep.subr.mxu0 0.0
  %1279 = vmatpush2.msra.mxu0 0.0
  %1280 = vmatprep.subr.mxu0 0.0
  %1281 = vmatpush2.msra.mxu0 0.0
  %1282 = vmatprep.subr.mxu0 0.0
  %1283 = vmatpush2.msra.mxu0 0.0
  %1284 = vmatprep.subr.mxu0 0.0
  %1285 = vmatpush2.msra.mxu0 0.0
  %1286 = vmatprep.subr.mxu0 0.0
  %1287 = vmatpush2.msra.mxu0 0.0
  %1288 = vmatprep.subr.mxu0 0.0
  %1289 = vmatpush2.msra.mxu0 0.0
  %1290 = vmatprep.subr.mxu0 0.0
  %1291 = vmatpush2.msra.mxu0 0.0
  %1292 = vmatprep.subr.mxu0 0.0
  %1293 = vmatpush2.msra.mxu0 0.0
  %1294 = vmatprep.mubr.f32.mxu0 0.0
  %1295 = vmatmul.mubr.f32.gmra.mxu0 %v1228
  %v1296 = vpop.f32.mrf.mxu0
  %v1297 = vadd.f32 0.0, %v1296
  %v1298 = vpop.f32.mrf.mxu0
  %v1299 = vadd.f32 0.0, %v1298
  %1300 = vdwg.mxu0
  %1301 = vmatprep.subr.mxu0 0.0
  %1302 = vmatpush1.msra.mxu0 0.0
  %1303 = vmatprep.subr.mxu0 0.0
  %1304 = vmatpush1.msra.mxu0 0.0
  %1305 = vmatprep.subr.mxu0 0.0
  %1306 = vmatpush1.msra.mxu0 0.0
  %1307 = vmatprep.subr.mxu0 0.0
  %1308 = vmatpush1.msra.mxu0 0.0
  %1309 = vmatprep.subr.mxu0 0.0
  %1310 = vmatpush1.msra.mxu0 0.0
  %1311 = vmatprep.subr.mxu0 0.0
  %1312 = vmatpush1.msra.mxu0 0.0
  %1313 = vmatprep.subr.mxu0 0.0
  %1314 = vmatpush1.msra.mxu0 0.0
  %1315 = vmatprep.subr.mxu0 0.0
  %1316 = vmatpush1.msra.mxu0 0.0
  %1317 = vmatprep.subr.mxu0 0.0
  %1318 = vmatpush1.msra.mxu0 0.0
  %1319 = vmatprep.subr.mxu0 0.0
  %1320 = vmatpush1.msra.mxu0 0.0
  %1321 = vmatprep.subr.mxu0 0.0
  %1322 = vmatpush1.msra.mxu0 0.0
  %1323 = vmatprep.subr.mxu0 0.0
  %1324 = vmatpush1.msra.mxu0 0.0
  %1325 = vmatprep.subr.mxu0 %v469
  %1326 = vmatpush1.msra.mxu0 %v468
  %1327 = vmatprep.subr.mxu0 %v465
  %1328 = vmatpush1.msra.mxu0 %v464
  %1329 = vmatprep.subr.mxu0 %v461
  %1330 = vmatpush1.msra.mxu0 %v460
  %1331 = vmatprep.subr.mxu0 %v457
  %1332 = vmatpush1.msra.mxu0 %v456
  %1333 = vmatprep.subr.mxu0 0.0
  %1334 = vmatpush2.msra.mxu0 0.0
  %1335 = vmatprep.subr.mxu0 0.0
  %1336 = vmatpush2.msra.mxu0 0.0
  %1337 = vmatprep.subr.mxu0 0.0
  %1338 = vmatpush2.msra.mxu0 0.0
  %1339 = vmatprep.subr.mxu0 0.0
  %1340 = vmatpush2.msra.mxu0 0.0
  %1341 = vmatprep.subr.mxu0 0.0
  %1342 = vmatpush2.msra.mxu0 0.0
  %1343 = vmatprep.subr.mxu0 0.0
  %1344 = vmatpush2.msra.mxu0 0.0
  %1345 = vmatprep.subr.mxu0 0.0
  %1346 = vmatpush2.msra.mxu0 0.0
  %1347 = vmatprep.subr.mxu0 0.0
  %1348 = vmatpush2.msra.mxu0 0.0
  %1349 = vmatprep.subr.mxu0 0.0
  %1350 = vmatpush2.msra.mxu0 0.0
  %1351 = vmatprep.subr.mxu0 0.0
  %1352 = vmatpush2.msra.mxu0 0.0
  %1353 = vmatprep.subr.mxu0 0.0
  %1354 = vmatpush2.msra.mxu0 0.0
  %1355 = vmatprep.subr.mxu0 0.0
  %1356 = vmatpush2.msra.mxu0 0.0
  %1357 = vmatprep.subr.mxu0 0.0
  %1358 = vmatpush2.msra.mxu0 0.0
  %1359 = vmatprep.subr.mxu0 0.0
  %1360 = vmatpush2.msra.mxu0 0.0
  %1361 = vmatprep.subr.mxu0 0.0
  %1362 = vmatpush2.msra.mxu0 0.0
  %1363 = vmatprep.subr.mxu0 0.0
  %1364 = vmatpush2.msra.mxu0 0.0
  %1365 = vmatprep.mubr.f32.mxu0 0.0
  %1366 = vmatmul.mubr.f32.gmra.mxu0 %v1228
  %v1367 = vpop.f32.mrf.mxu0
  %v1368 = vadd.f32 0.0, %v1367
  %v1369 = vpop.f32.mrf.mxu0
  %v1370 = vadd.f32 0.0, %v1369
  %1371 = vdwg.mxu0
  %v1376 = vrot.slane %v1297, 4
  %v1377 = vrot.slane %v1299, 4
  %v1378 = vrot.slane %v1368, 4
  %v1379 = vrot.slane %v1370, 4
  %v1384 = vadd.f32 %v1218, %v1376
  %v1385 = vadd.f32 %v1219, %v1377
  %v1386 = vadd.f32 %v1220, %v1378
  %v1387 = vadd.f32 %v1221, %v1379
  %v1389 = vrot.slane %v1213, 4
  %v1390 = vsel %vm123, %v1389, 0
  %1392 = vmatprep.subr.mxu0 0.0
  %1393 = vmatpush1.msra.mxu0 0.0
  %1394 = vmatprep.subr.mxu0 0.0
  %1395 = vmatpush1.msra.mxu0 0.0
  %1396 = vmatprep.subr.mxu0 0.0
  %1397 = vmatpush1.msra.mxu0 0.0
  %1398 = vmatprep.subr.mxu0 0.0
  %1399 = vmatpush1.msra.mxu0 0.0
  %1400 = vmatprep.subr.mxu0 0.0
  %1401 = vmatpush1.msra.mxu0 0.0
  %1402 = vmatprep.subr.mxu0 0.0
  %1403 = vmatpush1.msra.mxu0 0.0
  %1404 = vmatprep.subr.mxu0 0.0
  %1405 = vmatpush1.msra.mxu0 0.0
  %1406 = vmatprep.subr.mxu0 0.0
  %1407 = vmatpush1.msra.mxu0 0.0
  %1408 = vmatprep.subr.mxu0 0.0
  %1409 = vmatpush1.msra.mxu0 0.0
  %1410 = vmatprep.subr.mxu0 0.0
  %1411 = vmatpush1.msra.mxu0 0.0
  %1412 = vmatprep.subr.mxu0 0.0
  %1413 = vmatpush1.msra.mxu0 0.0
  %1414 = vmatprep.subr.mxu0 0.0
  %1415 = vmatpush1.msra.mxu0 0.0
  %1416 = vmatprep.subr.mxu0 %v483
  %1417 = vmatpush1.msra.mxu0 %v482
  %1418 = vmatprep.subr.mxu0 %v479
  %1419 = vmatpush1.msra.mxu0 %v478
  %1420 = vmatprep.subr.mxu0 %v475
  %1421 = vmatpush1.msra.mxu0 %v474
  %1422 = vmatprep.subr.mxu0 %v471
  %1423 = vmatpush1.msra.mxu0 %v470
  %1424 = vmatprep.subr.mxu0 0.0
  %1425 = vmatpush2.msra.mxu0 0.0
  %1426 = vmatprep.subr.mxu0 0.0
  %1427 = vmatpush2.msra.mxu0 0.0
  %1428 = vmatprep.subr.mxu0 0.0
  %1429 = vmatpush2.msra.mxu0 0.0
  %1430 = vmatprep.subr.mxu0 0.0
  %1431 = vmatpush2.msra.mxu0 0.0
  %1432 = vmatprep.subr.mxu0 0.0
  %1433 = vmatpush2.msra.mxu0 0.0
  %1434 = vmatprep.subr.mxu0 0.0
  %1435 = vmatpush2.msra.mxu0 0.0
  %1436 = vmatprep.subr.mxu0 0.0
  %1437 = vmatpush2.msra.mxu0 0.0
  %1438 = vmatprep.subr.mxu0 0.0
  %1439 = vmatpush2.msra.mxu0 0.0
  %1440 = vmatprep.subr.mxu0 0.0
  %1441 = vmatpush2.msra.mxu0 0.0
  %1442 = vmatprep.subr.mxu0 0.0
  %1443 = vmatpush2.msra.mxu0 0.0
  %1444 = vmatprep.subr.mxu0 0.0
  %1445 = vmatpush2.msra.mxu0 0.0
  %1446 = vmatprep.subr.mxu0 0.0
  %1447 = vmatpush2.msra.mxu0 0.0
  %1448 = vmatprep.subr.mxu0 0.0
  %1449 = vmatpush2.msra.mxu0 0.0
  %1450 = vmatprep.subr.mxu0 0.0
  %1451 = vmatpush2.msra.mxu0 0.0
  %1452 = vmatprep.subr.mxu0 0.0
  %1453 = vmatpush2.msra.mxu0 0.0
  %1454 = vmatprep.subr.mxu0 0.0
  %1455 = vmatpush2.msra.mxu0 0.0
  %1456 = vmatprep.mubr.f32.mxu0 0.0
  %1457 = vmatmul.mubr.f32.gmra.mxu0 %v1390
  %v1458 = vpop.f32.mrf.mxu0
  %v1459 = vadd.f32 0.0, %v1458
  %v1460 = vpop.f32.mrf.mxu0
  %v1461 = vadd.f32 0.0, %v1460
  %1462 = vdwg.mxu0
  %1463 = vmatprep.subr.mxu0 0.0
  %1464 = vmatpush1.msra.mxu0 0.0
  %1465 = vmatprep.subr.mxu0 0.0
  %1466 = vmatpush1.msra.mxu0 0.0
  %1467 = vmatprep.subr.mxu0 0.0
  %1468 = vmatpush1.msra.mxu0 0.0
  %1469 = vmatprep.subr.mxu0 0.0
  %1470 = vmatpush1.msra.mxu0 0.0
  %1471 = vmatprep.subr.mxu0 0.0
  %1472 = vmatpush1.msra.mxu0 0.0
  %1473 = vmatprep.subr.mxu0 0.0
  %1474 = vmatpush1.msra.mxu0 0.0
  %1475 = vmatprep.subr.mxu0 0.0
  %1476 = vmatpush1.msra.mxu0 0.0
  %1477 = vmatprep.subr.mxu0 0.0
  %1478 = vmatpush1.msra.mxu0 0.0
  %1479 = vmatprep.subr.mxu0 0.0
  %1480 = vmatpush1.msra.mxu0 0.0
  %1481 = vmatprep.subr.mxu0 0.0
  %1482 = vmatpush1.msra.mxu0 0.0
  %1483 = vmatprep.subr.mxu0 0.0
  %1484 = vmatpush1.msra.mxu0 0.0
  %1485 = vmatprep.subr.mxu0 0.0
  %1486 = vmatpush1.msra.mxu0 0.0
  %1487 = vmatprep.subr.mxu0 %v485
  %1488 = vmatpush1.msra.mxu0 %v484
  %1489 = vmatprep.subr.mxu0 %v481
  %1490 = vmatpush1.msra.mxu0 %v480
  %1491 = vmatprep.subr.mxu0 %v477
  %1492 = vmatpush1.msra.mxu0 %v476
  %1493 = vmatprep.subr.mxu0 %v473
  %1494 = vmatpush1.msra.mxu0 %v472
  %1495 = vmatprep.subr.mxu0 0.0
  %1496 = vmatpush2.msra.mxu0 0.0
  %1497 = vmatprep.subr.mxu0 0.0
  %1498 = vmatpush2.msra.mxu0 0.0
  %1499 = vmatprep.subr.mxu0 0.0
  %1500 = vmatpush2.msra.mxu0 0.0
  %1501 = vmatprep.subr.mxu0 0.0
  %1502 = vmatpush2.msra.mxu0 0.0
  %1503 = vmatprep.subr.mxu0 0.0
  %1504 = vmatpush2.msra.mxu0 0.0
  %1505 = vmatprep.subr.mxu0 0.0
  %1506 = vmatpush2.msra.mxu0 0.0
  %1507 = vmatprep.subr.mxu0 0.0
  %1508 = vmatpush2.msra.mxu0 0.0
  %1509 = vmatprep.subr.mxu0 0.0
  %1510 = vmatpush2.msra.mxu0 0.0
  %1511 = vmatprep.subr.mxu0 0.0
  %1512 = vmatpush2.msra.mxu0 0.0
  %1513 = vmatprep.subr.mxu0 0.0
  %1514 = vmatpush2.msra.mxu0 0.0
  %1515 = vmatprep.subr.mxu0 0.0
  %1516 = vmatpush2.msra.mxu0 0.0
  %1517 = vmatprep.subr.mxu0 0.0
  %1518 = vmatpush2.msra.mxu0 0.0
  %1519 = vmatprep.subr.mxu0 0.0
  %1520 = vmatpush2.msra.mxu0 0.0
  %1521 = vmatprep.subr.mxu0 0.0
  %1522 = vmatpush2.msra.mxu0 0.0
  %1523 = vmatprep.subr.mxu0 0.0
  %1524 = vmatpush2.msra.mxu0 0.0
  %1525 = vmatprep.subr.mxu0 0.0
  %1526 = vmatpush2.msra.mxu0 0.0
  %1527 = vmatprep.mubr.f32.mxu0 0.0
  %1528 = vmatmul.mubr.f32.gmra.mxu0 %v1390
  %v1529 = vpop.f32.mrf.mxu0
  %v1530 = vadd.f32 0.0, %v1529
  %v1531 = vpop.f32.mrf.mxu0
  %v1532 = vadd.f32 0.0, %v1531
  %1533 = vdwg.mxu0
  %v1538 = vrot.slane %v1459, 6
  %v1539 = vrot.slane %v1461, 6
  %v1540 = vrot.slane %v1530, 6
  %v1541 = vrot.slane %v1532, 6
  %v1546 = vadd.f32 %v1222, %v1538
  %v1547 = vadd.f32 %v1223, %v1539
  %v1548 = vadd.f32 %v1224, %v1540
  %v1549 = vadd.f32 %v1225, %v1541
  %v1550 = vmul.f32 %v1384, 0.5
  %v1551 = vtanh.pop %v1550
  %v1552 = vmul.f32 %v1551, 0.5
  %v1553 = vadd.f32 %v1552, 0.5
  %v1554 = vmul.f32 %v1385, 0.5
  %v1555 = vtanh.pop %v1554
  %v1556 = vmul.f32 %v1555, 0.5
  %v1557 = vadd.f32 %v1556, 0.5
  %v1558 = vtanh.pop %v1386
  %v1559 = vmul.f32 %v1387, 0.5
  %v1560 = vtanh.pop %v1559
  %v1561 = vmul.f32 %v1560, 0.5
  %v1562 = vadd.f32 %v1561, 0.5
  %v1564 = vrot.slane %v1190, 6
  %v1566 = vmul.f32 %v1557, %v1564
  %v1567 = vmul.f32 %v1553, %v1558
  %v1568 = vadd.f32 %v1566, %v1567
  %v1569 = vtanh.pop %v1568
  %v1570 = vmul.f32 %v1562, %v1569
  %v1571 = vmul.f32 %v1546, 0.5
  %v1572 = vtanh.pop %v1571
  %v1573 = vmul.f32 %v1572, 0.5
  %v1574 = vadd.f32 %v1573, 0.5
  %v1575 = vmul.f32 %v1547, 0.5
  %v1576 = vtanh.pop %v1575
  %v1577 = vmul.f32 %v1576, 0.5
  %v1578 = vadd.f32 %v1577, 0.5
  %v1579 = vtanh.pop %v1548
  %v1580 = vmul.f32 %v1549, 0.5
  %v1581 = vtanh.pop %v1580
  %v1582 = vmul.f32 %v1581, 0.5
  %v1583 = vadd.f32 %v1582, 0.5
  %v1585 = vrot.slane %v1211, 2
  %v1587 = vmul.f32 %v1578, %v1585
  %v1588 = vmul.f32 %v1574, %v1579
  %v1589 = vadd.f32 %v1587, %v1588
  %v1590 = vtanh.pop %v1589
  %v1591 = vmul.f32 %v1583, %v1590
  %1592 = vst.msk [vmem:[#allocation3] sm:$0x30] %vm1216, %v1570
  %1593 = vst.msk [vmem:[#allocation3 + $0x18] sm:$0xc] %vm1214, %v1591
  %v1594 = vld [vmem:[#allocation2] sm:$0xc0]
  %v1595 = vld [vmem:[#allocation2 + $0x8] sm:$0xc0]
  %v1596 = vld [vmem:[#allocation2 + $0x10] sm:$0xc0]
  %v1597 = vld [vmem:[#allocation2 + $0x18] sm:$0xc0]
  %v1598 = vld [vmem:[#allocation2 + $0x60] sm:$0x3]
  %v1599 = vld [vmem:[#allocation2 + $0x68] sm:$0x3]
  %v1600 = vld [vmem:[#allocation2 + $0x70] sm:$0x3]
  %v1601 = vld [vmem:[#allocation2 + $0x78] sm:$0x3]
  %v1603 = vrot.slane %v1570, 4
  %v1604 = vsel %vm123, %v1603, 0
  %1606 = vmatprep.subr.mxu0 0.0
  %1607 = vmatpush1.msra.mxu0 0.0
  %1608 = vmatprep.subr.mxu0 0.0
  %1609 = vmatpush1.msra.mxu0 0.0
  %1610 = vmatprep.subr.mxu0 0.0
  %1611 = vmatpush1.msra.mxu0 0.0
  %1612 = vmatprep.subr.mxu0 0.0
  %1613 = vmatpush1.msra.mxu0 0.0
  %1614 = vmatprep.subr.mxu0 0.0
  %1615 = vmatpush1.msra.mxu0 0.0
  %1616 = vmatprep.subr.mxu0 0.0
  %1617 = vmatpush1.msra.mxu0 0.0
  %1618 = vmatprep.subr.mxu0 0.0
  %1619 = vmatpush1.msra.mxu0 0.0
  %1620 = vmatprep.subr.mxu0 0.0
  %1621 = vmatpush1.msra.mxu0 0.0
  %1622 = vmatprep.subr.mxu0 0.0
  %1623 = vmatpush1.msra.mxu0 0.0
  %1624 = vmatprep.subr.mxu0 0.0
  %1625 = vmatpush1.msra.mxu0 0.0
  %1626 = vmatprep.subr.mxu0 0.0
  %1627 = vmatpush1.msra.mxu0 0.0
  %1628 = vmatprep.subr.mxu0 0.0
  %1629 = vmatpush1.msra.mxu0 0.0
  %1630 = vmatprep.subr.mxu0 %v467
  %1631 = vmatpush1.msra.mxu0 %v466
  %1632 = vmatprep.subr.mxu0 %v463
  %1633 = vmatpush1.msra.mxu0 %v462
  %1634 = vmatprep.subr.mxu0 %v459
  %1635 = vmatpush1.msra.mxu0 %v458
  %1636 = vmatprep.subr.mxu0 %v455
  %1637 = vmatpush1.msra.mxu0 %v454
  %1638 = vmatprep.subr.mxu0 0.0
  %1639 = vmatpush2.msra.mxu0 0.0
  %1640 = vmatprep.subr.mxu0 0.0
  %1641 = vmatpush2.msra.mxu0 0.0
  %1642 = vmatprep.subr.mxu0 0.0
  %1643 = vmatpush2.msra.mxu0 0.0
  %1644 = vmatprep.subr.mxu0 0.0
  %1645 = vmatpush2.msra.mxu0 0.0
  %1646 = vmatprep.subr.mxu0 0.0
  %1647 = vmatpush2.msra.mxu0 0.0
  %1648 = vmatprep.subr.mxu0 0.0
  %1649 = vmatpush2.msra.mxu0 0.0
  %1650 = vmatprep.subr.mxu0 0.0
  %1651 = vmatpush2.msra.mxu0 0.0
  %1652 = vmatprep.subr.mxu0 0.0
  %1653 = vmatpush2.msra.mxu0 0.0
  %1654 = vmatprep.subr.mxu0 0.0
  %1655 = vmatpush2.msra.mxu0 0.0
  %1656 = vmatprep.subr.mxu0 0.0
  %1657 = vmatpush2.msra.mxu0 0.0
  %1658 = vmatprep.subr.mxu0 0.0
  %1659 = vmatpush2.msra.mxu0 0.0
  %1660 = vmatprep.subr.mxu0 0.0
  %1661 = vmatpush2.msra.mxu0 0.0
  %1662 = vmatprep.subr.mxu0 0.0
  %1663 = vmatpush2.msra.mxu0 0.0
  %1664 = vmatprep.subr.mxu0 0.0
  %1665 = vmatpush2.msra.mxu0 0.0
  %1666 = vmatprep.subr.mxu0 0.0
  %1667 = vmatpush2.msra.mxu0 0.0
  %1668 = vmatprep.subr.mxu0 0.0
  %1669 = vmatpush2.msra.mxu0 0.0
  %1670 = vmatprep.mubr.f32.mxu0 0.0
  %1671 = vmatmul.mubr.f32.gmra.mxu0 %v1604
  %v1672 = vpop.f32.mrf.mxu0
  %v1673 = vadd.f32 0.0, %v1672
  %v1674 = vpop.f32.mrf.mxu0
  %v1675 = vadd.f32 0.0, %v1674
  %1676 = vdwg.mxu0
  %1677 = vmatprep.subr.mxu0 0.0
  %1678 = vmatpush1.msra.mxu0 0.0
  %1679 = vmatprep.subr.mxu0 0.0
  %1680 = vmatpush1.msra.mxu0 0.0
  %1681 = vmatprep.subr.mxu0 0.0
  %1682 = vmatpush1.msra.mxu0 0.0
  %1683 = vmatprep.subr.mxu0 0.0
  %1684 = vmatpush1.msra.mxu0 0.0
  %1685 = vmatprep.subr.mxu0 0.0
  %1686 = vmatpush1.msra.mxu0 0.0
  %1687 = vmatprep.subr.mxu0 0.0
  %1688 = vmatpush1.msra.mxu0 0.0
  %1689 = vmatprep.subr.mxu0 0.0
  %1690 = vmatpush1.msra.mxu0 0.0
  %1691 = vmatprep.subr.mxu0 0.0
  %1692 = vmatpush1.msra.mxu0 0.0
  %1693 = vmatprep.subr.mxu0 0.0
  %1694 = vmatpush1.msra.mxu0 0.0
  %1695 = vmatprep.subr.mxu0 0.0
  %1696 = vmatpush1.msra.mxu0 0.0
  %1697 = vmatprep.subr.mxu0 0.0
  %1698 = vmatpush1.msra.mxu0 0.0
  %1699 = vmatprep.subr.mxu0 0.0
  %1700 = vmatpush1.msra.mxu0 0.0
  %1701 = vmatprep.subr.mxu0 %v469
  %1702 = vmatpush1.msra.mxu0 %v468
  %1703 = vmatprep.subr.mxu0 %v465
  %1704 = vmatpush1.msra.mxu0 %v464
  %1705 = vmatprep.subr.mxu0 %v461
  %1706 = vmatpush1.msra.mxu0 %v460
  %1707 = vmatprep.subr.mxu0 %v457
  %1708 = vmatpush1.msra.mxu0 %v456
  %1709 = vmatprep.subr.mxu0 0.0
  %1710 = vmatpush2.msra.mxu0 0.0
  %1711 = vmatprep.subr.mxu0 0.0
  %1712 = vmatpush2.msra.mxu0 0.0
  %1713 = vmatprep.subr.mxu0 0.0
  %1714 = vmatpush2.msra.mxu0 0.0
  %1715 = vmatprep.subr.mxu0 0.0
  %1716 = vmatpush2.msra.mxu0 0.0
  %1717 = vmatprep.subr.mxu0 0.0
  %1718 = vmatpush2.msra.mxu0 0.0
  %1719 = vmatprep.subr.mxu0 0.0
  %1720 = vmatpush2.msra.mxu0 0.0
  %1721 = vmatprep.subr.mxu0 0.0
  %1722 = vmatpush2.msra.mxu0 0.0
  %1723 = vmatprep.subr.mxu0 0.0
  %1724 = vmatpush2.msra.mxu0 0.0
  %1725 = vmatprep.subr.mxu0 0.0
  %1726 = vmatpush2.msra.mxu0 0.0
  %1727 = vmatprep.subr.mxu0 0.0
  %1728 = vmatpush2.msra.mxu0 0.0
  %1729 = vmatprep.subr.mxu0 0.0
  %1730 = vmatpush2.msra.mxu0 0.0
  %1731 = vmatprep.subr.mxu0 0.0
  %1732 = vmatpush2.msra.mxu0 0.0
  %1733 = vmatprep.subr.mxu0 0.0
  %1734 = vmatpush2.msra.mxu0 0.0
  %1735 = vmatprep.subr.mxu0 0.0
  %1736 = vmatpush2.msra.mxu0 0.0
  %1737 = vmatprep.subr.mxu0 0.0
  %1738 = vmatpush2.msra.mxu0 0.0
  %1739 = vmatprep.subr.mxu0 0.0
  %1740 = vmatpush2.msra.mxu0 0.0
  %1741 = vmatprep.mubr.f32.mxu0 0.0
  %1742 = vmatmul.mubr.f32.gmra.mxu0 %v1604
  %v1743 = vpop.f32.mrf.mxu0
  %v1744 = vadd.f32 0.0, %v1743
  %v1745 = vpop.f32.mrf.mxu0
  %v1746 = vadd.f32 0.0, %v1745
  %1747 = vdwg.mxu0
  %v1752 = vrot.slane %v1673, 2
  %v1753 = vrot.slane %v1675, 2
  %v1754 = vrot.slane %v1744, 2
  %v1755 = vrot.slane %v1746, 2
  %v1760 = vadd.f32 %v1594, %v1752
  %v1761 = vadd.f32 %v1595, %v1753
  %v1762 = vadd.f32 %v1596, %v1754
  %v1763 = vadd.f32 %v1597, %v1755
  %v1765 = vrot.slane %v1591, 2
  %v1766 = vsel %vm123, %v1765, 0
  %1768 = vmatprep.subr.mxu0 0.0
  %1769 = vmatpush1.msra.mxu0 0.0
  %1770 = vmatprep.subr.mxu0 0.0
  %1771 = vmatpush1.msra.mxu0 0.0
  %1772 = vmatprep.subr.mxu0 0.0
  %1773 = vmatpush1.msra.mxu0 0.0
  %1774 = vmatprep.subr.mxu0 0.0
  %1775 = vmatpush1.msra.mxu0 0.0
  %1776 = vmatprep.subr.mxu0 0.0
  %1777 = vmatpush1.msra.mxu0 0.0
  %1778 = vmatprep.subr.mxu0 0.0
  %1779 = vmatpush1.msra.mxu0 0.0
  %1780 = vmatprep.subr.mxu0 0.0
  %1781 = vmatpush1.msra.mxu0 0.0
  %1782 = vmatprep.subr.mxu0 0.0
  %1783 = vmatpush1.msra.mxu0 0.0
  %1784 = vmatprep.subr.mxu0 0.0
  %1785 = vmatpush1.msra.mxu0 0.0
  %1786 = vmatprep.subr.mxu0 0.0
  %1787 = vmatpush1.msra.mxu0 0.0
  %1788 = vmatprep.subr.mxu0 0.0
  %1789 = vmatpush1.msra.mxu0 0.0
  %1790 = vmatprep.subr.mxu0 0.0
  %1791 = vmatpush1.msra.mxu0 0.0
  %1792 = vmatprep.subr.mxu0 %v483
  %1793 = vmatpush1.msra.mxu0 %v482
  %1794 = vmatprep.subr.mxu0 %v479
  %1795 = vmatpush1.msra.mxu0 %v478
  %1796 = vmatprep.subr.mxu0 %v475
  %1797 = vmatpush1.msra.mxu0 %v474
  %1798 = vmatprep.subr.mxu0 %v471
  %1799 = vmatpush1.msra.mxu0 %v470
  %1800 = vmatprep.subr.mxu0 0.0
  %1801 = vmatpush2.msra.mxu0 0.0
  %1802 = vmatprep.subr.mxu0 0.0
  %1803 = vmatpush2.msra.mxu0 0.0
  %1804 = vmatprep.subr.mxu0 0.0
  %1805 = vmatpush2.msra.mxu0 0.0
  %1806 = vmatprep.subr.mxu0 0.0
  %1807 = vmatpush2.msra.mxu0 0.0
  %1808 = vmatprep.subr.mxu0 0.0
  %1809 = vmatpush2.msra.mxu0 0.0
  %1810 = vmatprep.subr.mxu0 0.0
  %1811 = vmatpush2.msra.mxu0 0.0
  %1812 = vmatprep.subr.mxu0 0.0
  %1813 = vmatpush2.msra.mxu0 0.0
  %1814 = vmatprep.subr.mxu0 0.0
  %1815 = vmatpush2.msra.mxu0 0.0
  %1816 = vmatprep.subr.mxu0 0.0
  %1817 = vmatpush2.msra.mxu0 0.0
  %1818 = vmatprep.subr.mxu0 0.0
  %1819 = vmatpush2.msra.mxu0 0.0
  %1820 = vmatprep.subr.mxu0 0.0
  %1821 = vmatpush2.msra.mxu0 0.0
  %1822 = vmatprep.subr.mxu0 0.0
  %1823 = vmatpush2.msra.mxu0 0.0
  %1824 = vmatprep.subr.mxu0 0.0
  %1825 = vmatpush2.msra.mxu0 0.0
  %1826 = vmatprep.subr.mxu0 0.0
  %1827 = vmatpush2.msra.mxu0 0.0
  %1828 = vmatprep.subr.mxu0 0.0
  %1829 = vmatpush2.msra.mxu0 0.0
  %1830 = vmatprep.subr.mxu0 0.0
  %1831 = vmatpush2.msra.mxu0 0.0
  %1832 = vmatprep.mubr.f32.mxu0 0.0
  %1833 = vmatmul.mubr.f32.gmra.mxu0 %v1766
  %v1834 = vpop.f32.mrf.mxu0
  %v1835 = vadd.f32 0.0, %v1834
  %v1836 = vpop.f32.mrf.mxu0
  %v1837 = vadd.f32 0.0, %v1836
  %1838 = vdwg.mxu0
  %1839 = vmatprep.subr.mxu0 0.0
  %1840 = vmatpush1.msra.mxu0 0.0
  %1841 = vmatprep.subr.mxu0 0.0
  %1842 = vmatpush1.msra.mxu0 0.0
  %1843 = vmatprep.subr.mxu0 0.0
  %1844 = vmatpush1.msra.mxu0 0.0
  %1845 = vmatprep.subr.mxu0 0.0
  %1846 = vmatpush1.msra.mxu0 0.0
  %1847 = vmatprep.subr.mxu0 0.0
  %1848 = vmatpush1.msra.mxu0 0.0
  %1849 = vmatprep.subr.mxu0 0.0
  %1850 = vmatpush1.msra.mxu0 0.0
  %1851 = vmatprep.subr.mxu0 0.0
  %1852 = vmatpush1.msra.mxu0 0.0
  %1853 = vmatprep.subr.mxu0 0.0
  %1854 = vmatpush1.msra.mxu0 0.0
  %1855 = vmatprep.subr.mxu0 0.0
  %1856 = vmatpush1.msra.mxu0 0.0
  %1857 = vmatprep.subr.mxu0 0.0
  %1858 = vmatpush1.msra.mxu0 0.0
  %1859 = vmatprep.subr.mxu0 0.0
  %1860 = vmatpush1.msra.mxu0 0.0
  %1861 = vmatprep.subr.mxu0 0.0
  %1862 = vmatpush1.msra.mxu0 0.0
  %1863 = vmatprep.subr.mxu0 %v485
  %1864 = vmatpush1.msra.mxu0 %v484
  %1865 = vmatprep.subr.mxu0 %v481
  %1866 = vmatpush1.msra.mxu0 %v480
  %1867 = vmatprep.subr.mxu0 %v477
  %1868 = vmatpush1.msra.mxu0 %v476
  %1869 = vmatprep.subr.mxu0 %v473
  %1870 = vmatpush1.msra.mxu0 %v472
  %1871 = vmatprep.subr.mxu0 0.0
  %1872 = vmatpush2.msra.mxu0 0.0
  %1873 = vmatprep.subr.mxu0 0.0
  %1874 = vmatpush2.msra.mxu0 0.0
  %1875 = vmatprep.subr.mxu0 0.0
  %1876 = vmatpush2.msra.mxu0 0.0
  %1877 = vmatprep.subr.mxu0 0.0
  %1878 = vmatpush2.msra.mxu0 0.0
  %1879 = vmatprep.subr.mxu0 0.0
  %1880 = vmatpush2.msra.mxu0 0.0
  %1881 = vmatprep.subr.mxu0 0.0
  %1882 = vmatpush2.msra.mxu0 0.0
  %1883 = vmatprep.subr.mxu0 0.0
  %1884 = vmatpush2.msra.mxu0 0.0
  %1885 = vmatprep.subr.mxu0 0.0
  %1886 = vmatpush2.msra.mxu0 0.0
  %1887 = vmatprep.subr.mxu0 0.0
  %1888 = vmatpush2.msra.mxu0 0.0
  %1889 = vmatprep.subr.mxu0 0.0
  %1890 = vmatpush2.msra.mxu0 0.0
  %1891 = vmatprep.subr.mxu0 0.0
  %1892 = vmatpush2.msra.mxu0 0.0
  %1893 = vmatprep.subr.mxu0 0.0
  %1894 = vmatpush2.msra.mxu0 0.0
  %1895 = vmatprep.subr.mxu0 0.0
  %1896 = vmatpush2.msra.mxu0 0.0
  %1897 = vmatprep.subr.mxu0 0.0
  %1898 = vmatpush2.msra.mxu0 0.0
  %1899 = vmatprep.subr.mxu0 0.0
  %1900 = vmatpush2.msra.mxu0 0.0
  %1901 = vmatprep.subr.mxu0 0.0
  %1902 = vmatpush2.msra.mxu0 0.0
  %1903 = vmatprep.mubr.f32.mxu0 0.0
  %1904 = vmatmul.mubr.f32.gmra.mxu0 %v1766
  %v1905 = vpop.f32.mrf.mxu0
  %v1906 = vadd.f32 0.0, %v1905
  %v1907 = vpop.f32.mrf.mxu0
  %v1908 = vadd.f32 0.0, %v1907
  %1909 = vdwg.mxu0
  %v1910 = vadd.f32 %v1598, %v1835
  %v1911 = vadd.f32 %v1599, %v1837
  %v1912 = vadd.f32 %v1600, %v1906
  %v1913 = vadd.f32 %v1601, %v1908
  %v1914 = vmul.f32 %v1760, 0.5
  %v1915 = vtanh.pop %v1914
  %v1916 = vmul.f32 %v1915, 0.5
  %v1917 = vadd.f32 %v1916, 0.5
  %v1918 = vmul.f32 %v1761, 0.5
  %v1919 = vtanh.pop %v1918
  %v1920 = vmul.f32 %v1919, 0.5
  %v1921 = vadd.f32 %v1920, 0.5
  %v1922 = vtanh.pop %v1762
  %v1923 = vmul.f32 %v1763, 0.5
  %v1924 = vtanh.pop %v1923
  %v1925 = vmul.f32 %v1924, 0.5
  %v1926 = vadd.f32 %v1925, 0.5
  %v1928 = vrot.slane %v1568, 6
  %v1930 = vmul.f32 %v1921, %v1928
  %v1931 = vmul.f32 %v1917, %v1922
  %v1932 = vadd.f32 %v1930, %v1931
  %v1933 = vtanh.pop %v1932
  %v1934 = vmul.f32 %v1926, %v1933
  %v1935 = vmul.f32 %v1910, 0.5
  %v1936 = vtanh.pop %v1935
  %v1937 = vmul.f32 %v1936, 0.5
  %v1938 = vadd.f32 %v1937, 0.5
  %v1939 = vmul.f32 %v1911, 0.5
  %v1940 = vtanh.pop %v1939
  %v1941 = vmul.f32 %v1940, 0.5
  %v1942 = vadd.f32 %v1941, 0.5
  %v1943 = vtanh.pop %v1912
  %v1944 = vmul.f32 %v1913, 0.5
  %v1945 = vtanh.pop %v1944
  %v1946 = vmul.f32 %v1945, 0.5
  %v1947 = vadd.f32 %v1946, 0.5
  %v1949 = vrot.slane %v1589, 2
  %v1951 = vmul.f32 %v1942, %v1949
  %v1952 = vmul.f32 %v1938, %v1943
  %v1953 = vadd.f32 %v1951, %v1952
  %v1954 = vtanh.pop %v1953
  %v1955 = vmul.f32 %v1947, %v1954
  %1956 = vst.msk [vmem:[#allocation3] sm:$0xc0] %vm839, %v1934
  %1957 = vst.msk [vmem:[#allocation3 + $0x18] sm:$0x3] %vm837, %v1955
  %v1958 = vld [vmem:[#allocation2 + $0x40] sm:$0x3]
  %v1959 = vld [vmem:[#allocation2 + $0x48] sm:$0x3]
  %v1960 = vld [vmem:[#allocation2 + $0x50] sm:$0x3]
  %v1961 = vld [vmem:[#allocation2 + $0x58] sm:$0x3]
  %v1962 = vld [vmem:[#allocation2 + $0x20] sm:$0xc0]
  %v1963 = vld [vmem:[#allocation2 + $0x28] sm:$0xc0]
  %v1964 = vld [vmem:[#allocation2 + $0x30] sm:$0xc0]
  %v1965 = vld [vmem:[#allocation2 + $0x38] sm:$0xc0]
  %v1967 = vrot.slane %v1934, 6
  %v1968 = vsel %vm123, %v1967, 0
  %1970 = vmatprep.subr.mxu0 0.0
  %1971 = vmatpush1.msra.mxu0 0.0
  %1972 = vmatprep.subr.mxu0 0.0
  %1973 = vmatpush1.msra.mxu0 0.0
  %1974 = vmatprep.subr.mxu0 0.0
  %1975 = vmatpush1.msra.mxu0 0.0
  %1976 = vmatprep.subr.mxu0 0.0
  %1977 = vmatpush1.msra.mxu0 0.0
  %1978 = vmatprep.subr.mxu0 0.0
  %1979 = vmatpush1.msra.mxu0 0.0
  %1980 = vmatprep.subr.mxu0 0.0
  %1981 = vmatpush1.msra.mxu0 0.0
  %1982 = vmatprep.subr.mxu0 0.0
  %1983 = vmatpush1.msra.mxu0 0.0
  %1984 = vmatprep.subr.mxu0 0.0
  %1985 = vmatpush1.msra.mxu0 0.0
  %1986 = vmatprep.subr.mxu0 0.0
  %1987 = vmatpush1.msra.mxu0 0.0
  %1988 = vmatprep.subr.mxu0 0.0
  %1989 = vmatpush1.msra.mxu0 0.0
  %1990 = vmatprep.subr.mxu0 0.0
  %1991 = vmatpush1.msra.mxu0 0.0
  %1992 = vmatprep.subr.mxu0 0.0
  %1993 = vmatpush1.msra.mxu0 0.0
  %1994 = vmatprep.subr.mxu0 %v467
  %1995 = vmatpush1.msra.mxu0 %v466
  %1996 = vmatprep.subr.mxu0 %v463
  %1997 = vmatpush1.msra.mxu0 %v462
  %1998 = vmatprep.subr.mxu0 %v459
  %1999 = vmatpush1.msra.mxu0 %v458
  %2000 = vmatprep.subr.mxu0 %v455
  %2001 = vmatpush1.msra.mxu0 %v454
  %2002 = vmatprep.subr.mxu0 0.0
  %2003 = vmatpush2.msra.mxu0 0.0
  %2004 = vmatprep.subr.mxu0 0.0
  %2005 = vmatpush2.msra.mxu0 0.0
  %2006 = vmatprep.subr.mxu0 0.0
  %2007 = vmatpush2.msra.mxu0 0.0
  %2008 = vmatprep.subr.mxu0 0.0
  %2009 = vmatpush2.msra.mxu0 0.0
  %2010 = vmatprep.subr.mxu0 0.0
  %2011 = vmatpush2.msra.mxu0 0.0
  %2012 = vmatprep.subr.mxu0 0.0
  %2013 = vmatpush2.msra.mxu0 0.0
  %2014 = vmatprep.subr.mxu0 0.0
  %2015 = vmatpush2.msra.mxu0 0.0
  %2016 = vmatprep.subr.mxu0 0.0
  %2017 = vmatpush2.msra.mxu0 0.0
  %2018 = vmatprep.subr.mxu0 0.0
  %2019 = vmatpush2.msra.mxu0 0.0
  %2020 = vmatprep.subr.mxu0 0.0
  %2021 = vmatpush2.msra.mxu0 0.0
  %2022 = vmatprep.subr.mxu0 0.0
  %2023 = vmatpush2.msra.mxu0 0.0
  %2024 = vmatprep.subr.mxu0 0.0
  %2025 = vmatpush2.msra.mxu0 0.0
  %2026 = vmatprep.subr.mxu0 0.0
  %2027 = vmatpush2.msra.mxu0 0.0
  %2028 = vmatprep.subr.mxu0 0.0
  %2029 = vmatpush2.msra.mxu0 0.0
  %2030 = vmatprep.subr.mxu0 0.0
  %2031 = vmatpush2.msra.mxu0 0.0
  %2032 = vmatprep.subr.mxu0 0.0
  %2033 = vmatpush2.msra.mxu0 0.0
  %2034 = vmatprep.mubr.f32.mxu0 0.0
  %2035 = vmatmul.mubr.f32.gmra.mxu0 %v1968
  %v2036 = vpop.f32.mrf.mxu0
  %v2037 = vadd.f32 0.0, %v2036
  %v2038 = vpop.f32.mrf.mxu0
  %v2039 = vadd.f32 0.0, %v2038
  %2040 = vdwg.mxu0
  %2041 = vmatprep.subr.mxu0 0.0
  %2042 = vmatpush1.msra.mxu0 0.0
  %2043 = vmatprep.subr.mxu0 0.0
  %2044 = vmatpush1.msra.mxu0 0.0
  %2045 = vmatprep.subr.mxu0 0.0
  %2046 = vmatpush1.msra.mxu0 0.0
  %2047 = vmatprep.subr.mxu0 0.0
  %2048 = vmatpush1.msra.mxu0 0.0
  %2049 = vmatprep.subr.mxu0 0.0
  %2050 = vmatpush1.msra.mxu0 0.0
  %2051 = vmatprep.subr.mxu0 0.0
  %2052 = vmatpush1.msra.mxu0 0.0
  %2053 = vmatprep.subr.mxu0 0.0
  %2054 = vmatpush1.msra.mxu0 0.0
  %2055 = vmatprep.subr.mxu0 0.0
  %2056 = vmatpush1.msra.mxu0 0.0
  %2057 = vmatprep.subr.mxu0 0.0
  %2058 = vmatpush1.msra.mxu0 0.0
  %2059 = vmatprep.subr.mxu0 0.0
  %2060 = vmatpush1.msra.mxu0 0.0
  %2061 = vmatprep.subr.mxu0 0.0
  %2062 = vmatpush1.msra.mxu0 0.0
  %2063 = vmatprep.subr.mxu0 0.0
  %2064 = vmatpush1.msra.mxu0 0.0
  %2065 = vmatprep.subr.mxu0 %v469
  %2066 = vmatpush1.msra.mxu0 %v468
  %2067 = vmatprep.subr.mxu0 %v465
  %2068 = vmatpush1.msra.mxu0 %v464
  %2069 = vmatprep.subr.mxu0 %v461
  %2070 = vmatpush1.msra.mxu0 %v460
  %2071 = vmatprep.subr.mxu0 %v457
  %2072 = vmatpush1.msra.mxu0 %v456
  %2073 = vmatprep.subr.mxu0 0.0
  %2074 = vmatpush2.msra.mxu0 0.0
  %2075 = vmatprep.subr.mxu0 0.0
  %2076 = vmatpush2.msra.mxu0 0.0
  %2077 = vmatprep.subr.mxu0 0.0
  %2078 = vmatpush2.msra.mxu0 0.0
  %2079 = vmatprep.subr.mxu0 0.0
  %2080 = vmatpush2.msra.mxu0 0.0
  %2081 = vmatprep.subr.mxu0 0.0
  %2082 = vmatpush2.msra.mxu0 0.0
  %2083 = vmatprep.subr.mxu0 0.0
  %2084 = vmatpush2.msra.mxu0 0.0
  %2085 = vmatprep.subr.mxu0 0.0
  %2086 = vmatpush2.msra.mxu0 0.0
  %2087 = vmatprep.subr.mxu0 0.0
  %2088 = vmatpush2.msra.mxu0 0.0
  %2089 = vmatprep.subr.mxu0 0.0
  %2090 = vmatpush2.msra.mxu0 0.0
  %2091 = vmatprep.subr.mxu0 0.0
  %2092 = vmatpush2.msra.mxu0 0.0
  %2093 = vmatprep.subr.mxu0 0.0
  %2094 = vmatpush2.msra.mxu0 0.0
  %2095 = vmatprep.subr.mxu0 0.0
  %2096 = vmatpush2.msra.mxu0 0.0
  %2097 = vmatprep.subr.mxu0 0.0
  %2098 = vmatpush2.msra.mxu0 0.0
  %2099 = vmatprep.subr.mxu0 0.0
  %2100 = vmatpush2.msra.mxu0 0.0
  %2101 = vmatprep.subr.mxu0 0.0
  %2102 = vmatpush2.msra.mxu0 0.0
  %2103 = vmatprep.subr.mxu0 0.0
  %2104 = vmatpush2.msra.mxu0 0.0
  %2105 = vmatprep.mubr.f32.mxu0 0.0
  %2106 = vmatmul.mubr.f32.gmra.mxu0 %v1968
  %v2107 = vpop.f32.mrf.mxu0
  %v2108 = vadd.f32 0.0, %v2107
  %v2109 = vpop.f32.mrf.mxu0
  %v2110 = vadd.f32 0.0, %v2109
  %2111 = vdwg.mxu0
  %v2112 = vadd.f32 %v1958, %v2037
  %v2113 = vadd.f32 %v1959, %v2039
  %v2114 = vadd.f32 %v1960, %v2108
  %v2115 = vadd.f32 %v1961, %v2110
  %v2117 = vsel %vm123, %v1955, 0
  %2119 = vmatprep.subr.mxu0 0.0
  %2120 = vmatpush1.msra.mxu0 0.0
  %2121 = vmatprep.subr.mxu0 0.0
  %2122 = vmatpush1.msra.mxu0 0.0
  %2123 = vmatprep.subr.mxu0 0.0
  %2124 = vmatpush1.msra.mxu0 0.0
  %2125 = vmatprep.subr.mxu0 0.0
  %2126 = vmatpush1.msra.mxu0 0.0
  %2127 = vmatprep.subr.mxu0 0.0
  %2128 = vmatpush1.msra.mxu0 0.0
  %2129 = vmatprep.subr.mxu0 0.0
  %2130 = vmatpush1.msra.mxu0 0.0
  %2131 = vmatprep.subr.mxu0 0.0
  %2132 = vmatpush1.msra.mxu0 0.0
  %2133 = vmatprep.subr.mxu0 0.0
  %2134 = vmatpush1.msra.mxu0 0.0
  %2135 = vmatprep.subr.mxu0 0.0
  %2136 = vmatpush1.msra.mxu0 0.0
  %2137 = vmatprep.subr.mxu0 0.0
  %2138 = vmatpush1.msra.mxu0 0.0
  %2139 = vmatprep.subr.mxu0 0.0
  %2140 = vmatpush1.msra.mxu0 0.0
  %2141 = vmatprep.subr.mxu0 0.0
  %2142 = vmatpush1.msra.mxu0 0.0
  %2143 = vmatprep.subr.mxu0 %v483
  %2144 = vmatpush1.msra.mxu0 %v482
  %2145 = vmatprep.subr.mxu0 %v479
  %2146 = vmatpush1.msra.mxu0 %v478
  %2147 = vmatprep.subr.mxu0 %v475
  %2148 = vmatpush1.msra.mxu0 %v474
  %2149 = vmatprep.subr.mxu0 %v471
  %2150 = vmatpush1.msra.mxu0 %v470
  %2151 = vmatprep.subr.mxu0 0.0
  %2152 = vmatpush2.msra.mxu0 0.0
  %2153 = vmatprep.subr.mxu0 0.0
  %2154 = vmatpush2.msra.mxu0 0.0
  %2155 = vmatprep.subr.mxu0 0.0
  %2156 = vmatpush2.msra.mxu0 0.0
  %2157 = vmatprep.subr.mxu0 0.0
  %2158 = vmatpush2.msra.mxu0 0.0
  %2159 = vmatprep.subr.mxu0 0.0
  %2160 = vmatpush2.msra.mxu0 0.0
  %2161 = vmatprep.subr.mxu0 0.0
  %2162 = vmatpush2.msra.mxu0 0.0
  %2163 = vmatprep.subr.mxu0 0.0
  %2164 = vmatpush2.msra.mxu0 0.0
  %2165 = vmatprep.subr.mxu0 0.0
  %2166 = vmatpush2.msra.mxu0 0.0
  %2167 = vmatprep.subr.mxu0 0.0
  %2168 = vmatpush2.msra.mxu0 0.0
  %2169 = vmatprep.subr.mxu0 0.0
  %2170 = vmatpush2.msra.mxu0 0.0
  %2171 = vmatprep.subr.mxu0 0.0
  %2172 = vmatpush2.msra.mxu0 0.0
  %2173 = vmatprep.subr.mxu0 0.0
  %2174 = vmatpush2.msra.mxu0 0.0
  %2175 = vmatprep.subr.mxu0 0.0
  %2176 = vmatpush2.msra.mxu0 0.0
  %2177 = vmatprep.subr.mxu0 0.0
  %2178 = vmatpush2.msra.mxu0 0.0
  %2179 = vmatprep.subr.mxu0 0.0
  %2180 = vmatpush2.msra.mxu0 0.0
  %2181 = vmatprep.subr.mxu0 0.0
  %2182 = vmatpush2.msra.mxu0 0.0
  %2183 = vmatprep.mubr.f32.mxu0 0.0
  %2184 = vmatmul.mubr.f32.gmra.mxu0 %v2117
  %v2185 = vpop.f32.mrf.mxu0
  %v2186 = vadd.f32 0.0, %v2185
  %v2187 = vpop.f32.mrf.mxu0
  %v2188 = vadd.f32 0.0, %v2187
  %2189 = vdwg.mxu0
  %2190 = vmatprep.subr.mxu0 0.0
  %2191 = vmatpush1.msra.mxu0 0.0
  %2192 = vmatprep.subr.mxu0 0.0
  %2193 = vmatpush1.msra.mxu0 0.0
  %2194 = vmatprep.subr.mxu0 0.0
  %2195 = vmatpush1.msra.mxu0 0.0
  %2196 = vmatprep.subr.mxu0 0.0
  %2197 = vmatpush1.msra.mxu0 0.0
  %2198 = vmatprep.subr.mxu0 0.0
  %2199 = vmatpush1.msra.mxu0 0.0
  %2200 = vmatprep.subr.mxu0 0.0
  %2201 = vmatpush1.msra.mxu0 0.0
  %2202 = vmatprep.subr.mxu0 0.0
  %2203 = vmatpush1.msra.mxu0 0.0
  %2204 = vmatprep.subr.mxu0 0.0
  %2205 = vmatpush1.msra.mxu0 0.0
  %2206 = vmatprep.subr.mxu0 0.0
  %2207 = vmatpush1.msra.mxu0 0.0
  %2208 = vmatprep.subr.mxu0 0.0
  %2209 = vmatpush1.msra.mxu0 0.0
  %2210 = vmatprep.subr.mxu0 0.0
  %2211 = vmatpush1.msra.mxu0 0.0
  %2212 = vmatprep.subr.mxu0 0.0
  %2213 = vmatpush1.msra.mxu0 0.0
  %2214 = vmatprep.subr.mxu0 %v485
  %2215 = vmatpush1.msra.mxu0 %v484
  %2216 = vmatprep.subr.mxu0 %v481
  %2217 = vmatpush1.msra.mxu0 %v480
  %2218 = vmatprep.subr.mxu0 %v477
  %2219 = vmatpush1.msra.mxu0 %v476
  %2220 = vmatprep.subr.mxu0 %v473
  %2221 = vmatpush1.msra.mxu0 %v472
  %2222 = vmatprep.subr.mxu0 0.0
  %2223 = vmatpush2.msra.mxu0 0.0
  %2224 = vmatprep.subr.mxu0 0.0
  %2225 = vmatpush2.msra.mxu0 0.0
  %2226 = vmatprep.subr.mxu0 0.0
  %2227 = vmatpush2.msra.mxu0 0.0
  %2228 = vmatprep.subr.mxu0 0.0
  %2229 = vmatpush2.msra.mxu0 0.0
  %2230 = vmatprep.subr.mxu0 0.0
  %2231 = vmatpush2.msra.mxu0 0.0
  %2232 = vmatprep.subr.mxu0 0.0
  %2233 = vmatpush2.msra.mxu0 0.0
  %2234 = vmatprep.subr.mxu0 0.0
  %2235 = vmatpush2.msra.mxu0 0.0
  %2236 = vmatprep.subr.mxu0 0.0
  %2237 = vmatpush2.msra.mxu0 0.0
  %2238 = vmatprep.subr.mxu0 0.0
  %2239 = vmatpush2.msra.mxu0 0.0
  %2240 = vmatprep.subr.mxu0 0.0
  %2241 = vmatpush2.msra.mxu0 0.0
  %2242 = vmatprep.subr.mxu0 0.0
  %2243 = vmatpush2.msra.mxu0 0.0
  %2244 = vmatprep.subr.mxu0 0.0
  %2245 = vmatpush2.msra.mxu0 0.0
  %2246 = vmatprep.subr.mxu0 0.0
  %2247 = vmatpush2.msra.mxu0 0.0
  %2248 = vmatprep.subr.mxu0 0.0
  %2249 = vmatpush2.msra.mxu0 0.0
  %2250 = vmatprep.subr.mxu0 0.0
  %2251 = vmatpush2.msra.mxu0 0.0
  %2252 = vmatprep.subr.mxu0 0.0
  %2253 = vmatpush2.msra.mxu0 0.0
  %2254 = vmatprep.mubr.f32.mxu0 0.0
  %2255 = vmatmul.mubr.f32.gmra.mxu0 %v2117
  %v2256 = vpop.f32.mrf.mxu0
  %v2257 = vadd.f32 0.0, %v2256
  %v2258 = vpop.f32.mrf.mxu0
  %v2259 = vadd.f32 0.0, %v2258
  %2260 = vdwg.mxu0
  %v2265 = vrot.slane %v2186, 2
  %v2266 = vrot.slane %v2188, 2
  %v2267 = vrot.slane %v2257, 2
  %v2268 = vrot.slane %v2259, 2
  %v2273 = vadd.f32 %v1962, %v2265
  %v2274 = vadd.f32 %v1963, %v2266
  %v2275 = vadd.f32 %v1964, %v2267
  %v2276 = vadd.f32 %v1965, %v2268
  %v2277 = vmul.f32 %v2112, 0.5
  %v2278 = vtanh.pop %v2277
  %v2279 = vmul.f32 %v2278, 0.5
  %v2280 = vadd.f32 %v2279, 0.5
  %v2281 = vmul.f32 %v2113, 0.5
  %v2282 = vtanh.pop %v2281
  %v2283 = vmul.f32 %v2282, 0.5
  %v2284 = vadd.f32 %v2283, 0.5
  %v2285 = vtanh.pop %v2114
  %v2286 = vmul.f32 %v2115, 0.5
  %v2287 = vtanh.pop %v2286
  %v2288 = vmul.f32 %v2287, 0.5
  %v2289 = vadd.f32 %v2288, 0.5
  %v2291 = vrot.slane %v1932, 6
  %v2293 = vmul.f32 %v2284, %v2291
  %v2294 = vmul.f32 %v2280, %v2285
  %v2295 = vadd.f32 %v2293, %v2294
  %v2296 = vtanh.pop %v2295
  %v2297 = vmul.f32 %v2289, %v2296
  %v2298 = vmul.f32 %v2273, 0.5
  %v2299 = vtanh.pop %v2298
  %v2300 = vmul.f32 %v2299, 0.5
  %v2301 = vadd.f32 %v2300, 0.5
  %v2302 = vmul.f32 %v2274, 0.5
  %v2303 = vtanh.pop %v2302
  %v2304 = vmul.f32 %v2303, 0.5
  %v2305 = vadd.f32 %v2304, 0.5
  %v2306 = vtanh.pop %v2275
  %v2307 = vmul.f32 %v2276, 0.5
  %v2308 = vtanh.pop %v2307
  %v2309 = vmul.f32 %v2308, 0.5
  %v2310 = vadd.f32 %v2309, 0.5
  %v2312 = vrot.slane %v1953, 2
  %v2314 = vmul.f32 %v2305, %v2312
  %v2315 = vmul.f32 %v2301, %v2306
  %v2316 = vadd.f32 %v2314, %v2315
  %v2317 = vtanh.pop %v2316
  %v2318 = vmul.f32 %v2310, %v2317
  %2319 = vst.msk [vmem:[#allocation3 + $0x8] sm:$0x3] %vm837, %v2297
  %2320 = vst.msk [vmem:[#allocation3 + $0x10] sm:$0xc0] %vm839, %v2318
  %v2321 = vld [vmem:[#allocation2 + $0x40] sm:$0xc]
  %v2322 = vld [vmem:[#allocation2 + $0x48] sm:$0xc]
  %v2323 = vld [vmem:[#allocation2 + $0x50] sm:$0xc]
  %v2324 = vld [vmem:[#allocation2 + $0x58] sm:$0xc]
  %v2325 = vld [vmem:[#allocation2 + $0x20] sm:$0x30]
  %v2326 = vld [vmem:[#allocation2 + $0x28] sm:$0x30]
  %v2327 = vld [vmem:[#allocation2 + $0x30] sm:$0x30]
  %v2328 = vld [vmem:[#allocation2 + $0x38] sm:$0x30]
  %v2330 = vsel %vm123, %v2297, 0
  %2332 = vmatprep.subr.mxu0 0.0
  %2333 = vmatpush1.msra.mxu0 0.0
  %2334 = vmatprep.subr.mxu0 0.0
  %2335 = vmatpush1.msra.mxu0 0.0
  %2336 = vmatprep.subr.mxu0 0.0
  %2337 = vmatpush1.msra.mxu0 0.0
  %2338 = vmatprep.subr.mxu0 0.0
  %2339 = vmatpush1.msra.mxu0 0.0
  %2340 = vmatprep.subr.mxu0 0.0
  %2341 = vmatpush1.msra.mxu0 0.0
  %2342 = vmatprep.subr.mxu0 0.0
  %2343 = vmatpush1.msra.mxu0 0.0
  %2344 = vmatprep.subr.mxu0 0.0
  %2345 = vmatpush1.msra.mxu0 0.0
  %2346 = vmatprep.subr.mxu0 0.0
  %2347 = vmatpush1.msra.mxu0 0.0
  %2348 = vmatprep.subr.mxu0 0.0
  %2349 = vmatpush1.msra.mxu0 0.0
  %2350 = vmatprep.subr.mxu0 0.0
  %2351 = vmatpush1.msra.mxu0 0.0
  %2352 = vmatprep.subr.mxu0 0.0
  %2353 = vmatpush1.msra.mxu0 0.0
  %2354 = vmatprep.subr.mxu0 0.0
  %2355 = vmatpush1.msra.mxu0 0.0
  %2356 = vmatprep.subr.mxu0 %v467
  %2357 = vmatpush1.msra.mxu0 %v466
  %2358 = vmatprep.subr.mxu0 %v463
  %2359 = vmatpush1.msra.mxu0 %v462
  %2360 = vmatprep.subr.mxu0 %v459
  %2361 = vmatpush1.msra.mxu0 %v458
  %2362 = vmatprep.subr.mxu0 %v455
  %2363 = vmatpush1.msra.mxu0 %v454
  %2364 = vmatprep.subr.mxu0 0.0
  %2365 = vmatpush2.msra.mxu0 0.0
  %2366 = vmatprep.subr.mxu0 0.0
  %2367 = vmatpush2.msra.mxu0 0.0
  %2368 = vmatprep.subr.mxu0 0.0
  %2369 = vmatpush2.msra.mxu0 0.0
  %2370 = vmatprep.subr.mxu0 0.0
  %2371 = vmatpush2.msra.mxu0 0.0
  %2372 = vmatprep.subr.mxu0 0.0
  %2373 = vmatpush2.msra.mxu0 0.0
  %2374 = vmatprep.subr.mxu0 0.0
  %2375 = vmatpush2.msra.mxu0 0.0
  %2376 = vmatprep.subr.mxu0 0.0
  %2377 = vmatpush2.msra.mxu0 0.0
  %2378 = vmatprep.subr.mxu0 0.0
  %2379 = vmatpush2.msra.mxu0 0.0
  %2380 = vmatprep.subr.mxu0 0.0
  %2381 = vmatpush2.msra.mxu0 0.0
  %2382 = vmatprep.subr.mxu0 0.0
  %2383 = vmatpush2.msra.mxu0 0.0
  %2384 = vmatprep.subr.mxu0 0.0
  %2385 = vmatpush2.msra.mxu0 0.0
  %2386 = vmatprep.subr.mxu0 0.0
  %2387 = vmatpush2.msra.mxu0 0.0
  %2388 = vmatprep.subr.mxu0 0.0
  %2389 = vmatpush2.msra.mxu0 0.0
  %2390 = vmatprep.subr.mxu0 0.0
  %2391 = vmatpush2.msra.mxu0 0.0
  %2392 = vmatprep.subr.mxu0 0.0
  %2393 = vmatpush2.msra.mxu0 0.0
  %2394 = vmatprep.subr.mxu0 0.0
  %2395 = vmatpush2.msra.mxu0 0.0
  %2396 = vmatprep.mubr.f32.mxu0 0.0
  %2397 = vmatmul.mubr.f32.gmra.mxu0 %v2330
  %v2398 = vpop.f32.mrf.mxu0
  %v2399 = vadd.f32 0.0, %v2398
  %v2400 = vpop.f32.mrf.mxu0
  %v2401 = vadd.f32 0.0, %v2400
  %2402 = vdwg.mxu0
  %2403 = vmatprep.subr.mxu0 0.0
  %2404 = vmatpush1.msra.mxu0 0.0
  %2405 = vmatprep.subr.mxu0 0.0
  %2406 = vmatpush1.msra.mxu0 0.0
  %2407 = vmatprep.subr.mxu0 0.0
  %2408 = vmatpush1.msra.mxu0 0.0
  %2409 = vmatprep.subr.mxu0 0.0
  %2410 = vmatpush1.msra.mxu0 0.0
  %2411 = vmatprep.subr.mxu0 0.0
  %2412 = vmatpush1.msra.mxu0 0.0
  %2413 = vmatprep.subr.mxu0 0.0
  %2414 = vmatpush1.msra.mxu0 0.0
  %2415 = vmatprep.subr.mxu0 0.0
  %2416 = vmatpush1.msra.mxu0 0.0
  %2417 = vmatprep.subr.mxu0 0.0
  %2418 = vmatpush1.msra.mxu0 0.0
  %2419 = vmatprep.subr.mxu0 0.0
  %2420 = vmatpush1.msra.mxu0 0.0
  %2421 = vmatprep.subr.mxu0 0.0
  %2422 = vmatpush1.msra.mxu0 0.0
  %2423 = vmatprep.subr.mxu0 0.0
  %2424 = vmatpush1.msra.mxu0 0.0
  %2425 = vmatprep.subr.mxu0 0.0
  %2426 = vmatpush1.msra.mxu0 0.0
  %2427 = vmatprep.subr.mxu0 %v469
  %2428 = vmatpush1.msra.mxu0 %v468
  %2429 = vmatprep.subr.mxu0 %v465
  %2430 = vmatpush1.msra.mxu0 %v464
  %2431 = vmatprep.subr.mxu0 %v461
  %2432 = vmatpush1.msra.mxu0 %v460
  %2433 = vmatprep.subr.mxu0 %v457
  %2434 = vmatpush1.msra.mxu0 %v456
  %2435 = vmatprep.subr.mxu0 0.0
  %2436 = vmatpush2.msra.mxu0 0.0
  %2437 = vmatprep.subr.mxu0 0.0
  %2438 = vmatpush2.msra.mxu0 0.0
  %2439 = vmatprep.subr.mxu0 0.0
  %2440 = vmatpush2.msra.mxu0 0.0
  %2441 = vmatprep.subr.mxu0 0.0
  %2442 = vmatpush2.msra.mxu0 0.0
  %2443 = vmatprep.subr.mxu0 0.0
  %2444 = vmatpush2.msra.mxu0 0.0
  %2445 = vmatprep.subr.mxu0 0.0
  %2446 = vmatpush2.msra.mxu0 0.0
  %2447 = vmatprep.subr.mxu0 0.0
  %2448 = vmatpush2.msra.mxu0 0.0
  %2449 = vmatprep.subr.mxu0 0.0
  %2450 = vmatpush2.msra.mxu0 0.0
  %2451 = vmatprep.subr.mxu0 0.0
  %2452 = vmatpush2.msra.mxu0 0.0
  %2453 = vmatprep.subr.mxu0 0.0
  %2454 = vmatpush2.msra.mxu0 0.0
  %2455 = vmatprep.subr.mxu0 0.0
  %2456 = vmatpush2.msra.mxu0 0.0
  %2457 = vmatprep.subr.mxu0 0.0
  %2458 = vmatpush2.msra.mxu0 0.0
  %2459 = vmatprep.subr.mxu0 0.0
  %2460 = vmatpush2.msra.mxu0 0.0
  %2461 = vmatprep.subr.mxu0 0.0
  %2462 = vmatpush2.msra.mxu0 0.0
  %2463 = vmatprep.subr.mxu0 0.0
  %2464 = vmatpush2.msra.mxu0 0.0
  %2465 = vmatprep.subr.mxu0 0.0
  %2466 = vmatpush2.msra.mxu0 0.0
  %2467 = vmatprep.mubr.f32.mxu0 0.0
  %2468 = vmatmul.mubr.f32.gmra.mxu0 %v2330
  %v2469 = vpop.f32.mrf.mxu0
  %v2470 = vadd.f32 0.0, %v2469
  %v2471 = vpop.f32.mrf.mxu0
  %v2472 = vadd.f32 0.0, %v2471
  %2473 = vdwg.mxu0
  %v2478 = vrot.slane %v2399, 6
  %v2479 = vrot.slane %v2401, 6
  %v2480 = vrot.slane %v2470, 6
  %v2481 = vrot.slane %v2472, 6
  %v2486 = vadd.f32 %v2321, %v2478
  %v2487 = vadd.f32 %v2322, %v2479
  %v2488 = vadd.f32 %v2323, %v2480
  %v2489 = vadd.f32 %v2324, %v2481
  %v2491 = vrot.slane %v2318, 6
  %v2492 = vsel %vm123, %v2491, 0
  %2494 = vmatprep.subr.mxu0 0.0
  %2495 = vmatpush1.msra.mxu0 0.0
  %2496 = vmatprep.subr.mxu0 0.0
  %2497 = vmatpush1.msra.mxu0 0.0
  %2498 = vmatprep.subr.mxu0 0.0
  %2499 = vmatpush1.msra.mxu0 0.0
  %2500 = vmatprep.subr.mxu0 0.0
  %2501 = vmatpush1.msra.mxu0 0.0
  %2502 = vmatprep.subr.mxu0 0.0
  %2503 = vmatpush1.msra.mxu0 0.0
  %2504 = vmatprep.subr.mxu0 0.0
  %2505 = vmatpush1.msra.mxu0 0.0
  %2506 = vmatprep.subr.mxu0 0.0
  %2507 = vmatpush1.msra.mxu0 0.0
  %2508 = vmatprep.subr.mxu0 0.0
  %2509 = vmatpush1.msra.mxu0 0.0
  %2510 = vmatprep.subr.mxu0 0.0
  %2511 = vmatpush1.msra.mxu0 0.0
  %2512 = vmatprep.subr.mxu0 0.0
  %2513 = vmatpush1.msra.mxu0 0.0
  %2514 = vmatprep.subr.mxu0 0.0
  %2515 = vmatpush1.msra.mxu0 0.0
  %2516 = vmatprep.subr.mxu0 0.0
  %2517 = vmatpush1.msra.mxu0 0.0
  %2518 = vmatprep.subr.mxu0 %v483
  %2519 = vmatpush1.msra.mxu0 %v482
  %2520 = vmatprep.subr.mxu0 %v479
  %2521 = vmatpush1.msra.mxu0 %v478
  %2522 = vmatprep.subr.mxu0 %v475
  %2523 = vmatpush1.msra.mxu0 %v474
  %2524 = vmatprep.subr.mxu0 %v471
  %2525 = vmatpush1.msra.mxu0 %v470
  %2526 = vmatprep.subr.mxu0 0.0
  %2527 = vmatpush2.msra.mxu0 0.0
  %2528 = vmatprep.subr.mxu0 0.0
  %2529 = vmatpush2.msra.mxu0 0.0
  %2530 = vmatprep.subr.mxu0 0.0
  %2531 = vmatpush2.msra.mxu0 0.0
  %2532 = vmatprep.subr.mxu0 0.0
  %2533 = vmatpush2.msra.mxu0 0.0
  %2534 = vmatprep.subr.mxu0 0.0
  %2535 = vmatpush2.msra.mxu0 0.0
  %2536 = vmatprep.subr.mxu0 0.0
  %2537 = vmatpush2.msra.mxu0 0.0
  %2538 = vmatprep.subr.mxu0 0.0
  %2539 = vmatpush2.msra.mxu0 0.0
  %2540 = vmatprep.subr.mxu0 0.0
  %2541 = vmatpush2.msra.mxu0 0.0
  %2542 = vmatprep.subr.mxu0 0.0
  %2543 = vmatpush2.msra.mxu0 0.0
  %2544 = vmatprep.subr.mxu0 0.0
  %2545 = vmatpush2.msra.mxu0 0.0
  %2546 = vmatprep.subr.mxu0 0.0
  %2547 = vmatpush2.msra.mxu0 0.0
  %2548 = vmatprep.subr.mxu0 0.0
  %2549 = vmatpush2.msra.mxu0 0.0
  %2550 = vmatprep.subr.mxu0 0.0
  %2551 = vmatpush2.msra.mxu0 0.0
  %2552 = vmatprep.subr.mxu0 0.0
  %2553 = vmatpush2.msra.mxu0 0.0
  %2554 = vmatprep.subr.mxu0 0.0
  %2555 = vmatpush2.msra.mxu0 0.0
  %2556 = vmatprep.subr.mxu0 0.0
  %2557 = vmatpush2.msra.mxu0 0.0
  %2558 = vmatprep.mubr.f32.mxu0 0.0
  %2559 = vmatmul.mubr.f32.gmra.mxu0 %v2492
  %v2560 = vpop.f32.mrf.mxu0
  %v2561 = vadd.f32 0.0, %v2560
  %v2562 = vpop.f32.mrf.mxu0
  %v2563 = vadd.f32 0.0, %v2562
  %2564 = vdwg.mxu0
  %2565 = vmatprep.subr.mxu0 0.0
  %2566 = vmatpush1.msra.mxu0 0.0
  %2567 = vmatprep.subr.mxu0 0.0
  %2568 = vmatpush1.msra.mxu0 0.0
  %2569 = vmatprep.subr.mxu0 0.0
  %2570 = vmatpush1.msra.mxu0 0.0
  %2571 = vmatprep.subr.mxu0 0.0
  %2572 = vmatpush1.msra.mxu0 0.0
  %2573 = vmatprep.subr.mxu0 0.0
  %2574 = vmatpush1.msra.mxu0 0.0
  %2575 = vmatprep.subr.mxu0 0.0
  %2576 = vmatpush1.msra.mxu0 0.0
  %2577 = vmatprep.subr.mxu0 0.0
  %2578 = vmatpush1.msra.mxu0 0.0
  %2579 = vmatprep.subr.mxu0 0.0
  %2580 = vmatpush1.msra.mxu0 0.0
  %2581 = vmatprep.subr.mxu0 0.0
  %2582 = vmatpush1.msra.mxu0 0.0
  %2583 = vmatprep.subr.mxu0 0.0
  %2584 = vmatpush1.msra.mxu0 0.0
  %2585 = vmatprep.subr.mxu0 0.0
  %2586 = vmatpush1.msra.mxu0 0.0
  %2587 = vmatprep.subr.mxu0 0.0
  %2588 = vmatpush1.msra.mxu0 0.0
  %2589 = vmatprep.subr.mxu0 %v485
  %2590 = vmatpush1.msra.mxu0 %v484
  %2591 = vmatprep.subr.mxu0 %v481
  %2592 = vmatpush1.msra.mxu0 %v480
  %2593 = vmatprep.subr.mxu0 %v477
  %2594 = vmatpush1.msra.mxu0 %v476
  %2595 = vmatprep.subr.mxu0 %v473
  %2596 = vmatpush1.msra.mxu0 %v472
  %2597 = vmatprep.subr.mxu0 0.0
  %2598 = vmatpush2.msra.mxu0 0.0
  %2599 = vmatprep.subr.mxu0 0.0
  %2600 = vmatpush2.msra.mxu0 0.0
  %2601 = vmatprep.subr.mxu0 0.0
  %2602 = vmatpush2.msra.mxu0 0.0
  %2603 = vmatprep.subr.mxu0 0.0
  %2604 = vmatpush2.msra.mxu0 0.0
  %2605 = vmatprep.subr.mxu0 0.0
  %2606 = vmatpush2.msra.mxu0 0.0
  %2607 = vmatprep.subr.mxu0 0.0
  %2608 = vmatpush2.msra.mxu0 0.0
  %2609 = vmatprep.subr.mxu0 0.0
  %2610 = vmatpush2.msra.mxu0 0.0
  %2611 = vmatprep.subr.mxu0 0.0
  %2612 = vmatpush2.msra.mxu0 0.0
  %2613 = vmatprep.subr.mxu0 0.0
  %2614 = vmatpush2.msra.mxu0 0.0
  %2615 = vmatprep.subr.mxu0 0.0
  %2616 = vmatpush2.msra.mxu0 0.0
  %2617 = vmatprep.subr.mxu0 0.0
  %2618 = vmatpush2.msra.mxu0 0.0
  %2619 = vmatprep.subr.mxu0 0.0
  %2620 = vmatpush2.msra.mxu0 0.0
  %2621 = vmatprep.subr.mxu0 0.0
  %2622 = vmatpush2.msra.mxu0 0.0
  %2623 = vmatprep.subr.mxu0 0.0
  %2624 = vmatpush2.msra.mxu0 0.0
  %2625 = vmatprep.subr.mxu0 0.0
  %2626 = vmatpush2.msra.mxu0 0.0
  %2627 = vmatprep.subr.mxu0 0.0
  %2628 = vmatpush2.msra.mxu0 0.0
  %2629 = vmatprep.mubr.f32.mxu0 0.0
  %2630 = vmatmul.mubr.f32.gmra.mxu0 %v2492
  %v2631 = vpop.f32.mrf.mxu0
  %v2632 = vadd.f32 0.0, %v2631
  %v2633 = vpop.f32.mrf.mxu0
  %v2634 = vadd.f32 0.0, %v2633
  %2635 = vdwg.mxu0
  %v2640 = vrot.slane %v2561, 4
  %v2641 = vrot.slane %v2563, 4
  %v2642 = vrot.slane %v2632, 4
  %v2643 = vrot.slane %v2634, 4
  %v2648 = vadd.f32 %v2325, %v2640
  %v2649 = vadd.f32 %v2326, %v2641
  %v2650 = vadd.f32 %v2327, %v2642
  %v2651 = vadd.f32 %v2328, %v2643
  %v2652 = vmul.f32 %v2486, 0.5
  %v2653 = vtanh.pop %v2652
  %v2654 = vmul.f32 %v2653, 0.5
  %v2655 = vadd.f32 %v2654, 0.5
  %v2656 = vmul.f32 %v2487, 0.5
  %v2657 = vtanh.pop %v2656
  %v2658 = vmul.f32 %v2657, 0.5
  %v2659 = vadd.f32 %v2658, 0.5
  %v2660 = vtanh.pop %v2488
  %v2661 = vmul.f32 %v2489, 0.5
  %v2662 = vtanh.pop %v2661
  %v2663 = vmul.f32 %v2662, 0.5
  %v2664 = vadd.f32 %v2663, 0.5
  %v2666 = vrot.slane %v2295, 6
  %v2668 = vmul.f32 %v2659, %v2666
  %v2669 = vmul.f32 %v2655, %v2660
  %v2670 = vadd.f32 %v2668, %v2669
  %v2671 = vtanh.pop %v2670
  %v2672 = vmul.f32 %v2664, %v2671
  %v2673 = vmul.f32 %v2648, 0.5
  %v2674 = vtanh.pop %v2673
  %v2675 = vmul.f32 %v2674, 0.5
  %v2676 = vadd.f32 %v2675, 0.5
  %v2677 = vmul.f32 %v2649, 0.5
  %v2678 = vtanh.pop %v2677
  %v2679 = vmul.f32 %v2678, 0.5
  %v2680 = vadd.f32 %v2679, 0.5
  %v2681 = vtanh.pop %v2650
  %v2682 = vmul.f32 %v2651, 0.5
  %v2683 = vtanh.pop %v2682
  %v2684 = vmul.f32 %v2683, 0.5
  %v2685 = vadd.f32 %v2684, 0.5
  %v2687 = vrot.slane %v2316, 2
  %v2689 = vmul.f32 %v2680, %v2687
  %v2690 = vmul.f32 %v2676, %v2681
  %v2691 = vadd.f32 %v2689, %v2690
  %v2692 = vtanh.pop %v2691
  %v2693 = vmul.f32 %v2685, %v2692
  %2694 = vst.msk [vmem:[#allocation3 + $0x8] sm:$0xc] %vm1214, %v2672
  %2695 = vst.msk [vmem:[#allocation3 + $0x10] sm:$0x30] %vm1216, %v2693
  %v2696 = vld [vmem:[#allocation2 + $0x40] sm:$0x30]
  %v2697 = vld [vmem:[#allocation2 + $0x48] sm:$0x30]
  %v2698 = vld [vmem:[#allocation2 + $0x50] sm:$0x30]
  %v2699 = vld [vmem:[#allocation2 + $0x58] sm:$0x30]
  %v2700 = vld [vmem:[#allocation2 + $0x20] sm:$0xc]
  %v2701 = vld [vmem:[#allocation2 + $0x28] sm:$0xc]
  %v2702 = vld [vmem:[#allocation2 + $0x30] sm:$0xc]
  %v2703 = vld [vmem:[#allocation2 + $0x38] sm:$0xc]
  %v2705 = vrot.slane %v2672, 2
  %v2706 = vsel %vm123, %v2705, 0
  %2708 = vmatprep.subr.mxu0 0.0
  %2709 = vmatpush1.msra.mxu0 0.0
  %2710 = vmatprep.subr.mxu0 0.0
  %2711 = vmatpush1.msra.mxu0 0.0
  %2712 = vmatprep.subr.mxu0 0.0
  %2713 = vmatpush1.msra.mxu0 0.0
  %2714 = vmatprep.subr.mxu0 0.0
  %2715 = vmatpush1.msra.mxu0 0.0
  %2716 = vmatprep.subr.mxu0 0.0
  %2717 = vmatpush1.msra.mxu0 0.0
  %2718 = vmatprep.subr.mxu0 0.0
  %2719 = vmatpush1.msra.mxu0 0.0
  %2720 = vmatprep.subr.mxu0 0.0
  %2721 = vmatpush1.msra.mxu0 0.0
  %2722 = vmatprep.subr.mxu0 0.0
  %2723 = vmatpush1.msra.mxu0 0.0
  %2724 = vmatprep.subr.mxu0 0.0
  %2725 = vmatpush1.msra.mxu0 0.0
  %2726 = vmatprep.subr.mxu0 0.0
  %2727 = vmatpush1.msra.mxu0 0.0
  %2728 = vmatprep.subr.mxu0 0.0
  %2729 = vmatpush1.msra.mxu0 0.0
  %2730 = vmatprep.subr.mxu0 0.0
  %2731 = vmatpush1.msra.mxu0 0.0
  %2732 = vmatprep.subr.mxu0 %v467
  %2733 = vmatpush1.msra.mxu0 %v466
  %2734 = vmatprep.subr.mxu0 %v463
  %2735 = vmatpush1.msra.mxu0 %v462
  %2736 = vmatprep.subr.mxu0 %v459
  %2737 = vmatpush1.msra.mxu0 %v458
  %2738 = vmatprep.subr.mxu0 %v455
  %2739 = vmatpush1.msra.mxu0 %v454
  %2740 = vmatprep.subr.mxu0 0.0
  %2741 = vmatpush2.msra.mxu0 0.0
  %2742 = vmatprep.subr.mxu0 0.0
  %2743 = vmatpush2.msra.mxu0 0.0
  %2744 = vmatprep.subr.mxu0 0.0
  %2745 = vmatpush2.msra.mxu0 0.0
  %2746 = vmatprep.subr.mxu0 0.0
  %2747 = vmatpush2.msra.mxu0 0.0
  %2748 = vmatprep.subr.mxu0 0.0
  %2749 = vmatpush2.msra.mxu0 0.0
  %2750 = vmatprep.subr.mxu0 0.0
  %2751 = vmatpush2.msra.mxu0 0.0
  %2752 = vmatprep.subr.mxu0 0.0
  %2753 = vmatpush2.msra.mxu0 0.0
  %2754 = vmatprep.subr.mxu0 0.0
  %2755 = vmatpush2.msra.mxu0 0.0
  %2756 = vmatprep.subr.mxu0 0.0
  %2757 = vmatpush2.msra.mxu0 0.0
  %2758 = vmatprep.subr.mxu0 0.0
  %2759 = vmatpush2.msra.mxu0 0.0
  %2760 = vmatprep.subr.mxu0 0.0
  %2761 = vmatpush2.msra.mxu0 0.0
  %2762 = vmatprep.subr.mxu0 0.0
  %2763 = vmatpush2.msra.mxu0 0.0
  %2764 = vmatprep.subr.mxu0 0.0
  %2765 = vmatpush2.msra.mxu0 0.0
  %2766 = vmatprep.subr.mxu0 0.0
  %2767 = vmatpush2.msra.mxu0 0.0
  %2768 = vmatprep.subr.mxu0 0.0
  %2769 = vmatpush2.msra.mxu0 0.0
  %2770 = vmatprep.subr.mxu0 0.0
  %2771 = vmatpush2.msra.mxu0 0.0
  %2772 = vmatprep.mubr.f32.mxu0 0.0
  %2773 = vmatmul.mubr.f32.gmra.mxu0 %v2706
  %v2774 = vpop.f32.mrf.mxu0
  %v2775 = vadd.f32 0.0, %v2774
  %v2776 = vpop.f32.mrf.mxu0
  %v2777 = vadd.f32 0.0, %v2776
  %2778 = vdwg.mxu0
  %2779 = vmatprep.subr.mxu0 0.0
  %2780 = vmatpush1.msra.mxu0 0.0
  %2781 = vmatprep.subr.mxu0 0.0
  %2782 = vmatpush1.msra.mxu0 0.0
  %2783 = vmatprep.subr.mxu0 0.0
  %2784 = vmatpush1.msra.mxu0 0.0
  %2785 = vmatprep.subr.mxu0 0.0
  %2786 = vmatpush1.msra.mxu0 0.0
  %2787 = vmatprep.subr.mxu0 0.0
  %2788 = vmatpush1.msra.mxu0 0.0
  %2789 = vmatprep.subr.mxu0 0.0
  %2790 = vmatpush1.msra.mxu0 0.0
  %2791 = vmatprep.subr.mxu0 0.0
  %2792 = vmatpush1.msra.mxu0 0.0
  %2793 = vmatprep.subr.mxu0 0.0
  %2794 = vmatpush1.msra.mxu0 0.0
  %2795 = vmatprep.subr.mxu0 0.0
  %2796 = vmatpush1.msra.mxu0 0.0
  %2797 = vmatprep.subr.mxu0 0.0
  %2798 = vmatpush1.msra.mxu0 0.0
  %2799 = vmatprep.subr.mxu0 0.0
  %2800 = vmatpush1.msra.mxu0 0.0
  %2801 = vmatprep.subr.mxu0 0.0
  %2802 = vmatpush1.msra.mxu0 0.0
  %2803 = vmatprep.subr.mxu0 %v469
  %2804 = vmatpush1.msra.mxu0 %v468
  %2805 = vmatprep.subr.mxu0 %v465
  %2806 = vmatpush1.msra.mxu0 %v464
  %2807 = vmatprep.subr.mxu0 %v461
  %2808 = vmatpush1.msra.mxu0 %v460
  %2809 = vmatprep.subr.mxu0 %v457
  %2810 = vmatpush1.msra.mxu0 %v456
  %2811 = vmatprep.subr.mxu0 0.0
  %2812 = vmatpush2.msra.mxu0 0.0
  %2813 = vmatprep.subr.mxu0 0.0
  %2814 = vmatpush2.msra.mxu0 0.0
  %2815 = vmatprep.subr.mxu0 0.0
  %2816 = vmatpush2.msra.mxu0 0.0
  %2817 = vmatprep.subr.mxu0 0.0
  %2818 = vmatpush2.msra.mxu0 0.0
  %2819 = vmatprep.subr.mxu0 0.0
  %2820 = vmatpush2.msra.mxu0 0.0
  %2821 = vmatprep.subr.mxu0 0.0
  %2822 = vmatpush2.msra.mxu0 0.0
  %2823 = vmatprep.subr.mxu0 0.0
  %2824 = vmatpush2.msra.mxu0 0.0
  %2825 = vmatprep.subr.mxu0 0.0
  %2826 = vmatpush2.msra.mxu0 0.0
  %2827 = vmatprep.subr.mxu0 0.0
  %2828 = vmatpush2.msra.mxu0 0.0
  %2829 = vmatprep.subr.mxu0 0.0
  %2830 = vmatpush2.msra.mxu0 0.0
  %2831 = vmatprep.subr.mxu0 0.0
  %2832 = vmatpush2.msra.mxu0 0.0
  %2833 = vmatprep.subr.mxu0 0.0
  %2834 = vmatpush2.msra.mxu0 0.0
  %2835 = vmatprep.subr.mxu0 0.0
  %2836 = vmatpush2.msra.mxu0 0.0
  %2837 = vmatprep.subr.mxu0 0.0
  %2838 = vmatpush2.msra.mxu0 0.0
  %2839 = vmatprep.subr.mxu0 0.0
  %2840 = vmatpush2.msra.mxu0 0.0
  %2841 = vmatprep.subr.mxu0 0.0
  %2842 = vmatpush2.msra.mxu0 0.0
  %2843 = vmatprep.mubr.f32.mxu0 0.0
  %2844 = vmatmul.mubr.f32.gmra.mxu0 %v2706
  %v2845 = vpop.f32.mrf.mxu0
  %v2846 = vadd.f32 0.0, %v2845
  %v2847 = vpop.f32.mrf.mxu0
  %v2848 = vadd.f32 0.0, %v2847
  %2849 = vdwg.mxu0
  %v2854 = vrot.slane %v2775, 4
  %v2855 = vrot.slane %v2777, 4
  %v2856 = vrot.slane %v2846, 4
  %v2857 = vrot.slane %v2848, 4
  %v2862 = vadd.f32 %v2696, %v2854
  %v2863 = vadd.f32 %v2697, %v2855
  %v2864 = vadd.f32 %v2698, %v2856
  %v2865 = vadd.f32 %v2699, %v2857
  %v2867 = vrot.slane %v2693, 4
  %v2868 = vsel %vm123, %v2867, 0
  %2870 = vmatprep.subr.mxu0 0.0
  %2871 = vmatpush1.msra.mxu0 0.0
  %2872 = vmatprep.subr.mxu0 0.0
  %2873 = vmatpush1.msra.mxu0 0.0
  %2874 = vmatprep.subr.mxu0 0.0
  %2875 = vmatpush1.msra.mxu0 0.0
  %2876 = vmatprep.subr.mxu0 0.0
  %2877 = vmatpush1.msra.mxu0 0.0
  %2878 = vmatprep.subr.mxu0 0.0
  %2879 = vmatpush1.msra.mxu0 0.0
  %2880 = vmatprep.subr.mxu0 0.0
  %2881 = vmatpush1.msra.mxu0 0.0
  %2882 = vmatprep.subr.mxu0 0.0
  %2883 = vmatpush1.msra.mxu0 0.0
  %2884 = vmatprep.subr.mxu0 0.0
  %2885 = vmatpush1.msra.mxu0 0.0
  %2886 = vmatprep.subr.mxu0 0.0
  %2887 = vmatpush1.msra.mxu0 0.0
  %2888 = vmatprep.subr.mxu0 0.0
  %2889 = vmatpush1.msra.mxu0 0.0
  %2890 = vmatprep.subr.mxu0 0.0
  %2891 = vmatpush1.msra.mxu0 0.0
  %2892 = vmatprep.subr.mxu0 0.0
  %2893 = vmatpush1.msra.mxu0 0.0
  %2894 = vmatprep.subr.mxu0 %v483
  %2895 = vmatpush1.msra.mxu0 %v482
  %2896 = vmatprep.subr.mxu0 %v479
  %2897 = vmatpush1.msra.mxu0 %v478
  %2898 = vmatprep.subr.mxu0 %v475
  %2899 = vmatpush1.msra.mxu0 %v474
  %2900 = vmatprep.subr.mxu0 %v471
  %2901 = vmatpush1.msra.mxu0 %v470
  %2902 = vmatprep.subr.mxu0 0.0
  %2903 = vmatpush2.msra.mxu0 0.0
  %2904 = vmatprep.subr.mxu0 0.0
  %2905 = vmatpush2.msra.mxu0 0.0
  %2906 = vmatprep.subr.mxu0 0.0
  %2907 = vmatpush2.msra.mxu0 0.0
  %2908 = vmatprep.subr.mxu0 0.0
  %2909 = vmatpush2.msra.mxu0 0.0
  %2910 = vmatprep.subr.mxu0 0.0
  %2911 = vmatpush2.msra.mxu0 0.0
  %2912 = vmatprep.subr.mxu0 0.0
  %2913 = vmatpush2.msra.mxu0 0.0
  %2914 = vmatprep.subr.mxu0 0.0
  %2915 = vmatpush2.msra.mxu0 0.0
  %2916 = vmatprep.subr.mxu0 0.0
  %2917 = vmatpush2.msra.mxu0 0.0
  %2918 = vmatprep.subr.mxu0 0.0
  %2919 = vmatpush2.msra.mxu0 0.0
  %2920 = vmatprep.subr.mxu0 0.0
  %2921 = vmatpush2.msra.mxu0 0.0
  %2922 = vmatprep.subr.mxu0 0.0
  %2923 = vmatpush2.msra.mxu0 0.0
  %2924 = vmatprep.subr.mxu0 0.0
  %2925 = vmatpush2.msra.mxu0 0.0
  %2926 = vmatprep.subr.mxu0 0.0
  %2927 = vmatpush2.msra.mxu0 0.0
  %2928 = vmatprep.subr.mxu0 0.0
  %2929 = vmatpush2.msra.mxu0 0.0
  %2930 = vmatprep.subr.mxu0 0.0
  %2931 = vmatpush2.msra.mxu0 0.0
  %2932 = vmatprep.subr.mxu0 0.0
  %2933 = vmatpush2.msra.mxu0 0.0
  %2934 = vmatprep.mubr.f32.mxu0 0.0
  %2935 = vmatmul.mubr.f32.gmra.mxu0 %v2868
  %v2936 = vpop.f32.mrf.mxu0
  %v2937 = vadd.f32 0.0, %v2936
  %v2938 = vpop.f32.mrf.mxu0
  %v2939 = vadd.f32 0.0, %v2938
  %2940 = vdwg.mxu0
  %2941 = vmatprep.subr.mxu0 0.0
  %2942 = vmatpush1.msra.mxu0 0.0
  %2943 = vmatprep.subr.mxu0 0.0
  %2944 = vmatpush1.msra.mxu0 0.0
  %2945 = vmatprep.subr.mxu0 0.0
  %2946 = vmatpush1.msra.mxu0 0.0
  %2947 = vmatprep.subr.mxu0 0.0
  %2948 = vmatpush1.msra.mxu0 0.0
  %2949 = vmatprep.subr.mxu0 0.0
  %2950 = vmatpush1.msra.mxu0 0.0
  %2951 = vmatprep.subr.mxu0 0.0
  %2952 = vmatpush1.msra.mxu0 0.0
  %2953 = vmatprep.subr.mxu0 0.0
  %2954 = vmatpush1.msra.mxu0 0.0
  %2955 = vmatprep.subr.mxu0 0.0
  %2956 = vmatpush1.msra.mxu0 0.0
  %2957 = vmatprep.subr.mxu0 0.0
  %2958 = vmatpush1.msra.mxu0 0.0
  %2959 = vmatprep.subr.mxu0 0.0
  %2960 = vmatpush1.msra.mxu0 0.0
  %2961 = vmatprep.subr.mxu0 0.0
  %2962 = vmatpush1.msra.mxu0 0.0
  %2963 = vmatprep.subr.mxu0 0.0
  %2964 = vmatpush1.msra.mxu0 0.0
  %2965 = vmatprep.subr.mxu0 %v485
  %2966 = vmatpush1.msra.mxu0 %v484
  %2967 = vmatprep.subr.mxu0 %v481
  %2968 = vmatpush1.msra.mxu0 %v480
  %2969 = vmatprep.subr.mxu0 %v477
  %2970 = vmatpush1.msra.mxu0 %v476
  %2971 = vmatprep.subr.mxu0 %v473
  %2972 = vmatpush1.msra.mxu0 %v472
  %2973 = vmatprep.subr.mxu0 0.0
  %2974 = vmatpush2.msra.mxu0 0.0
  %2975 = vmatprep.subr.mxu0 0.0
  %2976 = vmatpush2.msra.mxu0 0.0
  %2977 = vmatprep.subr.mxu0 0.0
  %2978 = vmatpush2.msra.mxu0 0.0
  %2979 = vmatprep.subr.mxu0 0.0
  %2980 = vmatpush2.msra.mxu0 0.0
  %2981 = vmatprep.subr.mxu0 0.0
  %2982 = vmatpush2.msra.mxu0 0.0
  %2983 = vmatprep.subr.mxu0 0.0
  %2984 = vmatpush2.msra.mxu0 0.0
  %2985 = vmatprep.subr.mxu0 0.0
  %2986 = vmatpush2.msra.mxu0 0.0
  %2987 = vmatprep.subr.mxu0 0.0
  %2988 = vmatpush2.msra.mxu0 0.0
  %2989 = vmatprep.subr.mxu0 0.0
  %2990 = vmatpush2.msra.mxu0 0.0
  %2991 = vmatprep.subr.mxu0 0.0
  %2992 = vmatpush2.msra.mxu0 0.0
  %2993 = vmatprep.subr.mxu0 0.0
  %2994 = vmatpush2.msra.mxu0 0.0
  %2995 = vmatprep.subr.mxu0 0.0
  %2996 = vmatpush2.msra.mxu0 0.0
  %2997 = vmatprep.subr.mxu0 0.0
  %2998 = vmatpush2.msra.mxu0 0.0
  %2999 = vmatprep.subr.mxu0 0.0
  %3000 = vmatpush2.msra.mxu0 0.0
  %3001 = vmatprep.subr.mxu0 0.0
  %3002 = vmatpush2.msra.mxu0 0.0
  %3003 = vmatprep.subr.mxu0 0.0
  %3004 = vmatpush2.msra.mxu0 0.0
  %3005 = vmatprep.mubr.f32.mxu0 0.0
  %3006 = vmatmul.mubr.f32.gmra.mxu0 %v2868
  %v3007 = vpop.f32.mrf.mxu0
  %v3008 = vadd.f32 0.0, %v3007
  %v3009 = vpop.f32.mrf.mxu0
  %v3010 = vadd.f32 0.0, %v3009
  %3011 = vdwg.mxu0
  %v3016 = vrot.slane %v2937, 6
  %v3017 = vrot.slane %v2939, 6
  %v3018 = vrot.slane %v3008, 6
  %v3019 = vrot.slane %v3010, 6
  %v3024 = vadd.f32 %v2700, %v3016
  %v3025 = vadd.f32 %v2701, %v3017
  %v3026 = vadd.f32 %v2702, %v3018
  %v3027 = vadd.f32 %v2703, %v3019
  %v3028 = vmul.f32 %v2862, 0.5
  %v3029 = vtanh.pop %v3028
  %v3030 = vmul.f32 %v3029, 0.5
  %v3031 = vadd.f32 %v3030, 0.5
  %v3032 = vmul.f32 %v2863, 0.5
  %v3033 = vtanh.pop %v3032
  %v3034 = vmul.f32 %v3033, 0.5
  %v3035 = vadd.f32 %v3034, 0.5
  %v3036 = vtanh.pop %v2864
  %v3037 = vmul.f32 %v2865, 0.5
  %v3038 = vtanh.pop %v3037
  %v3039 = vmul.f32 %v3038, 0.5
  %v3040 = vadd.f32 %v3039, 0.5
  %v3042 = vrot.slane %v2670, 6
  %v3044 = vmul.f32 %v3035, %v3042
  %v3045 = vmul.f32 %v3031, %v3036
  %v3046 = vadd.f32 %v3044, %v3045
  %v3047 = vtanh.pop %v3046
  %v3048 = vmul.f32 %v3040, %v3047
  %v3049 = vmul.f32 %v3024, 0.5
  %v3050 = vtanh.pop %v3049
  %v3051 = vmul.f32 %v3050, 0.5
  %v3052 = vadd.f32 %v3051, 0.5
  %v3053 = vmul.f32 %v3025, 0.5
  %v3054 = vtanh.pop %v3053
  %v3055 = vmul.f32 %v3054, 0.5
  %v3056 = vadd.f32 %v3055, 0.5
  %v3057 = vtanh.pop %v3026
  %v3058 = vmul.f32 %v3027, 0.5
  %v3059 = vtanh.pop %v3058
  %v3060 = vmul.f32 %v3059, 0.5
  %v3061 = vadd.f32 %v3060, 0.5
  %v3063 = vrot.slane %v2691, 2
  %v3065 = vmul.f32 %v3056, %v3063
  %v3066 = vmul.f32 %v3052, %v3057
  %v3067 = vadd.f32 %v3065, %v3066
  %v3068 = vtanh.pop %v3067
  %v3069 = vmul.f32 %v3061, %v3068
  %3070 = vst.msk [vmem:[#allocation3 + $0x8] sm:$0x30] %vm1216, %v3048
  %3071 = vst.msk [vmem:[#allocation3 + $0x10] sm:$0xc] %vm1214, %v3069
  %v3072 = vld [vmem:[#allocation2 + $0x40] sm:$0xc0]
  %v3073 = vld [vmem:[#allocation2 + $0x48] sm:$0xc0]
  %v3074 = vld [vmem:[#allocation2 + $0x50] sm:$0xc0]
  %v3075 = vld [vmem:[#allocation2 + $0x58] sm:$0xc0]
  %v3076 = vld [vmem:[#allocation2 + $0x20] sm:$0x3]
  %v3077 = vld [vmem:[#allocation2 + $0x28] sm:$0x3]
  %v3078 = vld [vmem:[#allocation2 + $0x30] sm:$0x3]
  %v3079 = vld [vmem:[#allocation2 + $0x38] sm:$0x3]
  %v3081 = vrot.slane %v3048, 4
  %v3082 = vsel %vm123, %v3081, 0
  %3084 = vmatprep.subr.mxu0 0.0
  %3085 = vmatpush1.msra.mxu0 0.0
  %3086 = vmatprep.subr.mxu0 0.0
  %3087 = vmatpush1.msra.mxu0 0.0
  %3088 = vmatprep.subr.mxu0 0.0
  %3089 = vmatpush1.msra.mxu0 0.0
  %3090 = vmatprep.subr.mxu0 0.0
  %3091 = vmatpush1.msra.mxu0 0.0
  %3092 = vmatprep.subr.mxu0 0.0
  %3093 = vmatpush1.msra.mxu0 0.0
  %3094 = vmatprep.subr.mxu0 0.0
  %3095 = vmatpush1.msra.mxu0 0.0
  %3096 = vmatprep.subr.mxu0 0.0
  %3097 = vmatpush1.msra.mxu0 0.0
  %3098 = vmatprep.subr.mxu0 0.0
  %3099 = vmatpush1.msra.mxu0 0.0
  %3100 = vmatprep.subr.mxu0 0.0
  %3101 = vmatpush1.msra.mxu0 0.0
  %3102 = vmatprep.subr.mxu0 0.0
  %3103 = vmatpush1.msra.mxu0 0.0
  %3104 = vmatprep.subr.mxu0 0.0
  %3105 = vmatpush1.msra.mxu0 0.0
  %3106 = vmatprep.subr.mxu0 0.0
  %3107 = vmatpush1.msra.mxu0 0.0
  %3108 = vmatprep.subr.mxu0 %v467
  %3109 = vmatpush1.msra.mxu0 %v466
  %3110 = vmatprep.subr.mxu0 %v463
  %3111 = vmatpush1.msra.mxu0 %v462
  %3112 = vmatprep.subr.mxu0 %v459
  %3113 = vmatpush1.msra.mxu0 %v458
  %3114 = vmatprep.subr.mxu0 %v455
  %3115 = vmatpush1.msra.mxu0 %v454
  %3116 = vmatprep.subr.mxu0 0.0
  %3117 = vmatpush2.msra.mxu0 0.0
  %3118 = vmatprep.subr.mxu0 0.0
  %3119 = vmatpush2.msra.mxu0 0.0
  %3120 = vmatprep.subr.mxu0 0.0
  %3121 = vmatpush2.msra.mxu0 0.0
  %3122 = vmatprep.subr.mxu0 0.0
  %3123 = vmatpush2.msra.mxu0 0.0
  %3124 = vmatprep.subr.mxu0 0.0
  %3125 = vmatpush2.msra.mxu0 0.0
  %3126 = vmatprep.subr.mxu0 0.0
  %3127 = vmatpush2.msra.mxu0 0.0
  %3128 = vmatprep.subr.mxu0 0.0
  %3129 = vmatpush2.msra.mxu0 0.0
  %3130 = vmatprep.subr.mxu0 0.0
  %3131 = vmatpush2.msra.mxu0 0.0
  %3132 = vmatprep.subr.mxu0 0.0
  %3133 = vmatpush2.msra.mxu0 0.0
  %3134 = vmatprep.subr.mxu0 0.0
  %3135 = vmatpush2.msra.mxu0 0.0
  %3136 = vmatprep.subr.mxu0 0.0
  %3137 = vmatpush2.msra.mxu0 0.0
  %3138 = vmatprep.subr.mxu0 0.0
  %3139 = vmatpush2.msra.mxu0 0.0
  %3140 = vmatprep.subr.mxu0 0.0
  %3141 = vmatpush2.msra.mxu0 0.0
  %3142 = vmatprep.subr.mxu0 0.0
  %3143 = vmatpush2.msra.mxu0 0.0
  %3144 = vmatprep.subr.mxu0 0.0
  %3145 = vmatpush2.msra.mxu0 0.0
  %3146 = vmatprep.subr.mxu0 0.0
  %3147 = vmatpush2.msra.mxu0 0.0
  %3148 = vmatprep.mubr.f32.mxu0 0.0
  %3149 = vmatmul.mubr.f32.gmra.mxu0 %v3082
  %v3150 = vpop.f32.mrf.mxu0
  %v3151 = vadd.f32 0.0, %v3150
  %v3152 = vpop.f32.mrf.mxu0
  %v3153 = vadd.f32 0.0, %v3152
  %3154 = vdwg.mxu0
  %3155 = vmatprep.subr.mxu0 0.0
  %3156 = vmatpush1.msra.mxu0 0.0
  %3157 = vmatprep.subr.mxu0 0.0
  %3158 = vmatpush1.msra.mxu0 0.0
  %3159 = vmatprep.subr.mxu0 0.0
  %3160 = vmatpush1.msra.mxu0 0.0
  %3161 = vmatprep.subr.mxu0 0.0
  %3162 = vmatpush1.msra.mxu0 0.0
  %3163 = vmatprep.subr.mxu0 0.0
  %3164 = vmatpush1.msra.mxu0 0.0
  %3165 = vmatprep.subr.mxu0 0.0
  %3166 = vmatpush1.msra.mxu0 0.0
  %3167 = vmatprep.subr.mxu0 0.0
  %3168 = vmatpush1.msra.mxu0 0.0
  %3169 = vmatprep.subr.mxu0 0.0
  %3170 = vmatpush1.msra.mxu0 0.0
  %3171 = vmatprep.subr.mxu0 0.0
  %3172 = vmatpush1.msra.mxu0 0.0
  %3173 = vmatprep.subr.mxu0 0.0
  %3174 = vmatpush1.msra.mxu0 0.0
  %3175 = vmatprep.subr.mxu0 0.0
  %3176 = vmatpush1.msra.mxu0 0.0
  %3177 = vmatprep.subr.mxu0 0.0
  %3178 = vmatpush1.msra.mxu0 0.0
  %3179 = vmatprep.subr.mxu0 %v469
  %3180 = vmatpush1.msra.mxu0 %v468
  %3181 = vmatprep.subr.mxu0 %v465
  %3182 = vmatpush1.msra.mxu0 %v464
  %3183 = vmatprep.subr.mxu0 %v461
  %3184 = vmatpush1.msra.mxu0 %v460
  %3185 = vmatprep.subr.mxu0 %v457
  %3186 = vmatpush1.msra.mxu0 %v456
  %3187 = vmatprep.subr.mxu0 0.0
  %3188 = vmatpush2.msra.mxu0 0.0
  %3189 = vmatprep.subr.mxu0 0.0
  %3190 = vmatpush2.msra.mxu0 0.0
  %3191 = vmatprep.subr.mxu0 0.0
  %3192 = vmatpush2.msra.mxu0 0.0
  %3193 = vmatprep.subr.mxu0 0.0
  %3194 = vmatpush2.msra.mxu0 0.0
  %3195 = vmatprep.subr.mxu0 0.0
  %3196 = vmatpush2.msra.mxu0 0.0
  %3197 = vmatprep.subr.mxu0 0.0
  %3198 = vmatpush2.msra.mxu0 0.0
  %3199 = vmatprep.subr.mxu0 0.0
  %3200 = vmatpush2.msra.mxu0 0.0
  %3201 = vmatprep.subr.mxu0 0.0
  %3202 = vmatpush2.msra.mxu0 0.0
  %3203 = vmatprep.subr.mxu0 0.0
  %3204 = vmatpush2.msra.mxu0 0.0
  %3205 = vmatprep.subr.mxu0 0.0
  %3206 = vmatpush2.msra.mxu0 0.0
  %3207 = vmatprep.subr.mxu0 0.0
  %3208 = vmatpush2.msra.mxu0 0.0
  %3209 = vmatprep.subr.mxu0 0.0
  %3210 = vmatpush2.msra.mxu0 0.0
  %3211 = vmatprep.subr.mxu0 0.0
  %3212 = vmatpush2.msra.mxu0 0.0
  %3213 = vmatprep.subr.mxu0 0.0
  %3214 = vmatpush2.msra.mxu0 0.0
  %3215 = vmatprep.subr.mxu0 0.0
  %3216 = vmatpush2.msra.mxu0 0.0
  %3217 = vmatprep.subr.mxu0 0.0
  %3218 = vmatpush2.msra.mxu0 0.0
  %3219 = vmatprep.mubr.f32.mxu0 0.0
  %3220 = vmatmul.mubr.f32.gmra.mxu0 %v3082
  %v3221 = vpop.f32.mrf.mxu0
  %v3222 = vadd.f32 0.0, %v3221
  %v3223 = vpop.f32.mrf.mxu0
  %v3224 = vadd.f32 0.0, %v3223
  %3225 = vdwg.mxu0
  %v3230 = vrot.slane %v3151, 2
  %v3231 = vrot.slane %v3153, 2
  %v3232 = vrot.slane %v3222, 2
  %v3233 = vrot.slane %v3224, 2
  %v3238 = vadd.f32 %v3072, %v3230
  %v3239 = vadd.f32 %v3073, %v3231
  %v3240 = vadd.f32 %v3074, %v3232
  %v3241 = vadd.f32 %v3075, %v3233
  %v3243 = vrot.slane %v3069, 2
  %v3244 = vsel %vm123, %v3243, 0
  %3246 = vmatprep.subr.mxu0 0.0
  %3247 = vmatpush1.msra.mxu0 0.0
  %3248 = vmatprep.subr.mxu0 0.0
  %3249 = vmatpush1.msra.mxu0 0.0
  %3250 = vmatprep.subr.mxu0 0.0
  %3251 = vmatpush1.msra.mxu0 0.0
  %3252 = vmatprep.subr.mxu0 0.0
  %3253 = vmatpush1.msra.mxu0 0.0
  %3254 = vmatprep.subr.mxu0 0.0
  %3255 = vmatpush1.msra.mxu0 0.0
  %3256 = vmatprep.subr.mxu0 0.0
  %3257 = vmatpush1.msra.mxu0 0.0
  %3258 = vmatprep.subr.mxu0 0.0
  %3259 = vmatpush1.msra.mxu0 0.0
  %3260 = vmatprep.subr.mxu0 0.0
  %3261 = vmatpush1.msra.mxu0 0.0
  %3262 = vmatprep.subr.mxu0 0.0
  %3263 = vmatpush1.msra.mxu0 0.0
  %3264 = vmatprep.subr.mxu0 0.0
  %3265 = vmatpush1.msra.mxu0 0.0
  %3266 = vmatprep.subr.mxu0 0.0
  %3267 = vmatpush1.msra.mxu0 0.0
  %3268 = vmatprep.subr.mxu0 0.0
  %3269 = vmatpush1.msra.mxu0 0.0
  %3270 = vmatprep.subr.mxu0 %v483
  %3271 = vmatpush1.msra.mxu0 %v482
  %3272 = vmatprep.subr.mxu0 %v479
  %3273 = vmatpush1.msra.mxu0 %v478
  %3274 = vmatprep.subr.mxu0 %v475
  %3275 = vmatpush1.msra.mxu0 %v474
  %3276 = vmatprep.subr.mxu0 %v471
  %3277 = vmatpush1.msra.mxu0 %v470
  %3278 = vmatprep.subr.mxu0 0.0
  %3279 = vmatpush2.msra.mxu0 0.0
  %3280 = vmatprep.subr.mxu0 0.0
  %3281 = vmatpush2.msra.mxu0 0.0
  %3282 = vmatprep.subr.mxu0 0.0
  %3283 = vmatpush2.msra.mxu0 0.0
  %3284 = vmatprep.subr.mxu0 0.0
  %3285 = vmatpush2.msra.mxu0 0.0
  %3286 = vmatprep.subr.mxu0 0.0
  %3287 = vmatpush2.msra.mxu0 0.0
  %3288 = vmatprep.subr.mxu0 0.0
  %3289 = vmatpush2.msra.mxu0 0.0
  %3290 = vmatprep.subr.mxu0 0.0
  %3291 = vmatpush2.msra.mxu0 0.0
  %3292 = vmatprep.subr.mxu0 0.0
  %3293 = vmatpush2.msra.mxu0 0.0
  %3294 = vmatprep.subr.mxu0 0.0
  %3295 = vmatpush2.msra.mxu0 0.0
  %3296 = vmatprep.subr.mxu0 0.0
  %3297 = vmatpush2.msra.mxu0 0.0
  %3298 = vmatprep.subr.mxu0 0.0
  %3299 = vmatpush2.msra.mxu0 0.0
  %3300 = vmatprep.subr.mxu0 0.0
  %3301 = vmatpush2.msra.mxu0 0.0
  %3302 = vmatprep.subr.mxu0 0.0
  %3303 = vmatpush2.msra.mxu0 0.0
  %3304 = vmatprep.subr.mxu0 0.0
  %3305 = vmatpush2.msra.mxu0 0.0
  %3306 = vmatprep.subr.mxu0 0.0
  %3307 = vmatpush2.msra.mxu0 0.0
  %3308 = vmatprep.subr.mxu0 0.0
  %3309 = vmatpush2.msra.mxu0 0.0
  %3310 = vmatprep.mubr.f32.mxu0 0.0
  %3311 = vmatmul.mubr.f32.gmra.mxu0 %v3244
  %v3312 = vpop.f32.mrf.mxu0
  %v3313 = vadd.f32 0.0, %v3312
  %v3314 = vpop.f32.mrf.mxu0
  %v3315 = vadd.f32 0.0, %v3314
  %3316 = vdwg.mxu0
  %3317 = vmatprep.subr.mxu0 0.0
  %3318 = vmatpush1.msra.mxu0 0.0
  %3319 = vmatprep.subr.mxu0 0.0
  %3320 = vmatpush1.msra.mxu0 0.0
  %3321 = vmatprep.subr.mxu0 0.0
  %3322 = vmatpush1.msra.mxu0 0.0
  %3323 = vmatprep.subr.mxu0 0.0
  %3324 = vmatpush1.msra.mxu0 0.0
  %3325 = vmatprep.subr.mxu0 0.0
  %3326 = vmatpush1.msra.mxu0 0.0
  %3327 = vmatprep.subr.mxu0 0.0
  %3328 = vmatpush1.msra.mxu0 0.0
  %3329 = vmatprep.subr.mxu0 0.0
  %3330 = vmatpush1.msra.mxu0 0.0
  %3331 = vmatprep.subr.mxu0 0.0
  %3332 = vmatpush1.msra.mxu0 0.0
  %3333 = vmatprep.subr.mxu0 0.0
  %3334 = vmatpush1.msra.mxu0 0.0
  %3335 = vmatprep.subr.mxu0 0.0
  %3336 = vmatpush1.msra.mxu0 0.0
  %3337 = vmatprep.subr.mxu0 0.0
  %3338 = vmatpush1.msra.mxu0 0.0
  %3339 = vmatprep.subr.mxu0 0.0
  %3340 = vmatpush1.msra.mxu0 0.0
  %3341 = vmatprep.subr.mxu0 %v485
  %3342 = vmatpush1.msra.mxu0 %v484
  %3343 = vmatprep.subr.mxu0 %v481
  %3344 = vmatpush1.msra.mxu0 %v480
  %3345 = vmatprep.subr.mxu0 %v477
  %3346 = vmatpush1.msra.mxu0 %v476
  %3347 = vmatprep.subr.mxu0 %v473
  %3348 = vmatpush1.msra.mxu0 %v472
  %3349 = vmatprep.subr.mxu0 0.0
  %3350 = vmatpush2.msra.mxu0 0.0
  %3351 = vmatprep.subr.mxu0 0.0
  %3352 = vmatpush2.msra.mxu0 0.0
  %3353 = vmatprep.subr.mxu0 0.0
  %3354 = vmatpush2.msra.mxu0 0.0
  %3355 = vmatprep.subr.mxu0 0.0
  %3356 = vmatpush2.msra.mxu0 0.0
  %3357 = vmatprep.subr.mxu0 0.0
  %3358 = vmatpush2.msra.mxu0 0.0
  %3359 = vmatprep.subr.mxu0 0.0
  %3360 = vmatpush2.msra.mxu0 0.0
  %3361 = vmatprep.subr.mxu0 0.0
  %3362 = vmatpush2.msra.mxu0 0.0
  %3363 = vmatprep.subr.mxu0 0.0
  %3364 = vmatpush2.msra.mxu0 0.0
  %3365 = vmatprep.subr.mxu0 0.0
  %3366 = vmatpush2.msra.mxu0 0.0
  %3367 = vmatprep.subr.mxu0 0.0
  %3368 = vmatpush2.msra.mxu0 0.0
  %3369 = vmatprep.subr.mxu0 0.0
  %3370 = vmatpush2.msra.mxu0 0.0
  %3371 = vmatprep.subr.mxu0 0.0
  %3372 = vmatpush2.msra.mxu0 0.0
  %3373 = vmatprep.subr.mxu0 0.0
  %3374 = vmatpush2.msra.mxu0 0.0
  %3375 = vmatprep.subr.mxu0 0.0
  %3376 = vmatpush2.msra.mxu0 0.0
  %3377 = vmatprep.subr.mxu0 0.0
  %3378 = vmatpush2.msra.mxu0 0.0
  %3379 = vmatprep.subr.mxu0 0.0
  %3380 = vmatpush2.msra.mxu0 0.0
  %3381 = vmatprep.mubr.f32.mxu0 0.0
  %3382 = vmatmul.mubr.f32.gmra.mxu0 %v3244
  %v3383 = vpop.f32.mrf.mxu0
  %v3384 = vadd.f32 0.0, %v3383
  %v3385 = vpop.f32.mrf.mxu0
  %v3386 = vadd.f32 0.0, %v3385
  %3387 = vdwg.mxu0
  %v3388 = vadd.f32 %v3076, %v3313
  %v3389 = vadd.f32 %v3077, %v3315
  %v3390 = vadd.f32 %v3078, %v3384
  %v3391 = vadd.f32 %v3079, %v3386
  %v3392 = vmul.f32 %v3238, 0.5
  %v3393 = vtanh.pop %v3392
  %v3394 = vmul.f32 %v3393, 0.5
  %v3395 = vadd.f32 %v3394, 0.5
  %v3396 = vmul.f32 %v3239, 0.5
  %v3397 = vtanh.pop %v3396
  %v3398 = vmul.f32 %v3397, 0.5
  %v3399 = vadd.f32 %v3398, 0.5
  %v3400 = vtanh.pop %v3240
  %v3401 = vmul.f32 %v3241, 0.5
  %v3402 = vtanh.pop %v3401
  %v3403 = vmul.f32 %v3402, 0.5
  %v3404 = vadd.f32 %v3403, 0.5
  %v3406 = vrot.slane %v3046, 6
  %v3408 = vmul.f32 %v3399, %v3406
  %v3409 = vmul.f32 %v3395, %v3400
  %v3410 = vadd.f32 %v3408, %v3409
  %v3411 = vtanh.pop %v3410
  %v3412 = vmul.f32 %v3404, %v3411
  %v3413 = vmul.f32 %v3388, 0.5
  %v3414 = vtanh.pop %v3413
  %v3415 = vmul.f32 %v3414, 0.5
  %v3416 = vadd.f32 %v3415, 0.5
  %v3417 = vmul.f32 %v3389, 0.5
  %v3418 = vtanh.pop %v3417
  %v3419 = vmul.f32 %v3418, 0.5
  %v3420 = vadd.f32 %v3419, 0.5
  %v3421 = vtanh.pop %v3390
  %v3422 = vmul.f32 %v3391, 0.5
  %v3423 = vtanh.pop %v3422
  %v3424 = vmul.f32 %v3423, 0.5
  %v3425 = vadd.f32 %v3424, 0.5
  %v3427 = vrot.slane %v3067, 2
  %v3429 = vmul.f32 %v3420, %v3427
  %v3430 = vmul.f32 %v3416, %v3421
  %v3431 = vadd.f32 %v3429, %v3430
  %v3432 = vtanh.pop %v3431
  %v3433 = vmul.f32 %v3425, %v3432
  %3434 = vst.msk [vmem:[#allocation3 + $0x8] sm:$0xc0] %vm839, %v3412
  %3435 = vst.msk [vmem:[#allocation3 + $0x10] sm:$0x3] %vm837, %v3433
  %v3436 = vld [vmem:[#allocation3] sm:$0xff]
  %v3437 = vld [vmem:[#allocation3 + $0x8] sm:$0xff]
  %v3438 = vld [vmem:[#allocation3 + $0x10] sm:$0xff]
  %v3439 = vld [vmem:[#allocation3 + $0x18] sm:$0xff]
  %v3440 = vld [vmem:[%s5] sm:$0xff]
  %v3441 = vld [vmem:[%s5 + $0x8] sm:$0xff]
  %v3442 = vld [vmem:[%s5 + $0x10] sm:$0xff]
  %v3443 = vld [vmem:[%s5 + $0x18] sm:$0xff]
  %v3444 = vld [vmem:[%s5 + $0x20] sm:$0xff]
  %v3445 = vld [vmem:[%s5 + $0x28] sm:$0xff]
  %v3446 = vld [vmem:[%s5 + $0x30] sm:$0xff]
  %v3447 = vld [vmem:[%s5 + $0x38] sm:$0xff]
  %v3448 = vld [vmem:[%s5 + $0x40] sm:$0xff]
  %v3449 = vld [vmem:[%s5 + $0x48] sm:$0xff]
  %v3450 = vld [vmem:[%s5 + $0x50] sm:$0xff]
  %v3451 = vld [vmem:[%s5 + $0x58] sm:$0xff]
  %v3452 = vld [vmem:[%s5 + $0x60] sm:$0xff]
  %v3453 = vld [vmem:[%s5 + $0x68] sm:$0xff]
  %v3454 = vld [vmem:[%s5 + $0x70] sm:$0xff]
  %v3455 = vld [vmem:[%s5 + $0x78] sm:$0xff]
  %v3456 = vld [vmem:[%s5 + $0x80] sm:$0xff]
  %v3457 = vld [vmem:[%s5 + $0x88] sm:$0xff]
  %v3458 = vld [vmem:[%s5 + $0x90] sm:$0xff]
  %v3459 = vld [vmem:[%s5 + $0x98] sm:$0xff]
  %v3460 = vld [vmem:[%s5 + $0xa0] sm:$0xff]
  %v3461 = vld [vmem:[%s5 + $0xa8] sm:$0xff]
  %v3462 = vld [vmem:[%s5 + $0xb0] sm:$0xff]
  %v3463 = vld [vmem:[%s5 + $0xb8] sm:$0xff]
  %v3464 = vld [vmem:[%s5 + $0xc0] sm:$0xff]
  %v3465 = vld [vmem:[%s5 + $0xc8] sm:$0xff]
  %v3466 = vld [vmem:[%s5 + $0xd0] sm:$0xff]
  %v3467 = vld [vmem:[%s5 + $0xd8] sm:$0xff]
  %v3468 = vld [vmem:[%s5 + $0xe0] sm:$0xff]
  %v3469 = vld [vmem:[%s5 + $0xe8] sm:$0xff]
  %v3470 = vld [vmem:[%s5 + $0xf0] sm:$0xff]
  %v3471 = vld [vmem:[%s5 + $0xf8] sm:$0xff]
  %v3472 = vld [vmem:[%s6] sm:$0xff]
  %v3473 = vld [vmem:[%s6 + $0x8] sm:$0xff]
  %v3474 = vld [vmem:[%s6 + $0x10] sm:$0xff]
  %v3475 = vld [vmem:[%s6 + $0x18] sm:$0xff]
  %v3476 = vld [vmem:[%s6 + $0x20] sm:$0xff]
  %v3477 = vld [vmem:[%s6 + $0x28] sm:$0xff]
  %v3478 = vld [vmem:[%s6 + $0x30] sm:$0xff]
  %v3479 = vld [vmem:[%s6 + $0x38] sm:$0xff]
  %v3480 = vld [vmem:[%s6 + $0x40] sm:$0xff]
  %v3481 = vld [vmem:[%s6 + $0x48] sm:$0xff]
  %v3482 = vld [vmem:[%s6 + $0x50] sm:$0xff]
  %v3483 = vld [vmem:[%s6 + $0x58] sm:$0xff]
  %v3484 = vld [vmem:[%s6 + $0x60] sm:$0xff]
  %v3485 = vld [vmem:[%s6 + $0x68] sm:$0xff]
  %v3486 = vld [vmem:[%s6 + $0x70] sm:$0xff]
  %v3487 = vld [vmem:[%s6 + $0x78] sm:$0xff]
  %v3488 = vld [vmem:[%s6 + $0x80] sm:$0xff]
  %v3489 = vld [vmem:[%s6 + $0x88] sm:$0xff]
  %v3490 = vld [vmem:[%s6 + $0x90] sm:$0xff]
  %v3491 = vld [vmem:[%s6 + $0x98] sm:$0xff]
  %v3492 = vld [vmem:[%s6 + $0xa0] sm:$0xff]
  %v3493 = vld [vmem:[%s6 + $0xa8] sm:$0xff]
  %v3494 = vld [vmem:[%s6 + $0xb0] sm:$0xff]
  %v3495 = vld [vmem:[%s6 + $0xb8] sm:$0xff]
  %v3496 = vld [vmem:[%s6 + $0xc0] sm:$0xff]
  %v3497 = vld [vmem:[%s6 + $0xc8] sm:$0xff]
  %v3498 = vld [vmem:[%s6 + $0xd0] sm:$0xff]
  %v3499 = vld [vmem:[%s6 + $0xd8] sm:$0xff]
  %v3500 = vld [vmem:[%s6 + $0xe0] sm:$0xff]
  %v3501 = vld [vmem:[%s6 + $0xe8] sm:$0xff]
  %v3502 = vld [vmem:[%s6 + $0xf0] sm:$0xff]
  %v3503 = vld [vmem:[%s6 + $0xf8] sm:$0xff]
  %v3505 = vsel %vm123, %v3438, 0
  %v3508 = vsel %vm123, %v3439, 0
  %3510 = vmatprep.subr.mxu0 0.0
  %3511 = vmatpush1.msra.mxu0 0.0
  %3512 = vmatprep.subr.mxu0 0.0
  %3513 = vmatpush1.msra.mxu0 0.0
  %3514 = vmatprep.subr.mxu0 0.0
  %3515 = vmatpush1.msra.mxu0 0.0
  %3516 = vmatprep.subr.mxu0 0.0
  %3517 = vmatpush1.msra.mxu0 0.0
  %3518 = vmatprep.subr.mxu0 0.0
  %3519 = vmatpush1.msra.mxu0 0.0
  %3520 = vmatprep.subr.mxu0 0.0
  %3521 = vmatpush1.msra.mxu0 0.0
  %3522 = vmatprep.subr.mxu0 0.0
  %3523 = vmatpush1.msra.mxu0 0.0
  %3524 = vmatprep.subr.mxu0 0.0
  %3525 = vmatpush1.msra.mxu0 0.0
  %3526 = vmatprep.subr.mxu0 0.0
  %3527 = vmatpush1.msra.mxu0 0.0
  %3528 = vmatprep.subr.mxu0 0.0
  %3529 = vmatpush1.msra.mxu0 0.0
  %3530 = vmatprep.subr.mxu0 0.0
  %3531 = vmatpush1.msra.mxu0 0.0
  %3532 = vmatprep.subr.mxu0 0.0
  %3533 = vmatpush1.msra.mxu0 0.0
  %3534 = vmatprep.subr.mxu0 %v3497
  %3535 = vmatpush1.msra.mxu0 %v3496
  %3536 = vmatprep.subr.mxu0 %v3489
  %3537 = vmatpush1.msra.mxu0 %v3488
  %3538 = vmatprep.subr.mxu0 %v3481
  %3539 = vmatpush1.msra.mxu0 %v3480
  %3540 = vmatprep.subr.mxu0 %v3473
  %3541 = vmatpush1.msra.mxu0 %v3472
  %3542 = vmatprep.subr.mxu0 0.0
  %3543 = vmatpush2.msra.mxu0 0.0
  %3544 = vmatprep.subr.mxu0 0.0
  %3545 = vmatpush2.msra.mxu0 0.0
  %3546 = vmatprep.subr.mxu0 0.0
  %3547 = vmatpush2.msra.mxu0 0.0
  %3548 = vmatprep.subr.mxu0 0.0
  %3549 = vmatpush2.msra.mxu0 0.0
  %3550 = vmatprep.subr.mxu0 0.0
  %3551 = vmatpush2.msra.mxu0 0.0
  %3552 = vmatprep.subr.mxu0 0.0
  %3553 = vmatpush2.msra.mxu0 0.0
  %3554 = vmatprep.subr.mxu0 0.0
  %3555 = vmatpush2.msra.mxu0 0.0
  %3556 = vmatprep.subr.mxu0 0.0
  %3557 = vmatpush2.msra.mxu0 0.0
  %3558 = vmatprep.subr.mxu0 0.0
  %3559 = vmatpush2.msra.mxu0 0.0
  %3560 = vmatprep.subr.mxu0 0.0
  %3561 = vmatpush2.msra.mxu0 0.0
  %3562 = vmatprep.subr.mxu0 0.0
  %3563 = vmatpush2.msra.mxu0 0.0
  %3564 = vmatprep.subr.mxu0 0.0
  %3565 = vmatpush2.msra.mxu0 0.0
  %3566 = vmatprep.subr.mxu0 0.0
  %3567 = vmatpush2.msra.mxu0 0.0
  %3568 = vmatprep.subr.mxu0 0.0
  %3569 = vmatpush2.msra.mxu0 0.0
  %3570 = vmatprep.subr.mxu0 0.0
  %3571 = vmatpush2.msra.mxu0 0.0
  %3572 = vmatprep.subr.mxu0 0.0
  %3573 = vmatpush2.msra.mxu0 0.0
  %3574 = vmatprep.mubr.f32.mxu0 0.0
  %3575 = vmatmul.mubr.f32.gmra.mxu0 %v3505
  %v3576 = vpop.f32.mrf.mxu0
  %v3577 = vadd.f32 0.0, %v3576
  %v3578 = vpop.f32.mrf.mxu0
  %v3579 = vadd.f32 0.0, %v3578
  %3580 = vmatprep.mubr.f32.mxu0 0.0
  %3581 = vmatmul.mubr.f32.gmra.mxu0 %v3508
  %v3582 = vpop.f32.mrf.mxu0
  %v3583 = vadd.f32 0.0, %v3582
  %v3584 = vpop.f32.mrf.mxu0
  %v3585 = vadd.f32 0.0, %v3584
  %3586 = vdwg.mxu0
  %3587 = vmatprep.subr.mxu0 0.0
  %3588 = vmatpush1.msra.mxu0 0.0
  %3589 = vmatprep.subr.mxu0 0.0
  %3590 = vmatpush1.msra.mxu0 0.0
  %3591 = vmatprep.subr.mxu0 0.0
  %3592 = vmatpush1.msra.mxu0 0.0
  %3593 = vmatprep.subr.mxu0 0.0
  %3594 = vmatpush1.msra.mxu0 0.0
  %3595 = vmatprep.subr.mxu0 0.0
  %3596 = vmatpush1.msra.mxu0 0.0
  %3597 = vmatprep.subr.mxu0 0.0
  %3598 = vmatpush1.msra.mxu0 0.0
  %3599 = vmatprep.subr.mxu0 0.0
  %3600 = vmatpush1.msra.mxu0 0.0
  %3601 = vmatprep.subr.mxu0 0.0
  %3602 = vmatpush1.msra.mxu0 0.0
  %3603 = vmatprep.subr.mxu0 0.0
  %3604 = vmatpush1.msra.mxu0 0.0
  %3605 = vmatprep.subr.mxu0 0.0
  %3606 = vmatpush1.msra.mxu0 0.0
  %3607 = vmatprep.subr.mxu0 0.0
  %3608 = vmatpush1.msra.mxu0 0.0
  %3609 = vmatprep.subr.mxu0 0.0
  %3610 = vmatpush1.msra.mxu0 0.0
  %3611 = vmatprep.subr.mxu0 %v3499
  %3612 = vmatpush1.msra.mxu0 %v3498
  %3613 = vmatprep.subr.mxu0 %v3491
  %3614 = vmatpush1.msra.mxu0 %v3490
  %3615 = vmatprep.subr.mxu0 %v3483
  %3616 = vmatpush1.msra.mxu0 %v3482
  %3617 = vmatprep.subr.mxu0 %v3475
  %3618 = vmatpush1.msra.mxu0 %v3474
  %3619 = vmatprep.subr.mxu0 0.0
  %3620 = vmatpush2.msra.mxu0 0.0
  %3621 = vmatprep.subr.mxu0 0.0
  %3622 = vmatpush2.msra.mxu0 0.0
  %3623 = vmatprep.subr.mxu0 0.0
  %3624 = vmatpush2.msra.mxu0 0.0
  %3625 = vmatprep.subr.mxu0 0.0
  %3626 = vmatpush2.msra.mxu0 0.0
  %3627 = vmatprep.subr.mxu0 0.0
  %3628 = vmatpush2.msra.mxu0 0.0
  %3629 = vmatprep.subr.mxu0 0.0
  %3630 = vmatpush2.msra.mxu0 0.0
  %3631 = vmatprep.subr.mxu0 0.0
  %3632 = vmatpush2.msra.mxu0 0.0
  %3633 = vmatprep.subr.mxu0 0.0
  %3634 = vmatpush2.msra.mxu0 0.0
  %3635 = vmatprep.subr.mxu0 0.0
  %3636 = vmatpush2.msra.mxu0 0.0
  %3637 = vmatprep.subr.mxu0 0.0
  %3638 = vmatpush2.msra.mxu0 0.0
  %3639 = vmatprep.subr.mxu0 0.0
  %3640 = vmatpush2.msra.mxu0 0.0
  %3641 = vmatprep.subr.mxu0 0.0
  %3642 = vmatpush2.msra.mxu0 0.0
  %3643 = vmatprep.subr.mxu0 0.0
  %3644 = vmatpush2.msra.mxu0 0.0
  %3645 = vmatprep.subr.mxu0 0.0
  %3646 = vmatpush2.msra.mxu0 0.0
  %3647 = vmatprep.subr.mxu0 0.0
  %3648 = vmatpush2.msra.mxu0 0.0
  %3649 = vmatprep.subr.mxu0 0.0
  %3650 = vmatpush2.msra.mxu0 0.0
  %3651 = vmatprep.mubr.f32.mxu0 0.0
  %3652 = vmatmul.mubr.f32.gmra.mxu0 %v3505
  %v3653 = vpop.f32.mrf.mxu0
  %v3654 = vadd.f32 0.0, %v3653
  %v3655 = vpop.f32.mrf.mxu0
  %v3656 = vadd.f32 0.0, %v3655
  %3657 = vmatprep.mubr.f32.mxu0 0.0
  %3658 = vmatmul.mubr.f32.gmra.mxu0 %v3508
  %v3659 = vpop.f32.mrf.mxu0
  %v3660 = vadd.f32 0.0, %v3659
  %v3661 = vpop.f32.mrf.mxu0
  %v3662 = vadd.f32 0.0, %v3661
  %3663 = vdwg.mxu0
  %3664 = vmatprep.subr.mxu0 0.0
  %3665 = vmatpush1.msra.mxu0 0.0
  %3666 = vmatprep.subr.mxu0 0.0
  %3667 = vmatpush1.msra.mxu0 0.0
  %3668 = vmatprep.subr.mxu0 0.0
  %3669 = vmatpush1.msra.mxu0 0.0
  %3670 = vmatprep.subr.mxu0 0.0
  %3671 = vmatpush1.msra.mxu0 0.0
  %3672 = vmatprep.subr.mxu0 0.0
  %3673 = vmatpush1.msra.mxu0 0.0
  %3674 = vmatprep.subr.mxu0 0.0
  %3675 = vmatpush1.msra.mxu0 0.0
  %3676 = vmatprep.subr.mxu0 0.0
  %3677 = vmatpush1.msra.mxu0 0.0
  %3678 = vmatprep.subr.mxu0 0.0
  %3679 = vmatpush1.msra.mxu0 0.0
  %3680 = vmatprep.subr.mxu0 0.0
  %3681 = vmatpush1.msra.mxu0 0.0
  %3682 = vmatprep.subr.mxu0 0.0
  %3683 = vmatpush1.msra.mxu0 0.0
  %3684 = vmatprep.subr.mxu0 0.0
  %3685 = vmatpush1.msra.mxu0 0.0
  %3686 = vmatprep.subr.mxu0 0.0
  %3687 = vmatpush1.msra.mxu0 0.0
  %3688 = vmatprep.subr.mxu0 %v3501
  %3689 = vmatpush1.msra.mxu0 %v3500
  %3690 = vmatprep.subr.mxu0 %v3493
  %3691 = vmatpush1.msra.mxu0 %v3492
  %3692 = vmatprep.subr.mxu0 %v3485
  %3693 = vmatpush1.msra.mxu0 %v3484
  %3694 = vmatprep.subr.mxu0 %v3477
  %3695 = vmatpush1.msra.mxu0 %v3476
  %3696 = vmatprep.subr.mxu0 0.0
  %3697 = vmatpush2.msra.mxu0 0.0
  %3698 = vmatprep.subr.mxu0 0.0
  %3699 = vmatpush2.msra.mxu0 0.0
  %3700 = vmatprep.subr.mxu0 0.0
  %3701 = vmatpush2.msra.mxu0 0.0
  %3702 = vmatprep.subr.mxu0 0.0
  %3703 = vmatpush2.msra.mxu0 0.0
  %3704 = vmatprep.subr.mxu0 0.0
  %3705 = vmatpush2.msra.mxu0 0.0
  %3706 = vmatprep.subr.mxu0 0.0
  %3707 = vmatpush2.msra.mxu0 0.0
  %3708 = vmatprep.subr.mxu0 0.0
  %3709 = vmatpush2.msra.mxu0 0.0
  %3710 = vmatprep.subr.mxu0 0.0
  %3711 = vmatpush2.msra.mxu0 0.0
  %3712 = vmatprep.subr.mxu0 0.0
  %3713 = vmatpush2.msra.mxu0 0.0
  %3714 = vmatprep.subr.mxu0 0.0
  %3715 = vmatpush2.msra.mxu0 0.0
  %3716 = vmatprep.subr.mxu0 0.0
  %3717 = vmatpush2.msra.mxu0 0.0
  %3718 = vmatprep.subr.mxu0 0.0
  %3719 = vmatpush2.msra.mxu0 0.0
  %3720 = vmatprep.subr.mxu0 0.0
  %3721 = vmatpush2.msra.mxu0 0.0
  %3722 = vmatprep.subr.mxu0 0.0
  %3723 = vmatpush2.msra.mxu0 0.0
  %3724 = vmatprep.subr.mxu0 0.0
  %3725 = vmatpush2.msra.mxu0 0.0
  %3726 = vmatprep.subr.mxu0 0.0
  %3727 = vmatpush2.msra.mxu0 0.0
  %3728 = vmatprep.mubr.f32.mxu0 0.0
  %3729 = vmatmul.mubr.f32.gmra.mxu0 %v3505
  %v3730 = vpop.f32.mrf.mxu0
  %v3731 = vadd.f32 0.0, %v3730
  %v3732 = vpop.f32.mrf.mxu0
  %v3733 = vadd.f32 0.0, %v3732
  %3734 = vmatprep.mubr.f32.mxu0 0.0
  %3735 = vmatmul.mubr.f32.gmra.mxu0 %v3508
  %v3736 = vpop.f32.mrf.mxu0
  %v3737 = vadd.f32 0.0, %v3736
  %v3738 = vpop.f32.mrf.mxu0
  %v3739 = vadd.f32 0.0, %v3738
  %3740 = vdwg.mxu0
  %3741 = vmatprep.subr.mxu0 0.0
  %3742 = vmatpush1.msra.mxu0 0.0
  %3743 = vmatprep.subr.mxu0 0.0
  %3744 = vmatpush1.msra.mxu0 0.0
  %3745 = vmatprep.subr.mxu0 0.0
  %3746 = vmatpush1.msra.mxu0 0.0
  %3747 = vmatprep.subr.mxu0 0.0
  %3748 = vmatpush1.msra.mxu0 0.0
  %3749 = vmatprep.subr.mxu0 0.0
  %3750 = vmatpush1.msra.mxu0 0.0
  %3751 = vmatprep.subr.mxu0 0.0
  %3752 = vmatpush1.msra.mxu0 0.0
  %3753 = vmatprep.subr.mxu0 0.0
  %3754 = vmatpush1.msra.mxu0 0.0
  %3755 = vmatprep.subr.mxu0 0.0
  %3756 = vmatpush1.msra.mxu0 0.0
  %3757 = vmatprep.subr.mxu0 0.0
  %3758 = vmatpush1.msra.mxu0 0.0
  %3759 = vmatprep.subr.mxu0 0.0
  %3760 = vmatpush1.msra.mxu0 0.0
  %3761 = vmatprep.subr.mxu0 0.0
  %3762 = vmatpush1.msra.mxu0 0.0
  %3763 = vmatprep.subr.mxu0 0.0
  %3764 = vmatpush1.msra.mxu0 0.0
  %3765 = vmatprep.subr.mxu0 %v3503
  %3766 = vmatpush1.msra.mxu0 %v3502
  %3767 = vmatprep.subr.mxu0 %v3495
  %3768 = vmatpush1.msra.mxu0 %v3494
  %3769 = vmatprep.subr.mxu0 %v3487
  %3770 = vmatpush1.msra.mxu0 %v3486
  %3771 = vmatprep.subr.mxu0 %v3479
  %3772 = vmatpush1.msra.mxu0 %v3478
  %3773 = vmatprep.subr.mxu0 0.0
  %3774 = vmatpush2.msra.mxu0 0.0
  %3775 = vmatprep.subr.mxu0 0.0
  %3776 = vmatpush2.msra.mxu0 0.0
  %3777 = vmatprep.subr.mxu0 0.0
  %3778 = vmatpush2.msra.mxu0 0.0
  %3779 = vmatprep.subr.mxu0 0.0
  %3780 = vmatpush2.msra.mxu0 0.0
  %3781 = vmatprep.subr.mxu0 0.0
  %3782 = vmatpush2.msra.mxu0 0.0
  %3783 = vmatprep.subr.mxu0 0.0
  %3784 = vmatpush2.msra.mxu0 0.0
  %3785 = vmatprep.subr.mxu0 0.0
  %3786 = vmatpush2.msra.mxu0 0.0
  %3787 = vmatprep.subr.mxu0 0.0
  %3788 = vmatpush2.msra.mxu0 0.0
  %3789 = vmatprep.subr.mxu0 0.0
  %3790 = vmatpush2.msra.mxu0 0.0
  %3791 = vmatprep.subr.mxu0 0.0
  %3792 = vmatpush2.msra.mxu0 0.0
  %3793 = vmatprep.subr.mxu0 0.0
  %3794 = vmatpush2.msra.mxu0 0.0
  %3795 = vmatprep.subr.mxu0 0.0
  %3796 = vmatpush2.msra.mxu0 0.0
  %3797 = vmatprep.subr.mxu0 0.0
  %3798 = vmatpush2.msra.mxu0 0.0
  %3799 = vmatprep.subr.mxu0 0.0
  %3800 = vmatpush2.msra.mxu0 0.0
  %3801 = vmatprep.subr.mxu0 0.0
  %3802 = vmatpush2.msra.mxu0 0.0
  %3803 = vmatprep.subr.mxu0 0.0
  %3804 = vmatpush2.msra.mxu0 0.0
  %3805 = vmatprep.mubr.f32.mxu0 0.0
  %3806 = vmatmul.mubr.f32.gmra.mxu0 %v3505
  %v3807 = vpop.f32.mrf.mxu0
  %v3808 = vadd.f32 0.0, %v3807
  %v3809 = vpop.f32.mrf.mxu0
  %v3810 = vadd.f32 0.0, %v3809
  %3811 = vmatprep.mubr.f32.mxu0 0.0
  %3812 = vmatmul.mubr.f32.gmra.mxu0 %v3508
  %v3813 = vpop.f32.mrf.mxu0
  %v3814 = vadd.f32 0.0, %v3813
  %v3815 = vpop.f32.mrf.mxu0
  %v3816 = vadd.f32 0.0, %v3815
  %3817 = vdwg.mxu0
  %v3819 = vsel %vm123, %v3436, 0
  %v3822 = vsel %vm123, %v3437, 0
  %3824 = vmatprep.subr.mxu0 0.0
  %3825 = vmatpush1.msra.mxu0 0.0
  %3826 = vmatprep.subr.mxu0 0.0
  %3827 = vmatpush1.msra.mxu0 0.0
  %3828 = vmatprep.subr.mxu0 0.0
  %3829 = vmatpush1.msra.mxu0 0.0
  %3830 = vmatprep.subr.mxu0 0.0
  %3831 = vmatpush1.msra.mxu0 0.0
  %3832 = vmatprep.subr.mxu0 0.0
  %3833 = vmatpush1.msra.mxu0 0.0
  %3834 = vmatprep.subr.mxu0 0.0
  %3835 = vmatpush1.msra.mxu0 0.0
  %3836 = vmatprep.subr.mxu0 0.0
  %3837 = vmatpush1.msra.mxu0 0.0
  %3838 = vmatprep.subr.mxu0 0.0
  %3839 = vmatpush1.msra.mxu0 0.0
  %3840 = vmatprep.subr.mxu0 0.0
  %3841 = vmatpush1.msra.mxu0 0.0
  %3842 = vmatprep.subr.mxu0 0.0
  %3843 = vmatpush1.msra.mxu0 0.0
  %3844 = vmatprep.subr.mxu0 0.0
  %3845 = vmatpush1.msra.mxu0 0.0
  %3846 = vmatprep.subr.mxu0 0.0
  %3847 = vmatpush1.msra.mxu0 0.0
  %3848 = vmatprep.subr.mxu0 %v3465
  %3849 = vmatpush1.msra.mxu0 %v3464
  %3850 = vmatprep.subr.mxu0 %v3457
  %3851 = vmatpush1.msra.mxu0 %v3456
  %3852 = vmatprep.subr.mxu0 %v3449
  %3853 = vmatpush1.msra.mxu0 %v3448
  %3854 = vmatprep.subr.mxu0 %v3441
  %3855 = vmatpush1.msra.mxu0 %v3440
  %3856 = vmatprep.subr.mxu0 0.0
  %3857 = vmatpush2.msra.mxu0 0.0
  %3858 = vmatprep.subr.mxu0 0.0
  %3859 = vmatpush2.msra.mxu0 0.0
  %3860 = vmatprep.subr.mxu0 0.0
  %3861 = vmatpush2.msra.mxu0 0.0
  %3862 = vmatprep.subr.mxu0 0.0
  %3863 = vmatpush2.msra.mxu0 0.0
  %3864 = vmatprep.subr.mxu0 0.0
  %3865 = vmatpush2.msra.mxu0 0.0
  %3866 = vmatprep.subr.mxu0 0.0
  %3867 = vmatpush2.msra.mxu0 0.0
  %3868 = vmatprep.subr.mxu0 0.0
  %3869 = vmatpush2.msra.mxu0 0.0
  %3870 = vmatprep.subr.mxu0 0.0
  %3871 = vmatpush2.msra.mxu0 0.0
  %3872 = vmatprep.subr.mxu0 0.0
  %3873 = vmatpush2.msra.mxu0 0.0
  %3874 = vmatprep.subr.mxu0 0.0
  %3875 = vmatpush2.msra.mxu0 0.0
  %3876 = vmatprep.subr.mxu0 0.0
  %3877 = vmatpush2.msra.mxu0 0.0
  %3878 = vmatprep.subr.mxu0 0.0
  %3879 = vmatpush2.msra.mxu0 0.0
  %3880 = vmatprep.subr.mxu0 0.0
  %3881 = vmatpush2.msra.mxu0 0.0
  %3882 = vmatprep.subr.mxu0 0.0
  %3883 = vmatpush2.msra.mxu0 0.0
  %3884 = vmatprep.subr.mxu0 0.0
  %3885 = vmatpush2.msra.mxu0 0.0
  %3886 = vmatprep.subr.mxu0 0.0
  %3887 = vmatpush2.msra.mxu0 0.0
  %3888 = vmatprep.mubr.f32.mxu0 0.0
  %3889 = vmatmul.mubr.f32.gmra.mxu0 %v3819
  %v3890 = vpop.f32.mrf.mxu0
  %v3891 = vadd.f32 %v3577, %v3890
  %v3892 = vpop.f32.mrf.mxu0
  %v3893 = vadd.f32 %v3579, %v3892
  %3894 = vmatprep.mubr.f32.mxu0 0.0
  %3895 = vmatmul.mubr.f32.gmra.mxu0 %v3822
  %v3896 = vpop.f32.mrf.mxu0
  %v3897 = vadd.f32 %v3583, %v3896
  %v3898 = vpop.f32.mrf.mxu0
  %v3899 = vadd.f32 %v3585, %v3898
  %3900 = vdwg.mxu0
  %3901 = vmatprep.subr.mxu0 0.0
  %3902 = vmatpush1.msra.mxu0 0.0
  %3903 = vmatprep.subr.mxu0 0.0
  %3904 = vmatpush1.msra.mxu0 0.0
  %3905 = vmatprep.subr.mxu0 0.0
  %3906 = vmatpush1.msra.mxu0 0.0
  %3907 = vmatprep.subr.mxu0 0.0
  %3908 = vmatpush1.msra.mxu0 0.0
  %3909 = vmatprep.subr.mxu0 0.0
  %3910 = vmatpush1.msra.mxu0 0.0
  %3911 = vmatprep.subr.mxu0 0.0
  %3912 = vmatpush1.msra.mxu0 0.0
  %3913 = vmatprep.subr.mxu0 0.0
  %3914 = vmatpush1.msra.mxu0 0.0
  %3915 = vmatprep.subr.mxu0 0.0
  %3916 = vmatpush1.msra.mxu0 0.0
  %3917 = vmatprep.subr.mxu0 0.0
  %3918 = vmatpush1.msra.mxu0 0.0
  %3919 = vmatprep.subr.mxu0 0.0
  %3920 = vmatpush1.msra.mxu0 0.0
  %3921 = vmatprep.subr.mxu0 0.0
  %3922 = vmatpush1.msra.mxu0 0.0
  %3923 = vmatprep.subr.mxu0 0.0
  %3924 = vmatpush1.msra.mxu0 0.0
  %3925 = vmatprep.subr.mxu0 %v3467
  %3926 = vmatpush1.msra.mxu0 %v3466
  %3927 = vmatprep.subr.mxu0 %v3459
  %3928 = vmatpush1.msra.mxu0 %v3458
  %3929 = vmatprep.subr.mxu0 %v3451
  %3930 = vmatpush1.msra.mxu0 %v3450
  %3931 = vmatprep.subr.mxu0 %v3443
  %3932 = vmatpush1.msra.mxu0 %v3442
  %3933 = vmatprep.subr.mxu0 0.0
  %3934 = vmatpush2.msra.mxu0 0.0
  %3935 = vmatprep.subr.mxu0 0.0
  %3936 = vmatpush2.msra.mxu0 0.0
  %3937 = vmatprep.subr.mxu0 0.0
  %3938 = vmatpush2.msra.mxu0 0.0
  %3939 = vmatprep.subr.mxu0 0.0
  %3940 = vmatpush2.msra.mxu0 0.0
  %3941 = vmatprep.subr.mxu0 0.0
  %3942 = vmatpush2.msra.mxu0 0.0
  %3943 = vmatprep.subr.mxu0 0.0
  %3944 = vmatpush2.msra.mxu0 0.0
  %3945 = vmatprep.subr.mxu0 0.0
  %3946 = vmatpush2.msra.mxu0 0.0
  %3947 = vmatprep.subr.mxu0 0.0
  %3948 = vmatpush2.msra.mxu0 0.0
  %3949 = vmatprep.subr.mxu0 0.0
  %3950 = vmatpush2.msra.mxu0 0.0
  %3951 = vmatprep.subr.mxu0 0.0
  %3952 = vmatpush2.msra.mxu0 0.0
  %3953 = vmatprep.subr.mxu0 0.0
  %3954 = vmatpush2.msra.mxu0 0.0
  %3955 = vmatprep.subr.mxu0 0.0
  %3956 = vmatpush2.msra.mxu0 0.0
  %3957 = vmatprep.subr.mxu0 0.0
  %3958 = vmatpush2.msra.mxu0 0.0
  %3959 = vmatprep.subr.mxu0 0.0
  %3960 = vmatpush2.msra.mxu0 0.0
  %3961 = vmatprep.subr.mxu0 0.0
  %3962 = vmatpush2.msra.mxu0 0.0
  %3963 = vmatprep.subr.mxu0 0.0
  %3964 = vmatpush2.msra.mxu0 0.0
  %3965 = vmatprep.mubr.f32.mxu0 0.0
  %3966 = vmatmul.mubr.f32.gmra.mxu0 %v3819
  %v3967 = vpop.f32.mrf.mxu0
  %v3968 = vadd.f32 %v3654, %v3967
  %v3969 = vpop.f32.mrf.mxu0
  %v3970 = vadd.f32 %v3656, %v3969
  %3971 = vmatprep.mubr.f32.mxu0 0.0
  %3972 = vmatmul.mubr.f32.gmra.mxu0 %v3822
  %v3973 = vpop.f32.mrf.mxu0
  %v3974 = vadd.f32 %v3660, %v3973
  %v3975 = vpop.f32.mrf.mxu0
  %v3976 = vadd.f32 %v3662, %v3975
  %3977 = vdwg.mxu0
  %3978 = vmatprep.subr.mxu0 0.0
  %3979 = vmatpush1.msra.mxu0 0.0
  %3980 = vmatprep.subr.mxu0 0.0
  %3981 = vmatpush1.msra.mxu0 0.0
  %3982 = vmatprep.subr.mxu0 0.0
  %3983 = vmatpush1.msra.mxu0 0.0
  %3984 = vmatprep.subr.mxu0 0.0
  %3985 = vmatpush1.msra.mxu0 0.0
  %3986 = vmatprep.subr.mxu0 0.0
  %3987 = vmatpush1.msra.mxu0 0.0
  %3988 = vmatprep.subr.mxu0 0.0
  %3989 = vmatpush1.msra.mxu0 0.0
  %3990 = vmatprep.subr.mxu0 0.0
  %3991 = vmatpush1.msra.mxu0 0.0
  %3992 = vmatprep.subr.mxu0 0.0
  %3993 = vmatpush1.msra.mxu0 0.0
  %3994 = vmatprep.subr.mxu0 0.0
  %3995 = vmatpush1.msra.mxu0 0.0
  %3996 = vmatprep.subr.mxu0 0.0
  %3997 = vmatpush1.msra.mxu0 0.0
  %3998 = vmatprep.subr.mxu0 0.0
  %3999 = vmatpush1.msra.mxu0 0.0
  %4000 = vmatprep.subr.mxu0 0.0
  %4001 = vmatpush1.msra.mxu0 0.0
  %4002 = vmatprep.subr.mxu0 %v3469
  %4003 = vmatpush1.msra.mxu0 %v3468
  %4004 = vmatprep.subr.mxu0 %v3461
  %4005 = vmatpush1.msra.mxu0 %v3460
  %4006 = vmatprep.subr.mxu0 %v3453
  %4007 = vmatpush1.msra.mxu0 %v3452
  %4008 = vmatprep.subr.mxu0 %v3445
  %4009 = vmatpush1.msra.mxu0 %v3444
  %4010 = vmatprep.subr.mxu0 0.0
  %4011 = vmatpush2.msra.mxu0 0.0
  %4012 = vmatprep.subr.mxu0 0.0
  %4013 = vmatpush2.msra.mxu0 0.0
  %4014 = vmatprep.subr.mxu0 0.0
  %4015 = vmatpush2.msra.mxu0 0.0
  %4016 = vmatprep.subr.mxu0 0.0
  %4017 = vmatpush2.msra.mxu0 0.0
  %4018 = vmatprep.subr.mxu0 0.0
  %4019 = vmatpush2.msra.mxu0 0.0
  %4020 = vmatprep.subr.mxu0 0.0
  %4021 = vmatpush2.msra.mxu0 0.0
  %4022 = vmatprep.subr.mxu0 0.0
  %4023 = vmatpush2.msra.mxu0 0.0
  %4024 = vmatprep.subr.mxu0 0.0
  %4025 = vmatpush2.msra.mxu0 0.0
  %4026 = vmatprep.subr.mxu0 0.0
  %4027 = vmatpush2.msra.mxu0 0.0
  %4028 = vmatprep.subr.mxu0 0.0
  %4029 = vmatpush2.msra.mxu0 0.0
  %4030 = vmatprep.subr.mxu0 0.0
  %4031 = vmatpush2.msra.mxu0 0.0
  %4032 = vmatprep.subr.mxu0 0.0
  %4033 = vmatpush2.msra.mxu0 0.0
  %4034 = vmatprep.subr.mxu0 0.0
  %4035 = vmatpush2.msra.mxu0 0.0
  %4036 = vmatprep.subr.mxu0 0.0
  %4037 = vmatpush2.msra.mxu0 0.0
  %4038 = vmatprep.subr.mxu0 0.0
  %4039 = vmatpush2.msra.mxu0 0.0
  %4040 = vmatprep.subr.mxu0 0.0
  %4041 = vmatpush2.msra.mxu0 0.0
  %4042 = vmatprep.mubr.f32.mxu0 0.0
  %4043 = vmatmul.mubr.f32.gmra.mxu0 %v3819
  %v4044 = vpop.f32.mrf.mxu0
  %v4045 = vadd.f32 %v3731, %v4044
  %v4046 = vpop.f32.mrf.mxu0
  %v4047 = vadd.f32 %v3733, %v4046
  %4048 = vmatprep.mubr.f32.mxu0 0.0
  %4049 = vmatmul.mubr.f32.gmra.mxu0 %v3822
  %v4050 = vpop.f32.mrf.mxu0
  %v4051 = vadd.f32 %v3737, %v4050
  %v4052 = vpop.f32.mrf.mxu0
  %v4053 = vadd.f32 %v3739, %v4052
  %4054 = vdwg.mxu0
  %4055 = vmatprep.subr.mxu0 0.0
  %4056 = vmatpush1.msra.mxu0 0.0
  %4057 = vmatprep.subr.mxu0 0.0
  %4058 = vmatpush1.msra.mxu0 0.0
  %4059 = vmatprep.subr.mxu0 0.0
  %4060 = vmatpush1.msra.mxu0 0.0
  %4061 = vmatprep.subr.mxu0 0.0
  %4062 = vmatpush1.msra.mxu0 0.0
  %4063 = vmatprep.subr.mxu0 0.0
  %4064 = vmatpush1.msra.mxu0 0.0
  %4065 = vmatprep.subr.mxu0 0.0
  %4066 = vmatpush1.msra.mxu0 0.0
  %4067 = vmatprep.subr.mxu0 0.0
  %4068 = vmatpush1.msra.mxu0 0.0
  %4069 = vmatprep.subr.mxu0 0.0
  %4070 = vmatpush1.msra.mxu0 0.0
  %4071 = vmatprep.subr.mxu0 0.0
  %4072 = vmatpush1.msra.mxu0 0.0
  %4073 = vmatprep.subr.mxu0 0.0
  %4074 = vmatpush1.msra.mxu0 0.0
  %4075 = vmatprep.subr.mxu0 0.0
  %4076 = vmatpush1.msra.mxu0 0.0
  %4077 = vmatprep.subr.mxu0 0.0
  %4078 = vmatpush1.msra.mxu0 0.0
  %4079 = vmatprep.subr.mxu0 %v3471
  %4080 = vmatpush1.msra.mxu0 %v3470
  %4081 = vmatprep.subr.mxu0 %v3463
  %4082 = vmatpush1.msra.mxu0 %v3462
  %4083 = vmatprep.subr.mxu0 %v3455
  %4084 = vmatpush1.msra.mxu0 %v3454
  %4085 = vmatprep.subr.mxu0 %v3447
  %4086 = vmatpush1.msra.mxu0 %v3446
  %4087 = vmatprep.subr.mxu0 0.0
  %4088 = vmatpush2.msra.mxu0 0.0
  %4089 = vmatprep.subr.mxu0 0.0
  %4090 = vmatpush2.msra.mxu0 0.0
  %4091 = vmatprep.subr.mxu0 0.0
  %4092 = vmatpush2.msra.mxu0 0.0
  %4093 = vmatprep.subr.mxu0 0.0
  %4094 = vmatpush2.msra.mxu0 0.0
  %4095 = vmatprep.subr.mxu0 0.0
  %4096 = vmatpush2.msra.mxu0 0.0
  %4097 = vmatprep.subr.mxu0 0.0
  %4098 = vmatpush2.msra.mxu0 0.0
  %4099 = vmatprep.subr.mxu0 0.0
  %4100 = vmatpush2.msra.mxu0 0.0
  %4101 = vmatprep.subr.mxu0 0.0
  %4102 = vmatpush2.msra.mxu0 0.0
  %4103 = vmatprep.subr.mxu0 0.0
  %4104 = vmatpush2.msra.mxu0 0.0
  %4105 = vmatprep.subr.mxu0 0.0
  %4106 = vmatpush2.msra.mxu0 0.0
  %4107 = vmatprep.subr.mxu0 0.0
  %4108 = vmatpush2.msra.mxu0 0.0
  %4109 = vmatprep.subr.mxu0 0.0
  %4110 = vmatpush2.msra.mxu0 0.0
  %4111 = vmatprep.subr.mxu0 0.0
  %4112 = vmatpush2.msra.mxu0 0.0
  %4113 = vmatprep.subr.mxu0 0.0
  %4114 = vmatpush2.msra.mxu0 0.0
  %4115 = vmatprep.subr.mxu0 0.0
  %4116 = vmatpush2.msra.mxu0 0.0
  %4117 = vmatprep.subr.mxu0 0.0
  %4118 = vmatpush2.msra.mxu0 0.0
  %4119 = vmatprep.mubr.f32.mxu0 0.0
  %4120 = vmatmul.mubr.f32.gmra.mxu0 %v3819
  %v4121 = vpop.f32.mrf.mxu0
  %v4122 = vadd.f32 %v3808, %v4121
  %v4123 = vpop.f32.mrf.mxu0
  %v4124 = vadd.f32 %v3810, %v4123
  %4125 = vmatprep.mubr.f32.mxu0 0.0
  %4126 = vmatmul.mubr.f32.gmra.mxu0 %v3822
  %v4127 = vpop.f32.mrf.mxu0
  %v4128 = vadd.f32 %v3814, %v4127
  %v4129 = vpop.f32.mrf.mxu0
  %v4130 = vadd.f32 %v3816, %v4129
  %4131 = vdwg.mxu0
  %v4132 = vld [vmem:[%s7] sm:$0xff]
  %v4134 = vlaneseq
  %v4135 = vshrl.u32 %v4134, 7
  %v4136 = vsub.s32 0, %v4135
  %v4137 = vrot.slane %v4132, %v4136
  %v4138 = vlaneseq
  %v4139 = vshrl.u32 %v4138, 7
  %v4140 = vsub.s32 1, %v4139
  %v4141 = vrot.slane %v4132, %v4140
  %v4142 = vlaneseq
  %v4143 = vshrl.u32 %v4142, 7
  %v4144 = vsub.s32 2, %v4143
  %v4145 = vrot.slane %v4132, %v4144
  %v4146 = vlaneseq
  %v4147 = vshrl.u32 %v4146, 7
  %v4148 = vsub.s32 3, %v4147
  %v4149 = vrot.slane %v4132, %v4148
  %v4150 = vlaneseq
  %v4151 = vshrl.u32 %v4150, 7
  %v4152 = vsub.s32 4, %v4151
  %v4153 = vrot.slane %v4132, %v4152
  %v4154 = vlaneseq
  %v4155 = vshrl.u32 %v4154, 7
  %v4156 = vsub.s32 5, %v4155
  %v4157 = vrot.slane %v4132, %v4156
  %v4158 = vlaneseq
  %v4159 = vshrl.u32 %v4158, 7
  %v4160 = vsub.s32 6, %v4159
  %v4161 = vrot.slane %v4132, %v4160
  %v4162 = vlaneseq
  %v4163 = vshrl.u32 %v4162, 7
  %v4164 = vsub.s32 7, %v4163
  %v4165 = vrot.slane %v4132, %v4164
  %v4174 = vadd.f32 %v3891, %v4137
  %v4175 = vadd.f32 %v3893, %v4141
  %v4176 = vadd.f32 %v3968, %v4145
  %v4177 = vadd.f32 %v3970, %v4149
  %v4178 = vadd.f32 %v4045, %v4153
  %v4179 = vadd.f32 %v4047, %v4157
  %v4180 = vadd.f32 %v4122, %v4161
  %v4181 = vadd.f32 %v4124, %v4165
  %v4182 = vadd.f32 %v3897, %v4137
  %v4183 = vadd.f32 %v3899, %v4141
  %v4184 = vadd.f32 %v3974, %v4145
  %v4185 = vadd.f32 %v3976, %v4149
  %v4186 = vadd.f32 %v4051, %v4153
  %v4187 = vadd.f32 %v4053, %v4157
  %v4188 = vadd.f32 %v4128, %v4161
  %v4189 = vadd.f32 %v4130, %v4165
  %4190 = vst [vmem:[#allocation2] sm:$0xff] %v4174
  %4191 = vst [vmem:[#allocation2 + $0x8] sm:$0xff] %v4175
  %4192 = vst [vmem:[#allocation2 + $0x10] sm:$0xff] %v4176
  %4193 = vst [vmem:[#allocation2 + $0x18] sm:$0xff] %v4177
  %4194 = vst [vmem:[#allocation2 + $0x20] sm:$0xff] %v4178
  %4195 = vst [vmem:[#allocation2 + $0x28] sm:$0xff] %v4179
  %4196 = vst [vmem:[#allocation2 + $0x30] sm:$0xff] %v4180
  %4197 = vst [vmem:[#allocation2 + $0x38] sm:$0xff] %v4181
  %4198 = vst [vmem:[#allocation2 + $0x40] sm:$0xff] %v4182
  %4199 = vst [vmem:[#allocation2 + $0x48] sm:$0xff] %v4183
  %4200 = vst [vmem:[#allocation2 + $0x50] sm:$0xff] %v4184
  %4201 = vst [vmem:[#allocation2 + $0x58] sm:$0xff] %v4185
  %4202 = vst [vmem:[#allocation2 + $0x60] sm:$0xff] %v4186
  %4203 = vst [vmem:[#allocation2 + $0x68] sm:$0xff] %v4187
  %4204 = vst [vmem:[#allocation2 + $0x70] sm:$0xff] %v4188
  %4205 = vst [vmem:[#allocation2 + $0x78] sm:$0xff] %v4189
  %v4206 = vld [vmem:[%s8] sm:$0xff]
  %v4207 = vld [vmem:[%s8 + $0x8] sm:$0xff]
  %v4208 = vld [vmem:[%s8 + $0x10] sm:$0xff]
  %v4209 = vld [vmem:[%s8 + $0x18] sm:$0xff]
  %v4210 = vld [vmem:[%s8 + $0x20] sm:$0xff]
  %v4211 = vld [vmem:[%s8 + $0x28] sm:$0xff]
  %v4212 = vld [vmem:[%s8 + $0x30] sm:$0xff]
  %v4213 = vld [vmem:[%s8 + $0x38] sm:$0xff]
  %v4214 = vld [vmem:[%s8 + $0x40] sm:$0xff]
  %v4215 = vld [vmem:[%s8 + $0x48] sm:$0xff]
  %v4216 = vld [vmem:[%s8 + $0x50] sm:$0xff]
  %v4217 = vld [vmem:[%s8 + $0x58] sm:$0xff]
  %v4218 = vld [vmem:[%s8 + $0x60] sm:$0xff]
  %v4219 = vld [vmem:[%s8 + $0x68] sm:$0xff]
  %v4220 = vld [vmem:[%s8 + $0x70] sm:$0xff]
  %v4221 = vld [vmem:[%s8 + $0x78] sm:$0xff]
  %v4222 = vld [vmem:[%s9] sm:$0xff]
  %v4223 = vld [vmem:[%s9 + $0x8] sm:$0xff]
  %v4224 = vld [vmem:[%s9 + $0x10] sm:$0xff]
  %v4225 = vld [vmem:[%s9 + $0x18] sm:$0xff]
  %v4226 = vld [vmem:[%s9 + $0x20] sm:$0xff]
  %v4227 = vld [vmem:[%s9 + $0x28] sm:$0xff]
  %v4228 = vld [vmem:[%s9 + $0x30] sm:$0xff]
  %v4229 = vld [vmem:[%s9 + $0x38] sm:$0xff]
  %v4230 = vld [vmem:[%s9 + $0x40] sm:$0xff]
  %v4231 = vld [vmem:[%s9 + $0x48] sm:$0xff]
  %v4232 = vld [vmem:[%s9 + $0x50] sm:$0xff]
  %v4233 = vld [vmem:[%s9 + $0x58] sm:$0xff]
  %v4234 = vld [vmem:[%s9 + $0x60] sm:$0xff]
  %v4235 = vld [vmem:[%s9 + $0x68] sm:$0xff]
  %v4236 = vld [vmem:[%s9 + $0x70] sm:$0xff]
  %v4237 = vld [vmem:[%s9 + $0x78] sm:$0xff]
  %v4238 = vld [vmem:[#allocation2] sm:$0x3]
  %v4239 = vld [vmem:[#allocation2 + $0x8] sm:$0x3]
  %v4240 = vld [vmem:[#allocation2 + $0x10] sm:$0x3]
  %v4241 = vld [vmem:[#allocation2 + $0x18] sm:$0x3]
  %v4242 = vld [vmem:[#allocation2 + $0x60] sm:$0xc0]
  %v4243 = vld [vmem:[#allocation2 + $0x68] sm:$0xc0]
  %v4244 = vld [vmem:[#allocation2 + $0x70] sm:$0xc0]
  %v4245 = vld [vmem:[#allocation2 + $0x78] sm:$0xc0]
  %4246 = vmatprep.subr.mxu0 0.0
  %4247 = vmatpush1.msra.mxu0 0.0
  %4248 = vmatprep.subr.mxu0 0.0
  %4249 = vmatpush1.msra.mxu0 0.0
  %4250 = vmatprep.subr.mxu0 0.0
  %4251 = vmatpush1.msra.mxu0 0.0
  %4252 = vmatprep.subr.mxu0 0.0
  %4253 = vmatpush1.msra.mxu0 0.0
  %4254 = vmatprep.subr.mxu0 0.0
  %4255 = vmatpush1.msra.mxu0 0.0
  %4256 = vmatprep.subr.mxu0 0.0
  %4257 = vmatpush1.msra.mxu0 0.0
  %4258 = vmatprep.subr.mxu0 0.0
  %4259 = vmatpush1.msra.mxu0 0.0
  %4260 = vmatprep.subr.mxu0 0.0
  %4261 = vmatpush1.msra.mxu0 0.0
  %4262 = vmatprep.subr.mxu0 0.0
  %4263 = vmatpush1.msra.mxu0 0.0
  %4264 = vmatprep.subr.mxu0 0.0
  %4265 = vmatpush1.msra.mxu0 0.0
  %4266 = vmatprep.subr.mxu0 0.0
  %4267 = vmatpush1.msra.mxu0 0.0
  %4268 = vmatprep.subr.mxu0 0.0
  %4269 = vmatpush1.msra.mxu0 0.0
  %4270 = vmatprep.subr.mxu0 %v4219
  %4271 = vmatpush1.msra.mxu0 %v4218
  %4272 = vmatprep.subr.mxu0 %v4215
  %4273 = vmatpush1.msra.mxu0 %v4214
  %4274 = vmatprep.subr.mxu0 %v4211
  %4275 = vmatpush1.msra.mxu0 %v4210
  %4276 = vmatprep.subr.mxu0 %v4207
  %4277 = vmatpush1.msra.mxu0 %v4206
  %4278 = vmatprep.subr.mxu0 0.0
  %4279 = vmatpush2.msra.mxu0 0.0
  %4280 = vmatprep.subr.mxu0 0.0
  %4281 = vmatpush2.msra.mxu0 0.0
  %4282 = vmatprep.subr.mxu0 0.0
  %4283 = vmatpush2.msra.mxu0 0.0
  %4284 = vmatprep.subr.mxu0 0.0
  %4285 = vmatpush2.msra.mxu0 0.0
  %4286 = vmatprep.subr.mxu0 0.0
  %4287 = vmatpush2.msra.mxu0 0.0
  %4288 = vmatprep.subr.mxu0 0.0
  %4289 = vmatpush2.msra.mxu0 0.0
  %4290 = vmatprep.subr.mxu0 0.0
  %4291 = vmatpush2.msra.mxu0 0.0
  %4292 = vmatprep.subr.mxu0 0.0
  %4293 = vmatpush2.msra.mxu0 0.0
  %4294 = vmatprep.subr.mxu0 0.0
  %4295 = vmatpush2.msra.mxu0 0.0
  %4296 = vmatprep.subr.mxu0 0.0
  %4297 = vmatpush2.msra.mxu0 0.0
  %4298 = vmatprep.subr.mxu0 0.0
  %4299 = vmatpush2.msra.mxu0 0.0
  %4300 = vmatprep.subr.mxu0 0.0
  %4301 = vmatpush2.msra.mxu0 0.0
  %4302 = vmatprep.subr.mxu0 0.0
  %4303 = vmatpush2.msra.mxu0 0.0
  %4304 = vmatprep.subr.mxu0 0.0
  %4305 = vmatpush2.msra.mxu0 0.0
  %4306 = vmatprep.subr.mxu0 0.0
  %4307 = vmatpush2.msra.mxu0 0.0
  %4308 = vmatprep.subr.mxu0 0.0
  %4309 = vmatpush2.msra.mxu0 0.0
  %4310 = vmatprep.mubr.f32.mxu0 0.0
  %4311 = vmatmul.mubr.f32.gmra.mxu0 %v495
  %v4312 = vpop.f32.mrf.mxu0
  %v4313 = vadd.f32 0.0, %v4312
  %v4314 = vpop.f32.mrf.mxu0
  %v4315 = vadd.f32 0.0, %v4314
  %4316 = vdwg.mxu0
  %4317 = vmatprep.subr.mxu0 0.0
  %4318 = vmatpush1.msra.mxu0 0.0
  %4319 = vmatprep.subr.mxu0 0.0
  %4320 = vmatpush1.msra.mxu0 0.0
  %4321 = vmatprep.subr.mxu0 0.0
  %4322 = vmatpush1.msra.mxu0 0.0
  %4323 = vmatprep.subr.mxu0 0.0
  %4324 = vmatpush1.msra.mxu0 0.0
  %4325 = vmatprep.subr.mxu0 0.0
  %4326 = vmatpush1.msra.mxu0 0.0
  %4327 = vmatprep.subr.mxu0 0.0
  %4328 = vmatpush1.msra.mxu0 0.0
  %4329 = vmatprep.subr.mxu0 0.0
  %4330 = vmatpush1.msra.mxu0 0.0
  %4331 = vmatprep.subr.mxu0 0.0
  %4332 = vmatpush1.msra.mxu0 0.0
  %4333 = vmatprep.subr.mxu0 0.0
  %4334 = vmatpush1.msra.mxu0 0.0
  %4335 = vmatprep.subr.mxu0 0.0
  %4336 = vmatpush1.msra.mxu0 0.0
  %4337 = vmatprep.subr.mxu0 0.0
  %4338 = vmatpush1.msra.mxu0 0.0
  %4339 = vmatprep.subr.mxu0 0.0
  %4340 = vmatpush1.msra.mxu0 0.0
  %4341 = vmatprep.subr.mxu0 %v4221
  %4342 = vmatpush1.msra.mxu0 %v4220
  %4343 = vmatprep.subr.mxu0 %v4217
  %4344 = vmatpush1.msra.mxu0 %v4216
  %4345 = vmatprep.subr.mxu0 %v4213
  %4346 = vmatpush1.msra.mxu0 %v4212
  %4347 = vmatprep.subr.mxu0 %v4209
  %4348 = vmatpush1.msra.mxu0 %v4208
  %4349 = vmatprep.subr.mxu0 0.0
  %4350 = vmatpush2.msra.mxu0 0.0
  %4351 = vmatprep.subr.mxu0 0.0
  %4352 = vmatpush2.msra.mxu0 0.0
  %4353 = vmatprep.subr.mxu0 0.0
  %4354 = vmatpush2.msra.mxu0 0.0
  %4355 = vmatprep.subr.mxu0 0.0
  %4356 = vmatpush2.msra.mxu0 0.0
  %4357 = vmatprep.subr.mxu0 0.0
  %4358 = vmatpush2.msra.mxu0 0.0
  %4359 = vmatprep.subr.mxu0 0.0
  %4360 = vmatpush2.msra.mxu0 0.0
  %4361 = vmatprep.subr.mxu0 0.0
  %4362 = vmatpush2.msra.mxu0 0.0
  %4363 = vmatprep.subr.mxu0 0.0
  %4364 = vmatpush2.msra.mxu0 0.0
  %4365 = vmatprep.subr.mxu0 0.0
  %4366 = vmatpush2.msra.mxu0 0.0
  %4367 = vmatprep.subr.mxu0 0.0
  %4368 = vmatpush2.msra.mxu0 0.0
  %4369 = vmatprep.subr.mxu0 0.0
  %4370 = vmatpush2.msra.mxu0 0.0
  %4371 = vmatprep.subr.mxu0 0.0
  %4372 = vmatpush2.msra.mxu0 0.0
  %4373 = vmatprep.subr.mxu0 0.0
  %4374 = vmatpush2.msra.mxu0 0.0
  %4375 = vmatprep.subr.mxu0 0.0
  %4376 = vmatpush2.msra.mxu0 0.0
  %4377 = vmatprep.subr.mxu0 0.0
  %4378 = vmatpush2.msra.mxu0 0.0
  %4379 = vmatprep.subr.mxu0 0.0
  %4380 = vmatpush2.msra.mxu0 0.0
  %4381 = vmatprep.mubr.f32.mxu0 0.0
  %4382 = vmatmul.mubr.f32.gmra.mxu0 %v495
  %v4383 = vpop.f32.mrf.mxu0
  %v4384 = vadd.f32 0.0, %v4383
  %v4385 = vpop.f32.mrf.mxu0
  %v4386 = vadd.f32 0.0, %v4385
  %4387 = vdwg.mxu0
  %v4388 = vadd.f32 %v4238, %v4313
  %v4389 = vadd.f32 %v4239, %v4315
  %v4390 = vadd.f32 %v4240, %v4384
  %v4391 = vadd.f32 %v4241, %v4386
  %4392 = vmatprep.subr.mxu0 0.0
  %4393 = vmatpush1.msra.mxu0 0.0
  %4394 = vmatprep.subr.mxu0 0.0
  %4395 = vmatpush1.msra.mxu0 0.0
  %4396 = vmatprep.subr.mxu0 0.0
  %4397 = vmatpush1.msra.mxu0 0.0
  %4398 = vmatprep.subr.mxu0 0.0
  %4399 = vmatpush1.msra.mxu0 0.0
  %4400 = vmatprep.subr.mxu0 0.0
  %4401 = vmatpush1.msra.mxu0 0.0
  %4402 = vmatprep.subr.mxu0 0.0
  %4403 = vmatpush1.msra.mxu0 0.0
  %4404 = vmatprep.subr.mxu0 0.0
  %4405 = vmatpush1.msra.mxu0 0.0
  %4406 = vmatprep.subr.mxu0 0.0
  %4407 = vmatpush1.msra.mxu0 0.0
  %4408 = vmatprep.subr.mxu0 0.0
  %4409 = vmatpush1.msra.mxu0 0.0
  %4410 = vmatprep.subr.mxu0 0.0
  %4411 = vmatpush1.msra.mxu0 0.0
  %4412 = vmatprep.subr.mxu0 0.0
  %4413 = vmatpush1.msra.mxu0 0.0
  %4414 = vmatprep.subr.mxu0 0.0
  %4415 = vmatpush1.msra.mxu0 0.0
  %4416 = vmatprep.subr.mxu0 %v4235
  %4417 = vmatpush1.msra.mxu0 %v4234
  %4418 = vmatprep.subr.mxu0 %v4231
  %4419 = vmatpush1.msra.mxu0 %v4230
  %4420 = vmatprep.subr.mxu0 %v4227
  %4421 = vmatpush1.msra.mxu0 %v4226
  %4422 = vmatprep.subr.mxu0 %v4223
  %4423 = vmatpush1.msra.mxu0 %v4222
  %4424 = vmatprep.subr.mxu0 0.0
  %4425 = vmatpush2.msra.mxu0 0.0
  %4426 = vmatprep.subr.mxu0 0.0
  %4427 = vmatpush2.msra.mxu0 0.0
  %4428 = vmatprep.subr.mxu0 0.0
  %4429 = vmatpush2.msra.mxu0 0.0
  %4430 = vmatprep.subr.mxu0 0.0
  %4431 = vmatpush2.msra.mxu0 0.0
  %4432 = vmatprep.subr.mxu0 0.0
  %4433 = vmatpush2.msra.mxu0 0.0
  %4434 = vmatprep.subr.mxu0 0.0
  %4435 = vmatpush2.msra.mxu0 0.0
  %4436 = vmatprep.subr.mxu0 0.0
  %4437 = vmatpush2.msra.mxu0 0.0
  %4438 = vmatprep.subr.mxu0 0.0
  %4439 = vmatpush2.msra.mxu0 0.0
  %4440 = vmatprep.subr.mxu0 0.0
  %4441 = vmatpush2.msra.mxu0 0.0
  %4442 = vmatprep.subr.mxu0 0.0
  %4443 = vmatpush2.msra.mxu0 0.0
  %4444 = vmatprep.subr.mxu0 0.0
  %4445 = vmatpush2.msra.mxu0 0.0
  %4446 = vmatprep.subr.mxu0 0.0
  %4447 = vmatpush2.msra.mxu0 0.0
  %4448 = vmatprep.subr.mxu0 0.0
  %4449 = vmatpush2.msra.mxu0 0.0
  %4450 = vmatprep.subr.mxu0 0.0
  %4451 = vmatpush2.msra.mxu0 0.0
  %4452 = vmatprep.subr.mxu0 0.0
  %4453 = vmatpush2.msra.mxu0 0.0
  %4454 = vmatprep.subr.mxu0 0.0
  %4455 = vmatpush2.msra.mxu0 0.0
  %4456 = vmatprep.mubr.f32.mxu0 0.0
  %4457 = vmatmul.mubr.f32.gmra.mxu0 %v495
  %v4458 = vpop.f32.mrf.mxu0
  %v4459 = vadd.f32 0.0, %v4458
  %v4460 = vpop.f32.mrf.mxu0
  %v4461 = vadd.f32 0.0, %v4460
  %4462 = vdwg.mxu0
  %4463 = vmatprep.subr.mxu0 0.0
  %4464 = vmatpush1.msra.mxu0 0.0
  %4465 = vmatprep.subr.mxu0 0.0
  %4466 = vmatpush1.msra.mxu0 0.0
  %4467 = vmatprep.subr.mxu0 0.0
  %4468 = vmatpush1.msra.mxu0 0.0
  %4469 = vmatprep.subr.mxu0 0.0
  %4470 = vmatpush1.msra.mxu0 0.0
  %4471 = vmatprep.subr.mxu0 0.0
  %4472 = vmatpush1.msra.mxu0 0.0
  %4473 = vmatprep.subr.mxu0 0.0
  %4474 = vmatpush1.msra.mxu0 0.0
  %4475 = vmatprep.subr.mxu0 0.0
  %4476 = vmatpush1.msra.mxu0 0.0
  %4477 = vmatprep.subr.mxu0 0.0
  %4478 = vmatpush1.msra.mxu0 0.0
  %4479 = vmatprep.subr.mxu0 0.0
  %4480 = vmatpush1.msra.mxu0 0.0
  %4481 = vmatprep.subr.mxu0 0.0
  %4482 = vmatpush1.msra.mxu0 0.0
  %4483 = vmatprep.subr.mxu0 0.0
  %4484 = vmatpush1.msra.mxu0 0.0
  %4485 = vmatprep.subr.mxu0 0.0
  %4486 = vmatpush1.msra.mxu0 0.0
  %4487 = vmatprep.subr.mxu0 %v4237
  %4488 = vmatpush1.msra.mxu0 %v4236
  %4489 = vmatprep.subr.mxu0 %v4233
  %4490 = vmatpush1.msra.mxu0 %v4232
  %4491 = vmatprep.subr.mxu0 %v4229
  %4492 = vmatpush1.msra.mxu0 %v4228
  %4493 = vmatprep.subr.mxu0 %v4225
  %4494 = vmatpush1.msra.mxu0 %v4224
  %4495 = vmatprep.subr.mxu0 0.0
  %4496 = vmatpush2.msra.mxu0 0.0
  %4497 = vmatprep.subr.mxu0 0.0
  %4498 = vmatpush2.msra.mxu0 0.0
  %4499 = vmatprep.subr.mxu0 0.0
  %4500 = vmatpush2.msra.mxu0 0.0
  %4501 = vmatprep.subr.mxu0 0.0
  %4502 = vmatpush2.msra.mxu0 0.0
  %4503 = vmatprep.subr.mxu0 0.0
  %4504 = vmatpush2.msra.mxu0 0.0
  %4505 = vmatprep.subr.mxu0 0.0
  %4506 = vmatpush2.msra.mxu0 0.0
  %4507 = vmatprep.subr.mxu0 0.0
  %4508 = vmatpush2.msra.mxu0 0.0
  %4509 = vmatprep.subr.mxu0 0.0
  %4510 = vmatpush2.msra.mxu0 0.0
  %4511 = vmatprep.subr.mxu0 0.0
  %4512 = vmatpush2.msra.mxu0 0.0
  %4513 = vmatprep.subr.mxu0 0.0
  %4514 = vmatpush2.msra.mxu0 0.0
  %4515 = vmatprep.subr.mxu0 0.0
  %4516 = vmatpush2.msra.mxu0 0.0
  %4517 = vmatprep.subr.mxu0 0.0
  %4518 = vmatpush2.msra.mxu0 0.0
  %4519 = vmatprep.subr.mxu0 0.0
  %4520 = vmatpush2.msra.mxu0 0.0
  %4521 = vmatprep.subr.mxu0 0.0
  %4522 = vmatpush2.msra.mxu0 0.0
  %4523 = vmatprep.subr.mxu0 0.0
  %4524 = vmatpush2.msra.mxu0 0.0
  %4525 = vmatprep.subr.mxu0 0.0
  %4526 = vmatpush2.msra.mxu0 0.0
  %4527 = vmatprep.mubr.f32.mxu0 0.0
  %4528 = vmatmul.mubr.f32.gmra.mxu0 %v495
  %v4529 = vpop.f32.mrf.mxu0
  %v4530 = vadd.f32 0.0, %v4529
  %v4531 = vpop.f32.mrf.mxu0
  %v4532 = vadd.f32 0.0, %v4531
  %4533 = vdwg.mxu0
  %v4538 = vrot.slane %v4459, 2
  %v4539 = vrot.slane %v4461, 2
  %v4540 = vrot.slane %v4530, 2
  %v4541 = vrot.slane %v4532, 2
  %v4546 = vadd.f32 %v4242, %v4538
  %v4547 = vadd.f32 %v4243, %v4539
  %v4548 = vadd.f32 %v4244, %v4540
  %v4549 = vadd.f32 %v4245, %v4541
  %v4550 = vmul.f32 %v4388, 0.5
  %v4551 = vtanh.pop %v4550
  %v4552 = vmul.f32 %v4551, 0.5
  %v4553 = vadd.f32 %v4552, 0.5
  %v4554 = vmul.f32 %v4389, 0.5
  %v4555 = vtanh.pop %v4554
  %v4556 = vmul.f32 %v4555, 0.5
  %v4557 = vadd.f32 %v4556, 0.5
  %v4558 = vtanh.pop %v4390
  %v4559 = vmul.f32 %v4391, 0.5
  %v4560 = vtanh.pop %v4559
  %v4561 = vmul.f32 %v4560, 0.5
  %v4562 = vadd.f32 %v4561, 0.5
  %v4563 = vmul.f32 %v4557, 0.0
  %v4564 = vmul.f32 %v4553, %v4558
  %v4565 = vadd.f32 %v4563, %v4564
  %v4566 = vtanh.pop %v4565
  %v4567 = vmul.f32 %v4562, %v4566
  %v4568 = vmul.f32 %v4546, 0.5
  %v4569 = vtanh.pop %v4568
  %v4570 = vmul.f32 %v4569, 0.5
  %v4571 = vadd.f32 %v4570, 0.5
  %v4572 = vmul.f32 %v4547, 0.5
  %v4573 = vtanh.pop %v4572
  %v4574 = vmul.f32 %v4573, 0.5
  %v4575 = vadd.f32 %v4574, 0.5
  %v4576 = vtanh.pop %v4548
  %v4577 = vmul.f32 %v4549, 0.5
  %v4578 = vtanh.pop %v4577
  %v4579 = vmul.f32 %v4578, 0.5
  %v4580 = vadd.f32 %v4579, 0.5
  %v4581 = vmul.f32 %v4575, 0.0
  %v4582 = vmul.f32 %v4571, %v4576
  %v4583 = vadd.f32 %v4581, %v4582
  %v4584 = vtanh.pop %v4583
  %v4585 = vmul.f32 %v4580, %v4584
  %4586 = vst.msk [vmem:[#allocation3] sm:$0x3] %vm837, %v4567
  %4587 = vst.msk [vmem:[#allocation3 + $0x18] sm:$0xc0] %vm839, %v4585
  %v4588 = vld [vmem:[#allocation2] sm:$0xc]
  %v4589 = vld [vmem:[#allocation2 + $0x8] sm:$0xc]
  %v4590 = vld [vmem:[#allocation2 + $0x10] sm:$0xc]
  %v4591 = vld [vmem:[#allocation2 + $0x18] sm:$0xc]
  %v4592 = vld [vmem:[#allocation2 + $0x60] sm:$0x30]
  %v4593 = vld [vmem:[#allocation2 + $0x68] sm:$0x30]
  %v4594 = vld [vmem:[#allocation2 + $0x70] sm:$0x30]
  %v4595 = vld [vmem:[#allocation2 + $0x78] sm:$0x30]
  %v4597 = vsel %vm123, %v4567, 0
  %4599 = vmatprep.subr.mxu0 0.0
  %4600 = vmatpush1.msra.mxu0 0.0
  %4601 = vmatprep.subr.mxu0 0.0
  %4602 = vmatpush1.msra.mxu0 0.0
  %4603 = vmatprep.subr.mxu0 0.0
  %4604 = vmatpush1.msra.mxu0 0.0
  %4605 = vmatprep.subr.mxu0 0.0
  %4606 = vmatpush1.msra.mxu0 0.0
  %4607 = vmatprep.subr.mxu0 0.0
  %4608 = vmatpush1.msra.mxu0 0.0
  %4609 = vmatprep.subr.mxu0 0.0
  %4610 = vmatpush1.msra.mxu0 0.0
  %4611 = vmatprep.subr.mxu0 0.0
  %4612 = vmatpush1.msra.mxu0 0.0
  %4613 = vmatprep.subr.mxu0 0.0
  %4614 = vmatpush1.msra.mxu0 0.0
  %4615 = vmatprep.subr.mxu0 0.0
  %4616 = vmatpush1.msra.mxu0 0.0
  %4617 = vmatprep.subr.mxu0 0.0
  %4618 = vmatpush1.msra.mxu0 0.0
  %4619 = vmatprep.subr.mxu0 0.0
  %4620 = vmatpush1.msra.mxu0 0.0
  %4621 = vmatprep.subr.mxu0 0.0
  %4622 = vmatpush1.msra.mxu0 0.0
  %4623 = vmatprep.subr.mxu0 %v4219
  %4624 = vmatpush1.msra.mxu0 %v4218
  %4625 = vmatprep.subr.mxu0 %v4215
  %4626 = vmatpush1.msra.mxu0 %v4214
  %4627 = vmatprep.subr.mxu0 %v4211
  %4628 = vmatpush1.msra.mxu0 %v4210
  %4629 = vmatprep.subr.mxu0 %v4207
  %4630 = vmatpush1.msra.mxu0 %v4206
  %4631 = vmatprep.subr.mxu0 0.0
  %4632 = vmatpush2.msra.mxu0 0.0
  %4633 = vmatprep.subr.mxu0 0.0
  %4634 = vmatpush2.msra.mxu0 0.0
  %4635 = vmatprep.subr.mxu0 0.0
  %4636 = vmatpush2.msra.mxu0 0.0
  %4637 = vmatprep.subr.mxu0 0.0
  %4638 = vmatpush2.msra.mxu0 0.0
  %4639 = vmatprep.subr.mxu0 0.0
  %4640 = vmatpush2.msra.mxu0 0.0
  %4641 = vmatprep.subr.mxu0 0.0
  %4642 = vmatpush2.msra.mxu0 0.0
  %4643 = vmatprep.subr.mxu0 0.0
  %4644 = vmatpush2.msra.mxu0 0.0
  %4645 = vmatprep.subr.mxu0 0.0
  %4646 = vmatpush2.msra.mxu0 0.0
  %4647 = vmatprep.subr.mxu0 0.0
  %4648 = vmatpush2.msra.mxu0 0.0
  %4649 = vmatprep.subr.mxu0 0.0
  %4650 = vmatpush2.msra.mxu0 0.0
  %4651 = vmatprep.subr.mxu0 0.0
  %4652 = vmatpush2.msra.mxu0 0.0
  %4653 = vmatprep.subr.mxu0 0.0
  %4654 = vmatpush2.msra.mxu0 0.0
  %4655 = vmatprep.subr.mxu0 0.0
  %4656 = vmatpush2.msra.mxu0 0.0
  %4657 = vmatprep.subr.mxu0 0.0
  %4658 = vmatpush2.msra.mxu0 0.0
  %4659 = vmatprep.subr.mxu0 0.0
  %4660 = vmatpush2.msra.mxu0 0.0
  %4661 = vmatprep.subr.mxu0 0.0
  %4662 = vmatpush2.msra.mxu0 0.0
  %4663 = vmatprep.mubr.f32.mxu0 0.0
  %4664 = vmatmul.mubr.f32.gmra.mxu0 %v4597
  %v4665 = vpop.f32.mrf.mxu0
  %v4666 = vadd.f32 0.0, %v4665
  %v4667 = vpop.f32.mrf.mxu0
  %v4668 = vadd.f32 0.0, %v4667
  %4669 = vdwg.mxu0
  %4670 = vmatprep.subr.mxu0 0.0
  %4671 = vmatpush1.msra.mxu0 0.0
  %4672 = vmatprep.subr.mxu0 0.0
  %4673 = vmatpush1.msra.mxu0 0.0
  %4674 = vmatprep.subr.mxu0 0.0
  %4675 = vmatpush1.msra.mxu0 0.0
  %4676 = vmatprep.subr.mxu0 0.0
  %4677 = vmatpush1.msra.mxu0 0.0
  %4678 = vmatprep.subr.mxu0 0.0
  %4679 = vmatpush1.msra.mxu0 0.0
  %4680 = vmatprep.subr.mxu0 0.0
  %4681 = vmatpush1.msra.mxu0 0.0
  %4682 = vmatprep.subr.mxu0 0.0
  %4683 = vmatpush1.msra.mxu0 0.0
  %4684 = vmatprep.subr.mxu0 0.0
  %4685 = vmatpush1.msra.mxu0 0.0
  %4686 = vmatprep.subr.mxu0 0.0
  %4687 = vmatpush1.msra.mxu0 0.0
  %4688 = vmatprep.subr.mxu0 0.0
  %4689 = vmatpush1.msra.mxu0 0.0
  %4690 = vmatprep.subr.mxu0 0.0
  %4691 = vmatpush1.msra.mxu0 0.0
  %4692 = vmatprep.subr.mxu0 0.0
  %4693 = vmatpush1.msra.mxu0 0.0
  %4694 = vmatprep.subr.mxu0 %v4221
  %4695 = vmatpush1.msra.mxu0 %v4220
  %4696 = vmatprep.subr.mxu0 %v4217
  %4697 = vmatpush1.msra.mxu0 %v4216
  %4698 = vmatprep.subr.mxu0 %v4213
  %4699 = vmatpush1.msra.mxu0 %v4212
  %4700 = vmatprep.subr.mxu0 %v4209
  %4701 = vmatpush1.msra.mxu0 %v4208
  %4702 = vmatprep.subr.mxu0 0.0
  %4703 = vmatpush2.msra.mxu0 0.0
  %4704 = vmatprep.subr.mxu0 0.0
  %4705 = vmatpush2.msra.mxu0 0.0
  %4706 = vmatprep.subr.mxu0 0.0
  %4707 = vmatpush2.msra.mxu0 0.0
  %4708 = vmatprep.subr.mxu0 0.0
  %4709 = vmatpush2.msra.mxu0 0.0
  %4710 = vmatprep.subr.mxu0 0.0
  %4711 = vmatpush2.msra.mxu0 0.0
  %4712 = vmatprep.subr.mxu0 0.0
  %4713 = vmatpush2.msra.mxu0 0.0
  %4714 = vmatprep.subr.mxu0 0.0
  %4715 = vmatpush2.msra.mxu0 0.0
  %4716 = vmatprep.subr.mxu0 0.0
  %4717 = vmatpush2.msra.mxu0 0.0
  %4718 = vmatprep.subr.mxu0 0.0
  %4719 = vmatpush2.msra.mxu0 0.0
  %4720 = vmatprep.subr.mxu0 0.0
  %4721 = vmatpush2.msra.mxu0 0.0
  %4722 = vmatprep.subr.mxu0 0.0
  %4723 = vmatpush2.msra.mxu0 0.0
  %4724 = vmatprep.subr.mxu0 0.0
  %4725 = vmatpush2.msra.mxu0 0.0
  %4726 = vmatprep.subr.mxu0 0.0
  %4727 = vmatpush2.msra.mxu0 0.0
  %4728 = vmatprep.subr.mxu0 0.0
  %4729 = vmatpush2.msra.mxu0 0.0
  %4730 = vmatprep.subr.mxu0 0.0
  %4731 = vmatpush2.msra.mxu0 0.0
  %4732 = vmatprep.subr.mxu0 0.0
  %4733 = vmatpush2.msra.mxu0 0.0
  %4734 = vmatprep.mubr.f32.mxu0 0.0
  %4735 = vmatmul.mubr.f32.gmra.mxu0 %v4597
  %v4736 = vpop.f32.mrf.mxu0
  %v4737 = vadd.f32 0.0, %v4736
  %v4738 = vpop.f32.mrf.mxu0
  %v4739 = vadd.f32 0.0, %v4738
  %4740 = vdwg.mxu0
  %v4745 = vrot.slane %v4666, 6
  %v4746 = vrot.slane %v4668, 6
  %v4747 = vrot.slane %v4737, 6
  %v4748 = vrot.slane %v4739, 6
  %v4753 = vadd.f32 %v4588, %v4745
  %v4754 = vadd.f32 %v4589, %v4746
  %v4755 = vadd.f32 %v4590, %v4747
  %v4756 = vadd.f32 %v4591, %v4748
  %v4758 = vrot.slane %v4585, 6
  %v4759 = vsel %vm123, %v4758, 0
  %4761 = vmatprep.subr.mxu0 0.0
  %4762 = vmatpush1.msra.mxu0 0.0
  %4763 = vmatprep.subr.mxu0 0.0
  %4764 = vmatpush1.msra.mxu0 0.0
  %4765 = vmatprep.subr.mxu0 0.0
  %4766 = vmatpush1.msra.mxu0 0.0
  %4767 = vmatprep.subr.mxu0 0.0
  %4768 = vmatpush1.msra.mxu0 0.0
  %4769 = vmatprep.subr.mxu0 0.0
  %4770 = vmatpush1.msra.mxu0 0.0
  %4771 = vmatprep.subr.mxu0 0.0
  %4772 = vmatpush1.msra.mxu0 0.0
  %4773 = vmatprep.subr.mxu0 0.0
  %4774 = vmatpush1.msra.mxu0 0.0
  %4775 = vmatprep.subr.mxu0 0.0
  %4776 = vmatpush1.msra.mxu0 0.0
  %4777 = vmatprep.subr.mxu0 0.0
  %4778 = vmatpush1.msra.mxu0 0.0
  %4779 = vmatprep.subr.mxu0 0.0
  %4780 = vmatpush1.msra.mxu0 0.0
  %4781 = vmatprep.subr.mxu0 0.0
  %4782 = vmatpush1.msra.mxu0 0.0
  %4783 = vmatprep.subr.mxu0 0.0
  %4784 = vmatpush1.msra.mxu0 0.0
  %4785 = vmatprep.subr.mxu0 %v4235
  %4786 = vmatpush1.msra.mxu0 %v4234
  %4787 = vmatprep.subr.mxu0 %v4231
  %4788 = vmatpush1.msra.mxu0 %v4230
  %4789 = vmatprep.subr.mxu0 %v4227
  %4790 = vmatpush1.msra.mxu0 %v4226
  %4791 = vmatprep.subr.mxu0 %v4223
  %4792 = vmatpush1.msra.mxu0 %v4222
  %4793 = vmatprep.subr.mxu0 0.0
  %4794 = vmatpush2.msra.mxu0 0.0
  %4795 = vmatprep.subr.mxu0 0.0
  %4796 = vmatpush2.msra.mxu0 0.0
  %4797 = vmatprep.subr.mxu0 0.0
  %4798 = vmatpush2.msra.mxu0 0.0
  %4799 = vmatprep.subr.mxu0 0.0
  %4800 = vmatpush2.msra.mxu0 0.0
  %4801 = vmatprep.subr.mxu0 0.0
  %4802 = vmatpush2.msra.mxu0 0.0
  %4803 = vmatprep.subr.mxu0 0.0
  %4804 = vmatpush2.msra.mxu0 0.0
  %4805 = vmatprep.subr.mxu0 0.0
  %4806 = vmatpush2.msra.mxu0 0.0
  %4807 = vmatprep.subr.mxu0 0.0
  %4808 = vmatpush2.msra.mxu0 0.0
  %4809 = vmatprep.subr.mxu0 0.0
  %4810 = vmatpush2.msra.mxu0 0.0
  %4811 = vmatprep.subr.mxu0 0.0
  %4812 = vmatpush2.msra.mxu0 0.0
  %4813 = vmatprep.subr.mxu0 0.0
  %4814 = vmatpush2.msra.mxu0 0.0
  %4815 = vmatprep.subr.mxu0 0.0
  %4816 = vmatpush2.msra.mxu0 0.0
  %4817 = vmatprep.subr.mxu0 0.0
  %4818 = vmatpush2.msra.mxu0 0.0
  %4819 = vmatprep.subr.mxu0 0.0
  %4820 = vmatpush2.msra.mxu0 0.0
  %4821 = vmatprep.subr.mxu0 0.0
  %4822 = vmatpush2.msra.mxu0 0.0
  %4823 = vmatprep.subr.mxu0 0.0
  %4824 = vmatpush2.msra.mxu0 0.0
  %4825 = vmatprep.mubr.f32.mxu0 0.0
  %4826 = vmatmul.mubr.f32.gmra.mxu0 %v4759
  %v4827 = vpop.f32.mrf.mxu0
  %v4828 = vadd.f32 0.0, %v4827
  %v4829 = vpop.f32.mrf.mxu0
  %v4830 = vadd.f32 0.0, %v4829
  %4831 = vdwg.mxu0
  %4832 = vmatprep.subr.mxu0 0.0
  %4833 = vmatpush1.msra.mxu0 0.0
  %4834 = vmatprep.subr.mxu0 0.0
  %4835 = vmatpush1.msra.mxu0 0.0
  %4836 = vmatprep.subr.mxu0 0.0
  %4837 = vmatpush1.msra.mxu0 0.0
  %4838 = vmatprep.subr.mxu0 0.0
  %4839 = vmatpush1.msra.mxu0 0.0
  %4840 = vmatprep.subr.mxu0 0.0
  %4841 = vmatpush1.msra.mxu0 0.0
  %4842 = vmatprep.subr.mxu0 0.0
  %4843 = vmatpush1.msra.mxu0 0.0
  %4844 = vmatprep.subr.mxu0 0.0
  %4845 = vmatpush1.msra.mxu0 0.0
  %4846 = vmatprep.subr.mxu0 0.0
  %4847 = vmatpush1.msra.mxu0 0.0
  %4848 = vmatprep.subr.mxu0 0.0
  %4849 = vmatpush1.msra.mxu0 0.0
  %4850 = vmatprep.subr.mxu0 0.0
  %4851 = vmatpush1.msra.mxu0 0.0
  %4852 = vmatprep.subr.mxu0 0.0
  %4853 = vmatpush1.msra.mxu0 0.0
  %4854 = vmatprep.subr.mxu0 0.0
  %4855 = vmatpush1.msra.mxu0 0.0
  %4856 = vmatprep.subr.mxu0 %v4237
  %4857 = vmatpush1.msra.mxu0 %v4236
  %4858 = vmatprep.subr.mxu0 %v4233
  %4859 = vmatpush1.msra.mxu0 %v4232
  %4860 = vmatprep.subr.mxu0 %v4229
  %4861 = vmatpush1.msra.mxu0 %v4228
  %4862 = vmatprep.subr.mxu0 %v4225
  %4863 = vmatpush1.msra.mxu0 %v4224
  %4864 = vmatprep.subr.mxu0 0.0
  %4865 = vmatpush2.msra.mxu0 0.0
  %4866 = vmatprep.subr.mxu0 0.0
  %4867 = vmatpush2.msra.mxu0 0.0
  %4868 = vmatprep.subr.mxu0 0.0
  %4869 = vmatpush2.msra.mxu0 0.0
  %4870 = vmatprep.subr.mxu0 0.0
  %4871 = vmatpush2.msra.mxu0 0.0
  %4872 = vmatprep.subr.mxu0 0.0
  %4873 = vmatpush2.msra.mxu0 0.0
  %4874 = vmatprep.subr.mxu0 0.0
  %4875 = vmatpush2.msra.mxu0 0.0
  %4876 = vmatprep.subr.mxu0 0.0
  %4877 = vmatpush2.msra.mxu0 0.0
  %4878 = vmatprep.subr.mxu0 0.0
  %4879 = vmatpush2.msra.mxu0 0.0
  %4880 = vmatprep.subr.mxu0 0.0
  %4881 = vmatpush2.msra.mxu0 0.0
  %4882 = vmatprep.subr.mxu0 0.0
  %4883 = vmatpush2.msra.mxu0 0.0
  %4884 = vmatprep.subr.mxu0 0.0
  %4885 = vmatpush2.msra.mxu0 0.0
  %4886 = vmatprep.subr.mxu0 0.0
  %4887 = vmatpush2.msra.mxu0 0.0
  %4888 = vmatprep.subr.mxu0 0.0
  %4889 = vmatpush2.msra.mxu0 0.0
  %4890 = vmatprep.subr.mxu0 0.0
  %4891 = vmatpush2.msra.mxu0 0.0
  %4892 = vmatprep.subr.mxu0 0.0
  %4893 = vmatpush2.msra.mxu0 0.0
  %4894 = vmatprep.subr.mxu0 0.0
  %4895 = vmatpush2.msra.mxu0 0.0
  %4896 = vmatprep.mubr.f32.mxu0 0.0
  %4897 = vmatmul.mubr.f32.gmra.mxu0 %v4759
  %v4898 = vpop.f32.mrf.mxu0
  %v4899 = vadd.f32 0.0, %v4898
  %v4900 = vpop.f32.mrf.mxu0
  %v4901 = vadd.f32 0.0, %v4900
  %4902 = vdwg.mxu0
  %v4907 = vrot.slane %v4828, 4
  %v4908 = vrot.slane %v4830, 4
  %v4909 = vrot.slane %v4899, 4
  %v4910 = vrot.slane %v4901, 4
  %v4915 = vadd.f32 %v4592, %v4907
  %v4916 = vadd.f32 %v4593, %v4908
  %v4917 = vadd.f32 %v4594, %v4909
  %v4918 = vadd.f32 %v4595, %v4910
  %v4919 = vmul.f32 %v4753, 0.5
  %v4920 = vtanh.pop %v4919
  %v4921 = vmul.f32 %v4920, 0.5
  %v4922 = vadd.f32 %v4921, 0.5
  %v4923 = vmul.f32 %v4754, 0.5
  %v4924 = vtanh.pop %v4923
  %v4925 = vmul.f32 %v4924, 0.5
  %v4926 = vadd.f32 %v4925, 0.5
  %v4927 = vtanh.pop %v4755
  %v4928 = vmul.f32 %v4756, 0.5
  %v4929 = vtanh.pop %v4928
  %v4930 = vmul.f32 %v4929, 0.5
  %v4931 = vadd.f32 %v4930, 0.5
  %v4933 = vrot.slane %v4565, 6
  %v4935 = vmul.f32 %v4926, %v4933
  %v4936 = vmul.f32 %v4922, %v4927
  %v4937 = vadd.f32 %v4935, %v4936
  %v4938 = vtanh.pop %v4937
  %v4939 = vmul.f32 %v4931, %v4938
  %v4940 = vmul.f32 %v4915, 0.5
  %v4941 = vtanh.pop %v4940
  %v4942 = vmul.f32 %v4941, 0.5
  %v4943 = vadd.f32 %v4942, 0.5
  %v4944 = vmul.f32 %v4916, 0.5
  %v4945 = vtanh.pop %v4944
  %v4946 = vmul.f32 %v4945, 0.5
  %v4947 = vadd.f32 %v4946, 0.5
  %v4948 = vtanh.pop %v4917
  %v4949 = vmul.f32 %v4918, 0.5
  %v4950 = vtanh.pop %v4949
  %v4951 = vmul.f32 %v4950, 0.5
  %v4952 = vadd.f32 %v4951, 0.5
  %v4954 = vrot.slane %v4583, 2
  %v4956 = vmul.f32 %v4947, %v4954
  %v4957 = vmul.f32 %v4943, %v4948
  %v4958 = vadd.f32 %v4956, %v4957
  %v4959 = vtanh.pop %v4958
  %v4960 = vmul.f32 %v4952, %v4959
  %4961 = vst.msk [vmem:[#allocation3] sm:$0xc] %vm1214, %v4939
  %4962 = vst.msk [vmem:[#allocation3 + $0x18] sm:$0x30] %vm1216, %v4960
  %v4963 = vld [vmem:[#allocation2] sm:$0x30]
  %v4964 = vld [vmem:[#allocation2 + $0x8] sm:$0x30]
  %v4965 = vld [vmem:[#allocation2 + $0x10] sm:$0x30]
  %v4966 = vld [vmem:[#allocation2 + $0x18] sm:$0x30]
  %v4967 = vld [vmem:[#allocation2 + $0x60] sm:$0xc]
  %v4968 = vld [vmem:[#allocation2 + $0x68] sm:$0xc]
  %v4969 = vld [vmem:[#allocation2 + $0x70] sm:$0xc]
  %v4970 = vld [vmem:[#allocation2 + $0x78] sm:$0xc]
  %v4972 = vrot.slane %v4939, 2
  %v4973 = vsel %vm123, %v4972, 0
  %4975 = vmatprep.subr.mxu0 0.0
  %4976 = vmatpush1.msra.mxu0 0.0
  %4977 = vmatprep.subr.mxu0 0.0
  %4978 = vmatpush1.msra.mxu0 0.0
  %4979 = vmatprep.subr.mxu0 0.0
  %4980 = vmatpush1.msra.mxu0 0.0
  %4981 = vmatprep.subr.mxu0 0.0
  %4982 = vmatpush1.msra.mxu0 0.0
  %4983 = vmatprep.subr.mxu0 0.0
  %4984 = vmatpush1.msra.mxu0 0.0
  %4985 = vmatprep.subr.mxu0 0.0
  %4986 = vmatpush1.msra.mxu0 0.0
  %4987 = vmatprep.subr.mxu0 0.0
  %4988 = vmatpush1.msra.mxu0 0.0
  %4989 = vmatprep.subr.mxu0 0.0
  %4990 = vmatpush1.msra.mxu0 0.0
  %4991 = vmatprep.subr.mxu0 0.0
  %4992 = vmatpush1.msra.mxu0 0.0
  %4993 = vmatprep.subr.mxu0 0.0
  %4994 = vmatpush1.msra.mxu0 0.0
  %4995 = vmatprep.subr.mxu0 0.0
  %4996 = vmatpush1.msra.mxu0 0.0
  %4997 = vmatprep.subr.mxu0 0.0
  %4998 = vmatpush1.msra.mxu0 0.0
  %4999 = vmatprep.subr.mxu0 %v4219
  %5000 = vmatpush1.msra.mxu0 %v4218
  %5001 = vmatprep.subr.mxu0 %v4215
  %5002 = vmatpush1.msra.mxu0 %v4214
  %5003 = vmatprep.subr.mxu0 %v4211
  %5004 = vmatpush1.msra.mxu0 %v4210
  %5005 = vmatprep.subr.mxu0 %v4207
  %5006 = vmatpush1.msra.mxu0 %v4206
  %5007 = vmatprep.subr.mxu0 0.0
  %5008 = vmatpush2.msra.mxu0 0.0
  %5009 = vmatprep.subr.mxu0 0.0
  %5010 = vmatpush2.msra.mxu0 0.0
  %5011 = vmatprep.subr.mxu0 0.0
  %5012 = vmatpush2.msra.mxu0 0.0
  %5013 = vmatprep.subr.mxu0 0.0
  %5014 = vmatpush2.msra.mxu0 0.0
  %5015 = vmatprep.subr.mxu0 0.0
  %5016 = vmatpush2.msra.mxu0 0.0
  %5017 = vmatprep.subr.mxu0 0.0
  %5018 = vmatpush2.msra.mxu0 0.0
  %5019 = vmatprep.subr.mxu0 0.0
  %5020 = vmatpush2.msra.mxu0 0.0
  %5021 = vmatprep.subr.mxu0 0.0
  %5022 = vmatpush2.msra.mxu0 0.0
  %5023 = vmatprep.subr.mxu0 0.0
  %5024 = vmatpush2.msra.mxu0 0.0
  %5025 = vmatprep.subr.mxu0 0.0
  %5026 = vmatpush2.msra.mxu0 0.0
  %5027 = vmatprep.subr.mxu0 0.0
  %5028 = vmatpush2.msra.mxu0 0.0
  %5029 = vmatprep.subr.mxu0 0.0
  %5030 = vmatpush2.msra.mxu0 0.0
  %5031 = vmatprep.subr.mxu0 0.0
  %5032 = vmatpush2.msra.mxu0 0.0
  %5033 = vmatprep.subr.mxu0 0.0
  %5034 = vmatpush2.msra.mxu0 0.0
  %5035 = vmatprep.subr.mxu0 0.0
  %5036 = vmatpush2.msra.mxu0 0.0
  %5037 = vmatprep.subr.mxu0 0.0
  %5038 = vmatpush2.msra.mxu0 0.0
  %5039 = vmatprep.mubr.f32.mxu0 0.0
  %5040 = vmatmul.mubr.f32.gmra.mxu0 %v4973
  %v5041 = vpop.f32.mrf.mxu0
  %v5042 = vadd.f32 0.0, %v5041
  %v5043 = vpop.f32.mrf.mxu0
  %v5044 = vadd.f32 0.0, %v5043
  %5045 = vdwg.mxu0
  %5046 = vmatprep.subr.mxu0 0.0
  %5047 = vmatpush1.msra.mxu0 0.0
  %5048 = vmatprep.subr.mxu0 0.0
  %5049 = vmatpush1.msra.mxu0 0.0
  %5050 = vmatprep.subr.mxu0 0.0
  %5051 = vmatpush1.msra.mxu0 0.0
  %5052 = vmatprep.subr.mxu0 0.0
  %5053 = vmatpush1.msra.mxu0 0.0
  %5054 = vmatprep.subr.mxu0 0.0
  %5055 = vmatpush1.msra.mxu0 0.0
  %5056 = vmatprep.subr.mxu0 0.0
  %5057 = vmatpush1.msra.mxu0 0.0
  %5058 = vmatprep.subr.mxu0 0.0
  %5059 = vmatpush1.msra.mxu0 0.0
  %5060 = vmatprep.subr.mxu0 0.0
  %5061 = vmatpush1.msra.mxu0 0.0
  %5062 = vmatprep.subr.mxu0 0.0
  %5063 = vmatpush1.msra.mxu0 0.0
  %5064 = vmatprep.subr.mxu0 0.0
  %5065 = vmatpush1.msra.mxu0 0.0
  %5066 = vmatprep.subr.mxu0 0.0
  %5067 = vmatpush1.msra.mxu0 0.0
  %5068 = vmatprep.subr.mxu0 0.0
  %5069 = vmatpush1.msra.mxu0 0.0
  %5070 = vmatprep.subr.mxu0 %v4221
  %5071 = vmatpush1.msra.mxu0 %v4220
  %5072 = vmatprep.subr.mxu0 %v4217
  %5073 = vmatpush1.msra.mxu0 %v4216
  %5074 = vmatprep.subr.mxu0 %v4213
  %5075 = vmatpush1.msra.mxu0 %v4212
  %5076 = vmatprep.subr.mxu0 %v4209
  %5077 = vmatpush1.msra.mxu0 %v4208
  %5078 = vmatprep.subr.mxu0 0.0
  %5079 = vmatpush2.msra.mxu0 0.0
  %5080 = vmatprep.subr.mxu0 0.0
  %5081 = vmatpush2.msra.mxu0 0.0
  %5082 = vmatprep.subr.mxu0 0.0
  %5083 = vmatpush2.msra.mxu0 0.0
  %5084 = vmatprep.subr.mxu0 0.0
  %5085 = vmatpush2.msra.mxu0 0.0
  %5086 = vmatprep.subr.mxu0 0.0
  %5087 = vmatpush2.msra.mxu0 0.0
  %5088 = vmatprep.subr.mxu0 0.0
  %5089 = vmatpush2.msra.mxu0 0.0
  %5090 = vmatprep.subr.mxu0 0.0
  %5091 = vmatpush2.msra.mxu0 0.0
  %5092 = vmatprep.subr.mxu0 0.0
  %5093 = vmatpush2.msra.mxu0 0.0
  %5094 = vmatprep.subr.mxu0 0.0
  %5095 = vmatpush2.msra.mxu0 0.0
  %5096 = vmatprep.subr.mxu0 0.0
  %5097 = vmatpush2.msra.mxu0 0.0
  %5098 = vmatprep.subr.mxu0 0.0
  %5099 = vmatpush2.msra.mxu0 0.0
  %5100 = vmatprep.subr.mxu0 0.0
  %5101 = vmatpush2.msra.mxu0 0.0
  %5102 = vmatprep.subr.mxu0 0.0
  %5103 = vmatpush2.msra.mxu0 0.0
  %5104 = vmatprep.subr.mxu0 0.0
  %5105 = vmatpush2.msra.mxu0 0.0
  %5106 = vmatprep.subr.mxu0 0.0
  %5107 = vmatpush2.msra.mxu0 0.0
  %5108 = vmatprep.subr.mxu0 0.0
  %5109 = vmatpush2.msra.mxu0 0.0
  %5110 = vmatprep.mubr.f32.mxu0 0.0
  %5111 = vmatmul.mubr.f32.gmra.mxu0 %v4973
  %v5112 = vpop.f32.mrf.mxu0
  %v5113 = vadd.f32 0.0, %v5112
  %v5114 = vpop.f32.mrf.mxu0
  %v5115 = vadd.f32 0.0, %v5114
  %5116 = vdwg.mxu0
  %v5121 = vrot.slane %v5042, 4
  %v5122 = vrot.slane %v5044, 4
  %v5123 = vrot.slane %v5113, 4
  %v5124 = vrot.slane %v5115, 4
  %v5129 = vadd.f32 %v4963, %v5121
  %v5130 = vadd.f32 %v4964, %v5122
  %v5131 = vadd.f32 %v4965, %v5123
  %v5132 = vadd.f32 %v4966, %v5124
  %v5134 = vrot.slane %v4960, 4
  %v5135 = vsel %vm123, %v5134, 0
  %5137 = vmatprep.subr.mxu0 0.0
  %5138 = vmatpush1.msra.mxu0 0.0
  %5139 = vmatprep.subr.mxu0 0.0
  %5140 = vmatpush1.msra.mxu0 0.0
  %5141 = vmatprep.subr.mxu0 0.0
  %5142 = vmatpush1.msra.mxu0 0.0
  %5143 = vmatprep.subr.mxu0 0.0
  %5144 = vmatpush1.msra.mxu0 0.0
  %5145 = vmatprep.subr.mxu0 0.0
  %5146 = vmatpush1.msra.mxu0 0.0
  %5147 = vmatprep.subr.mxu0 0.0
  %5148 = vmatpush1.msra.mxu0 0.0
  %5149 = vmatprep.subr.mxu0 0.0
  %5150 = vmatpush1.msra.mxu0 0.0
  %5151 = vmatprep.subr.mxu0 0.0
  %5152 = vmatpush1.msra.mxu0 0.0
  %5153 = vmatprep.subr.mxu0 0.0
  %5154 = vmatpush1.msra.mxu0 0.0
  %5155 = vmatprep.subr.mxu0 0.0
  %5156 = vmatpush1.msra.mxu0 0.0
  %5157 = vmatprep.subr.mxu0 0.0
  %5158 = vmatpush1.msra.mxu0 0.0
  %5159 = vmatprep.subr.mxu0 0.0
  %5160 = vmatpush1.msra.mxu0 0.0
  %5161 = vmatprep.subr.mxu0 %v4235
  %5162 = vmatpush1.msra.mxu0 %v4234
  %5163 = vmatprep.subr.mxu0 %v4231
  %5164 = vmatpush1.msra.mxu0 %v4230
  %5165 = vmatprep.subr.mxu0 %v4227
  %5166 = vmatpush1.msra.mxu0 %v4226
  %5167 = vmatprep.subr.mxu0 %v4223
  %5168 = vmatpush1.msra.mxu0 %v4222
  %5169 = vmatprep.subr.mxu0 0.0
  %5170 = vmatpush2.msra.mxu0 0.0
  %5171 = vmatprep.subr.mxu0 0.0
  %5172 = vmatpush2.msra.mxu0 0.0
  %5173 = vmatprep.subr.mxu0 0.0
  %5174 = vmatpush2.msra.mxu0 0.0
  %5175 = vmatprep.subr.mxu0 0.0
  %5176 = vmatpush2.msra.mxu0 0.0
  %5177 = vmatprep.subr.mxu0 0.0
  %5178 = vmatpush2.msra.mxu0 0.0
  %5179 = vmatprep.subr.mxu0 0.0
  %5180 = vmatpush2.msra.mxu0 0.0
  %5181 = vmatprep.subr.mxu0 0.0
  %5182 = vmatpush2.msra.mxu0 0.0
  %5183 = vmatprep.subr.mxu0 0.0
  %5184 = vmatpush2.msra.mxu0 0.0
  %5185 = vmatprep.subr.mxu0 0.0
  %5186 = vmatpush2.msra.mxu0 0.0
  %5187 = vmatprep.subr.mxu0 0.0
  %5188 = vmatpush2.msra.mxu0 0.0
  %5189 = vmatprep.subr.mxu0 0.0
  %5190 = vmatpush2.msra.mxu0 0.0
  %5191 = vmatprep.subr.mxu0 0.0
  %5192 = vmatpush2.msra.mxu0 0.0
  %5193 = vmatprep.subr.mxu0 0.0
  %5194 = vmatpush2.msra.mxu0 0.0
  %5195 = vmatprep.subr.mxu0 0.0
  %5196 = vmatpush2.msra.mxu0 0.0
  %5197 = vmatprep.subr.mxu0 0.0
  %5198 = vmatpush2.msra.mxu0 0.0
  %5199 = vmatprep.subr.mxu0 0.0
  %5200 = vmatpush2.msra.mxu0 0.0
  %5201 = vmatprep.mubr.f32.mxu0 0.0
  %5202 = vmatmul.mubr.f32.gmra.mxu0 %v5135
  %v5203 = vpop.f32.mrf.mxu0
  %v5204 = vadd.f32 0.0, %v5203
  %v5205 = vpop.f32.mrf.mxu0
  %v5206 = vadd.f32 0.0, %v5205
  %5207 = vdwg.mxu0
  %5208 = vmatprep.subr.mxu0 0.0
  %5209 = vmatpush1.msra.mxu0 0.0
  %5210 = vmatprep.subr.mxu0 0.0
  %5211 = vmatpush1.msra.mxu0 0.0
  %5212 = vmatprep.subr.mxu0 0.0
  %5213 = vmatpush1.msra.mxu0 0.0
  %5214 = vmatprep.subr.mxu0 0.0
  %5215 = vmatpush1.msra.mxu0 0.0
  %5216 = vmatprep.subr.mxu0 0.0
  %5217 = vmatpush1.msra.mxu0 0.0
  %5218 = vmatprep.subr.mxu0 0.0
  %5219 = vmatpush1.msra.mxu0 0.0
  %5220 = vmatprep.subr.mxu0 0.0
  %5221 = vmatpush1.msra.mxu0 0.0
  %5222 = vmatprep.subr.mxu0 0.0
  %5223 = vmatpush1.msra.mxu0 0.0
  %5224 = vmatprep.subr.mxu0 0.0
  %5225 = vmatpush1.msra.mxu0 0.0
  %5226 = vmatprep.subr.mxu0 0.0
  %5227 = vmatpush1.msra.mxu0 0.0
  %5228 = vmatprep.subr.mxu0 0.0
  %5229 = vmatpush1.msra.mxu0 0.0
  %5230 = vmatprep.subr.mxu0 0.0
  %5231 = vmatpush1.msra.mxu0 0.0
  %5232 = vmatprep.subr.mxu0 %v4237
  %5233 = vmatpush1.msra.mxu0 %v4236
  %5234 = vmatprep.subr.mxu0 %v4233
  %5235 = vmatpush1.msra.mxu0 %v4232
  %5236 = vmatprep.subr.mxu0 %v4229
  %5237 = vmatpush1.msra.mxu0 %v4228
  %5238 = vmatprep.subr.mxu0 %v4225
  %5239 = vmatpush1.msra.mxu0 %v4224
  %5240 = vmatprep.subr.mxu0 0.0
  %5241 = vmatpush2.msra.mxu0 0.0
  %5242 = vmatprep.subr.mxu0 0.0
  %5243 = vmatpush2.msra.mxu0 0.0
  %5244 = vmatprep.subr.mxu0 0.0
  %5245 = vmatpush2.msra.mxu0 0.0
  %5246 = vmatprep.subr.mxu0 0.0
  %5247 = vmatpush2.msra.mxu0 0.0
  %5248 = vmatprep.subr.mxu0 0.0
  %5249 = vmatpush2.msra.mxu0 0.0
  %5250 = vmatprep.subr.mxu0 0.0
  %5251 = vmatpush2.msra.mxu0 0.0
  %5252 = vmatprep.subr.mxu0 0.0
  %5253 = vmatpush2.msra.mxu0 0.0
  %5254 = vmatprep.subr.mxu0 0.0
  %5255 = vmatpush2.msra.mxu0 0.0
  %5256 = vmatprep.subr.mxu0 0.0
  %5257 = vmatpush2.msra.mxu0 0.0
  %5258 = vmatprep.subr.mxu0 0.0
  %5259 = vmatpush2.msra.mxu0 0.0
  %5260 = vmatprep.subr.mxu0 0.0
  %5261 = vmatpush2.msra.mxu0 0.0
  %5262 = vmatprep.subr.mxu0 0.0
  %5263 = vmatpush2.msra.mxu0 0.0
  %5264 = vmatprep.subr.mxu0 0.0
  %5265 = vmatpush2.msra.mxu0 0.0
  %5266 = vmatprep.subr.mxu0 0.0
  %5267 = vmatpush2.msra.mxu0 0.0
  %5268 = vmatprep.subr.mxu0 0.0
  %5269 = vmatpush2.msra.mxu0 0.0
  %5270 = vmatprep.subr.mxu0 0.0
  %5271 = vmatpush2.msra.mxu0 0.0
  %5272 = vmatprep.mubr.f32.mxu0 0.0
  %5273 = vmatmul.mubr.f32.gmra.mxu0 %v5135
  %v5274 = vpop.f32.mrf.mxu0
  %v5275 = vadd.f32 0.0, %v5274
  %v5276 = vpop.f32.mrf.mxu0
  %v5277 = vadd.f32 0.0, %v5276
  %5278 = vdwg.mxu0
  %v5283 = vrot.slane %v5204, 6
  %v5284 = vrot.slane %v5206, 6
  %v5285 = vrot.slane %v5275, 6
  %v5286 = vrot.slane %v5277, 6
  %v5291 = vadd.f32 %v4967, %v5283
  %v5292 = vadd.f32 %v4968, %v5284
  %v5293 = vadd.f32 %v4969, %v5285
  %v5294 = vadd.f32 %v4970, %v5286
  %v5295 = vmul.f32 %v5129, 0.5
  %v5296 = vtanh.pop %v5295
  %v5297 = vmul.f32 %v5296, 0.5
  %v5298 = vadd.f32 %v5297, 0.5
  %v5299 = vmul.f32 %v5130, 0.5
  %v5300 = vtanh.pop %v5299
  %v5301 = vmul.f32 %v5300, 0.5
  %v5302 = vadd.f32 %v5301, 0.5
  %v5303 = vtanh.pop %v5131
  %v5304 = vmul.f32 %v5132, 0.5
  %v5305 = vtanh.pop %v5304
  %v5306 = vmul.f32 %v5305, 0.5
  %v5307 = vadd.f32 %v5306, 0.5
  %v5309 = vrot.slane %v4937, 6
  %v5311 = vmul.f32 %v5302, %v5309
  %v5312 = vmul.f32 %v5298, %v5303
  %v5313 = vadd.f32 %v5311, %v5312
  %v5314 = vtanh.pop %v5313
  %v5315 = vmul.f32 %v5307, %v5314
  %v5316 = vmul.f32 %v5291, 0.5
  %v5317 = vtanh.pop %v5316
  %v5318 = vmul.f32 %v5317, 0.5
  %v5319 = vadd.f32 %v5318, 0.5
  %v5320 = vmul.f32 %v5292, 0.5
  %v5321 = vtanh.pop %v5320
  %v5322 = vmul.f32 %v5321, 0.5
  %v5323 = vadd.f32 %v5322, 0.5
  %v5324 = vtanh.pop %v5293
  %v5325 = vmul.f32 %v5294, 0.5
  %v5326 = vtanh.pop %v5325
  %v5327 = vmul.f32 %v5326, 0.5
  %v5328 = vadd.f32 %v5327, 0.5
  %v5330 = vrot.slane %v4958, 2
  %v5332 = vmul.f32 %v5323, %v5330
  %v5333 = vmul.f32 %v5319, %v5324
  %v5334 = vadd.f32 %v5332, %v5333
  %v5335 = vtanh.pop %v5334
  %v5336 = vmul.f32 %v5328, %v5335
  %5337 = vst.msk [vmem:[#allocation3] sm:$0x30] %vm1216, %v5315
  %5338 = vst.msk [vmem:[#allocation3 + $0x18] sm:$0xc] %vm1214, %v5336
  %v5339 = vld [vmem:[#allocation2] sm:$0xc0]
  %v5340 = vld [vmem:[#allocation2 + $0x8] sm:$0xc0]
  %v5341 = vld [vmem:[#allocation2 + $0x10] sm:$0xc0]
  %v5342 = vld [vmem:[#allocation2 + $0x18] sm:$0xc0]
  %v5343 = vld [vmem:[#allocation2 + $0x60] sm:$0x3]
  %v5344 = vld [vmem:[#allocation2 + $0x68] sm:$0x3]
  %v5345 = vld [vmem:[#allocation2 + $0x70] sm:$0x3]
  %v5346 = vld [vmem:[#allocation2 + $0x78] sm:$0x3]
  %v5348 = vrot.slane %v5315, 4
  %v5349 = vsel %vm123, %v5348, 0
  %5351 = vmatprep.subr.mxu0 0.0
  %5352 = vmatpush1.msra.mxu0 0.0
  %5353 = vmatprep.subr.mxu0 0.0
  %5354 = vmatpush1.msra.mxu0 0.0
  %5355 = vmatprep.subr.mxu0 0.0
  %5356 = vmatpush1.msra.mxu0 0.0
  %5357 = vmatprep.subr.mxu0 0.0
  %5358 = vmatpush1.msra.mxu0 0.0
  %5359 = vmatprep.subr.mxu0 0.0
  %5360 = vmatpush1.msra.mxu0 0.0
  %5361 = vmatprep.subr.mxu0 0.0
  %5362 = vmatpush1.msra.mxu0 0.0
  %5363 = vmatprep.subr.mxu0 0.0
  %5364 = vmatpush1.msra.mxu0 0.0
  %5365 = vmatprep.subr.mxu0 0.0
  %5366 = vmatpush1.msra.mxu0 0.0
  %5367 = vmatprep.subr.mxu0 0.0
  %5368 = vmatpush1.msra.mxu0 0.0
  %5369 = vmatprep.subr.mxu0 0.0
  %5370 = vmatpush1.msra.mxu0 0.0
  %5371 = vmatprep.subr.mxu0 0.0
  %5372 = vmatpush1.msra.mxu0 0.0
  %5373 = vmatprep.subr.mxu0 0.0
  %5374 = vmatpush1.msra.mxu0 0.0
  %5375 = vmatprep.subr.mxu0 %v4219
  %5376 = vmatpush1.msra.mxu0 %v4218
  %5377 = vmatprep.subr.mxu0 %v4215
  %5378 = vmatpush1.msra.mxu0 %v4214
  %5379 = vmatprep.subr.mxu0 %v4211
  %5380 = vmatpush1.msra.mxu0 %v4210
  %5381 = vmatprep.subr.mxu0 %v4207
  %5382 = vmatpush1.msra.mxu0 %v4206
  %5383 = vmatprep.subr.mxu0 0.0
  %5384 = vmatpush2.msra.mxu0 0.0
  %5385 = vmatprep.subr.mxu0 0.0
  %5386 = vmatpush2.msra.mxu0 0.0
  %5387 = vmatprep.subr.mxu0 0.0
  %5388 = vmatpush2.msra.mxu0 0.0
  %5389 = vmatprep.subr.mxu0 0.0
  %5390 = vmatpush2.msra.mxu0 0.0
  %5391 = vmatprep.subr.mxu0 0.0
  %5392 = vmatpush2.msra.mxu0 0.0
  %5393 = vmatprep.subr.mxu0 0.0
  %5394 = vmatpush2.msra.mxu0 0.0
  %5395 = vmatprep.subr.mxu0 0.0
  %5396 = vmatpush2.msra.mxu0 0.0
  %5397 = vmatprep.subr.mxu0 0.0
  %5398 = vmatpush2.msra.mxu0 0.0
  %5399 = vmatprep.subr.mxu0 0.0
  %5400 = vmatpush2.msra.mxu0 0.0
  %5401 = vmatprep.subr.mxu0 0.0
  %5402 = vmatpush2.msra.mxu0 0.0
  %5403 = vmatprep.subr.mxu0 0.0
  %5404 = vmatpush2.msra.mxu0 0.0
  %5405 = vmatprep.subr.mxu0 0.0
  %5406 = vmatpush2.msra.mxu0 0.0
  %5407 = vmatprep.subr.mxu0 0.0
  %5408 = vmatpush2.msra.mxu0 0.0
  %5409 = vmatprep.subr.mxu0 0.0
  %5410 = vmatpush2.msra.mxu0 0.0
  %5411 = vmatprep.subr.mxu0 0.0
  %5412 = vmatpush2.msra.mxu0 0.0
  %5413 = vmatprep.subr.mxu0 0.0
  %5414 = vmatpush2.msra.mxu0 0.0
  %5415 = vmatprep.mubr.f32.mxu0 0.0
  %5416 = vmatmul.mubr.f32.gmra.mxu0 %v5349
  %v5417 = vpop.f32.mrf.mxu0
  %v5418 = vadd.f32 0.0, %v5417
  %v5419 = vpop.f32.mrf.mxu0
  %v5420 = vadd.f32 0.0, %v5419
  %5421 = vdwg.mxu0
  %5422 = vmatprep.subr.mxu0 0.0
  %5423 = vmatpush1.msra.mxu0 0.0
  %5424 = vmatprep.subr.mxu0 0.0
  %5425 = vmatpush1.msra.mxu0 0.0
  %5426 = vmatprep.subr.mxu0 0.0
  %5427 = vmatpush1.msra.mxu0 0.0
  %5428 = vmatprep.subr.mxu0 0.0
  %5429 = vmatpush1.msra.mxu0 0.0
  %5430 = vmatprep.subr.mxu0 0.0
  %5431 = vmatpush1.msra.mxu0 0.0
  %5432 = vmatprep.subr.mxu0 0.0
  %5433 = vmatpush1.msra.mxu0 0.0
  %5434 = vmatprep.subr.mxu0 0.0
  %5435 = vmatpush1.msra.mxu0 0.0
  %5436 = vmatprep.subr.mxu0 0.0
  %5437 = vmatpush1.msra.mxu0 0.0
  %5438 = vmatprep.subr.mxu0 0.0
  %5439 = vmatpush1.msra.mxu0 0.0
  %5440 = vmatprep.subr.mxu0 0.0
  %5441 = vmatpush1.msra.mxu0 0.0
  %5442 = vmatprep.subr.mxu0 0.0
  %5443 = vmatpush1.msra.mxu0 0.0
  %5444 = vmatprep.subr.mxu0 0.0
  %5445 = vmatpush1.msra.mxu0 0.0
  %5446 = vmatprep.subr.mxu0 %v4221
  %5447 = vmatpush1.msra.mxu0 %v4220
  %5448 = vmatprep.subr.mxu0 %v4217
  %5449 = vmatpush1.msra.mxu0 %v4216
  %5450 = vmatprep.subr.mxu0 %v4213
  %5451 = vmatpush1.msra.mxu0 %v4212
  %5452 = vmatprep.subr.mxu0 %v4209
  %5453 = vmatpush1.msra.mxu0 %v4208
  %5454 = vmatprep.subr.mxu0 0.0
  %5455 = vmatpush2.msra.mxu0 0.0
  %5456 = vmatprep.subr.mxu0 0.0
  %5457 = vmatpush2.msra.mxu0 0.0
  %5458 = vmatprep.subr.mxu0 0.0
  %5459 = vmatpush2.msra.mxu0 0.0
  %5460 = vmatprep.subr.mxu0 0.0
  %5461 = vmatpush2.msra.mxu0 0.0
  %5462 = vmatprep.subr.mxu0 0.0
  %5463 = vmatpush2.msra.mxu0 0.0
  %5464 = vmatprep.subr.mxu0 0.0
  %5465 = vmatpush2.msra.mxu0 0.0
  %5466 = vmatprep.subr.mxu0 0.0
  %5467 = vmatpush2.msra.mxu0 0.0
  %5468 = vmatprep.subr.mxu0 0.0
  %5469 = vmatpush2.msra.mxu0 0.0
  %5470 = vmatprep.subr.mxu0 0.0
  %5471 = vmatpush2.msra.mxu0 0.0
  %5472 = vmatprep.subr.mxu0 0.0
  %5473 = vmatpush2.msra.mxu0 0.0
  %5474 = vmatprep.subr.mxu0 0.0
  %5475 = vmatpush2.msra.mxu0 0.0
  %5476 = vmatprep.subr.mxu0 0.0
  %5477 = vmatpush2.msra.mxu0 0.0
  %5478 = vmatprep.subr.mxu0 0.0
  %5479 = vmatpush2.msra.mxu0 0.0
  %5480 = vmatprep.subr.mxu0 0.0
  %5481 = vmatpush2.msra.mxu0 0.0
  %5482 = vmatprep.subr.mxu0 0.0
  %5483 = vmatpush2.msra.mxu0 0.0
  %5484 = vmatprep.subr.mxu0 0.0
  %5485 = vmatpush2.msra.mxu0 0.0
  %5486 = vmatprep.mubr.f32.mxu0 0.0
  %5487 = vmatmul.mubr.f32.gmra.mxu0 %v5349
  %v5488 = vpop.f32.mrf.mxu0
  %v5489 = vadd.f32 0.0, %v5488
  %v5490 = vpop.f32.mrf.mxu0
  %v5491 = vadd.f32 0.0, %v5490
  %5492 = vdwg.mxu0
  %v5497 = vrot.slane %v5418, 2
  %v5498 = vrot.slane %v5420, 2
  %v5499 = vrot.slane %v5489, 2
  %v5500 = vrot.slane %v5491, 2
  %v5505 = vadd.f32 %v5339, %v5497
  %v5506 = vadd.f32 %v5340, %v5498
  %v5507 = vadd.f32 %v5341, %v5499
  %v5508 = vadd.f32 %v5342, %v5500
  %v5510 = vrot.slane %v5336, 2
  %v5511 = vsel %vm123, %v5510, 0
  %5513 = vmatprep.subr.mxu0 0.0
  %5514 = vmatpush1.msra.mxu0 0.0
  %5515 = vmatprep.subr.mxu0 0.0
  %5516 = vmatpush1.msra.mxu0 0.0
  %5517 = vmatprep.subr.mxu0 0.0
  %5518 = vmatpush1.msra.mxu0 0.0
  %5519 = vmatprep.subr.mxu0 0.0
  %5520 = vmatpush1.msra.mxu0 0.0
  %5521 = vmatprep.subr.mxu0 0.0
  %5522 = vmatpush1.msra.mxu0 0.0
  %5523 = vmatprep.subr.mxu0 0.0
  %5524 = vmatpush1.msra.mxu0 0.0
  %5525 = vmatprep.subr.mxu0 0.0
  %5526 = vmatpush1.msra.mxu0 0.0
  %5527 = vmatprep.subr.mxu0 0.0
  %5528 = vmatpush1.msra.mxu0 0.0
  %5529 = vmatprep.subr.mxu0 0.0
  %5530 = vmatpush1.msra.mxu0 0.0
  %5531 = vmatprep.subr.mxu0 0.0
  %5532 = vmatpush1.msra.mxu0 0.0
  %5533 = vmatprep.subr.mxu0 0.0
  %5534 = vmatpush1.msra.mxu0 0.0
  %5535 = vmatprep.subr.mxu0 0.0
  %5536 = vmatpush1.msra.mxu0 0.0
  %5537 = vmatprep.subr.mxu0 %v4235
  %5538 = vmatpush1.msra.mxu0 %v4234
  %5539 = vmatprep.subr.mxu0 %v4231
  %5540 = vmatpush1.msra.mxu0 %v4230
  %5541 = vmatprep.subr.mxu0 %v4227
  %5542 = vmatpush1.msra.mxu0 %v4226
  %5543 = vmatprep.subr.mxu0 %v4223
  %5544 = vmatpush1.msra.mxu0 %v4222
  %5545 = vmatprep.subr.mxu0 0.0
  %5546 = vmatpush2.msra.mxu0 0.0
  %5547 = vmatprep.subr.mxu0 0.0
  %5548 = vmatpush2.msra.mxu0 0.0
  %5549 = vmatprep.subr.mxu0 0.0
  %5550 = vmatpush2.msra.mxu0 0.0
  %5551 = vmatprep.subr.mxu0 0.0
  %5552 = vmatpush2.msra.mxu0 0.0
  %5553 = vmatprep.subr.mxu0 0.0
  %5554 = vmatpush2.msra.mxu0 0.0
  %5555 = vmatprep.subr.mxu0 0.0
  %5556 = vmatpush2.msra.mxu0 0.0
  %5557 = vmatprep.subr.mxu0 0.0
  %5558 = vmatpush2.msra.mxu0 0.0
  %5559 = vmatprep.subr.mxu0 0.0
  %5560 = vmatpush2.msra.mxu0 0.0
  %5561 = vmatprep.subr.mxu0 0.0
  %5562 = vmatpush2.msra.mxu0 0.0
  %5563 = vmatprep.subr.mxu0 0.0
  %5564 = vmatpush2.msra.mxu0 0.0
  %5565 = vmatprep.subr.mxu0 0.0
  %5566 = vmatpush2.msra.mxu0 0.0
  %5567 = vmatprep.subr.mxu0 0.0
  %5568 = vmatpush2.msra.mxu0 0.0
  %5569 = vmatprep.subr.mxu0 0.0
  %5570 = vmatpush2.msra.mxu0 0.0
  %5571 = vmatprep.subr.mxu0 0.0
  %5572 = vmatpush2.msra.mxu0 0.0
  %5573 = vmatprep.subr.mxu0 0.0
  %5574 = vmatpush2.msra.mxu0 0.0
  %5575 = vmatprep.subr.mxu0 0.0
  %5576 = vmatpush2.msra.mxu0 0.0
  %5577 = vmatprep.mubr.f32.mxu0 0.0
  %5578 = vmatmul.mubr.f32.gmra.mxu0 %v5511
  %v5579 = vpop.f32.mrf.mxu0
  %v5580 = vadd.f32 0.0, %v5579
  %v5581 = vpop.f32.mrf.mxu0
  %v5582 = vadd.f32 0.0, %v5581
  %5583 = vdwg.mxu0
  %5584 = vmatprep.subr.mxu0 0.0
  %5585 = vmatpush1.msra.mxu0 0.0
  %5586 = vmatprep.subr.mxu0 0.0
  %5587 = vmatpush1.msra.mxu0 0.0
  %5588 = vmatprep.subr.mxu0 0.0
  %5589 = vmatpush1.msra.mxu0 0.0
  %5590 = vmatprep.subr.mxu0 0.0
  %5591 = vmatpush1.msra.mxu0 0.0
  %5592 = vmatprep.subr.mxu0 0.0
  %5593 = vmatpush1.msra.mxu0 0.0
  %5594 = vmatprep.subr.mxu0 0.0
  %5595 = vmatpush1.msra.mxu0 0.0
  %5596 = vmatprep.subr.mxu0 0.0
  %5597 = vmatpush1.msra.mxu0 0.0
  %5598 = vmatprep.subr.mxu0 0.0
  %5599 = vmatpush1.msra.mxu0 0.0
  %5600 = vmatprep.subr.mxu0 0.0
  %5601 = vmatpush1.msra.mxu0 0.0
  %5602 = vmatprep.subr.mxu0 0.0
  %5603 = vmatpush1.msra.mxu0 0.0
  %5604 = vmatprep.subr.mxu0 0.0
  %5605 = vmatpush1.msra.mxu0 0.0
  %5606 = vmatprep.subr.mxu0 0.0
  %5607 = vmatpush1.msra.mxu0 0.0
  %5608 = vmatprep.subr.mxu0 %v4237
  %5609 = vmatpush1.msra.mxu0 %v4236
  %5610 = vmatprep.subr.mxu0 %v4233
  %5611 = vmatpush1.msra.mxu0 %v4232
  %5612 = vmatprep.subr.mxu0 %v4229
  %5613 = vmatpush1.msra.mxu0 %v4228
  %5614 = vmatprep.subr.mxu0 %v4225
  %5615 = vmatpush1.msra.mxu0 %v4224
  %5616 = vmatprep.subr.mxu0 0.0
  %5617 = vmatpush2.msra.mxu0 0.0
  %5618 = vmatprep.subr.mxu0 0.0
  %5619 = vmatpush2.msra.mxu0 0.0
  %5620 = vmatprep.subr.mxu0 0.0
  %5621 = vmatpush2.msra.mxu0 0.0
  %5622 = vmatprep.subr.mxu0 0.0
  %5623 = vmatpush2.msra.mxu0 0.0
  %5624 = vmatprep.subr.mxu0 0.0
  %5625 = vmatpush2.msra.mxu0 0.0
  %5626 = vmatprep.subr.mxu0 0.0
  %5627 = vmatpush2.msra.mxu0 0.0
  %5628 = vmatprep.subr.mxu0 0.0
  %5629 = vmatpush2.msra.mxu0 0.0
  %5630 = vmatprep.subr.mxu0 0.0
  %5631 = vmatpush2.msra.mxu0 0.0
  %5632 = vmatprep.subr.mxu0 0.0
  %5633 = vmatpush2.msra.mxu0 0.0
  %5634 = vmatprep.subr.mxu0 0.0
  %5635 = vmatpush2.msra.mxu0 0.0
  %5636 = vmatprep.subr.mxu0 0.0
  %5637 = vmatpush2.msra.mxu0 0.0
  %5638 = vmatprep.subr.mxu0 0.0
  %5639 = vmatpush2.msra.mxu0 0.0
  %5640 = vmatprep.subr.mxu0 0.0
  %5641 = vmatpush2.msra.mxu0 0.0
  %5642 = vmatprep.subr.mxu0 0.0
  %5643 = vmatpush2.msra.mxu0 0.0
  %5644 = vmatprep.subr.mxu0 0.0
  %5645 = vmatpush2.msra.mxu0 0.0
  %5646 = vmatprep.subr.mxu0 0.0
  %5647 = vmatpush2.msra.mxu0 0.0
  %5648 = vmatprep.mubr.f32.mxu0 0.0
  %5649 = vmatmul.mubr.f32.gmra.mxu0 %v5511
  %v5650 = vpop.f32.mrf.mxu0
  %v5651 = vadd.f32 0.0, %v5650
  %v5652 = vpop.f32.mrf.mxu0
  %v5653 = vadd.f32 0.0, %v5652
  %5654 = vdwg.mxu0
  %v5655 = vadd.f32 %v5343, %v5580
  %v5656 = vadd.f32 %v5344, %v5582
  %v5657 = vadd.f32 %v5345, %v5651
  %v5658 = vadd.f32 %v5346, %v5653
  %v5659 = vmul.f32 %v5505, 0.5
  %v5660 = vtanh.pop %v5659
  %v5661 = vmul.f32 %v5660, 0.5
  %v5662 = vadd.f32 %v5661, 0.5
  %v5663 = vmul.f32 %v5506, 0.5
  %v5664 = vtanh.pop %v5663
  %v5665 = vmul.f32 %v5664, 0.5
  %v5666 = vadd.f32 %v5665, 0.5
  %v5667 = vtanh.pop %v5507
  %v5668 = vmul.f32 %v5508, 0.5
  %v5669 = vtanh.pop %v5668
  %v5670 = vmul.f32 %v5669, 0.5
  %v5671 = vadd.f32 %v5670, 0.5
  %v5673 = vrot.slane %v5313, 6
  %v5675 = vmul.f32 %v5666, %v5673
  %v5676 = vmul.f32 %v5662, %v5667
  %v5677 = vadd.f32 %v5675, %v5676
  %v5678 = vtanh.pop %v5677
  %v5679 = vmul.f32 %v5671, %v5678
  %v5680 = vmul.f32 %v5655, 0.5
  %v5681 = vtanh.pop %v5680
  %v5682 = vmul.f32 %v5681, 0.5
  %v5683 = vadd.f32 %v5682, 0.5
  %v5684 = vmul.f32 %v5656, 0.5
  %v5685 = vtanh.pop %v5684
  %v5686 = vmul.f32 %v5685, 0.5
  %v5687 = vadd.f32 %v5686, 0.5
  %v5688 = vtanh.pop %v5657
  %v5689 = vmul.f32 %v5658, 0.5
  %v5690 = vtanh.pop %v5689
  %v5691 = vmul.f32 %v5690, 0.5
  %v5692 = vadd.f32 %v5691, 0.5
  %v5694 = vrot.slane %v5334, 2
  %v5696 = vmul.f32 %v5687, %v5694
  %v5697 = vmul.f32 %v5683, %v5688
  %v5698 = vadd.f32 %v5696, %v5697
  %v5699 = vtanh.pop %v5698
  %v5700 = vmul.f32 %v5692, %v5699
  %5701 = vst.msk [vmem:[#allocation3] sm:$0xc0] %vm839, %v5679
  %5702 = vst.msk [vmem:[#allocation3 + $0x18] sm:$0x3] %vm837, %v5700
  %v5703 = vld [vmem:[#allocation2 + $0x40] sm:$0x3]
  %v5704 = vld [vmem:[#allocation2 + $0x48] sm:$0x3]
  %v5705 = vld [vmem:[#allocation2 + $0x50] sm:$0x3]
  %v5706 = vld [vmem:[#allocation2 + $0x58] sm:$0x3]
  %v5707 = vld [vmem:[#allocation2 + $0x20] sm:$0xc0]
  %v5708 = vld [vmem:[#allocation2 + $0x28] sm:$0xc0]
  %v5709 = vld [vmem:[#allocation2 + $0x30] sm:$0xc0]
  %v5710 = vld [vmem:[#allocation2 + $0x38] sm:$0xc0]
  %v5712 = vrot.slane %v5679, 6
  %v5713 = vsel %vm123, %v5712, 0
  %5715 = vmatprep.subr.mxu0 0.0
  %5716 = vmatpush1.msra.mxu0 0.0
  %5717 = vmatprep.subr.mxu0 0.0
  %5718 = vmatpush1.msra.mxu0 0.0
  %5719 = vmatprep.subr.mxu0 0.0
  %5720 = vmatpush1.msra.mxu0 0.0
  %5721 = vmatprep.subr.mxu0 0.0
  %5722 = vmatpush1.msra.mxu0 0.0
  %5723 = vmatprep.subr.mxu0 0.0
  %5724 = vmatpush1.msra.mxu0 0.0
  %5725 = vmatprep.subr.mxu0 0.0
  %5726 = vmatpush1.msra.mxu0 0.0
  %5727 = vmatprep.subr.mxu0 0.0
  %5728 = vmatpush1.msra.mxu0 0.0
  %5729 = vmatprep.subr.mxu0 0.0
  %5730 = vmatpush1.msra.mxu0 0.0
  %5731 = vmatprep.subr.mxu0 0.0
  %5732 = vmatpush1.msra.mxu0 0.0
  %5733 = vmatprep.subr.mxu0 0.0
  %5734 = vmatpush1.msra.mxu0 0.0
  %5735 = vmatprep.subr.mxu0 0.0
  %5736 = vmatpush1.msra.mxu0 0.0
  %5737 = vmatprep.subr.mxu0 0.0
  %5738 = vmatpush1.msra.mxu0 0.0
  %5739 = vmatprep.subr.mxu0 %v4219
  %5740 = vmatpush1.msra.mxu0 %v4218
  %5741 = vmatprep.subr.mxu0 %v4215
  %5742 = vmatpush1.msra.mxu0 %v4214
  %5743 = vmatprep.subr.mxu0 %v4211
  %5744 = vmatpush1.msra.mxu0 %v4210
  %5745 = vmatprep.subr.mxu0 %v4207
  %5746 = vmatpush1.msra.mxu0 %v4206
  %5747 = vmatprep.subr.mxu0 0.0
  %5748 = vmatpush2.msra.mxu0 0.0
  %5749 = vmatprep.subr.mxu0 0.0
  %5750 = vmatpush2.msra.mxu0 0.0
  %5751 = vmatprep.subr.mxu0 0.0
  %5752 = vmatpush2.msra.mxu0 0.0
  %5753 = vmatprep.subr.mxu0 0.0
  %5754 = vmatpush2.msra.mxu0 0.0
  %5755 = vmatprep.subr.mxu0 0.0
  %5756 = vmatpush2.msra.mxu0 0.0
  %5757 = vmatprep.subr.mxu0 0.0
  %5758 = vmatpush2.msra.mxu0 0.0
  %5759 = vmatprep.subr.mxu0 0.0
  %5760 = vmatpush2.msra.mxu0 0.0
  %5761 = vmatprep.subr.mxu0 0.0
  %5762 = vmatpush2.msra.mxu0 0.0
  %5763 = vmatprep.subr.mxu0 0.0
  %5764 = vmatpush2.msra.mxu0 0.0
  %5765 = vmatprep.subr.mxu0 0.0
  %5766 = vmatpush2.msra.mxu0 0.0
  %5767 = vmatprep.subr.mxu0 0.0
  %5768 = vmatpush2.msra.mxu0 0.0
  %5769 = vmatprep.subr.mxu0 0.0
  %5770 = vmatpush2.msra.mxu0 0.0
  %5771 = vmatprep.subr.mxu0 0.0
  %5772 = vmatpush2.msra.mxu0 0.0
  %5773 = vmatprep.subr.mxu0 0.0
  %5774 = vmatpush2.msra.mxu0 0.0
  %5775 = vmatprep.subr.mxu0 0.0
  %5776 = vmatpush2.msra.mxu0 0.0
  %5777 = vmatprep.subr.mxu0 0.0
  %5778 = vmatpush2.msra.mxu0 0.0
  %5779 = vmatprep.mubr.f32.mxu0 0.0
  %5780 = vmatmul.mubr.f32.gmra.mxu0 %v5713
  %v5781 = vpop.f32.mrf.mxu0
  %v5782 = vadd.f32 0.0, %v5781
  %v5783 = vpop.f32.mrf.mxu0
  %v5784 = vadd.f32 0.0, %v5783
  %5785 = vdwg.mxu0
  %5786 = vmatprep.subr.mxu0 0.0
  %5787 = vmatpush1.msra.mxu0 0.0
  %5788 = vmatprep.subr.mxu0 0.0
  %5789 = vmatpush1.msra.mxu0 0.0
  %5790 = vmatprep.subr.mxu0 0.0
  %5791 = vmatpush1.msra.mxu0 0.0
  %5792 = vmatprep.subr.mxu0 0.0
  %5793 = vmatpush1.msra.mxu0 0.0
  %5794 = vmatprep.subr.mxu0 0.0
  %5795 = vmatpush1.msra.mxu0 0.0
  %5796 = vmatprep.subr.mxu0 0.0
  %5797 = vmatpush1.msra.mxu0 0.0
  %5798 = vmatprep.subr.mxu0 0.0
  %5799 = vmatpush1.msra.mxu0 0.0
  %5800 = vmatprep.subr.mxu0 0.0
  %5801 = vmatpush1.msra.mxu0 0.0
  %5802 = vmatprep.subr.mxu0 0.0
  %5803 = vmatpush1.msra.mxu0 0.0
  %5804 = vmatprep.subr.mxu0 0.0
  %5805 = vmatpush1.msra.mxu0 0.0
  %5806 = vmatprep.subr.mxu0 0.0
  %5807 = vmatpush1.msra.mxu0 0.0
  %5808 = vmatprep.subr.mxu0 0.0
  %5809 = vmatpush1.msra.mxu0 0.0
  %5810 = vmatprep.subr.mxu0 %v4221
  %5811 = vmatpush1.msra.mxu0 %v4220
  %5812 = vmatprep.subr.mxu0 %v4217
  %5813 = vmatpush1.msra.mxu0 %v4216
  %5814 = vmatprep.subr.mxu0 %v4213
  %5815 = vmatpush1.msra.mxu0 %v4212
  %5816 = vmatprep.subr.mxu0 %v4209
  %5817 = vmatpush1.msra.mxu0 %v4208
  %5818 = vmatprep.subr.mxu0 0.0
  %5819 = vmatpush2.msra.mxu0 0.0
  %5820 = vmatprep.subr.mxu0 0.0
  %5821 = vmatpush2.msra.mxu0 0.0
  %5822 = vmatprep.subr.mxu0 0.0
  %5823 = vmatpush2.msra.mxu0 0.0
  %5824 = vmatprep.subr.mxu0 0.0
  %5825 = vmatpush2.msra.mxu0 0.0
  %5826 = vmatprep.subr.mxu0 0.0
  %5827 = vmatpush2.msra.mxu0 0.0
  %5828 = vmatprep.subr.mxu0 0.0
  %5829 = vmatpush2.msra.mxu0 0.0
  %5830 = vmatprep.subr.mxu0 0.0
  %5831 = vmatpush2.msra.mxu0 0.0
  %5832 = vmatprep.subr.mxu0 0.0
  %5833 = vmatpush2.msra.mxu0 0.0
  %5834 = vmatprep.subr.mxu0 0.0
  %5835 = vmatpush2.msra.mxu0 0.0
  %5836 = vmatprep.subr.mxu0 0.0
  %5837 = vmatpush2.msra.mxu0 0.0
  %5838 = vmatprep.subr.mxu0 0.0
  %5839 = vmatpush2.msra.mxu0 0.0
  %5840 = vmatprep.subr.mxu0 0.0
  %5841 = vmatpush2.msra.mxu0 0.0
  %5842 = vmatprep.subr.mxu0 0.0
  %5843 = vmatpush2.msra.mxu0 0.0
  %5844 = vmatprep.subr.mxu0 0.0
  %5845 = vmatpush2.msra.mxu0 0.0
  %5846 = vmatprep.subr.mxu0 0.0
  %5847 = vmatpush2.msra.mxu0 0.0
  %5848 = vmatprep.subr.mxu0 0.0
  %5849 = vmatpush2.msra.mxu0 0.0
  %5850 = vmatprep.mubr.f32.mxu0 0.0
  %5851 = vmatmul.mubr.f32.gmra.mxu0 %v5713
  %v5852 = vpop.f32.mrf.mxu0
  %v5853 = vadd.f32 0.0, %v5852
  %v5854 = vpop.f32.mrf.mxu0
  %v5855 = vadd.f32 0.0, %v5854
  %5856 = vdwg.mxu0
  %v5857 = vadd.f32 %v5703, %v5782
  %v5858 = vadd.f32 %v5704, %v5784
  %v5859 = vadd.f32 %v5705, %v5853
  %v5860 = vadd.f32 %v5706, %v5855
  %v5862 = vsel %vm123, %v5700, 0
  %5864 = vmatprep.subr.mxu0 0.0
  %5865 = vmatpush1.msra.mxu0 0.0
  %5866 = vmatprep.subr.mxu0 0.0
  %5867 = vmatpush1.msra.mxu0 0.0
  %5868 = vmatprep.subr.mxu0 0.0
  %5869 = vmatpush1.msra.mxu0 0.0
  %5870 = vmatprep.subr.mxu0 0.0
  %5871 = vmatpush1.msra.mxu0 0.0
  %5872 = vmatprep.subr.mxu0 0.0
  %5873 = vmatpush1.msra.mxu0 0.0
  %5874 = vmatprep.subr.mxu0 0.0
  %5875 = vmatpush1.msra.mxu0 0.0
  %5876 = vmatprep.subr.mxu0 0.0
  %5877 = vmatpush1.msra.mxu0 0.0
  %5878 = vmatprep.subr.mxu0 0.0
  %5879 = vmatpush1.msra.mxu0 0.0
  %5880 = vmatprep.subr.mxu0 0.0
  %5881 = vmatpush1.msra.mxu0 0.0
  %5882 = vmatprep.subr.mxu0 0.0
  %5883 = vmatpush1.msra.mxu0 0.0
  %5884 = vmatprep.subr.mxu0 0.0
  %5885 = vmatpush1.msra.mxu0 0.0
  %5886 = vmatprep.subr.mxu0 0.0
  %5887 = vmatpush1.msra.mxu0 0.0
  %5888 = vmatprep.subr.mxu0 %v4235
  %5889 = vmatpush1.msra.mxu0 %v4234
  %5890 = vmatprep.subr.mxu0 %v4231
  %5891 = vmatpush1.msra.mxu0 %v4230
  %5892 = vmatprep.subr.mxu0 %v4227
  %5893 = vmatpush1.msra.mxu0 %v4226
  %5894 = vmatprep.subr.mxu0 %v4223
  %5895 = vmatpush1.msra.mxu0 %v4222
  %5896 = vmatprep.subr.mxu0 0.0
  %5897 = vmatpush2.msra.mxu0 0.0
  %5898 = vmatprep.subr.mxu0 0.0
  %5899 = vmatpush2.msra.mxu0 0.0
  %5900 = vmatprep.subr.mxu0 0.0
  %5901 = vmatpush2.msra.mxu0 0.0
  %5902 = vmatprep.subr.mxu0 0.0
  %5903 = vmatpush2.msra.mxu0 0.0
  %5904 = vmatprep.subr.mxu0 0.0
  %5905 = vmatpush2.msra.mxu0 0.0
  %5906 = vmatprep.subr.mxu0 0.0
  %5907 = vmatpush2.msra.mxu0 0.0
  %5908 = vmatprep.subr.mxu0 0.0
  %5909 = vmatpush2.msra.mxu0 0.0
  %5910 = vmatprep.subr.mxu0 0.0
  %5911 = vmatpush2.msra.mxu0 0.0
  %5912 = vmatprep.subr.mxu0 0.0
  %5913 = vmatpush2.msra.mxu0 0.0
  %5914 = vmatprep.subr.mxu0 0.0
  %5915 = vmatpush2.msra.mxu0 0.0
  %5916 = vmatprep.subr.mxu0 0.0
  %5917 = vmatpush2.msra.mxu0 0.0
  %5918 = vmatprep.subr.mxu0 0.0
  %5919 = vmatpush2.msra.mxu0 0.0
  %5920 = vmatprep.subr.mxu0 0.0
  %5921 = vmatpush2.msra.mxu0 0.0
  %5922 = vmatprep.subr.mxu0 0.0
  %5923 = vmatpush2.msra.mxu0 0.0
  %5924 = vmatprep.subr.mxu0 0.0
  %5925 = vmatpush2.msra.mxu0 0.0
  %5926 = vmatprep.subr.mxu0 0.0
  %5927 = vmatpush2.msra.mxu0 0.0
  %5928 = vmatprep.mubr.f32.mxu0 0.0
  %5929 = vmatmul.mubr.f32.gmra.mxu0 %v5862
  %v5930 = vpop.f32.mrf.mxu0
  %v5931 = vadd.f32 0.0, %v5930
  %v5932 = vpop.f32.mrf.mxu0
  %v5933 = vadd.f32 0.0, %v5932
  %5934 = vdwg.mxu0
  %5935 = vmatprep.subr.mxu0 0.0
  %5936 = vmatpush1.msra.mxu0 0.0
  %5937 = vmatprep.subr.mxu0 0.0
  %5938 = vmatpush1.msra.mxu0 0.0
  %5939 = vmatprep.subr.mxu0 0.0
  %5940 = vmatpush1.msra.mxu0 0.0
  %5941 = vmatprep.subr.mxu0 0.0
  %5942 = vmatpush1.msra.mxu0 0.0
  %5943 = vmatprep.subr.mxu0 0.0
  %5944 = vmatpush1.msra.mxu0 0.0
  %5945 = vmatprep.subr.mxu0 0.0
  %5946 = vmatpush1.msra.mxu0 0.0
  %5947 = vmatprep.subr.mxu0 0.0
  %5948 = vmatpush1.msra.mxu0 0.0
  %5949 = vmatprep.subr.mxu0 0.0
  %5950 = vmatpush1.msra.mxu0 0.0
  %5951 = vmatprep.subr.mxu0 0.0
  %5952 = vmatpush1.msra.mxu0 0.0
  %5953 = vmatprep.subr.mxu0 0.0
  %5954 = vmatpush1.msra.mxu0 0.0
  %5955 = vmatprep.subr.mxu0 0.0
  %5956 = vmatpush1.msra.mxu0 0.0
  %5957 = vmatprep.subr.mxu0 0.0
  %5958 = vmatpush1.msra.mxu0 0.0
  %5959 = vmatprep.subr.mxu0 %v4237
  %5960 = vmatpush1.msra.mxu0 %v4236
  %5961 = vmatprep.subr.mxu0 %v4233
  %5962 = vmatpush1.msra.mxu0 %v4232
  %5963 = vmatprep.subr.mxu0 %v4229
  %5964 = vmatpush1.msra.mxu0 %v4228
  %5965 = vmatprep.subr.mxu0 %v4225
  %5966 = vmatpush1.msra.mxu0 %v4224
  %5967 = vmatprep.subr.mxu0 0.0
  %5968 = vmatpush2.msra.mxu0 0.0
  %5969 = vmatprep.subr.mxu0 0.0
  %5970 = vmatpush2.msra.mxu0 0.0
  %5971 = vmatprep.subr.mxu0 0.0
  %5972 = vmatpush2.msra.mxu0 0.0
  %5973 = vmatprep.subr.mxu0 0.0
  %5974 = vmatpush2.msra.mxu0 0.0
  %5975 = vmatprep.subr.mxu0 0.0
  %5976 = vmatpush2.msra.mxu0 0.0
  %5977 = vmatprep.subr.mxu0 0.0
  %5978 = vmatpush2.msra.mxu0 0.0
  %5979 = vmatprep.subr.mxu0 0.0
  %5980 = vmatpush2.msra.mxu0 0.0
  %5981 = vmatprep.subr.mxu0 0.0
  %5982 = vmatpush2.msra.mxu0 0.0
  %5983 = vmatprep.subr.mxu0 0.0
  %5984 = vmatpush2.msra.mxu0 0.0
  %5985 = vmatprep.subr.mxu0 0.0
  %5986 = vmatpush2.msra.mxu0 0.0
  %5987 = vmatprep.subr.mxu0 0.0
  %5988 = vmatpush2.msra.mxu0 0.0
  %5989 = vmatprep.subr.mxu0 0.0
  %5990 = vmatpush2.msra.mxu0 0.0
  %5991 = vmatprep.subr.mxu0 0.0
  %5992 = vmatpush2.msra.mxu0 0.0
  %5993 = vmatprep.subr.mxu0 0.0
  %5994 = vmatpush2.msra.mxu0 0.0
  %5995 = vmatprep.subr.mxu0 0.0
  %5996 = vmatpush2.msra.mxu0 0.0
  %5997 = vmatprep.subr.mxu0 0.0
  %5998 = vmatpush2.msra.mxu0 0.0
  %5999 = vmatprep.mubr.f32.mxu0 0.0
  %6000 = vmatmul.mubr.f32.gmra.mxu0 %v5862
  %v6001 = vpop.f32.mrf.mxu0
  %v6002 = vadd.f32 0.0, %v6001
  %v6003 = vpop.f32.mrf.mxu0
  %v6004 = vadd.f32 0.0, %v6003
  %6005 = vdwg.mxu0
  %v6010 = vrot.slane %v5931, 2
  %v6011 = vrot.slane %v5933, 2
  %v6012 = vrot.slane %v6002, 2
  %v6013 = vrot.slane %v6004, 2
  %v6018 = vadd.f32 %v5707, %v6010
  %v6019 = vadd.f32 %v5708, %v6011
  %v6020 = vadd.f32 %v5709, %v6012
  %v6021 = vadd.f32 %v5710, %v6013
  %v6022 = vmul.f32 %v5857, 0.5
  %v6023 = vtanh.pop %v6022
  %v6024 = vmul.f32 %v6023, 0.5
  %v6025 = vadd.f32 %v6024, 0.5
  %v6026 = vmul.f32 %v5858, 0.5
  %v6027 = vtanh.pop %v6026
  %v6028 = vmul.f32 %v6027, 0.5
  %v6029 = vadd.f32 %v6028, 0.5
  %v6030 = vtanh.pop %v5859
  %v6031 = vmul.f32 %v5860, 0.5
  %v6032 = vtanh.pop %v6031
  %v6033 = vmul.f32 %v6032, 0.5
  %v6034 = vadd.f32 %v6033, 0.5
  %v6036 = vrot.slane %v5677, 6
  %v6038 = vmul.f32 %v6029, %v6036
  %v6039 = vmul.f32 %v6025, %v6030
  %v6040 = vadd.f32 %v6038, %v6039
  %v6041 = vtanh.pop %v6040
  %v6042 = vmul.f32 %v6034, %v6041
  %v6043 = vmul.f32 %v6018, 0.5
  %v6044 = vtanh.pop %v6043
  %v6045 = vmul.f32 %v6044, 0.5
  %v6046 = vadd.f32 %v6045, 0.5
  %v6047 = vmul.f32 %v6019, 0.5
  %v6048 = vtanh.pop %v6047
  %v6049 = vmul.f32 %v6048, 0.5
  %v6050 = vadd.f32 %v6049, 0.5
  %v6051 = vtanh.pop %v6020
  %v6052 = vmul.f32 %v6021, 0.5
  %v6053 = vtanh.pop %v6052
  %v6054 = vmul.f32 %v6053, 0.5
  %v6055 = vadd.f32 %v6054, 0.5
  %v6057 = vrot.slane %v5698, 2
  %v6059 = vmul.f32 %v6050, %v6057
  %v6060 = vmul.f32 %v6046, %v6051
  %v6061 = vadd.f32 %v6059, %v6060
  %v6062 = vtanh.pop %v6061
  %v6063 = vmul.f32 %v6055, %v6062
  %6064 = vst.msk [vmem:[#allocation3 + $0x8] sm:$0x3] %vm837, %v6042
  %6065 = vst.msk [vmem:[#allocation3 + $0x10] sm:$0xc0] %vm839, %v6063
  %v6066 = vld [vmem:[#allocation2 + $0x40] sm:$0xc]
  %v6067 = vld [vmem:[#allocation2 + $0x48] sm:$0xc]
  %v6068 = vld [vmem:[#allocation2 + $0x50] sm:$0xc]
  %v6069 = vld [vmem:[#allocation2 + $0x58] sm:$0xc]
  %v6070 = vld [vmem:[#allocation2 + $0x20] sm:$0x30]
  %v6071 = vld [vmem:[#allocation2 + $0x28] sm:$0x30]
  %v6072 = vld [vmem:[#allocation2 + $0x30] sm:$0x30]
  %v6073 = vld [vmem:[#allocation2 + $0x38] sm:$0x30]
  %v6075 = vsel %vm123, %v6042, 0
  %6077 = vmatprep.subr.mxu0 0.0
  %6078 = vmatpush1.msra.mxu0 0.0
  %6079 = vmatprep.subr.mxu0 0.0
  %6080 = vmatpush1.msra.mxu0 0.0
  %6081 = vmatprep.subr.mxu0 0.0
  %6082 = vmatpush1.msra.mxu0 0.0
  %6083 = vmatprep.subr.mxu0 0.0
  %6084 = vmatpush1.msra.mxu0 0.0
  %6085 = vmatprep.subr.mxu0 0.0
  %6086 = vmatpush1.msra.mxu0 0.0
  %6087 = vmatprep.subr.mxu0 0.0
  %6088 = vmatpush1.msra.mxu0 0.0
  %6089 = vmatprep.subr.mxu0 0.0
  %6090 = vmatpush1.msra.mxu0 0.0
  %6091 = vmatprep.subr.mxu0 0.0
  %6092 = vmatpush1.msra.mxu0 0.0
  %6093 = vmatprep.subr.mxu0 0.0
  %6094 = vmatpush1.msra.mxu0 0.0
  %6095 = vmatprep.subr.mxu0 0.0
  %6096 = vmatpush1.msra.mxu0 0.0
  %6097 = vmatprep.subr.mxu0 0.0
  %6098 = vmatpush1.msra.mxu0 0.0
  %6099 = vmatprep.subr.mxu0 0.0
  %6100 = vmatpush1.msra.mxu0 0.0
  %6101 = vmatprep.subr.mxu0 %v4219
  %6102 = vmatpush1.msra.mxu0 %v4218
  %6103 = vmatprep.subr.mxu0 %v4215
  %6104 = vmatpush1.msra.mxu0 %v4214
  %6105 = vmatprep.subr.mxu0 %v4211
  %6106 = vmatpush1.msra.mxu0 %v4210
  %6107 = vmatprep.subr.mxu0 %v4207
  %6108 = vmatpush1.msra.mxu0 %v4206
  %6109 = vmatprep.subr.mxu0 0.0
  %6110 = vmatpush2.msra.mxu0 0.0
  %6111 = vmatprep.subr.mxu0 0.0
  %6112 = vmatpush2.msra.mxu0 0.0
  %6113 = vmatprep.subr.mxu0 0.0
  %6114 = vmatpush2.msra.mxu0 0.0
  %6115 = vmatprep.subr.mxu0 0.0
  %6116 = vmatpush2.msra.mxu0 0.0
  %6117 = vmatprep.subr.mxu0 0.0
  %6118 = vmatpush2.msra.mxu0 0.0
  %6119 = vmatprep.subr.mxu0 0.0
  %6120 = vmatpush2.msra.mxu0 0.0
  %6121 = vmatprep.subr.mxu0 0.0
  %6122 = vmatpush2.msra.mxu0 0.0
  %6123 = vmatprep.subr.mxu0 0.0
  %6124 = vmatpush2.msra.mxu0 0.0
  %6125 = vmatprep.subr.mxu0 0.0
  %6126 = vmatpush2.msra.mxu0 0.0
  %6127 = vmatprep.subr.mxu0 0.0
  %6128 = vmatpush2.msra.mxu0 0.0
  %6129 = vmatprep.subr.mxu0 0.0
  %6130 = vmatpush2.msra.mxu0 0.0
  %6131 = vmatprep.subr.mxu0 0.0
  %6132 = vmatpush2.msra.mxu0 0.0
  %6133 = vmatprep.subr.mxu0 0.0
  %6134 = vmatpush2.msra.mxu0 0.0
  %6135 = vmatprep.subr.mxu0 0.0
  %6136 = vmatpush2.msra.mxu0 0.0
  %6137 = vmatprep.subr.mxu0 0.0
  %6138 = vmatpush2.msra.mxu0 0.0
  %6139 = vmatprep.subr.mxu0 0.0
  %6140 = vmatpush2.msra.mxu0 0.0
  %6141 = vmatprep.mubr.f32.mxu0 0.0
  %6142 = vmatmul.mubr.f32.gmra.mxu0 %v6075
  %v6143 = vpop.f32.mrf.mxu0
  %v6144 = vadd.f32 0.0, %v6143
  %v6145 = vpop.f32.mrf.mxu0
  %v6146 = vadd.f32 0.0, %v6145
  %6147 = vdwg.mxu0
  %6148 = vmatprep.subr.mxu0 0.0
  %6149 = vmatpush1.msra.mxu0 0.0
  %6150 = vmatprep.subr.mxu0 0.0
  %6151 = vmatpush1.msra.mxu0 0.0
  %6152 = vmatprep.subr.mxu0 0.0
  %6153 = vmatpush1.msra.mxu0 0.0
  %6154 = vmatprep.subr.mxu0 0.0
  %6155 = vmatpush1.msra.mxu0 0.0
  %6156 = vmatprep.subr.mxu0 0.0
  %6157 = vmatpush1.msra.mxu0 0.0
  %6158 = vmatprep.subr.mxu0 0.0
  %6159 = vmatpush1.msra.mxu0 0.0
  %6160 = vmatprep.subr.mxu0 0.0
  %6161 = vmatpush1.msra.mxu0 0.0
  %6162 = vmatprep.subr.mxu0 0.0
  %6163 = vmatpush1.msra.mxu0 0.0
  %6164 = vmatprep.subr.mxu0 0.0
  %6165 = vmatpush1.msra.mxu0 0.0
  %6166 = vmatprep.subr.mxu0 0.0
  %6167 = vmatpush1.msra.mxu0 0.0
  %6168 = vmatprep.subr.mxu0 0.0
  %6169 = vmatpush1.msra.mxu0 0.0
  %6170 = vmatprep.subr.mxu0 0.0
  %6171 = vmatpush1.msra.mxu0 0.0
  %6172 = vmatprep.subr.mxu0 %v4221
  %6173 = vmatpush1.msra.mxu0 %v4220
  %6174 = vmatprep.subr.mxu0 %v4217
  %6175 = vmatpush1.msra.mxu0 %v4216
  %6176 = vmatprep.subr.mxu0 %v4213
  %6177 = vmatpush1.msra.mxu0 %v4212
  %6178 = vmatprep.subr.mxu0 %v4209
  %6179 = vmatpush1.msra.mxu0 %v4208
  %6180 = vmatprep.subr.mxu0 0.0
  %6181 = vmatpush2.msra.mxu0 0.0
  %6182 = vmatprep.subr.mxu0 0.0
  %6183 = vmatpush2.msra.mxu0 0.0
  %6184 = vmatprep.subr.mxu0 0.0
  %6185 = vmatpush2.msra.mxu0 0.0
  %6186 = vmatprep.subr.mxu0 0.0
  %6187 = vmatpush2.msra.mxu0 0.0
  %6188 = vmatprep.subr.mxu0 0.0
  %6189 = vmatpush2.msra.mxu0 0.0
  %6190 = vmatprep.subr.mxu0 0.0
  %6191 = vmatpush2.msra.mxu0 0.0
  %6192 = vmatprep.subr.mxu0 0.0
  %6193 = vmatpush2.msra.mxu0 0.0
  %6194 = vmatprep.subr.mxu0 0.0
  %6195 = vmatpush2.msra.mxu0 0.0
  %6196 = vmatprep.subr.mxu0 0.0
  %6197 = vmatpush2.msra.mxu0 0.0
  %6198 = vmatprep.subr.mxu0 0.0
  %6199 = vmatpush2.msra.mxu0 0.0
  %6200 = vmatprep.subr.mxu0 0.0
  %6201 = vmatpush2.msra.mxu0 0.0
  %6202 = vmatprep.subr.mxu0 0.0
  %6203 = vmatpush2.msra.mxu0 0.0
  %6204 = vmatprep.subr.mxu0 0.0
  %6205 = vmatpush2.msra.mxu0 0.0
  %6206 = vmatprep.subr.mxu0 0.0
  %6207 = vmatpush2.msra.mxu0 0.0
  %6208 = vmatprep.subr.mxu0 0.0
  %6209 = vmatpush2.msra.mxu0 0.0
  %6210 = vmatprep.subr.mxu0 0.0
  %6211 = vmatpush2.msra.mxu0 0.0
  %6212 = vmatprep.mubr.f32.mxu0 0.0
  %6213 = vmatmul.mubr.f32.gmra.mxu0 %v6075
  %v6214 = vpop.f32.mrf.mxu0
  %v6215 = vadd.f32 0.0, %v6214
  %v6216 = vpop.f32.mrf.mxu0
  %v6217 = vadd.f32 0.0, %v6216
  %6218 = vdwg.mxu0
  %v6223 = vrot.slane %v6144, 6
  %v6224 = vrot.slane %v6146, 6
  %v6225 = vrot.slane %v6215, 6
  %v6226 = vrot.slane %v6217, 6
  %v6231 = vadd.f32 %v6066, %v6223
  %v6232 = vadd.f32 %v6067, %v6224
  %v6233 = vadd.f32 %v6068, %v6225
  %v6234 = vadd.f32 %v6069, %v6226
  %v6236 = vrot.slane %v6063, 6
  %v6237 = vsel %vm123, %v6236, 0
  %6239 = vmatprep.subr.mxu0 0.0
  %6240 = vmatpush1.msra.mxu0 0.0
  %6241 = vmatprep.subr.mxu0 0.0
  %6242 = vmatpush1.msra.mxu0 0.0
  %6243 = vmatprep.subr.mxu0 0.0
  %6244 = vmatpush1.msra.mxu0 0.0
  %6245 = vmatprep.subr.mxu0 0.0
  %6246 = vmatpush1.msra.mxu0 0.0
  %6247 = vmatprep.subr.mxu0 0.0
  %6248 = vmatpush1.msra.mxu0 0.0
  %6249 = vmatprep.subr.mxu0 0.0
  %6250 = vmatpush1.msra.mxu0 0.0
  %6251 = vmatprep.subr.mxu0 0.0
  %6252 = vmatpush1.msra.mxu0 0.0
  %6253 = vmatprep.subr.mxu0 0.0
  %6254 = vmatpush1.msra.mxu0 0.0
  %6255 = vmatprep.subr.mxu0 0.0
  %6256 = vmatpush1.msra.mxu0 0.0
  %6257 = vmatprep.subr.mxu0 0.0
  %6258 = vmatpush1.msra.mxu0 0.0
  %6259 = vmatprep.subr.mxu0 0.0
  %6260 = vmatpush1.msra.mxu0 0.0
  %6261 = vmatprep.subr.mxu0 0.0
  %6262 = vmatpush1.msra.mxu0 0.0
  %6263 = vmatprep.subr.mxu0 %v4235
  %6264 = vmatpush1.msra.mxu0 %v4234
  %6265 = vmatprep.subr.mxu0 %v4231
  %6266 = vmatpush1.msra.mxu0 %v4230
  %6267 = vmatprep.subr.mxu0 %v4227
  %6268 = vmatpush1.msra.mxu0 %v4226
  %6269 = vmatprep.subr.mxu0 %v4223
  %6270 = vmatpush1.msra.mxu0 %v4222
  %6271 = vmatprep.subr.mxu0 0.0
  %6272 = vmatpush2.msra.mxu0 0.0
  %6273 = vmatprep.subr.mxu0 0.0
  %6274 = vmatpush2.msra.mxu0 0.0
  %6275 = vmatprep.subr.mxu0 0.0
  %6276 = vmatpush2.msra.mxu0 0.0
  %6277 = vmatprep.subr.mxu0 0.0
  %6278 = vmatpush2.msra.mxu0 0.0
  %6279 = vmatprep.subr.mxu0 0.0
  %6280 = vmatpush2.msra.mxu0 0.0
  %6281 = vmatprep.subr.mxu0 0.0
  %6282 = vmatpush2.msra.mxu0 0.0
  %6283 = vmatprep.subr.mxu0 0.0
  %6284 = vmatpush2.msra.mxu0 0.0
  %6285 = vmatprep.subr.mxu0 0.0
  %6286 = vmatpush2.msra.mxu0 0.0
  %6287 = vmatprep.subr.mxu0 0.0
  %6288 = vmatpush2.msra.mxu0 0.0
  %6289 = vmatprep.subr.mxu0 0.0
  %6290 = vmatpush2.msra.mxu0 0.0
  %6291 = vmatprep.subr.mxu0 0.0
  %6292 = vmatpush2.msra.mxu0 0.0
  %6293 = vmatprep.subr.mxu0 0.0
  %6294 = vmatpush2.msra.mxu0 0.0
  %6295 = vmatprep.subr.mxu0 0.0
  %6296 = vmatpush2.msra.mxu0 0.0
  %6297 = vmatprep.subr.mxu0 0.0
  %6298 = vmatpush2.msra.mxu0 0.0
  %6299 = vmatprep.subr.mxu0 0.0
  %6300 = vmatpush2.msra.mxu0 0.0
  %6301 = vmatprep.subr.mxu0 0.0
  %6302 = vmatpush2.msra.mxu0 0.0
  %6303 = vmatprep.mubr.f32.mxu0 0.0
  %6304 = vmatmul.mubr.f32.gmra.mxu0 %v6237
  %v6305 = vpop.f32.mrf.mxu0
  %v6306 = vadd.f32 0.0, %v6305
  %v6307 = vpop.f32.mrf.mxu0
  %v6308 = vadd.f32 0.0, %v6307
  %6309 = vdwg.mxu0
  %6310 = vmatprep.subr.mxu0 0.0
  %6311 = vmatpush1.msra.mxu0 0.0
  %6312 = vmatprep.subr.mxu0 0.0
  %6313 = vmatpush1.msra.mxu0 0.0
  %6314 = vmatprep.subr.mxu0 0.0
  %6315 = vmatpush1.msra.mxu0 0.0
  %6316 = vmatprep.subr.mxu0 0.0
  %6317 = vmatpush1.msra.mxu0 0.0
  %6318 = vmatprep.subr.mxu0 0.0
  %6319 = vmatpush1.msra.mxu0 0.0
  %6320 = vmatprep.subr.mxu0 0.0
  %6321 = vmatpush1.msra.mxu0 0.0
  %6322 = vmatprep.subr.mxu0 0.0
  %6323 = vmatpush1.msra.mxu0 0.0
  %6324 = vmatprep.subr.mxu0 0.0
  %6325 = vmatpush1.msra.mxu0 0.0
  %6326 = vmatprep.subr.mxu0 0.0
  %6327 = vmatpush1.msra.mxu0 0.0
  %6328 = vmatprep.subr.mxu0 0.0
  %6329 = vmatpush1.msra.mxu0 0.0
  %6330 = vmatprep.subr.mxu0 0.0
  %6331 = vmatpush1.msra.mxu0 0.0
  %6332 = vmatprep.subr.mxu0 0.0
  %6333 = vmatpush1.msra.mxu0 0.0
  %6334 = vmatprep.subr.mxu0 %v4237
  %6335 = vmatpush1.msra.mxu0 %v4236
  %6336 = vmatprep.subr.mxu0 %v4233
  %6337 = vmatpush1.msra.mxu0 %v4232
  %6338 = vmatprep.subr.mxu0 %v4229
  %6339 = vmatpush1.msra.mxu0 %v4228
  %6340 = vmatprep.subr.mxu0 %v4225
  %6341 = vmatpush1.msra.mxu0 %v4224
  %6342 = vmatprep.subr.mxu0 0.0
  %6343 = vmatpush2.msra.mxu0 0.0
  %6344 = vmatprep.subr.mxu0 0.0
  %6345 = vmatpush2.msra.mxu0 0.0
  %6346 = vmatprep.subr.mxu0 0.0
  %6347 = vmatpush2.msra.mxu0 0.0
  %6348 = vmatprep.subr.mxu0 0.0
  %6349 = vmatpush2.msra.mxu0 0.0
  %6350 = vmatprep.subr.mxu0 0.0
  %6351 = vmatpush2.msra.mxu0 0.0
  %6352 = vmatprep.subr.mxu0 0.0
  %6353 = vmatpush2.msra.mxu0 0.0
  %6354 = vmatprep.subr.mxu0 0.0
  %6355 = vmatpush2.msra.mxu0 0.0
  %6356 = vmatprep.subr.mxu0 0.0
  %6357 = vmatpush2.msra.mxu0 0.0
  %6358 = vmatprep.subr.mxu0 0.0
  %6359 = vmatpush2.msra.mxu0 0.0
  %6360 = vmatprep.subr.mxu0 0.0
  %6361 = vmatpush2.msra.mxu0 0.0
  %6362 = vmatprep.subr.mxu0 0.0
  %6363 = vmatpush2.msra.mxu0 0.0
  %6364 = vmatprep.subr.mxu0 0.0
  %6365 = vmatpush2.msra.mxu0 0.0
  %6366 = vmatprep.subr.mxu0 0.0
  %6367 = vmatpush2.msra.mxu0 0.0
  %6368 = vmatprep.subr.mxu0 0.0
  %6369 = vmatpush2.msra.mxu0 0.0
  %6370 = vmatprep.subr.mxu0 0.0
  %6371 = vmatpush2.msra.mxu0 0.0
  %6372 = vmatprep.subr.mxu0 0.0
  %6373 = vmatpush2.msra.mxu0 0.0
  %6374 = vmatprep.mubr.f32.mxu0 0.0
  %6375 = vmatmul.mubr.f32.gmra.mxu0 %v6237
  %v6376 = vpop.f32.mrf.mxu0
  %v6377 = vadd.f32 0.0, %v6376
  %v6378 = vpop.f32.mrf.mxu0
  %v6379 = vadd.f32 0.0, %v6378
  %6380 = vdwg.mxu0
  %v6385 = vrot.slane %v6306, 4
  %v6386 = vrot.slane %v6308, 4
  %v6387 = vrot.slane %v6377, 4
  %v6388 = vrot.slane %v6379, 4
  %v6393 = vadd.f32 %v6070, %v6385
  %v6394 = vadd.f32 %v6071, %v6386
  %v6395 = vadd.f32 %v6072, %v6387
  %v6396 = vadd.f32 %v6073, %v6388
  %v6397 = vmul.f32 %v6231, 0.5
  %v6398 = vtanh.pop %v6397
  %v6399 = vmul.f32 %v6398, 0.5
  %v6400 = vadd.f32 %v6399, 0.5
  %v6401 = vmul.f32 %v6232, 0.5
  %v6402 = vtanh.pop %v6401
  %v6403 = vmul.f32 %v6402, 0.5
  %v6404 = vadd.f32 %v6403, 0.5
  %v6405 = vtanh.pop %v6233
  %v6406 = vmul.f32 %v6234, 0.5
  %v6407 = vtanh.pop %v6406
  %v6408 = vmul.f32 %v6407, 0.5
  %v6409 = vadd.f32 %v6408, 0.5
  %v6411 = vrot.slane %v6040, 6
  %v6413 = vmul.f32 %v6404, %v6411
  %v6414 = vmul.f32 %v6400, %v6405
  %v6415 = vadd.f32 %v6413, %v6414
  %v6416 = vtanh.pop %v6415
  %v6417 = vmul.f32 %v6409, %v6416
  %v6418 = vmul.f32 %v6393, 0.5
  %v6419 = vtanh.pop %v6418
  %v6420 = vmul.f32 %v6419, 0.5
  %v6421 = vadd.f32 %v6420, 0.5
  %v6422 = vmul.f32 %v6394, 0.5
  %v6423 = vtanh.pop %v6422
  %v6424 = vmul.f32 %v6423, 0.5
  %v6425 = vadd.f32 %v6424, 0.5
  %v6426 = vtanh.pop %v6395
  %v6427 = vmul.f32 %v6396, 0.5
  %v6428 = vtanh.pop %v6427
  %v6429 = vmul.f32 %v6428, 0.5
  %v6430 = vadd.f32 %v6429, 0.5
  %v6432 = vrot.slane %v6061, 2
  %v6434 = vmul.f32 %v6425, %v6432
  %v6435 = vmul.f32 %v6421, %v6426
  %v6436 = vadd.f32 %v6434, %v6435
  %v6437 = vtanh.pop %v6436
  %v6438 = vmul.f32 %v6430, %v6437
  %6439 = vst.msk [vmem:[#allocation3 + $0x8] sm:$0xc] %vm1214, %v6417
  %6440 = vst.msk [vmem:[#allocation3 + $0x10] sm:$0x30] %vm1216, %v6438
  %v6441 = vld [vmem:[#allocation2 + $0x40] sm:$0x30]
  %v6442 = vld [vmem:[#allocation2 + $0x48] sm:$0x30]
  %v6443 = vld [vmem:[#allocation2 + $0x50] sm:$0x30]
  %v6444 = vld [vmem:[#allocation2 + $0x58] sm:$0x30]
  %v6445 = vld [vmem:[#allocation2 + $0x20] sm:$0xc]
  %v6446 = vld [vmem:[#allocation2 + $0x28] sm:$0xc]
  %v6447 = vld [vmem:[#allocation2 + $0x30] sm:$0xc]
  %v6448 = vld [vmem:[#allocation2 + $0x38] sm:$0xc]
  %v6450 = vrot.slane %v6417, 2
  %v6451 = vsel %vm123, %v6450, 0
  %6453 = vmatprep.subr.mxu0 0.0
  %6454 = vmatpush1.msra.mxu0 0.0
  %6455 = vmatprep.subr.mxu0 0.0
  %6456 = vmatpush1.msra.mxu0 0.0
  %6457 = vmatprep.subr.mxu0 0.0
  %6458 = vmatpush1.msra.mxu0 0.0
  %6459 = vmatprep.subr.mxu0 0.0
  %6460 = vmatpush1.msra.mxu0 0.0
  %6461 = vmatprep.subr.mxu0 0.0
  %6462 = vmatpush1.msra.mxu0 0.0
  %6463 = vmatprep.subr.mxu0 0.0
  %6464 = vmatpush1.msra.mxu0 0.0
  %6465 = vmatprep.subr.mxu0 0.0
  %6466 = vmatpush1.msra.mxu0 0.0
  %6467 = vmatprep.subr.mxu0 0.0
  %6468 = vmatpush1.msra.mxu0 0.0
  %6469 = vmatprep.subr.mxu0 0.0
  %6470 = vmatpush1.msra.mxu0 0.0
  %6471 = vmatprep.subr.mxu0 0.0
  %6472 = vmatpush1.msra.mxu0 0.0
  %6473 = vmatprep.subr.mxu0 0.0
  %6474 = vmatpush1.msra.mxu0 0.0
  %6475 = vmatprep.subr.mxu0 0.0
  %6476 = vmatpush1.msra.mxu0 0.0
  %6477 = vmatprep.subr.mxu0 %v4219
  %6478 = vmatpush1.msra.mxu0 %v4218
  %6479 = vmatprep.subr.mxu0 %v4215
  %6480 = vmatpush1.msra.mxu0 %v4214
  %6481 = vmatprep.subr.mxu0 %v4211
  %6482 = vmatpush1.msra.mxu0 %v4210
  %6483 = vmatprep.subr.mxu0 %v4207
  %6484 = vmatpush1.msra.mxu0 %v4206
  %6485 = vmatprep.subr.mxu0 0.0
  %6486 = vmatpush2.msra.mxu0 0.0
  %6487 = vmatprep.subr.mxu0 0.0
  %6488 = vmatpush2.msra.mxu0 0.0
  %6489 = vmatprep.subr.mxu0 0.0
  %6490 = vmatpush2.msra.mxu0 0.0
  %6491 = vmatprep.subr.mxu0 0.0
  %6492 = vmatpush2.msra.mxu0 0.0
  %6493 = vmatprep.subr.mxu0 0.0
  %6494 = vmatpush2.msra.mxu0 0.0
  %6495 = vmatprep.subr.mxu0 0.0
  %6496 = vmatpush2.msra.mxu0 0.0
  %6497 = vmatprep.subr.mxu0 0.0
  %6498 = vmatpush2.msra.mxu0 0.0
  %6499 = vmatprep.subr.mxu0 0.0
  %6500 = vmatpush2.msra.mxu0 0.0
  %6501 = vmatprep.subr.mxu0 0.0
  %6502 = vmatpush2.msra.mxu0 0.0
  %6503 = vmatprep.subr.mxu0 0.0
  %6504 = vmatpush2.msra.mxu0 0.0
  %6505 = vmatprep.subr.mxu0 0.0
  %6506 = vmatpush2.msra.mxu0 0.0
  %6507 = vmatprep.subr.mxu0 0.0
  %6508 = vmatpush2.msra.mxu0 0.0
  %6509 = vmatprep.subr.mxu0 0.0
  %6510 = vmatpush2.msra.mxu0 0.0
  %6511 = vmatprep.subr.mxu0 0.0
  %6512 = vmatpush2.msra.mxu0 0.0
  %6513 = vmatprep.subr.mxu0 0.0
  %6514 = vmatpush2.msra.mxu0 0.0
  %6515 = vmatprep.subr.mxu0 0.0
  %6516 = vmatpush2.msra.mxu0 0.0
  %6517 = vmatprep.mubr.f32.mxu0 0.0
  %6518 = vmatmul.mubr.f32.gmra.mxu0 %v6451
  %v6519 = vpop.f32.mrf.mxu0
  %v6520 = vadd.f32 0.0, %v6519
  %v6521 = vpop.f32.mrf.mxu0
  %v6522 = vadd.f32 0.0, %v6521
  %6523 = vdwg.mxu0
  %6524 = vmatprep.subr.mxu0 0.0
  %6525 = vmatpush1.msra.mxu0 0.0
  %6526 = vmatprep.subr.mxu0 0.0
  %6527 = vmatpush1.msra.mxu0 0.0
  %6528 = vmatprep.subr.mxu0 0.0
  %6529 = vmatpush1.msra.mxu0 0.0
  %6530 = vmatprep.subr.mxu0 0.0
  %6531 = vmatpush1.msra.mxu0 0.0
  %6532 = vmatprep.subr.mxu0 0.0
  %6533 = vmatpush1.msra.mxu0 0.0
  %6534 = vmatprep.subr.mxu0 0.0
  %6535 = vmatpush1.msra.mxu0 0.0
  %6536 = vmatprep.subr.mxu0 0.0
  %6537 = vmatpush1.msra.mxu0 0.0
  %6538 = vmatprep.subr.mxu0 0.0
  %6539 = vmatpush1.msra.mxu0 0.0
  %6540 = vmatprep.subr.mxu0 0.0
  %6541 = vmatpush1.msra.mxu0 0.0
  %6542 = vmatprep.subr.mxu0 0.0
  %6543 = vmatpush1.msra.mxu0 0.0
  %6544 = vmatprep.subr.mxu0 0.0
  %6545 = vmatpush1.msra.mxu0 0.0
  %6546 = vmatprep.subr.mxu0 0.0
  %6547 = vmatpush1.msra.mxu0 0.0
  %6548 = vmatprep.subr.mxu0 %v4221
  %6549 = vmatpush1.msra.mxu0 %v4220
  %6550 = vmatprep.subr.mxu0 %v4217
  %6551 = vmatpush1.msra.mxu0 %v4216
  %6552 = vmatprep.subr.mxu0 %v4213
  %6553 = vmatpush1.msra.mxu0 %v4212
  %6554 = vmatprep.subr.mxu0 %v4209
  %6555 = vmatpush1.msra.mxu0 %v4208
  %6556 = vmatprep.subr.mxu0 0.0
  %6557 = vmatpush2.msra.mxu0 0.0
  %6558 = vmatprep.subr.mxu0 0.0
  %6559 = vmatpush2.msra.mxu0 0.0
  %6560 = vmatprep.subr.mxu0 0.0
  %6561 = vmatpush2.msra.mxu0 0.0
  %6562 = vmatprep.subr.mxu0 0.0
  %6563 = vmatpush2.msra.mxu0 0.0
  %6564 = vmatprep.subr.mxu0 0.0
  %6565 = vmatpush2.msra.mxu0 0.0
  %6566 = vmatprep.subr.mxu0 0.0
  %6567 = vmatpush2.msra.mxu0 0.0
  %6568 = vmatprep.subr.mxu0 0.0
  %6569 = vmatpush2.msra.mxu0 0.0
  %6570 = vmatprep.subr.mxu0 0.0
  %6571 = vmatpush2.msra.mxu0 0.0
  %6572 = vmatprep.subr.mxu0 0.0
  %6573 = vmatpush2.msra.mxu0 0.0
  %6574 = vmatprep.subr.mxu0 0.0
  %6575 = vmatpush2.msra.mxu0 0.0
  %6576 = vmatprep.subr.mxu0 0.0
  %6577 = vmatpush2.msra.mxu0 0.0
  %6578 = vmatprep.subr.mxu0 0.0
  %6579 = vmatpush2.msra.mxu0 0.0
  %6580 = vmatprep.subr.mxu0 0.0
  %6581 = vmatpush2.msra.mxu0 0.0
  %6582 = vmatprep.subr.mxu0 0.0
  %6583 = vmatpush2.msra.mxu0 0.0
  %6584 = vmatprep.subr.mxu0 0.0
  %6585 = vmatpush2.msra.mxu0 0.0
  %6586 = vmatprep.subr.mxu0 0.0
  %6587 = vmatpush2.msra.mxu0 0.0
  %6588 = vmatprep.mubr.f32.mxu0 0.0
  %6589 = vmatmul.mubr.f32.gmra.mxu0 %v6451
  %v6590 = vpop.f32.mrf.mxu0
  %v6591 = vadd.f32 0.0, %v6590
  %v6592 = vpop.f32.mrf.mxu0
  %v6593 = vadd.f32 0.0, %v6592
  %6594 = vdwg.mxu0
  %v6599 = vrot.slane %v6520, 4
  %v6600 = vrot.slane %v6522, 4
  %v6601 = vrot.slane %v6591, 4
  %v6602 = vrot.slane %v6593, 4
  %v6607 = vadd.f32 %v6441, %v6599
  %v6608 = vadd.f32 %v6442, %v6600
  %v6609 = vadd.f32 %v6443, %v6601
  %v6610 = vadd.f32 %v6444, %v6602
  %v6612 = vrot.slane %v6438, 4
  %v6613 = vsel %vm123, %v6612, 0
  %6615 = vmatprep.subr.mxu0 0.0
  %6616 = vmatpush1.msra.mxu0 0.0
  %6617 = vmatprep.subr.mxu0 0.0
  %6618 = vmatpush1.msra.mxu0 0.0
  %6619 = vmatprep.subr.mxu0 0.0
  %6620 = vmatpush1.msra.mxu0 0.0
  %6621 = vmatprep.subr.mxu0 0.0
  %6622 = vmatpush1.msra.mxu0 0.0
  %6623 = vmatprep.subr.mxu0 0.0
  %6624 = vmatpush1.msra.mxu0 0.0
  %6625 = vmatprep.subr.mxu0 0.0
  %6626 = vmatpush1.msra.mxu0 0.0
  %6627 = vmatprep.subr.mxu0 0.0
  %6628 = vmatpush1.msra.mxu0 0.0
  %6629 = vmatprep.subr.mxu0 0.0
  %6630 = vmatpush1.msra.mxu0 0.0
  %6631 = vmatprep.subr.mxu0 0.0
  %6632 = vmatpush1.msra.mxu0 0.0
  %6633 = vmatprep.subr.mxu0 0.0
  %6634 = vmatpush1.msra.mxu0 0.0
  %6635 = vmatprep.subr.mxu0 0.0
  %6636 = vmatpush1.msra.mxu0 0.0
  %6637 = vmatprep.subr.mxu0 0.0
  %6638 = vmatpush1.msra.mxu0 0.0
  %6639 = vmatprep.subr.mxu0 %v4235
  %6640 = vmatpush1.msra.mxu0 %v4234
  %6641 = vmatprep.subr.mxu0 %v4231
  %6642 = vmatpush1.msra.mxu0 %v4230
  %6643 = vmatprep.subr.mxu0 %v4227
  %6644 = vmatpush1.msra.mxu0 %v4226
  %6645 = vmatprep.subr.mxu0 %v4223
  %6646 = vmatpush1.msra.mxu0 %v4222
  %6647 = vmatprep.subr.mxu0 0.0
  %6648 = vmatpush2.msra.mxu0 0.0
  %6649 = vmatprep.subr.mxu0 0.0
  %6650 = vmatpush2.msra.mxu0 0.0
  %6651 = vmatprep.subr.mxu0 0.0
  %6652 = vmatpush2.msra.mxu0 0.0
  %6653 = vmatprep.subr.mxu0 0.0
  %6654 = vmatpush2.msra.mxu0 0.0
  %6655 = vmatprep.subr.mxu0 0.0
  %6656 = vmatpush2.msra.mxu0 0.0
  %6657 = vmatprep.subr.mxu0 0.0
  %6658 = vmatpush2.msra.mxu0 0.0
  %6659 = vmatprep.subr.mxu0 0.0
  %6660 = vmatpush2.msra.mxu0 0.0
  %6661 = vmatprep.subr.mxu0 0.0
  %6662 = vmatpush2.msra.mxu0 0.0
  %6663 = vmatprep.subr.mxu0 0.0
  %6664 = vmatpush2.msra.mxu0 0.0
  %6665 = vmatprep.subr.mxu0 0.0
  %6666 = vmatpush2.msra.mxu0 0.0
  %6667 = vmatprep.subr.mxu0 0.0
  %6668 = vmatpush2.msra.mxu0 0.0
  %6669 = vmatprep.subr.mxu0 0.0
  %6670 = vmatpush2.msra.mxu0 0.0
  %6671 = vmatprep.subr.mxu0 0.0
  %6672 = vmatpush2.msra.mxu0 0.0
  %6673 = vmatprep.subr.mxu0 0.0
  %6674 = vmatpush2.msra.mxu0 0.0
  %6675 = vmatprep.subr.mxu0 0.0
  %6676 = vmatpush2.msra.mxu0 0.0
  %6677 = vmatprep.subr.mxu0 0.0
  %6678 = vmatpush2.msra.mxu0 0.0
  %6679 = vmatprep.mubr.f32.mxu0 0.0
  %6680 = vmatmul.mubr.f32.gmra.mxu0 %v6613
  %v6681 = vpop.f32.mrf.mxu0
  %v6682 = vadd.f32 0.0, %v6681
  %v6683 = vpop.f32.mrf.mxu0
  %v6684 = vadd.f32 0.0, %v6683
  %6685 = vdwg.mxu0
  %6686 = vmatprep.subr.mxu0 0.0
  %6687 = vmatpush1.msra.mxu0 0.0
  %6688 = vmatprep.subr.mxu0 0.0
  %6689 = vmatpush1.msra.mxu0 0.0
  %6690 = vmatprep.subr.mxu0 0.0
  %6691 = vmatpush1.msra.mxu0 0.0
  %6692 = vmatprep.subr.mxu0 0.0
  %6693 = vmatpush1.msra.mxu0 0.0
  %6694 = vmatprep.subr.mxu0 0.0
  %6695 = vmatpush1.msra.mxu0 0.0
  %6696 = vmatprep.subr.mxu0 0.0
  %6697 = vmatpush1.msra.mxu0 0.0
  %6698 = vmatprep.subr.mxu0 0.0
  %6699 = vmatpush1.msra.mxu0 0.0
  %6700 = vmatprep.subr.mxu0 0.0
  %6701 = vmatpush1.msra.mxu0 0.0
  %6702 = vmatprep.subr.mxu0 0.0
  %6703 = vmatpush1.msra.mxu0 0.0
  %6704 = vmatprep.subr.mxu0 0.0
  %6705 = vmatpush1.msra.mxu0 0.0
  %6706 = vmatprep.subr.mxu0 0.0
  %6707 = vmatpush1.msra.mxu0 0.0
  %6708 = vmatprep.subr.mxu0 0.0
  %6709 = vmatpush1.msra.mxu0 0.0
  %6710 = vmatprep.subr.mxu0 %v4237
  %6711 = vmatpush1.msra.mxu0 %v4236
  %6712 = vmatprep.subr.mxu0 %v4233
  %6713 = vmatpush1.msra.mxu0 %v4232
  %6714 = vmatprep.subr.mxu0 %v4229
  %6715 = vmatpush1.msra.mxu0 %v4228
  %6716 = vmatprep.subr.mxu0 %v4225
  %6717 = vmatpush1.msra.mxu0 %v4224
  %6718 = vmatprep.subr.mxu0 0.0
  %6719 = vmatpush2.msra.mxu0 0.0
  %6720 = vmatprep.subr.mxu0 0.0
  %6721 = vmatpush2.msra.mxu0 0.0
  %6722 = vmatprep.subr.mxu0 0.0
  %6723 = vmatpush2.msra.mxu0 0.0
  %6724 = vmatprep.subr.mxu0 0.0
  %6725 = vmatpush2.msra.mxu0 0.0
  %6726 = vmatprep.subr.mxu0 0.0
  %6727 = vmatpush2.msra.mxu0 0.0
  %6728 = vmatprep.subr.mxu0 0.0
  %6729 = vmatpush2.msra.mxu0 0.0
  %6730 = vmatprep.subr.mxu0 0.0
  %6731 = vmatpush2.msra.mxu0 0.0
  %6732 = vmatprep.subr.mxu0 0.0
  %6733 = vmatpush2.msra.mxu0 0.0
  %6734 = vmatprep.subr.mxu0 0.0
  %6735 = vmatpush2.msra.mxu0 0.0
  %6736 = vmatprep.subr.mxu0 0.0
  %6737 = vmatpush2.msra.mxu0 0.0
  %6738 = vmatprep.subr.mxu0 0.0
  %6739 = vmatpush2.msra.mxu0 0.0
  %6740 = vmatprep.subr.mxu0 0.0
  %6741 = vmatpush2.msra.mxu0 0.0
  %6742 = vmatprep.subr.mxu0 0.0
  %6743 = vmatpush2.msra.mxu0 0.0
  %6744 = vmatprep.subr.mxu0 0.0
  %6745 = vmatpush2.msra.mxu0 0.0
  %6746 = vmatprep.subr.mxu0 0.0
  %6747 = vmatpush2.msra.mxu0 0.0
  %6748 = vmatprep.subr.mxu0 0.0
  %6749 = vmatpush2.msra.mxu0 0.0
  %6750 = vmatprep.mubr.f32.mxu0 0.0
  %6751 = vmatmul.mubr.f32.gmra.mxu0 %v6613
  %v6752 = vpop.f32.mrf.mxu0
  %v6753 = vadd.f32 0.0, %v6752
  %v6754 = vpop.f32.mrf.mxu0
  %v6755 = vadd.f32 0.0, %v6754
  %6756 = vdwg.mxu0
  %v6761 = vrot.slane %v6682, 6
  %v6762 = vrot.slane %v6684, 6
  %v6763 = vrot.slane %v6753, 6
  %v6764 = vrot.slane %v6755, 6
  %v6769 = vadd.f32 %v6445, %v6761
  %v6770 = vadd.f32 %v6446, %v6762
  %v6771 = vadd.f32 %v6447, %v6763
  %v6772 = vadd.f32 %v6448, %v6764
  %v6773 = vmul.f32 %v6607, 0.5
  %v6774 = vtanh.pop %v6773
  %v6775 = vmul.f32 %v6774, 0.5
  %v6776 = vadd.f32 %v6775, 0.5
  %v6777 = vmul.f32 %v6608, 0.5
  %v6778 = vtanh.pop %v6777
  %v6779 = vmul.f32 %v6778, 0.5
  %v6780 = vadd.f32 %v6779, 0.5
  %v6781 = vtanh.pop %v6609
  %v6782 = vmul.f32 %v6610, 0.5
  %v6783 = vtanh.pop %v6782
  %v6784 = vmul.f32 %v6783, 0.5
  %v6785 = vadd.f32 %v6784, 0.5
  %v6787 = vrot.slane %v6415, 6
  %v6789 = vmul.f32 %v6780, %v6787
  %v6790 = vmul.f32 %v6776, %v6781
  %v6791 = vadd.f32 %v6789, %v6790
  %v6792 = vtanh.pop %v6791
  %v6793 = vmul.f32 %v6785, %v6792
  %v6794 = vmul.f32 %v6769, 0.5
  %v6795 = vtanh.pop %v6794
  %v6796 = vmul.f32 %v6795, 0.5
  %v6797 = vadd.f32 %v6796, 0.5
  %v6798 = vmul.f32 %v6770, 0.5
  %v6799 = vtanh.pop %v6798
  %v6800 = vmul.f32 %v6799, 0.5
  %v6801 = vadd.f32 %v6800, 0.5
  %v6802 = vtanh.pop %v6771
  %v6803 = vmul.f32 %v6772, 0.5
  %v6804 = vtanh.pop %v6803
  %v6805 = vmul.f32 %v6804, 0.5
  %v6806 = vadd.f32 %v6805, 0.5
  %v6808 = vrot.slane %v6436, 2
  %v6810 = vmul.f32 %v6801, %v6808
  %v6811 = vmul.f32 %v6797, %v6802
  %v6812 = vadd.f32 %v6810, %v6811
  %v6813 = vtanh.pop %v6812
  %v6814 = vmul.f32 %v6806, %v6813
  %6815 = vst.msk [vmem:[#allocation3 + $0x8] sm:$0x30] %vm1216, %v6793
  %6816 = vst.msk [vmem:[#allocation3 + $0x10] sm:$0xc] %vm1214, %v6814
  %v6817 = vld [vmem:[#allocation2 + $0x40] sm:$0xc0]
  %v6818 = vld [vmem:[#allocation2 + $0x48] sm:$0xc0]
  %v6819 = vld [vmem:[#allocation2 + $0x50] sm:$0xc0]
  %v6820 = vld [vmem:[#allocation2 + $0x58] sm:$0xc0]
  %v6821 = vld [vmem:[#allocation2 + $0x20] sm:$0x3]
  %v6822 = vld [vmem:[#allocation2 + $0x28] sm:$0x3]
  %v6823 = vld [vmem:[#allocation2 + $0x30] sm:$0x3]
  %v6824 = vld [vmem:[#allocation2 + $0x38] sm:$0x3]
  %v6826 = vrot.slane %v6793, 4
  %v6827 = vsel %vm123, %v6826, 0
  %6829 = vmatprep.subr.mxu0 0.0
  %6830 = vmatpush1.msra.mxu0 0.0
  %6831 = vmatprep.subr.mxu0 0.0
  %6832 = vmatpush1.msra.mxu0 0.0
  %6833 = vmatprep.subr.mxu0 0.0
  %6834 = vmatpush1.msra.mxu0 0.0
  %6835 = vmatprep.subr.mxu0 0.0
  %6836 = vmatpush1.msra.mxu0 0.0
  %6837 = vmatprep.subr.mxu0 0.0
  %6838 = vmatpush1.msra.mxu0 0.0
  %6839 = vmatprep.subr.mxu0 0.0
  %6840 = vmatpush1.msra.mxu0 0.0
  %6841 = vmatprep.subr.mxu0 0.0
  %6842 = vmatpush1.msra.mxu0 0.0
  %6843 = vmatprep.subr.mxu0 0.0
  %6844 = vmatpush1.msra.mxu0 0.0
  %6845 = vmatprep.subr.mxu0 0.0
  %6846 = vmatpush1.msra.mxu0 0.0
  %6847 = vmatprep.subr.mxu0 0.0
  %6848 = vmatpush1.msra.mxu0 0.0
  %6849 = vmatprep.subr.mxu0 0.0
  %6850 = vmatpush1.msra.mxu0 0.0
  %6851 = vmatprep.subr.mxu0 0.0
  %6852 = vmatpush1.msra.mxu0 0.0
  %6853 = vmatprep.subr.mxu0 %v4219
  %6854 = vmatpush1.msra.mxu0 %v4218
  %6855 = vmatprep.subr.mxu0 %v4215
  %6856 = vmatpush1.msra.mxu0 %v4214
  %6857 = vmatprep.subr.mxu0 %v4211
  %6858 = vmatpush1.msra.mxu0 %v4210
  %6859 = vmatprep.subr.mxu0 %v4207
  %6860 = vmatpush1.msra.mxu0 %v4206
  %6861 = vmatprep.subr.mxu0 0.0
  %6862 = vmatpush2.msra.mxu0 0.0
  %6863 = vmatprep.subr.mxu0 0.0
  %6864 = vmatpush2.msra.mxu0 0.0
  %6865 = vmatprep.subr.mxu0 0.0
  %6866 = vmatpush2.msra.mxu0 0.0
  %6867 = vmatprep.subr.mxu0 0.0
  %6868 = vmatpush2.msra.mxu0 0.0
  %6869 = vmatprep.subr.mxu0 0.0
  %6870 = vmatpush2.msra.mxu0 0.0
  %6871 = vmatprep.subr.mxu0 0.0
  %6872 = vmatpush2.msra.mxu0 0.0
  %6873 = vmatprep.subr.mxu0 0.0
  %6874 = vmatpush2.msra.mxu0 0.0
  %6875 = vmatprep.subr.mxu0 0.0
  %6876 = vmatpush2.msra.mxu0 0.0
  %6877 = vmatprep.subr.mxu0 0.0
  %6878 = vmatpush2.msra.mxu0 0.0
  %6879 = vmatprep.subr.mxu0 0.0
  %6880 = vmatpush2.msra.mxu0 0.0
  %6881 = vmatprep.subr.mxu0 0.0
  %6882 = vmatpush2.msra.mxu0 0.0
  %6883 = vmatprep.subr.mxu0 0.0
  %6884 = vmatpush2.msra.mxu0 0.0
  %6885 = vmatprep.subr.mxu0 0.0
  %6886 = vmatpush2.msra.mxu0 0.0
  %6887 = vmatprep.subr.mxu0 0.0
  %6888 = vmatpush2.msra.mxu0 0.0
  %6889 = vmatprep.subr.mxu0 0.0
  %6890 = vmatpush2.msra.mxu0 0.0
  %6891 = vmatprep.subr.mxu0 0.0
  %6892 = vmatpush2.msra.mxu0 0.0
  %6893 = vmatprep.mubr.f32.mxu0 0.0
  %6894 = vmatmul.mubr.f32.gmra.mxu0 %v6827
  %v6895 = vpop.f32.mrf.mxu0
  %v6896 = vadd.f32 0.0, %v6895
  %v6897 = vpop.f32.mrf.mxu0
  %v6898 = vadd.f32 0.0, %v6897
  %6899 = vdwg.mxu0
  %6900 = vmatprep.subr.mxu0 0.0
  %6901 = vmatpush1.msra.mxu0 0.0
  %6902 = vmatprep.subr.mxu0 0.0
  %6903 = vmatpush1.msra.mxu0 0.0
  %6904 = vmatprep.subr.mxu0 0.0
  %6905 = vmatpush1.msra.mxu0 0.0
  %6906 = vmatprep.subr.mxu0 0.0
  %6907 = vmatpush1.msra.mxu0 0.0
  %6908 = vmatprep.subr.mxu0 0.0
  %6909 = vmatpush1.msra.mxu0 0.0
  %6910 = vmatprep.subr.mxu0 0.0
  %6911 = vmatpush1.msra.mxu0 0.0
  %6912 = vmatprep.subr.mxu0 0.0
  %6913 = vmatpush1.msra.mxu0 0.0
  %6914 = vmatprep.subr.mxu0 0.0
  %6915 = vmatpush1.msra.mxu0 0.0
  %6916 = vmatprep.subr.mxu0 0.0
  %6917 = vmatpush1.msra.mxu0 0.0
  %6918 = vmatprep.subr.mxu0 0.0
  %6919 = vmatpush1.msra.mxu0 0.0
  %6920 = vmatprep.subr.mxu0 0.0
  %6921 = vmatpush1.msra.mxu0 0.0
  %6922 = vmatprep.subr.mxu0 0.0
  %6923 = vmatpush1.msra.mxu0 0.0
  %6924 = vmatprep.subr.mxu0 %v4221
  %6925 = vmatpush1.msra.mxu0 %v4220
  %6926 = vmatprep.subr.mxu0 %v4217
  %6927 = vmatpush1.msra.mxu0 %v4216
  %6928 = vmatprep.subr.mxu0 %v4213
  %6929 = vmatpush1.msra.mxu0 %v4212
  %6930 = vmatprep.subr.mxu0 %v4209
  %6931 = vmatpush1.msra.mxu0 %v4208
  %6932 = vmatprep.subr.mxu0 0.0
  %6933 = vmatpush2.msra.mxu0 0.0
  %6934 = vmatprep.subr.mxu0 0.0
  %6935 = vmatpush2.msra.mxu0 0.0
  %6936 = vmatprep.subr.mxu0 0.0
  %6937 = vmatpush2.msra.mxu0 0.0
  %6938 = vmatprep.subr.mxu0 0.0
  %6939 = vmatpush2.msra.mxu0 0.0
  %6940 = vmatprep.subr.mxu0 0.0
  %6941 = vmatpush2.msra.mxu0 0.0
  %6942 = vmatprep.subr.mxu0 0.0
  %6943 = vmatpush2.msra.mxu0 0.0
  %6944 = vmatprep.subr.mxu0 0.0
  %6945 = vmatpush2.msra.mxu0 0.0
  %6946 = vmatprep.subr.mxu0 0.0
  %6947 = vmatpush2.msra.mxu0 0.0
  %6948 = vmatprep.subr.mxu0 0.0
  %6949 = vmatpush2.msra.mxu0 0.0
  %6950 = vmatprep.subr.mxu0 0.0
  %6951 = vmatpush2.msra.mxu0 0.0
  %6952 = vmatprep.subr.mxu0 0.0
  %6953 = vmatpush2.msra.mxu0 0.0
  %6954 = vmatprep.subr.mxu0 0.0
  %6955 = vmatpush2.msra.mxu0 0.0
  %6956 = vmatprep.subr.mxu0 0.0
  %6957 = vmatpush2.msra.mxu0 0.0
  %6958 = vmatprep.subr.mxu0 0.0
  %6959 = vmatpush2.msra.mxu0 0.0
  %6960 = vmatprep.subr.mxu0 0.0
  %6961 = vmatpush2.msra.mxu0 0.0
  %6962 = vmatprep.subr.mxu0 0.0
  %6963 = vmatpush2.msra.mxu0 0.0
  %6964 = vmatprep.mubr.f32.mxu0 0.0
  %6965 = vmatmul.mubr.f32.gmra.mxu0 %v6827
  %v6966 = vpop.f32.mrf.mxu0
  %v6967 = vadd.f32 0.0, %v6966
  %v6968 = vpop.f32.mrf.mxu0
  %v6969 = vadd.f32 0.0, %v6968
  %6970 = vdwg.mxu0
  %v6975 = vrot.slane %v6896, 2
  %v6976 = vrot.slane %v6898, 2
  %v6977 = vrot.slane %v6967, 2
  %v6978 = vrot.slane %v6969, 2
  %v6983 = vadd.f32 %v6817, %v6975
  %v6984 = vadd.f32 %v6818, %v6976
  %v6985 = vadd.f32 %v6819, %v6977
  %v6986 = vadd.f32 %v6820, %v6978
  %v6988 = vrot.slane %v6814, 2
  %v6989 = vsel %vm123, %v6988, 0
  %6991 = vmatprep.subr.mxu0 0.0
  %6992 = vmatpush1.msra.mxu0 0.0
  %6993 = vmatprep.subr.mxu0 0.0
  %6994 = vmatpush1.msra.mxu0 0.0
  %6995 = vmatprep.subr.mxu0 0.0
  %6996 = vmatpush1.msra.mxu0 0.0
  %6997 = vmatprep.subr.mxu0 0.0
  %6998 = vmatpush1.msra.mxu0 0.0
  %6999 = vmatprep.subr.mxu0 0.0
  %7000 = vmatpush1.msra.mxu0 0.0
  %7001 = vmatprep.subr.mxu0 0.0
  %7002 = vmatpush1.msra.mxu0 0.0
  %7003 = vmatprep.subr.mxu0 0.0
  %7004 = vmatpush1.msra.mxu0 0.0
  %7005 = vmatprep.subr.mxu0 0.0
  %7006 = vmatpush1.msra.mxu0 0.0
  %7007 = vmatprep.subr.mxu0 0.0
  %7008 = vmatpush1.msra.mxu0 0.0
  %7009 = vmatprep.subr.mxu0 0.0
  %7010 = vmatpush1.msra.mxu0 0.0
  %7011 = vmatprep.subr.mxu0 0.0
  %7012 = vmatpush1.msra.mxu0 0.0
  %7013 = vmatprep.subr.mxu0 0.0
  %7014 = vmatpush1.msra.mxu0 0.0
  %7015 = vmatprep.subr.mxu0 %v4235
  %7016 = vmatpush1.msra.mxu0 %v4234
  %7017 = vmatprep.subr.mxu0 %v4231
  %7018 = vmatpush1.msra.mxu0 %v4230
  %7019 = vmatprep.subr.mxu0 %v4227
  %7020 = vmatpush1.msra.mxu0 %v4226
  %7021 = vmatprep.subr.mxu0 %v4223
  %7022 = vmatpush1.msra.mxu0 %v4222
  %7023 = vmatprep.subr.mxu0 0.0
  %7024 = vmatpush2.msra.mxu0 0.0
  %7025 = vmatprep.subr.mxu0 0.0
  %7026 = vmatpush2.msra.mxu0 0.0
  %7027 = vmatprep.subr.mxu0 0.0
  %7028 = vmatpush2.msra.mxu0 0.0
  %7029 = vmatprep.subr.mxu0 0.0
  %7030 = vmatpush2.msra.mxu0 0.0
  %7031 = vmatprep.subr.mxu0 0.0
  %7032 = vmatpush2.msra.mxu0 0.0
  %7033 = vmatprep.subr.mxu0 0.0
  %7034 = vmatpush2.msra.mxu0 0.0
  %7035 = vmatprep.subr.mxu0 0.0
  %7036 = vmatpush2.msra.mxu0 0.0
  %7037 = vmatprep.subr.mxu0 0.0
  %7038 = vmatpush2.msra.mxu0 0.0
  %7039 = vmatprep.subr.mxu0 0.0
  %7040 = vmatpush2.msra.mxu0 0.0
  %7041 = vmatprep.subr.mxu0 0.0
  %7042 = vmatpush2.msra.mxu0 0.0
  %7043 = vmatprep.subr.mxu0 0.0
  %7044 = vmatpush2.msra.mxu0 0.0
  %7045 = vmatprep.subr.mxu0 0.0
  %7046 = vmatpush2.msra.mxu0 0.0
  %7047 = vmatprep.subr.mxu0 0.0
  %7048 = vmatpush2.msra.mxu0 0.0
  %7049 = vmatprep.subr.mxu0 0.0
  %7050 = vmatpush2.msra.mxu0 0.0
  %7051 = vmatprep.subr.mxu0 0.0
  %7052 = vmatpush2.msra.mxu0 0.0
  %7053 = vmatprep.subr.mxu0 0.0
  %7054 = vmatpush2.msra.mxu0 0.0
  %7055 = vmatprep.mubr.f32.mxu0 0.0
  %7056 = vmatmul.mubr.f32.gmra.mxu0 %v6989
  %v7057 = vpop.f32.mrf.mxu0
  %v7058 = vadd.f32 0.0, %v7057
  %v7059 = vpop.f32.mrf.mxu0
  %v7060 = vadd.f32 0.0, %v7059
  %7061 = vdwg.mxu0
  %7062 = vmatprep.subr.mxu0 0.0
  %7063 = vmatpush1.msra.mxu0 0.0
  %7064 = vmatprep.subr.mxu0 0.0
  %7065 = vmatpush1.msra.mxu0 0.0
  %7066 = vmatprep.subr.mxu0 0.0
  %7067 = vmatpush1.msra.mxu0 0.0
  %7068 = vmatprep.subr.mxu0 0.0
  %7069 = vmatpush1.msra.mxu0 0.0
  %7070 = vmatprep.subr.mxu0 0.0
  %7071 = vmatpush1.msra.mxu0 0.0
  %7072 = vmatprep.subr.mxu0 0.0
  %7073 = vmatpush1.msra.mxu0 0.0
  %7074 = vmatprep.subr.mxu0 0.0
  %7075 = vmatpush1.msra.mxu0 0.0
  %7076 = vmatprep.subr.mxu0 0.0
  %7077 = vmatpush1.msra.mxu0 0.0
  %7078 = vmatprep.subr.mxu0 0.0
  %7079 = vmatpush1.msra.mxu0 0.0
  %7080 = vmatprep.subr.mxu0 0.0
  %7081 = vmatpush1.msra.mxu0 0.0
  %7082 = vmatprep.subr.mxu0 0.0
  %7083 = vmatpush1.msra.mxu0 0.0
  %7084 = vmatprep.subr.mxu0 0.0
  %7085 = vmatpush1.msra.mxu0 0.0
  %7086 = vmatprep.subr.mxu0 %v4237
  %7087 = vmatpush1.msra.mxu0 %v4236
  %7088 = vmatprep.subr.mxu0 %v4233
  %7089 = vmatpush1.msra.mxu0 %v4232
  %7090 = vmatprep.subr.mxu0 %v4229
  %7091 = vmatpush1.msra.mxu0 %v4228
  %7092 = vmatprep.subr.mxu0 %v4225
  %7093 = vmatpush1.msra.mxu0 %v4224
  %7094 = vmatprep.subr.mxu0 0.0
  %7095 = vmatpush2.msra.mxu0 0.0
  %7096 = vmatprep.subr.mxu0 0.0
  %7097 = vmatpush2.msra.mxu0 0.0
  %7098 = vmatprep.subr.mxu0 0.0
  %7099 = vmatpush2.msra.mxu0 0.0
  %7100 = vmatprep.subr.mxu0 0.0
  %7101 = vmatpush2.msra.mxu0 0.0
  %7102 = vmatprep.subr.mxu0 0.0
  %7103 = vmatpush2.msra.mxu0 0.0
  %7104 = vmatprep.subr.mxu0 0.0
  %7105 = vmatpush2.msra.mxu0 0.0
  %7106 = vmatprep.subr.mxu0 0.0
  %7107 = vmatpush2.msra.mxu0 0.0
  %7108 = vmatprep.subr.mxu0 0.0
  %7109 = vmatpush2.msra.mxu0 0.0
  %7110 = vmatprep.subr.mxu0 0.0
  %7111 = vmatpush2.msra.mxu0 0.0
  %7112 = vmatprep.subr.mxu0 0.0
  %7113 = vmatpush2.msra.mxu0 0.0
  %7114 = vmatprep.subr.mxu0 0.0
  %7115 = vmatpush2.msra.mxu0 0.0
  %7116 = vmatprep.subr.mxu0 0.0
  %7117 = vmatpush2.msra.mxu0 0.0
  %7118 = vmatprep.subr.mxu0 0.0
  %7119 = vmatpush2.msra.mxu0 0.0
  %7120 = vmatprep.subr.mxu0 0.0
  %7121 = vmatpush2.msra.mxu0 0.0
  %7122 = vmatprep.subr.mxu0 0.0
  %7123 = vmatpush2.msra.mxu0 0.0
  %7124 = vmatprep.subr.mxu0 0.0
  %7125 = vmatpush2.msra.mxu0 0.0
  %7126 = vmatprep.mubr.f32.mxu0 0.0
  %7127 = vmatmul.mubr.f32.gmra.mxu0 %v6989
  %v7128 = vpop.f32.mrf.mxu0
  %v7129 = vadd.f32 0.0, %v7128
  %v7130 = vpop.f32.mrf.mxu0
  %v7131 = vadd.f32 0.0, %v7130
  %7132 = vdwg.mxu0
  %v7133 = vadd.f32 %v6821, %v7058
  %v7134 = vadd.f32 %v6822, %v7060
  %v7135 = vadd.f32 %v6823, %v7129
  %v7136 = vadd.f32 %v6824, %v7131
  %v7137 = vmul.f32 %v6983, 0.5
  %v7138 = vtanh.pop %v7137
  %v7139 = vmul.f32 %v7138, 0.5
  %v7140 = vadd.f32 %v7139, 0.5
  %v7141 = vmul.f32 %v6984, 0.5
  %v7142 = vtanh.pop %v7141
  %v7143 = vmul.f32 %v7142, 0.5
  %v7144 = vadd.f32 %v7143, 0.5
  %v7145 = vtanh.pop %v6985
  %v7146 = vmul.f32 %v6986, 0.5
  %v7147 = vtanh.pop %v7146
  %v7148 = vmul.f32 %v7147, 0.5
  %v7149 = vadd.f32 %v7148, 0.5
  %v7151 = vrot.slane %v6791, 6
  %v7153 = vmul.f32 %v7144, %v7151
  %v7154 = vmul.f32 %v7140, %v7145
  %v7155 = vadd.f32 %v7153, %v7154
  %v7156 = vtanh.pop %v7155
  %v7157 = vmul.f32 %v7149, %v7156
  %v7158 = vmul.f32 %v7133, 0.5
  %v7159 = vtanh.pop %v7158
  %v7160 = vmul.f32 %v7159, 0.5
  %v7161 = vadd.f32 %v7160, 0.5
  %v7162 = vmul.f32 %v7134, 0.5
  %v7163 = vtanh.pop %v7162
  %v7164 = vmul.f32 %v7163, 0.5
  %v7165 = vadd.f32 %v7164, 0.5
  %v7166 = vtanh.pop %v7135
  %v7167 = vmul.f32 %v7136, 0.5
  %v7168 = vtanh.pop %v7167
  %v7169 = vmul.f32 %v7168, 0.5
  %v7170 = vadd.f32 %v7169, 0.5
  %v7172 = vrot.slane %v6812, 2
  %v7174 = vmul.f32 %v7165, %v7172
  %v7175 = vmul.f32 %v7161, %v7166
  %v7176 = vadd.f32 %v7174, %v7175
  %v7177 = vtanh.pop %v7176
  %v7178 = vmul.f32 %v7170, %v7177
  %7179 = vst.msk [vmem:[#allocation3 + $0x8] sm:$0xc0] %vm839, %v7157
  %7180 = vst.msk [vmem:[#allocation3 + $0x10] sm:$0x3] %vm837, %v7178
  %v7181 = vld [vmem:[#allocation3] sm:$0xff]
  %v7182 = vld [vmem:[#allocation3 + $0x8] sm:$0xff]
  %v7183 = vld [vmem:[#allocation3 + $0x10] sm:$0xff]
  %v7184 = vld [vmem:[#allocation3 + $0x18] sm:$0xff]
  %v7185 = vsel %vm123, %v7181, 0.0
  %7186 = vadd.xlane.f32.xlu0 %v7185
  %v7187 = vpop.xlane.xlu0 %7186
  %v7188 = vsel %vm123, %v7182, 0.0
  %7189 = vadd.xlane.f32.xlu0 %v7188
  %v7190 = vpop.xlane.xlu0 %7189
  %v7191 = vsel %vm123, %v7183, 0.0
  %7192 = vadd.xlane.f32.xlu0 %v7191
  %v7193 = vpop.xlane.xlu0 %7192
  %v7194 = vsel %vm123, %v7184, 0.0
  %7195 = vadd.xlane.f32.xlu0 %v7194
  %v7196 = vpop.xlane.xlu0 %7195
  %v7197 = vrcp.pop 32.0
  %v7198 = vmul.f32 %v7187, %v7197
  %v7199 = vmul.f32 %v7190, %v7197
  %v7200 = vmul.f32 %v7193, %v7197
  %v7201 = vmul.f32 %v7196, %v7197
  %v7202 = vsub.f32 %v7181, %v7198
  %v7203 = vsub.f32 %v7182, %v7199
  %v7204 = vsub.f32 %v7183, %v7200
  %v7205 = vsub.f32 %v7184, %v7201
  %v7206 = vmul.f32 %v7202, %v7202
  %v7207 = vmul.f32 %v7203, %v7203
  %v7208 = vmul.f32 %v7204, %v7204
  %v7209 = vmul.f32 %v7205, %v7205
  %v7210 = vsel %vm123, %v7206, 0.0
  %7211 = vadd.xlane.f32.xlu0 %v7210
  %v7212 = vpop.xlane.xlu0 %7211
  %v7213 = vsel %vm123, %v7207, 0.0
  %7214 = vadd.xlane.f32.xlu0 %v7213
  %v7215 = vpop.xlane.xlu0 %7214
  %v7216 = vsel %vm123, %v7208, 0.0
  %7217 = vadd.xlane.f32.xlu0 %v7216
  %v7218 = vpop.xlane.xlu0 %7217
  %v7219 = vsel %vm123, %v7209, 0.0
  %7220 = vadd.xlane.f32.xlu0 %v7219
  %v7221 = vpop.xlane.xlu0 %7220
  %v7222 = vmul.f32 %v7212, %v7197
  %v7223 = vmul.f32 %v7215, %v7197
  %v7224 = vmul.f32 %v7218, %v7197
  %v7225 = vmul.f32 %v7221, %v7197
  %v7226 = vadd.f32 %v7222, 1e-05
  %v7227 = vadd.f32 %v7223, 1e-05
  %v7228 = vadd.f32 %v7224, 1e-05
  %v7229 = vadd.f32 %v7225, 1e-05
  %v7230 = vrsqrt.pop %v7226
  %v7231 = vrsqrt.pop %v7227
  %v7232 = vrsqrt.pop %v7228
  %v7233 = vrsqrt.pop %v7229
  %v7234 = vmul.f32 %v7202, %v7230
  %v7235 = vmul.f32 %v7203, %v7231
  %v7236 = vmul.f32 %v7204, %v7232
  %v7237 = vmul.f32 %v7205, %v7233
  %v7238 = vld [vmem:[%s10] sm:$0x1]
  %v7240 = vlaneseq
  %v7241 = vshrl.u32 %v7240, 7
  %v7242 = vsub.s32 0, %v7241
  %v7243 = vrot.slane %v7238, %v7242
  %v7245 = vmul.f32 %v7234, %v7243
  %v7246 = vmul.f32 %v7235, %v7243
  %v7247 = vmul.f32 %v7236, %v7243
  %v7248 = vmul.f32 %v7237, %v7243
  %v7249 = vld [vmem:[%s11] sm:$0x1]
  %v7251 = vlaneseq
  %v7252 = vshrl.u32 %v7251, 7
  %v7253 = vsub.s32 0, %v7252
  %v7254 = vrot.slane %v7249, %v7253
  %v7256 = vadd.f32 %v7245, %v7254
  %v7257 = vadd.f32 %v7246, %v7254
  %v7258 = vadd.f32 %v7247, %v7254
  %v7259 = vadd.f32 %v7248, %v7254
  %v7260 = vmax.f32 %v7256, 0.0
  %v7261 = vmax.f32 %v7257, 0.0
  %v7262 = vmax.f32 %v7258, 0.0
  %v7263 = vmax.f32 %v7259, 0.0
  %v7264 = vld [vmem:[%s12] sm:$0xff]
  %v7265 = vld [vmem:[%s12 + $0x8] sm:$0xff]
  %v7266 = vld [vmem:[%s12 + $0x10] sm:$0xff]
  %v7267 = vld [vmem:[%s12 + $0x18] sm:$0xff]
  %v7268 = vld [vmem:[%s13] sm:$0x1]
  %v7270 = vlaneseq
  %v7271 = vshrl.u32 %v7270, 7
  %v7272 = vsub.s32 0, %v7271
  %v7273 = vrot.slane %v7268, %v7272
  %v7276 = vsel %vm123, %v7260, 0
  %v7279 = vsel %vm123, %v7261, 0
  %v7282 = vsel %vm123, %v7262, 0
  %v7285 = vsel %vm123, %v7263, 0
  %7287 = vmatprep.subr.mxu0 0.0
  %7288 = vmatpush1.msra.mxu0 0.0
  %7289 = vmatprep.subr.mxu0 0.0
  %7290 = vmatpush1.msra.mxu0 0.0
  %7291 = vmatprep.subr.mxu0 0.0
  %7292 = vmatpush1.msra.mxu0 0.0
  %7293 = vmatprep.subr.mxu0 0.0
  %7294 = vmatpush1.msra.mxu0 0.0
  %7295 = vmatprep.subr.mxu0 0.0
  %7296 = vmatpush1.msra.mxu0 0.0
  %7297 = vmatprep.subr.mxu0 0.0
  %7298 = vmatpush1.msra.mxu0 0.0
  %7299 = vmatprep.subr.mxu0 0.0
  %7300 = vmatpush1.msra.mxu0 0.0
  %7301 = vmatprep.subr.mxu0 0.0
  %7302 = vmatpush1.msra.mxu0 0.0
  %7303 = vmatprep.subr.mxu0 0.0
  %7304 = vmatpush1.msra.mxu0 0.0
  %7305 = vmatprep.subr.mxu0 0.0
  %7306 = vmatpush1.msra.mxu0 0.0
  %7307 = vmatprep.subr.mxu0 0.0
  %7308 = vmatpush1.msra.mxu0 0.0
  %7309 = vmatprep.subr.mxu0 0.0
  %7310 = vmatpush1.msra.mxu0 0.0
  %7311 = vmatprep.subr.mxu0 0.0
  %7312 = vmatpush1.msra.mxu0 %v7267
  %7313 = vmatprep.subr.mxu0 0.0
  %7314 = vmatpush1.msra.mxu0 %v7266
  %7315 = vmatprep.subr.mxu0 0.0
  %7316 = vmatpush1.msra.mxu0 %v7265
  %7317 = vmatprep.subr.mxu0 0.0
  %7318 = vmatpush1.msra.mxu0 %v7264
  %7319 = vmatprep.subr.mxu0 0.0
  %7320 = vmatpush2.msra.mxu0 0.0
  %7321 = vmatprep.subr.mxu0 0.0
  %7322 = vmatpush2.msra.mxu0 0.0
  %7323 = vmatprep.subr.mxu0 0.0
  %7324 = vmatpush2.msra.mxu0 0.0
  %7325 = vmatprep.subr.mxu0 0.0
  %7326 = vmatpush2.msra.mxu0 0.0
  %7327 = vmatprep.subr.mxu0 0.0
  %7328 = vmatpush2.msra.mxu0 0.0
  %7329 = vmatprep.subr.mxu0 0.0
  %7330 = vmatpush2.msra.mxu0 0.0
  %7331 = vmatprep.subr.mxu0 0.0
  %7332 = vmatpush2.msra.mxu0 0.0
  %7333 = vmatprep.subr.mxu0 0.0
  %7334 = vmatpush2.msra.mxu0 0.0
  %7335 = vmatprep.subr.mxu0 0.0
  %7336 = vmatpush2.msra.mxu0 0.0
  %7337 = vmatprep.subr.mxu0 0.0
  %7338 = vmatpush2.msra.mxu0 0.0
  %7339 = vmatprep.subr.mxu0 0.0
  %7340 = vmatpush2.msra.mxu0 0.0
  %7341 = vmatprep.subr.mxu0 0.0
  %7342 = vmatpush2.msra.mxu0 0.0
  %7343 = vmatprep.subr.mxu0 0.0
  %7344 = vmatpush2.msra.mxu0 0.0
  %7345 = vmatprep.subr.mxu0 0.0
  %7346 = vmatpush2.msra.mxu0 0.0
  %7347 = vmatprep.subr.mxu0 0.0
  %7348 = vmatpush2.msra.mxu0 0.0
  %7349 = vmatprep.subr.mxu0 0.0
  %7350 = vmatpush2.msra.mxu0 0.0
  %7351 = vmatprep.mubr.f32.mxu0 0.0
  %7352 = vmatmul.mubr.f32.gmra.mxu0 %v7276
  %v7353 = vpop.f32.mrf.mxu0
  %v7354 = vadd.f32 %v7273, %v7353
  %v7355 = vpop.f32.mrf.mxu0
  %7356 = vmatprep.mubr.f32.mxu0 0.0
  %7357 = vmatmul.mubr.f32.gmra.mxu0 %v7279
  %v7358 = vpop.f32.mrf.mxu0
  %v7359 = vadd.f32 %v7273, %v7358
  %v7360 = vpop.f32.mrf.mxu0
  %7361 = vmatprep.mubr.f32.mxu0 0.0
  %7362 = vmatmul.mubr.f32.gmra.mxu0 %v7282
  %v7363 = vpop.f32.mrf.mxu0
  %v7364 = vadd.f32 %v7273, %v7363
  %v7365 = vpop.f32.mrf.mxu0
  %7366 = vmatprep.mubr.f32.mxu0 0.0
  %7367 = vmatmul.mubr.f32.gmra.mxu0 %v7285
  %v7368 = vpop.f32.mrf.mxu0
  %v7369 = vadd.f32 %v7273, %v7368
  %v7370 = vpop.f32.mrf.mxu0
  %7371 = vdwg.mxu0
  %7372 = vst [vmem:[%s14] sm:$0xff] %v7354
  %7373 = vst [vmem:[%s14 + $0x8] sm:$0xff] %v7359
  %7374 = vst [vmem:[%s14 + $0x10] sm:$0xff] %v7364
  %7375 = vst [vmem:[%s14 + $0x18] sm:$0xff] %v7369
  // Predicated region
  $region58: #{transformer_rater_forward.1} parent=0 // pred_check
    _
  $region59: #{transformer_rater_forward.1} parent=0 // pred_check_branch
    %7377 = sbr.rel (0) target = $region61
  $region60: #{transformer_rater_forward.1} parent=0 // pred_region
    _
  $region61: #{transformer_rater_forward.1} parent=0 // pred_fallthru
    _
  // Predicated region
  $region62: #{transformer_rater_forward.1} parent=0 // pred_check
    _
  $region63: #{transformer_rater_forward.1} parent=0 // pred_check_branch
    %7379 = sbr.rel (0) target = $region65
  $region64: #{transformer_rater_forward.1} parent=0 // pred_region
    _
  $region65: #{transformer_rater_forward.1} parent=0 // pred_fallthru
    _

</llo_original>
